<compile_context>
chip_gen: v7x
topology: tpu7x:2x2x1
jax: 0.10.0
libtpu: 0.0.40
codegen_flags: <defaults>
</compile_context>

<pallas_src>
import jax
import jax.numpy as jnp
from jax.experimental import pallas as pl
from jax.experimental.pallas import tpu as pltpu


# ----------------------------------------------------------------------------
# Fused WF kernel (per batch element)
# ----------------------------------------------------------------------------
def _wf_kernel(x_ref, res_ref, w1_ref, w9_ref, shift_ref, out_ref, fused_scr):
    # x_ref:     (1, H, W, Cd)      bf16, low-res input, pre-scaled by fw[1]
    # res_ref:   (1, H, W, 4*Cin)   bf16, parity-packed high-res skip (block = 2*rp+cp)
    # w1_ref:    (4*Cin, 4*Cd)      bf16, block-diagonal 1x1 weights, fw[0] folded in
    # w9_ref:    (9, 4*Cd, 4*Cd)    bf16, parity-packed 3x3 tap weights, BN scale folded
    # shift_ref: (1, 4*Cd)          f32, folded BatchNorm shift
    # out_ref:   (1, H, W, 4*Cd)    f32, parity-packed output
    # fused_scr: (H+2, W+2, 4*Cd)   bf16 scratch with 1-px zero halo
    _, H, W, Cd = x_ref.shape
    C4 = out_ref.shape[-1]

    # ---- zero ONLY the 1-px halo (scratch persists across grid steps / cores) ----
    zrow = jnp.zeros((1, W + 2, C4), fused_scr.dtype)
    zcol = jnp.zeros((H + 2, 1, C4), fused_scr.dtype)
    fused_scr[pl.ds(0, 1), :, :] = zrow
    fused_scr[pl.ds(H + 1, 1), :, :] = zrow
    fused_scr[:, pl.ds(0, 1), :] = zcol
    fused_scr[:, pl.ds(W + 1, 1), :] = zcol

    # ---- stage 1: fused = fw0*Conv1x1(res) + fw1*up2(x), parity-packed on channels ----
    pre = jnp.dot(res_ref[0].reshape(H * W, res_ref.shape[-1]), w1_ref[...],
                  preferred_element_type=jnp.float32).reshape(H, W, C4)

    # bilinear x2 upsample of x expressed per output parity (edge-clamped stencils):
    #   row parity 0: 0.25*x[i-1] + 0.75*x[i]     row parity 1: 0.75*x[i] + 0.25*x[i+1]
    x = x_ref[0].astype(jnp.float32)                              # (H, W, Cd)
    x_rm = jnp.concatenate([x[:1], x[:-1]], axis=0)
    x_rp = jnp.concatenate([x[1:], x[-1:]], axis=0)
    rows = (0.25 * x_rm + 0.75 * x,                               # row parity 0
            0.75 * x + 0.25 * x_rp)                               # row parity 1
    xups = []
    for ra in rows:
        ra_cm = jnp.concatenate([ra[:, :1], ra[:, :-1]], axis=1)
        ra_cp = jnp.concatenate([ra[:, 1:], ra[:, -1:]], axis=1)
        xups.append(0.25 * ra_cm + 0.75 * ra)                     # col parity 0
        xups.append(0.75 * ra + 0.25 * ra_cp)                     # col parity 1
    xup = jnp.concatenate(xups, axis=-1)                          # (H, W, 4*Cd)

    fused_scr[pl.ds(1, H), pl.ds(1, W), :] = (pre + xup).astype(fused_scr.dtype)

    # ---- stage 2: 3x3 conv == 9 accumulated lane-dense dots, then BN shift + ReLU6 ----
    acc = jnp.zeros((H * W, C4), jnp.float32)
    for dy in range(3):
        for dx in range(3):
            tap = fused_scr[pl.ds(dy, H), pl.ds(dx, W), :].reshape(H * W, C4)
            acc = acc + jnp.dot(tap, w9_ref[dy * 3 + dx],
                                preferred_element_type=jnp.float32)
    out_ref[0] = jnp.clip(acc + shift_ref[...], 0.0, 6.0).reshape(H, W, C4)


# ----------------------------------------------------------------------------
# Full WF forward (NCHW in / NCHW out, like PyTorch)
# ----------------------------------------------------------------------------
def wf_forward(x_nchw, res_nchw, fuse_w, w_pre, w_post,
               gamma, beta, run_mean, run_var, eps=1e-8, bn_eps=1e-5):
    B, Cd, H, W = x_nchw.shape
    Cin = res_nchw.shape[1]
    C4 = 4 * Cd

    w = jax.nn.relu(fuse_w)
    fw = w / (jnp.sum(w) + eps)

    # Layout plumbing (XLA fuses the fw-scaling / bf16 casts into these transposes;
    # with an NHWC / parity-packed producer these passes would disappear entirely).
    x_pk = (jnp.transpose(x_nchw, (0, 2, 3, 1)) * fw[1]).astype(jnp.bfloat16)
    res_pk = jnp.transpose(res_nchw.reshape(B, Cin, H, 2, W, 2),
                           (0, 2, 4, 3, 5, 1)).reshape(B, H, W, 4 * Cin)
    res_pk = res_pk.astype(jnp.bfloat16)

    # Block-diagonal 1x1 weights: input parity block -> same output parity block.
    w1 = jnp.kron(jnp.eye(4, dtype=jnp.float32), fw[0] * w_pre).astype(jnp.bfloat16)

    # Fold BN: scale into the 3x3 weights (per output channel), keep only the shift.
    inv = gamma / jnp.sqrt(run_var + bn_eps)
    w_post_s = w_post * inv[None, None, None, :]                  # HWIO
    shift = jnp.tile(beta - run_mean * inv, 4).reshape(1, C4).astype(jnp.float32)

    # Parity-packed low-res 3x3 conv weights: W9[(dy+1)*3+(dx+1)] maps fused parity
    # (ap,bq) channel block -> output parity (p,q) channel block.
    w9 = jnp.zeros((9, C4, C4), jnp.float32)
    for p in range(2):
        for q in range(2):
            ob = 2 * p + q
            for ap in range(2):
                for bq in range(2):
                    ib = 2 * ap + bq
                    for dy in (-1, 0, 1):
                        ky = 2 * dy + ap - p + 1
                        if not 0 <= ky <= 2:
                            continue
                        for dx in (-1, 0, 1):
                            kx = 2 * dx + bq - q + 1
                            if not 0 <= kx <= 2:
                                continue
                            t = (dy + 1) * 3 + (dx + 1)
                            w9 = w9.at[t, ib * Cd:(ib + 1) * Cd,
                                       ob * Cd:(ob + 1) * Cd].set(w_post_s[ky, kx])
    w9 = w9.astype(jnp.bfloat16)

    out_pk = pl.pallas_call(
        _wf_kernel,
        out_shape=jax.ShapeDtypeStruct((B, H, W, C4), jnp.float32),
        grid=(B,),
        in_specs=[
            pl.BlockSpec((1, H, W, Cd), lambda b: (b, 0, 0, 0)),
            pl.BlockSpec((1, H, W, 4 * Cin), lambda b: (b, 0, 0, 0)),
            pl.BlockSpec((4 * Cin, C4), lambda b: (0, 0)),
            pl.BlockSpec((9, C4, C4), lambda b: (0, 0, 0)),
            pl.BlockSpec((1, C4), lambda b: (0, 0)),
        ],
        out_specs=pl.BlockSpec((1, H, W, C4), lambda b: (b, 0, 0, 0)),
        scratch_shapes=[pltpu.VMEM((H + 2, W + 2, C4), jnp.bfloat16)],
        compiler_params=pltpu.CompilerParams(dimension_semantics=("parallel",)),
    )(x_pk, res_pk, w1, w9, shift)

    # Un-pack the 4 parities + NHWC->NCHW in a single transpose.
    out6 = out_pk.reshape(B, H, W, 2, 2, Cd)
    return jnp.transpose(out6, (0, 5, 1, 3, 2, 4)).reshape(B, Cd, 2 * H, 2 * W)


# ----------------------------------------------------------------------------
# Pure-JAX reference (f32 end-to-end) for the correctness check
# ----------------------------------------------------------------------------
def bilinear_up2(x):
    """x: (B, H, W, C) -> (B, 2H, 2W, C); matches F.interpolate(..., 'bilinear')."""
    B, H, W, C = x.shape

    def make_idx(n):
        i = jnp.arange(2 * n, dtype=jnp.float32)
        src = jnp.clip((i + 0.5) * 0.5 - 0.5, 0.0, float(n - 1))
        lo = jnp.floor(src).astype(jnp.int32)
        hi = jnp.minimum(lo + 1, n - 1)
        frac = src - lo.astype(jnp.float32)
        return lo, hi, frac

    lo_h, hi_h, fh = make_idx(H)
    lo_w, hi_w, fww = make_idx(W)
    rows = (x[:, lo_h] * (1.0 - fh)[None, :, None, None]
            + x[:, hi_h] * fh[None, :, None, None])
    out = (rows[:, :, lo_w] * (1.0 - fww)[None, None, :, None]
           + rows[:, :, hi_w] * fww[None, None, :, None])
    return out


def wf_reference(x_nchw, res_nchw, fuse_w, w_pre, w_post,
                 gamma, beta, run_mean, run_var, eps=1e-8, bn_eps=1e-5):
    x = jnp.transpose(x_nchw, (0, 2, 3, 1))
    res = jnp.transpose(res_nchw, (0, 2, 3, 1))
    x_up = bilinear_up2(x)
    w = jax.nn.relu(fuse_w)
    fw = w / (jnp.sum(w) + eps)
    dn = ("NHWC", "HWIO", "NHWC")
    pre = jax.lax.conv_general_dilated(res, w_pre.reshape(1, 1, *w_pre.shape),
                                       (1, 1), "VALID", dimension_numbers=dn)
    fused = fw[0] * pre + fw[1] * x_up
    conv = jax.lax.conv_general_dilated(fused, w_post, (1, 1), "SAME",
                                        dimension_numbers=dn)
    scale = gamma / jnp.sqrt(run_var + bn_eps)
    shift = beta - run_mean * scale
    out = jnp.clip(conv * scale + shift, 0.0, 6.0)
    return jnp.transpose(out, (0, 3, 1, 2))


if __name__ == "__main__":
    key = jax.random.PRNGKey(0)
    B, Cin, Cd = 2, 64, 32          # in_channels (res), decode_channels (x / output)
    H, W = 16, 16                   # x is low-res; res / output are 32x32

    k1, k2, k3, k4, k5, k6, k7 = jax.random.split(key, 7)
    x = jax.random.normal(k1, (B, Cd, H, W), jnp.float32)
    res = jax.random.normal(k2, (B, Cin, 2 * H, 2 * W), jnp.float32)

    # Parameters (shapes per WF.__init__):
    fuse_w = jnp.ones((2,), jnp.float32)                                # nn.Parameter(torch.ones(2))
    w_pre = 0.1 * jax.random.normal(k3, (Cin, Cd), jnp.float32)         # 1x1 conv, (Cin, Cout)
    w_post = 0.05 * jax.random.normal(k4, (3, 3, Cd, Cd), jnp.float32)  # 3x3 conv, HWIO
    gamma = 1.0 + 0.1 * jax.random.normal(k5, (Cd,), jnp.float32)       # BN weight
    beta = 0.1 * jax.random.normal(k6, (Cd,), jnp.float32)              # BN bias
    run_mean = 0.1 * jax.random.normal(k7, (Cd,), jnp.float32)          # BN running mean
    run_var = jnp.ones((Cd,), jnp.float32)                              # BN running var

    out = jax.jit(wf_forward)(x, res, fuse_w, w_pre, w_post,
                              gamma, beta, run_mean, run_var)
    out = jax.block_until_ready(out)

    ref = wf_reference(x, res, fuse_w, w_pre, w_post,
                       gamma, beta, run_mean, run_var)
    assert out.shape == (B, Cd, 2 * H, 2 * W), out.shape
    # bf16 MXU operands / bf16 fused intermediate are intentional (perf guidance);
    # tolerance documented accordingly.
    err = float(jnp.max(jnp.abs(out - ref)))
    assert jnp.allclose(out, ref, atol=2e-2, rtol=2e-2), err

    print("KERNEL_OK")
</pallas_src>

<mosaic_0001>
module attributes {stable_mosaic.version = 11 : i64} {
  func.func @_wf_kernel(%arg0: i32, %arg1: memref<1x16x16x32xbf16, #tpu.memory_space<vmem>>, %arg2: memref<1x16x16x256xbf16, #tpu.memory_space<vmem>>, %arg3: memref<256x128xbf16, #tpu.memory_space<vmem>>, %arg4: memref<9x128x128xbf16, #tpu.memory_space<vmem>>, %arg5: memref<1x128xf32, #tpu.memory_space<vmem>>, %arg6: memref<1x16x16x128xf32, #tpu.memory_space<vmem>>, %arg7: memref<18x18x128xbf16, #tpu.memory_space<vmem>>) attributes {dimension_semantics = [#tpu.dimension_semantics<parallel>], iteration_bounds = array<i64: 2>, scalar_prefetch = 0 : i64, scratch_operands = 1 : i64, tpu.core_type = #tpu.core_type<tc>, window_params = [{transform_indices = @transform_0, window_bounds = array<i64: 1, 16, 16, 32>}, {transform_indices = @transform_1, window_bounds = array<i64: 1, 16, 16, 256>}, {pipeline_mode = #tpu.pipeline_mode<synchronous>, transform_indices = @transform_2, window_bounds = array<i64: 256, 128>}, {pipeline_mode = #tpu.pipeline_mode<synchronous>, transform_indices = @transform_3, window_bounds = array<i64: 9, 128, 128>}, {pipeline_mode = #tpu.pipeline_mode<synchronous>, transform_indices = @transform_4, window_bounds = array<i64: 1, 128>}, {transform_indices = @transform_5, window_bounds = array<i64: 1, 16, 16, 128>}]} {
    %cst = arith.constant 0.000000e+00 : bf16
    %0 = vector.broadcast %cst : bf16 to vector<1x18x128xbf16>
    %cst_0 = arith.constant 0.000000e+00 : bf16
    %1 = vector.broadcast %cst_0 : bf16 to vector<18x1x128xbf16>
    %c0 = arith.constant 0 : index
    %c0_1 = arith.constant 0 : index
    %c0_2 = arith.constant 0 : index
    %2 = vector.load %arg7[%c0, %c0_1, %c0_2] : memref<18x18x128xbf16, #tpu.memory_space<vmem>>, vector<1x18x128xbf16>
    tpu.vector_store %arg7[%c0, %c0_1, %c0_2], %0 {strides = array<i32>} : memref<18x18x128xbf16, #tpu.memory_space<vmem>>, vector<1x18x128xbf16>,
    %c17 = arith.constant 17 : index
    %c0_3 = arith.constant 0 : index
    %c0_4 = arith.constant 0 : index
    %3 = vector.load %arg7[%c17, %c0_3, %c0_4] : memref<18x18x128xbf16, #tpu.memory_space<vmem>>, vector<1x18x128xbf16>
    tpu.vector_store %arg7[%c17, %c0_3, %c0_4], %0 {strides = array<i32>} : memref<18x18x128xbf16, #tpu.memory_space<vmem>>, vector<1x18x128xbf16>,
    %c0_5 = arith.constant 0 : index
    %c0_6 = arith.constant 0 : index
    %c0_7 = arith.constant 0 : index
    %4 = vector.load %arg7[%c0_5, %c0_6, %c0_7] : memref<18x18x128xbf16, #tpu.memory_space<vmem>>, vector<18x1x128xbf16>
    tpu.vector_store %arg7[%c0_5, %c0_6, %c0_7], %1 {strides = array<i32>} : memref<18x18x128xbf16, #tpu.memory_space<vmem>>, vector<18x1x128xbf16>,
    %c0_8 = arith.constant 0 : index
    %c17_9 = arith.constant 17 : index
    %c0_10 = arith.constant 0 : index
    %5 = vector.load %arg7[%c0_8, %c17_9, %c0_10] : memref<18x18x128xbf16, #tpu.memory_space<vmem>>, vector<18x1x128xbf16>
    tpu.vector_store %arg7[%c0_8, %c17_9, %c0_10], %1 {strides = array<i32>} : memref<18x18x128xbf16, #tpu.memory_space<vmem>>, vector<18x1x128xbf16>,
    %c0_11 = arith.constant 0 : index
    %c0_12 = arith.constant 0 : index
    %c0_13 = arith.constant 0 : index
    %c0_14 = arith.constant 0 : index
    %6 = vector.load %arg2[%c0_11, %c0_12, %c0_13, %c0_14] : memref<1x16x16x256xbf16, #tpu.memory_space<vmem>>, vector<1x16x16x256xbf16>
    %7 = vector.shape_cast %6 : vector<1x16x16x256xbf16> to vector<16x16x256xbf16>
    %8 = vector.shape_cast %7 : vector<16x16x256xbf16> to vector<256x256xbf16>
    %c0_15 = arith.constant 0 : index
    %c0_16 = arith.constant 0 : index
    %9 = vector.load %arg3[%c0_15, %c0_16] : memref<256x128xbf16, #tpu.memory_space<vmem>>, vector<256x128xbf16>
    %cst_17 = arith.constant dense<0.000000e+00> : vector<256x128xf32>
    %10 = tpu.matmul %8, %9, %cst_17 {dimension_numbers = #tpu.dot_dimension_numbers<[1], [0], [0], [1], [0, 0, 1, 1], [], []>} : vector<256x256xbf16>, vector<256x128xbf16>, vector<256x128xf32> -> vector<256x128xf32>
    %11 = vector.shape_cast %10 : vector<256x128xf32> to vector<16x16x128xf32>
    %c0_18 = arith.constant 0 : index
    %c0_19 = arith.constant 0 : index
    %c0_20 = arith.constant 0 : index
    %c0_21 = arith.constant 0 : index
    %12 = vector.load %arg1[%c0_18, %c0_19, %c0_20, %c0_21] : memref<1x16x16x32xbf16, #tpu.memory_space<vmem>>, vector<1x16x16x32xbf16>
    %13 = vector.shape_cast %12 : vector<1x16x16x32xbf16> to vector<16x16x32xbf16>
    %14 = arith.extf %13 : vector<16x16x32xbf16> to vector<16x16x32xf32>
    %15 = vector.extract_strided_slice %14 {offsets = [0, 0, 0], sizes = [1, 16, 32], strides = [1, 1, 1]} : vector<16x16x32xf32> to vector<1x16x32xf32>
    %16 = vector.extract_strided_slice %14 {offsets = [0, 0, 0], sizes = [15, 16, 32], strides = [1, 1, 1]} : vector<16x16x32xf32> to vector<15x16x32xf32>
    %17 = tpu.concatenate %15, %16 in 0 : vector<1x16x32xf32>, vector<15x16x32xf32> -> vector<16x16x32xf32>
    %18 = vector.extract_strided_slice %14 {offsets = [1, 0, 0], sizes = [15, 16, 32], strides = [1, 1, 1]} : vector<16x16x32xf32> to vector<15x16x32xf32>
    %19 = vector.extract_strided_slice %14 {offsets = [15, 0, 0], sizes = [1, 16, 32], strides = [1, 1, 1]} : vector<16x16x32xf32> to vector<1x16x32xf32>
    %20 = tpu.concatenate %18, %19 in 0 : vector<15x16x32xf32>, vector<1x16x32xf32> -> vector<16x16x32xf32>
    %cst_22 = arith.constant 2.500000e-01 : f32
    %21 = vector.broadcast %cst_22 : f32 to vector<16x16x32xf32>
    %22 = arith.mulf %21, %17 : vector<16x16x32xf32>
    %cst_23 = arith.constant 7.500000e-01 : f32
    %23 = vector.broadcast %cst_23 : f32 to vector<16x16x32xf32>
    %24 = arith.mulf %23, %14 : vector<16x16x32xf32>
    %25 = arith.addf %22, %24 : vector<16x16x32xf32>
    %cst_24 = arith.constant 7.500000e-01 : f32
    %26 = vector.broadcast %cst_24 : f32 to vector<16x16x32xf32>
    %27 = arith.mulf %26, %14 : vector<16x16x32xf32>
    %cst_25 = arith.constant 2.500000e-01 : f32
    %28 = vector.broadcast %cst_25 : f32 to vector<16x16x32xf32>
    %29 = arith.mulf %28, %20 : vector<16x16x32xf32>
    %30 = arith.addf %27, %29 : vector<16x16x32xf32>
    %31 = vector.extract_strided_slice %25 {offsets = [0, 0, 0], sizes = [16, 1, 32], strides = [1, 1, 1]} : vector<16x16x32xf32> to vector<16x1x32xf32>
    %32 = vector.extract_strided_slice %25 {offsets = [0, 0, 0], sizes = [16, 15, 32], strides = [1, 1, 1]} : vector<16x16x32xf32> to vector<16x15x32xf32>
    %33 = tpu.concatenate %31, %32 in 1 : vector<16x1x32xf32>, vector<16x15x32xf32> -> vector<16x16x32xf32>
    %34 = vector.extract_strided_slice %25 {offsets = [0, 1, 0], sizes = [16, 15, 32], strides = [1, 1, 1]} : vector<16x16x32xf32> to vector<16x15x32xf32>
    %35 = vector.extract_strided_slice %25 {offsets = [0, 15, 0], sizes = [16, 1, 32], strides = [1, 1, 1]} : vector<16x16x32xf32> to vector<16x1x32xf32>
    %36 = tpu.concatenate %34, %35 in 1 : vector<16x15x32xf32>, vector<16x1x32xf32> -> vector<16x16x32xf32>
    %cst_26 = arith.constant 2.500000e-01 : f32
    %37 = vector.broadcast %cst_26 : f32 to vector<16x16x32xf32>
    %38 = arith.mulf %37, %33 : vector<16x16x32xf32>
    %cst_27 = arith.constant 7.500000e-01 : f32
    %39 = vector.broadcast %cst_27 : f32 to vector<16x16x32xf32>
    %40 = arith.mulf %39, %25 : vector<16x16x32xf32>
    %41 = arith.addf %38, %40 : vector<16x16x32xf32>
    %cst_28 = arith.constant 7.500000e-01 : f32
    %42 = vector.broadcast %cst_28 : f32 to vector<16x16x32xf32>
    %43 = arith.mulf %42, %25 : vector<16x16x32xf32>
    %cst_29 = arith.constant 2.500000e-01 : f32
    %44 = vector.broadcast %cst_29 : f32 to vector<16x16x32xf32>
    %45 = arith.mulf %44, %36 : vector<16x16x32xf32>
    %46 = arith.addf %43, %45 : vector<16x16x32xf32>
    %47 = vector.extract_strided_slice %30 {offsets = [0, 0, 0], sizes = [16, 1, 32], strides = [1, 1, 1]} : vector<16x16x32xf32> to vector<16x1x32xf32>
    %48 = vector.extract_strided_slice %30 {offsets = [0, 0, 0], sizes = [16, 15, 32], strides = [1, 1, 1]} : vector<16x16x32xf32> to vector<16x15x32xf32>
    %49 = tpu.concatenate %47, %48 in 1 : vector<16x1x32xf32>, vector<16x15x32xf32> -> vector<16x16x32xf32>
    %50 = vector.extract_strided_slice %30 {offsets = [0, 1, 0], sizes = [16, 15, 32], strides = [1, 1, 1]} : vector<16x16x32xf32> to vector<16x15x32xf32>
    %51 = vector.extract_strided_slice %30 {offsets = [0, 15, 0], sizes = [16, 1, 32], strides = [1, 1, 1]} : vector<16x16x32xf32> to vector<16x1x32xf32>
    %52 = tpu.concatenate %50, %51 in 1 : vector<16x15x32xf32>, vector<16x1x32xf32> -> vector<16x16x32xf32>
    %cst_30 = arith.constant 2.500000e-01 : f32
    %53 = vector.broadcast %cst_30 : f32 to vector<16x16x32xf32>
    %54 = arith.mulf %53, %49 : vector<16x16x32xf32>
    %cst_31 = arith.constant 7.500000e-01 : f32
    %55 = vector.broadcast %cst_31 : f32 to vector<16x16x32xf32>
    %56 = arith.mulf %55, %30 : vector<16x16x32xf32>
    %57 = arith.addf %54, %56 : vector<16x16x32xf32>
    %cst_32 = arith.constant 7.500000e-01 : f32
    %58 = vector.broadcast %cst_32 : f32 to vector<16x16x32xf32>
    %59 = arith.mulf %58, %30 : vector<16x16x32xf32>
    %cst_33 = arith.constant 2.500000e-01 : f32
    %60 = vector.broadcast %cst_33 : f32 to vector<16x16x32xf32>
    %61 = arith.mulf %60, %52 : vector<16x16x32xf32>
    %62 = arith.addf %59, %61 : vector<16x16x32xf32>
    %63 = tpu.concatenate %41, %46, %57, %62 in 2 : vector<16x16x32xf32>, vector<16x16x32xf32>, vector<16x16x32xf32>, vector<16x16x32xf32> -> vector<16x16x128xf32>
    %64 = arith.addf %11, %63 : vector<16x16x128xf32>
    %65 = arith.truncf %64 : vector<16x16x128xf32> to vector<16x16x128xbf16>
    %c1 = arith.constant 1 : index
    %c1_34 = arith.constant 1 : index
    %c0_35 = arith.constant 0 : index
    %66 = vector.load %arg7[%c1, %c1_34, %c0_35] : memref<18x18x128xbf16, #tpu.memory_space<vmem>>, vector<16x16x128xbf16>
    tpu.vector_store %arg7[%c1, %c1_34, %c0_35], %65 {strides = array<i32>} : memref<18x18x128xbf16, #tpu.memory_space<vmem>>, vector<16x16x128xbf16>,
    %cst_36 = arith.constant 0.000000e+00 : f32
    %67 = vector.broadcast %cst_36 : f32 to vector<256x128xf32>
    %c0_37 = arith.constant 0 : index
    %c0_38 = arith.constant 0 : index
    %c0_39 = arith.constant 0 : index
    %68 = vector.load %arg7[%c0_37, %c0_38, %c0_39] : memref<18x18x128xbf16, #tpu.memory_space<vmem>>, vector<16x16x128xbf16>
    %69 = vector.shape_cast %68 : vector<16x16x128xbf16> to vector<256x128xbf16>
    %c0_40 = arith.constant 0 : index
    %c0_41 = arith.constant 0 : index
    %c0_42 = arith.constant 0 : index
    %70 = vector.load %arg4[%c0_40, %c0_41, %c0_42] : memref<9x128x128xbf16, #tpu.memory_space<vmem>>, vector<1x128x128xbf16>
    %71 = vector.shape_cast %70 : vector<1x128x128xbf16> to vector<128x128xbf16>
    %cst_43 = arith.constant dense<0.000000e+00> : vector<256x128xf32>
    %72 = tpu.matmul %69, %71, %cst_43 {dimension_numbers = #tpu.dot_dimension_numbers<[1], [0], [0], [1], [0, 0, 1, 1], [], []>} : vector<256x128xbf16>, vector<128x128xbf16>, vector<256x128xf32> -> vector<256x128xf32>
    %73 = arith.addf %67, %72 : vector<256x128xf32>
    %c0_44 = arith.constant 0 : index
    %c1_45 = arith.constant 1 : index
    %c0_46 = arith.constant 0 : index
    %74 = vector.load %arg7[%c0_44, %c1_45, %c0_46] : memref<18x18x128xbf16, #tpu.memory_space<vmem>>, vector<16x16x128xbf16>
    %75 = vector.shape_cast %74 : vector<16x16x128xbf16> to vector<256x128xbf16>
    %c1_47 = arith.constant 1 : index
    %c0_48 = arith.constant 0 : index
    %c0_49 = arith.constant 0 : index
    %76 = vector.load %arg4[%c1_47, %c0_48, %c0_49] : memref<9x128x128xbf16, #tpu.memory_space<vmem>>, vector<1x128x128xbf16>
    %77 = vector.shape_cast %76 : vector<1x128x128xbf16> to vector<128x128xbf16>
    %cst_50 = arith.constant dense<0.000000e+00> : vector<256x128xf32>
    %78 = tpu.matmul %75, %77, %cst_50 {dimension_numbers = #tpu.dot_dimension_numbers<[1], [0], [0], [1], [0, 0, 1, 1], [], []>} : vector<256x128xbf16>, vector<128x128xbf16>, vector<256x128xf32> -> vector<256x128xf32>
    %79 = arith.addf %73, %78 : vector<256x128xf32>
    %c0_51 = arith.constant 0 : index
    %c2 = arith.constant 2 : index
    %c0_52 = arith.constant 0 : index
    %80 = vector.load %arg7[%c0_51, %c2, %c0_52] : memref<18x18x128xbf16, #tpu.memory_space<vmem>>, vector<16x16x128xbf16>
    %81 = vector.shape_cast %80 : vector<16x16x128xbf16> to vector<256x128xbf16>
    %c2_53 = arith.constant 2 : index
    %c0_54 = arith.constant 0 : index
    %c0_55 = arith.constant 0 : index
    %82 = vector.load %arg4[%c2_53, %c0_54, %c0_55] : memref<9x128x128xbf16, #tpu.memory_space<vmem>>, vector<1x128x128xbf16>
    %83 = vector.shape_cast %82 : vector<1x128x128xbf16> to vector<128x128xbf16>
    %cst_56 = arith.constant dense<0.000000e+00> : vector<256x128xf32>
    %84 = tpu.matmul %81, %83, %cst_56 {dimension_numbers = #tpu.dot_dimension_numbers<[1], [0], [0], [1], [0, 0, 1, 1], [], []>} : vector<256x128xbf16>, vector<128x128xbf16>, vector<256x128xf32> -> vector<256x128xf32>
    %85 = arith.addf %79, %84 : vector<256x128xf32>
    %c1_57 = arith.constant 1 : index
    %c0_58 = arith.constant 0 : index
    %c0_59 = arith.constant 0 : index
    %86 = vector.load %arg7[%c1_57, %c0_58, %c0_59] : memref<18x18x128xbf16, #tpu.memory_space<vmem>>, vector<16x16x128xbf16>
    %87 = vector.shape_cast %86 : vector<16x16x128xbf16> to vector<256x128xbf16>
    %c3 = arith.constant 3 : index
    %c0_60 = arith.constant 0 : index
    %c0_61 = arith.constant 0 : index
    %88 = vector.load %arg4[%c3, %c0_60, %c0_61] : memref<9x128x128xbf16, #tpu.memory_space<vmem>>, vector<1x128x128xbf16>
    %89 = vector.shape_cast %88 : vector<1x128x128xbf16> to vector<128x128xbf16>
    %cst_62 = arith.constant dense<0.000000e+00> : vector<256x128xf32>
    %90 = tpu.matmul %87, %89, %cst_62 {dimension_numbers = #tpu.dot_dimension_numbers<[1], [0], [0], [1], [0, 0, 1, 1], [], []>} : vector<256x128xbf16>, vector<128x128xbf16>, vector<256x128xf32> -> vector<256x128xf32>
    %91 = arith.addf %85, %90 : vector<256x128xf32>
    %c1_63 = arith.constant 1 : index
    %c1_64 = arith.constant 1 : index
    %c0_65 = arith.constant 0 : index
    %92 = vector.load %arg7[%c1_63, %c1_64, %c0_65] : memref<18x18x128xbf16, #tpu.memory_space<vmem>>, vector<16x16x128xbf16>
    %93 = vector.shape_cast %92 : vector<16x16x128xbf16> to vector<256x128xbf16>
    %c4 = arith.constant 4 : index
    %c0_66 = arith.constant 0 : index
    %c0_67 = arith.constant 0 : index
    %94 = vector.load %arg4[%c4, %c0_66, %c0_67] : memref<9x128x128xbf16, #tpu.memory_space<vmem>>, vector<1x128x128xbf16>
    %95 = vector.shape_cast %94 : vector<1x128x128xbf16> to vector<128x128xbf16>
    %cst_68 = arith.constant dense<0.000000e+00> : vector<256x128xf32>
    %96 = tpu.matmul %93, %95, %cst_68 {dimension_numbers = #tpu.dot_dimension_numbers<[1], [0], [0], [1], [0, 0, 1, 1], [], []>} : vector<256x128xbf16>, vector<128x128xbf16>, vector<256x128xf32> -> vector<256x128xf32>
    %97 = arith.addf %91, %96 : vector<256x128xf32>
    %c1_69 = arith.constant 1 : index
    %c2_70 = arith.constant 2 : index
    %c0_71 = arith.constant 0 : index
    %98 = vector.load %arg7[%c1_69, %c2_70, %c0_71] : memref<18x18x128xbf16, #tpu.memory_space<vmem>>, vector<16x16x128xbf16>
    %99 = vector.shape_cast %98 : vector<16x16x128xbf16> to vector<256x128xbf16>
    %c5 = arith.constant 5 : index
    %c0_72 = arith.constant 0 : index
    %c0_73 = arith.constant 0 : index
    %100 = vector.load %arg4[%c5, %c0_72, %c0_73] : memref<9x128x128xbf16, #tpu.memory_space<vmem>>, vector<1x128x128xbf16>
    %101 = vector.shape_cast %100 : vector<1x128x128xbf16> to vector<128x128xbf16>
    %cst_74 = arith.constant dense<0.000000e+00> : vector<256x128xf32>
    %102 = tpu.matmul %99, %101, %cst_74 {dimension_numbers = #tpu.dot_dimension_numbers<[1], [0], [0], [1], [0, 0, 1, 1], [], []>} : vector<256x128xbf16>, vector<128x128xbf16>, vector<256x128xf32> -> vector<256x128xf32>
    %103 = arith.addf %97, %102 : vector<256x128xf32>
    %c2_75 = arith.constant 2 : index
    %c0_76 = arith.constant 0 : index
    %c0_77 = arith.constant 0 : index
    %104 = vector.load %arg7[%c2_75, %c0_76, %c0_77] : memref<18x18x128xbf16, #tpu.memory_space<vmem>>, vector<16x16x128xbf16>
    %105 = vector.shape_cast %104 : vector<16x16x128xbf16> to vector<256x128xbf16>
    %c6 = arith.constant 6 : index
    %c0_78 = arith.constant 0 : index
    %c0_79 = arith.constant 0 : index
    %106 = vector.load %arg4[%c6, %c0_78, %c0_79] : memref<9x128x128xbf16, #tpu.memory_space<vmem>>, vector<1x128x128xbf16>
    %107 = vector.shape_cast %106 : vector<1x128x128xbf16> to vector<128x128xbf16>
    %cst_80 = arith.constant dense<0.000000e+00> : vector<256x128xf32>
    %108 = tpu.matmul %105, %107, %cst_80 {dimension_numbers = #tpu.dot_dimension_numbers<[1], [0], [0], [1], [0, 0, 1, 1], [], []>} : vector<256x128xbf16>, vector<128x128xbf16>, vector<256x128xf32> -> vector<256x128xf32>
    %109 = arith.addf %103, %108 : vector<256x128xf32>
    %c2_81 = arith.constant 2 : index
    %c1_82 = arith.constant 1 : index
    %c0_83 = arith.constant 0 : index
    %110 = vector.load %arg7[%c2_81, %c1_82, %c0_83] : memref<18x18x128xbf16, #tpu.memory_space<vmem>>, vector<16x16x128xbf16>
    %111 = vector.shape_cast %110 : vector<16x16x128xbf16> to vector<256x128xbf16>
    %c7 = arith.constant 7 : index
    %c0_84 = arith.constant 0 : index
    %c0_85 = arith.constant 0 : index
    %112 = vector.load %arg4[%c7, %c0_84, %c0_85] : memref<9x128x128xbf16, #tpu.memory_space<vmem>>, vector<1x128x128xbf16>
    %113 = vector.shape_cast %112 : vector<1x128x128xbf16> to vector<128x128xbf16>
    %cst_86 = arith.constant dense<0.000000e+00> : vector<256x128xf32>
    %114 = tpu.matmul %111, %113, %cst_86 {dimension_numbers = #tpu.dot_dimension_numbers<[1], [0], [0], [1], [0, 0, 1, 1], [], []>} : vector<256x128xbf16>, vector<128x128xbf16>, vector<256x128xf32> -> vector<256x128xf32>
    %115 = arith.addf %109, %114 : vector<256x128xf32>
    %c2_87 = arith.constant 2 : index
    %c2_88 = arith.constant 2 : index
    %c0_89 = arith.constant 0 : index
    %116 = vector.load %arg7[%c2_87, %c2_88, %c0_89] : memref<18x18x128xbf16, #tpu.memory_space<vmem>>, vector<16x16x128xbf16>
    %117 = vector.shape_cast %116 : vector<16x16x128xbf16> to vector<256x128xbf16>
    %c8 = arith.constant 8 : index
    %c0_90 = arith.constant 0 : index
    %c0_91 = arith.constant 0 : index
    %118 = vector.load %arg4[%c8, %c0_90, %c0_91] : memref<9x128x128xbf16, #tpu.memory_space<vmem>>, vector<1x128x128xbf16>
    %119 = vector.shape_cast %118 : vector<1x128x128xbf16> to vector<128x128xbf16>
    %cst_92 = arith.constant dense<0.000000e+00> : vector<256x128xf32>
    %120 = tpu.matmul %117, %119, %cst_92 {dimension_numbers = #tpu.dot_dimension_numbers<[1], [0], [0], [1], [0, 0, 1, 1], [], []>} : vector<256x128xbf16>, vector<128x128xbf16>, vector<256x128xf32> -> vector<256x128xf32>
    %121 = arith.addf %115, %120 : vector<256x128xf32>
    %c0_93 = arith.constant 0 : index
    %c0_94 = arith.constant 0 : index
    %122 = vector.load %arg5[%c0_93, %c0_94] : memref<1x128xf32, #tpu.memory_space<vmem>>, vector<1x128xf32>
    %123 = vector.broadcast %122 : vector<1x128xf32> to vector<256x128xf32>
    %124 = arith.addf %121, %123 : vector<256x128xf32>
    %cst_95 = arith.constant 0.000000e+00 : f32
    %cst_96 = arith.constant 6.000000e+00 : f32
    %125 = vector.broadcast %cst_95 : f32 to vector<256x128xf32>
    %126 = arith.maximumf %125, %124 : vector<256x128xf32>
    %127 = vector.broadcast %cst_96 : f32 to vector<256x128xf32>
    %128 = arith.minimumf %127, %126 : vector<256x128xf32>
    %129 = vector.shape_cast %128 : vector<256x128xf32> to vector<16x16x128xf32>
    %c0_97 = arith.constant 0 : index
    %c0_98 = arith.constant 0 : index
    %c0_99 = arith.constant 0 : index
    %c0_100 = arith.constant 0 : index
    %130 = vector.load %arg6[%c0_97, %c0_98, %c0_99, %c0_100] : memref<1x16x16x128xf32, #tpu.memory_space<vmem>>, vector<1x16x16x128xf32>
    %131 = vector.shape_cast %130 : vector<1x16x16x128xf32> to vector<16x16x128xf32>
    %132 = vector.shape_cast %129 : vector<16x16x128xf32> to vector<1x16x16x128xf32>
    tpu.vector_store %arg6[%c0_97, %c0_98, %c0_99, %c0_100], %132 {strides = array<i32>} : memref<1x16x16x128xf32, #tpu.memory_space<vmem>>, vector<1x16x16x128xf32>,
    return
  }
  func.func @transform_0(%arg0: i32) -> (i32, i32, i32, i32) {
    %c0_i32 = arith.constant 0 : i32
    %c0_i32_0 = arith.constant 0 : i32
    %c0_i32_1 = arith.constant 0 : i32
    %c0_i32_2 = arith.constant 0 : i32
    return %arg0, %c0_i32, %c0_i32_0, %c0_i32_1 : i32, i32, i32, i32
  }
  func.func @transform_1(%arg0: i32) -> (i32, i32, i32, i32) {
    %c0_i32 = arith.constant 0 : i32
    %c0_i32_0 = arith.constant 0 : i32
    %c0_i32_1 = arith.constant 0 : i32
    %c0_i32_2 = arith.constant 0 : i32
    return %arg0, %c0_i32, %c0_i32_0, %c0_i32_1 : i32, i32, i32, i32
  }
  func.func @transform_2(%arg0: i32) -> (i32, i32) {
    %c0_i32 = arith.constant 0 : i32
    %c0_i32_0 = arith.constant 0 : i32
    %c0_i32_1 = arith.constant 0 : i32
    return %c0_i32, %c0_i32_0 : i32, i32
  }
  func.func @transform_3(%arg0: i32) -> (i32, i32, i32) {
    %c0_i32 = arith.constant 0 : i32
    %c0_i32_0 = arith.constant 0 : i32
    %c0_i32_1 = arith.constant 0 : i32
    %c0_i32_2 = arith.constant 0 : i32
    return %c0_i32, %c0_i32_0, %c0_i32_1 : i32, i32, i32
  }
  func.func @transform_4(%arg0: i32) -> (i32, i32) {
    %c0_i32 = arith.constant 0 : i32
    %c0_i32_0 = arith.constant 0 : i32
    %c0_i32_1 = arith.constant 0 : i32
    return %c0_i32, %c0_i32_0 : i32, i32
  }
  func.func @transform_5(%arg0: i32) -> (i32, i32, i32, i32) {
    %c0_i32 = arith.constant 0 : i32
    %c0_i32_0 = arith.constant 0 : i32
    %c0_i32_1 = arith.constant 0 : i32
    %c0_i32_2 = arith.constant 0 : i32
    return %arg0, %c0_i32, %c0_i32_0, %c0_i32_1 : i32, i32, i32, i32
  }
}

</mosaic_0001>

<llo_original>
// kernel: tile.8
$region0: #{tile.8}
  #allocation0 [shape = 's32[1]{0}', space=sflag, size = 0x4, scoped, tag = 'scoped memory for tile.8']
  %s0 = inlined_call_operand.vmem [shape: f32[32], index: 0, kind: input, shape index: {}]
  %s1 = inlined_call_operand.vmem [shape: f32[4,32], index: 1, kind: output, shape index: {}]
  // Predicated region
  $region2: #{tile.8} parent=0 // pred_check
    _
  $region3: #{tile.8} parent=0 // pred_check_branch
    %3 = sbr.rel (0) target = $region5
  $region4: #{tile.8} parent=0 // pred_region
    _
  $region5: #{tile.8} parent=0 // pred_fallthru
    _
  %v4 = vld [vmem:[%s0] ss:$0 sm:$0xff]
  %5 = vst [vmem:[%s1] sm:$0xf] %v4

// kernel: tile.9
$region0: #{tile.9}
  %s0 = inlined_call_operand.vmem [shape: f32[4,32], index: 0, kind: input, shape index: {}]
  %s1 = inlined_call_operand.vmem [shape: f32[1,128], index: 1, kind: output, shape index: {}]
  $region1: #{tile.9} parent=0
    #allocation0 [shape = 'u8[4096]{0}', space=vmem, size = 0x1000, scoped, tag = 'scoped mem for output reshape']
    #allocation1 [shape = 'u8[4096]{0}', space=vmem, size = 0x1000, scoped, tag = 'scoped mem for input reshape']
    %s3 = sshllo.u32 0, 4
    %v4 = vld [vmem:[%s0] sm:%s3]
    %5 = vst [vmem:[#allocation1] sm:%s3] %v4
    %v6 = vld [vmem:[#allocation1] sm:$0x1]
    %vm7 = vcmask 261120
    %8 = vst.msk [vmem:[#allocation0] sm:$0x1] %vm7, %v6
    %s9 = scalar_lea.vmem [#allocation1], 3
    %v10 = vld [vmem:[%s9] sm:$0x1]
    %11 = vrot.lane.b32.xlu0 %v10, 96
    %v12 = vpop.permute.xlu0 %11
    %vm13 = vcmask 1048320
    %14 = vst.msk [vmem:[#allocation0] sm:$0x1] %vm13, %v12
    %s15 = scalar_lea.vmem [#allocation1], 2
    %v16 = vld [vmem:[%s15] sm:$0x1]
    %17 = vrot.lane.b32.xlu0 %v16, 64
    %v18 = vpop.permute.xlu0 %17
    %vm19 = vcmask 785920
    %20 = vst.msk [vmem:[#allocation0] sm:$0x1] %vm19, %v18
    %s21 = scalar_lea.vmem [#allocation1], 1
    %v22 = vld [vmem:[%s21] sm:$0x1]
    %23 = vrot.lane.b32.xlu0 %v22, 32
    %v24 = vpop.permute.xlu0 %23
    %vm25 = vcmask 523520
    %26 = vst.msk [vmem:[#allocation0] sm:$0x1] %vm25, %v24
    %s28 = sshllo.u32 0, 1
    %v30 = vld [vmem:[#allocation0] sm:%s28]
    %s31 = sshllo.u32 0, 1
    %32 = vst [vmem:[%s1] sm:%s31] %v30

// kernel: wf_forward.1
$region0: #{wf_forward.1}
  #allocation0 [shape = 'u32[]', space=smem, size = 0x4, offset = 0x4, fixed_abs, tag = 'smem constant byte address 0x4 - core index']
  #allocation1 [shape = 'u32[144,128]{1,0:T(1,128)}', space=vmem, size = 0x12000, scoped, tag = 'internal scratch']
  #allocation2 [shape = 'bf16[18,18,128]{2,1,0:T(8,128)(2,1)}', space=vmem, size = 0x1b000, scoped, tag = 'scratch operand']
  %s0 = inlined_call_operand.vmem [shape: bf16[2,16,16,32], index: 0, kind: input, shape index: {}]
  %s1 = inlined_call_operand.vmem [shape: bf16[2,16,16,256], index: 1, kind: input, shape index: {}]
  %s2 = inlined_call_operand.vmem [shape: bf16[256,128], index: 2, kind: input, shape index: {}]
  %s3 = inlined_call_operand.vmem [shape: bf16[9,128,128], index: 3, kind: input, shape index: {}]
  %s4 = inlined_call_operand.vmem [shape: f32[1,128], index: 4, kind: input, shape index: {}]
  %s5 = inlined_call_operand.vmem [shape: f32[2,16,16,128], index: 5, kind: output, shape index: {}]
  %s6 = sld [smem:[#allocation0]]
  $region53: #{wf_forward.1} parent=0
    _
  %s8 = ssub.s32 1, %s6
  %s9 = scalar_select 0, %s8, %s6
  loop: start=0, step=1, limit=4
  $region2: #{wf_forward.1} parent=0 // loop_pre_header
    _
  $region3: #{wf_forward.1} parent=0 // loop_header
    %s11 = sphi 0, %s15
    %p12 = scmp.ge.s32.totalorder %s11, 4
    %s21 = sphi 0, %s23
    %s24 = sphi 0, %s21
    %s25 = sphi 0, %s24
    %s41 = sphi 0, %s25
    %s47 = sphi 0, %s49
    %s50 = sphi 0, %s47
    %s51 = sphi 0, %s50
    %s67 = sphi 0, %s51
    %s71 = sphi 0, %s71
    %s73 = sphi 0, %s71
    %s74 = sphi 0, %s73
    %s88 = sphi 0, %s74
    %s92 = sphi 0, %s92
    %s94 = sphi 0, %s92
    %s95 = sphi 0, %s94
    %s109 = sphi 0, %s95
    %s113 = sphi 0, %s113
    %s115 = sphi 0, %s113
    %s116 = sphi 0, %s115
    %s130 = sphi 0, %s116
    %s136 = sphi 0, %s138
    %s139 = sphi 0, %s136
    %s140 = sphi 0, %s139
    %s156 = sphi 0, %s140
  $region4: #{wf_forward.1} parent=0 // loop_header_branch
    %14 = sbr.rel (%p12) target = $region8
  $region5: #{wf_forward.1} parent=0 // loop_body
    %s16 = ssub.s32 %s11, 1
    %s17 = ssub.s32 %s11, 2
    %s18 = sadd.s32 %s11, 1
    %s19 = ssub.s32 %s11, %s18
    %p20 = scmp.eq.s32.totalorder %s19, 0
    %s22 = sadd.s32 %s21, 1
    %s23 = scalar_select %p20, %s21, %s22
    %p26 = pneg %p20
    %p27 = scmp.eq.s32.totalorder %s11, 1
    %p28 = por %p26, %p27
    %p29 = scmp.ne.s32.totalorder %s21, %s24
    %p30 = scmp.eq.s32.totalorder %s11, 0
    %p31 = por %p29, %p30
    %p32 = scmp.ne.s32.totalorder %s21, %s24
    %p33 = scmp.eq.s32.totalorder %s16, 1
    %p34 = por %p32, %p33
    %p35 = scmp.ne.s32.totalorder %s24, %s25
    %p36 = scmp.eq.s32.totalorder %s16, 0
    %p37 = por %p35, %p36
    %p38 = scmp.ne.s32.totalorder %s24, %s25
    %p39 = scmp.eq.s32.totalorder %s17, 1
    %p40 = por %p38, %p39
    %p42 = scmp.ne.s32.totalorder %s25, %s41
    %p43 = scmp.eq.s32.totalorder %s17, 0
    %p44 = por %p42, %p43
    %s45 = ssub.s32 %s11, %s18
    %p46 = scmp.eq.s32.totalorder %s45, 0
    %s48 = sadd.s32 %s47, 1
    %s49 = scalar_select %p46, %s47, %s48
    %p52 = pneg %p46
    %p53 = scmp.eq.s32.totalorder %s11, 1
    %p54 = por %p52, %p53
    %p55 = scmp.ne.s32.totalorder %s47, %s50
    %p56 = scmp.eq.s32.totalorder %s11, 0
    %p57 = por %p55, %p56
    %p58 = scmp.ne.s32.totalorder %s47, %s50
    %p59 = scmp.eq.s32.totalorder %s16, 1
    %p60 = por %p58, %p59
    %p61 = scmp.ne.s32.totalorder %s50, %s51
    %p62 = scmp.eq.s32.totalorder %s16, 0
    %p63 = por %p61, %p62
    %p64 = scmp.ne.s32.totalorder %s50, %s51
    %p65 = scmp.eq.s32.totalorder %s17, 1
    %p66 = por %p64, %p65
    %p68 = scmp.ne.s32.totalorder %s51, %s67
    %p69 = scmp.eq.s32.totalorder %s17, 0
    %p70 = por %p68, %p69
    %s72 = sadd.s32 %s71, 1
    %p75 = scmp.eq.s32.totalorder %s11, 1
    %p76 = scmp.ne.s32.totalorder %s71, %s73
    %p77 = scmp.eq.s32.totalorder %s11, 0
    %p78 = por %p76, %p77
    %p79 = scmp.ne.s32.totalorder %s71, %s73
    %p80 = scmp.eq.s32.totalorder %s16, 1
    %p81 = por %p79, %p80
    %p82 = scmp.ne.s32.totalorder %s73, %s74
    %p83 = scmp.eq.s32.totalorder %s16, 0
    %p84 = por %p82, %p83
    %p85 = scmp.ne.s32.totalorder %s73, %s74
    %p86 = scmp.eq.s32.totalorder %s17, 1
    %p87 = por %p85, %p86
    %p89 = scmp.ne.s32.totalorder %s74, %s88
    %p90 = scmp.eq.s32.totalorder %s17, 0
    %p91 = por %p89, %p90
    %s93 = sadd.s32 %s92, 1
    %p96 = scmp.eq.s32.totalorder %s11, 1
    %p97 = scmp.ne.s32.totalorder %s92, %s94
    %p98 = scmp.eq.s32.totalorder %s11, 0
    %p99 = por %p97, %p98
    %p100 = scmp.ne.s32.totalorder %s92, %s94
    %p101 = scmp.eq.s32.totalorder %s16, 1
    %p102 = por %p100, %p101
    %p103 = scmp.ne.s32.totalorder %s94, %s95
    %p104 = scmp.eq.s32.totalorder %s16, 0
    %p105 = por %p103, %p104
    %p106 = scmp.ne.s32.totalorder %s94, %s95
    %p107 = scmp.eq.s32.totalorder %s17, 1
    %p108 = por %p106, %p107
    %p110 = scmp.ne.s32.totalorder %s95, %s109
    %p111 = scmp.eq.s32.totalorder %s17, 0
    %p112 = por %p110, %p111
    %s114 = sadd.s32 %s113, 1
    %p117 = scmp.eq.s32.totalorder %s11, 1
    %p118 = scmp.ne.s32.totalorder %s113, %s115
    %p119 = scmp.eq.s32.totalorder %s11, 0
    %p120 = por %p118, %p119
    %p121 = scmp.ne.s32.totalorder %s113, %s115
    %p122 = scmp.eq.s32.totalorder %s16, 1
    %p123 = por %p121, %p122
    %p124 = scmp.ne.s32.totalorder %s115, %s116
    %p125 = scmp.eq.s32.totalorder %s16, 0
    %p126 = por %p124, %p125
    %p127 = scmp.ne.s32.totalorder %s115, %s116
    %p128 = scmp.eq.s32.totalorder %s17, 1
    %p129 = por %p127, %p128
    %p131 = scmp.ne.s32.totalorder %s116, %s130
    %p132 = scmp.eq.s32.totalorder %s17, 0
    %p133 = por %p131, %p132
    %s134 = ssub.s32 %s11, %s18
    %p135 = scmp.eq.s32.totalorder %s134, 0
    %s137 = sadd.s32 %s136, 1
    %s138 = scalar_select %p135, %s136, %s137
    %p141 = pneg %p135
    %p142 = scmp.eq.s32.totalorder %s11, 1
    %p143 = por %p141, %p142
    %p144 = scmp.ne.s32.totalorder %s136, %s139
    %p145 = scmp.eq.s32.totalorder %s11, 0
    %p146 = por %p144, %p145
    %p147 = scmp.ne.s32.totalorder %s136, %s139
    %p148 = scmp.eq.s32.totalorder %s16, 1
    %p149 = por %p147, %p148
    %p150 = scmp.ne.s32.totalorder %s139, %s140
    %p151 = scmp.eq.s32.totalorder %s16, 0
    %p152 = por %p150, %p151
    %p153 = scmp.ne.s32.totalorder %s139, %s140
    %p154 = scmp.eq.s32.totalorder %s17, 1
    %p155 = por %p153, %p154
    %p157 = scmp.ne.s32.totalorder %s140, %s156
    %p158 = scmp.eq.s32.totalorder %s17, 0
    %p159 = por %p157, %p158
    %p160 = scmp.le.s32.totalorder 1, %s11
    %p161 = scmp.lt.s32.totalorder %s11, 3
    %p162 = pnand %p160, %p161
    %p163 = pneg %p162
    // Predicated region
    $region9: #{wf_forward.1} parent=5 // pred_check
      _
    $region10: #{wf_forward.1} parent=5 // pred_check_branch
      %165 = sbr.rel (%p162) target = $region12
    $region11: #{wf_forward.1} parent=5 // pred_region
      %s166 = ssub.s32 %s11, 1
      // Predicated region
      $region13: #{wf_forward.1} parent=11 // pred_check
        %p167 = pneg %p84
      $region14: #{wf_forward.1} parent=11 // pred_check_branch
        %169 = sbr.rel (%p167) target = $region16
      $region15: #{wf_forward.1} parent=11 // pred_region
        _
      $region16: #{wf_forward.1} parent=11 // pred_fallthru
        _
      // Predicated region
      $region17: #{wf_forward.1} parent=11 // pred_check
        %p170 = pneg %p105
      $region18: #{wf_forward.1} parent=11 // pred_check_branch
        %172 = sbr.rel (%p170) target = $region20
      $region19: #{wf_forward.1} parent=11 // pred_region
        _
      $region20: #{wf_forward.1} parent=11 // pred_fallthru
        _
      // Predicated region
      $region21: #{wf_forward.1} parent=11 // pred_check
        %p173 = pneg %p126
      $region22: #{wf_forward.1} parent=11 // pred_check_branch
        %175 = sbr.rel (%p173) target = $region24
      $region23: #{wf_forward.1} parent=11 // pred_region
        _
      $region24: #{wf_forward.1} parent=11 // pred_fallthru
        _
    $region12: #{wf_forward.1} parent=5 // pred_fallthru
      _
    %p176 = scmp.lt.s32.totalorder %s11, 2
    // Predicated region
    $region25: #{wf_forward.1} parent=5 // pred_check
      %p177 = pneg %p176
    $region26: #{wf_forward.1} parent=5 // pred_check_branch
      %179 = sbr.rel (%p177) target = $region28
    $region27: #{wf_forward.1} parent=5 // pred_region
      // Predicated region
      $region29: #{wf_forward.1} parent=27 // pred_check
        %p180 = pneg %p31
      $region30: #{wf_forward.1} parent=27 // pred_check_branch
        %182 = sbr.rel (%p180) target = $region32
      $region31: #{wf_forward.1} parent=27 // pred_region
        %p183 = scmp.lt.s32.totalorder %s11, 1
        %s184 = scalar_select %p183, %s11, 1
        %s185 = smul.addr %s184, 32
        %s186 = smul.addr %s185, 4
        %s187 = scalar_lea.vmem %s0, %s186
      $region32: #{wf_forward.1} parent=27 // pred_fallthru
        _
      // Predicated region
      $region33: #{wf_forward.1} parent=27 // pred_check
        %p188 = pneg %p57
      $region34: #{wf_forward.1} parent=27 // pred_check_branch
        %190 = sbr.rel (%p188) target = $region36
      $region35: #{wf_forward.1} parent=27 // pred_region
        %p191 = scmp.lt.s32.totalorder %s11, 1
        %s192 = scalar_select %p191, %s11, 1
        %s193 = smul.addr %s192, 64
        %s194 = smul.addr %s193, 4
        %s195 = scalar_lea.vmem %s1, %s194
      $region36: #{wf_forward.1} parent=27 // pred_fallthru
        _
    $region28: #{wf_forward.1} parent=5 // pred_fallthru
      _
    %p196 = scmp.le.s32.totalorder 1, %s11
    %p197 = scmp.lt.s32.totalorder %s11, 3
    %p198 = pnand %p196, %p197
    %p199 = pneg %p198
    // Predicated region
    $region37: #{wf_forward.1} parent=5 // pred_check
      _
    $region38: #{wf_forward.1} parent=5 // pred_check_branch
      %201 = sbr.rel (%p198) target = $region40
    $region39: #{wf_forward.1} parent=5 // pred_region
      %s202 = ssub.s32 %s11, 1
      %p203 = scmp.lt.s32.totalorder %s16, 1
      %s204 = scalar_select %p203, %s16, 1
      %s205 = smul.addr %s204, 32
      %s206 = smul.addr %s205, 4
      %s207 = scalar_lea.vmem %s0, %s206
      %p208 = pneg %p37
      %p209 = pneg %p34
      %p210 = scmp.lt.s32.totalorder %s16, 1
      %s211 = scalar_select %p210, %s16, 1
      %s212 = smul.addr %s211, 64
      %s213 = smul.addr %s212, 4
      %s214 = scalar_lea.vmem %s1, %s213
      %p215 = pneg %p63
      %p216 = pneg %p60
      %p217 = pneg %p84
      %p218 = pneg %p81
      %p219 = pneg %p105
      %p220 = pneg %p102
      %p221 = pneg %p126
      %p222 = pneg %p123
      %p223 = pneg %p152
      %p224 = pneg %p149
      %p225 = scmp.lt.s32.totalorder %s16, 1
      %s226 = scalar_select %p225, %s16, 1
      %s227 = smul.addr %s226, 32
      %s228 = smul.addr %s227, 8
      %s229 = scalar_lea.vmem %s5, %s228
      %p230 = scmp.lt.s32.totalorder %s16, 1
      %s231 = scalar_select %p230, %s16, 1
      %s232 = smul.addr %s231, 32
      %s233 = smul.addr %s232, 4
      %s234 = scalar_lea.vmem %s0, %s233
      %p235 = scmp.lt.s32.totalorder %s16, 1
      %s236 = scalar_select %p235, %s16, 1
      %s237 = smul.addr %s236, 64
      %s238 = smul.addr %s237, 4
      %s239 = scalar_lea.vmem %s1, %s238
      %p240 = scmp.lt.s32.totalorder %s16, 1
      %s241 = scalar_select %p240, %s16, 1
      %s242 = smul.addr %s241, 32
      %s243 = smul.addr %s242, 8
      %s244 = scalar_lea.vmem %s5, %s243
      %246 = vst [vmem:[#allocation2] sm:$0xf] 0
      %247 = vst [vmem:[#allocation2 + $0x4] sm:$0xf] 0
      %248 = vst [vmem:[#allocation2 + $0x8] sm:$0x1] 0
      %s249 = scalar_lea.vmem [#allocation2], 204
      %250 = vst [vmem:[%s249] sm:$0xf] 0
      %251 = vst [vmem:[%s249 + $0x4] sm:$0xf] 0
      %252 = vst [vmem:[%s249 + $0x8] sm:$0x1] 0
      %vm253 = vcmask 1040384
      %vm254 = vsmask.f32 256
      %vm255 = vmand %vm253, %vm254
      %v256 = vld [vmem:[#allocation2] sm:$0x1]
      %v257 = vsel %vm255, 0, %v256
      %258 = vst [vmem:[#allocation2] sm:$0x1] %v257
      %v259 = vld [vmem:[#allocation2 + $0xc] sm:$0x1]
      %v260 = vsel %vm255, 0, %v259
      %261 = vst [vmem:[#allocation2 + $0xc] sm:$0x1] %v260
      %v262 = vld [vmem:[#allocation2 + $0x18] sm:$0x1]
      %v263 = vsel %vm255, 0, %v262
      %264 = vst [vmem:[#allocation2 + $0x18] sm:$0x1] %v263
      %v265 = vld [vmem:[#allocation2 + $0x24] sm:$0x1]
      %v266 = vsel %vm255, 0, %v265
      %267 = vst [vmem:[#allocation2 + $0x24] sm:$0x1] %v266
      %v268 = vld [vmem:[#allocation2 + $0x30] sm:$0x1]
      %v269 = vsel %vm255, 0, %v268
      %270 = vst [vmem:[#allocation2 + $0x30] sm:$0x1] %v269
      %v271 = vld [vmem:[#allocation2 + $0x3c] sm:$0x1]
      %v272 = vsel %vm255, 0, %v271
      %273 = vst [vmem:[#allocation2 + $0x3c] sm:$0x1] %v272
      %v274 = vld [vmem:[#allocation2 + $0x48] sm:$0x1]
      %v275 = vsel %vm255, 0, %v274
      %276 = vst [vmem:[#allocation2 + $0x48] sm:$0x1] %v275
      %v277 = vld [vmem:[#allocation2 + $0x54] sm:$0x1]
      %v278 = vsel %vm255, 0, %v277
      %279 = vst [vmem:[#allocation2 + $0x54] sm:$0x1] %v278
      %v280 = vld [vmem:[#allocation2 + $0x60] sm:$0x1]
      %v281 = vsel %vm255, 0, %v280
      %282 = vst [vmem:[#allocation2 + $0x60] sm:$0x1] %v281
      %v283 = vld [vmem:[#allocation2 + $0x6c] sm:$0x1]
      %v284 = vsel %vm255, 0, %v283
      %285 = vst [vmem:[#allocation2 + $0x6c] sm:$0x1] %v284
      %v286 = vld [vmem:[#allocation2 + $0x78] sm:$0x1]
      %v287 = vsel %vm255, 0, %v286
      %288 = vst [vmem:[#allocation2 + $0x78] sm:$0x1] %v287
      %v289 = vld [vmem:[#allocation2 + $0x84] sm:$0x1]
      %v290 = vsel %vm255, 0, %v289
      %291 = vst [vmem:[#allocation2 + $0x84] sm:$0x1] %v290
      %v292 = vld [vmem:[#allocation2 + $0x90] sm:$0x1]
      %v293 = vsel %vm255, 0, %v292
      %294 = vst [vmem:[#allocation2 + $0x90] sm:$0x1] %v293
      %v295 = vld [vmem:[#allocation2 + $0x9c] sm:$0x1]
      %v296 = vsel %vm255, 0, %v295
      %297 = vst [vmem:[#allocation2 + $0x9c] sm:$0x1] %v296
      %v298 = vld [vmem:[#allocation2 + $0xa8] sm:$0x1]
      %v299 = vsel %vm255, 0, %v298
      %300 = vst [vmem:[#allocation2 + $0xa8] sm:$0x1] %v299
      %v301 = vld [vmem:[#allocation2 + $0xb4] sm:$0x1]
      %v302 = vsel %vm255, 0, %v301
      %303 = vst [vmem:[#allocation2 + $0xb4] sm:$0x1] %v302
      %v304 = vld [vmem:[#allocation2 + $0xc0] sm:$0x1]
      %v305 = vsel %vm255, 0, %v304
      %306 = vst [vmem:[#allocation2 + $0xc0] sm:$0x1] %v305
      %v307 = vld [vmem:[#allocation2 + $0xcc] sm:$0x1]
      %v308 = vsel %vm255, 0, %v307
      %309 = vst [vmem:[#allocation2 + $0xcc] sm:$0x1] %v308
      %vm310 = vsmask.f32 7938
      %vm311 = vmand %vm253, %vm310
      %v312 = vld [vmem:[#allocation2 + $0x8] sm:$0x1]
      %v313 = vsel %vm311, 0, %v312
      %314 = vst [vmem:[#allocation2 + $0x8] sm:$0x1] %v313
      %v315 = vld [vmem:[#allocation2 + $0x14] sm:$0x1]
      %v316 = vsel %vm311, 0, %v315
      %317 = vst [vmem:[#allocation2 + $0x14] sm:$0x1] %v316
      %v318 = vld [vmem:[#allocation2 + $0x20] sm:$0x1]
      %v319 = vsel %vm311, 0, %v318
      %320 = vst [vmem:[#allocation2 + $0x20] sm:$0x1] %v319
      %v321 = vld [vmem:[#allocation2 + $0x2c] sm:$0x1]
      %v322 = vsel %vm311, 0, %v321
      %323 = vst [vmem:[#allocation2 + $0x2c] sm:$0x1] %v322
      %v324 = vld [vmem:[#allocation2 + $0x38] sm:$0x1]
      %v325 = vsel %vm311, 0, %v324
      %326 = vst [vmem:[#allocation2 + $0x38] sm:$0x1] %v325
      %v327 = vld [vmem:[#allocation2 + $0x44] sm:$0x1]
      %v328 = vsel %vm311, 0, %v327
      %329 = vst [vmem:[#allocation2 + $0x44] sm:$0x1] %v328
      %v330 = vld [vmem:[#allocation2 + $0x50] sm:$0x1]
      %v331 = vsel %vm311, 0, %v330
      %332 = vst [vmem:[#allocation2 + $0x50] sm:$0x1] %v331
      %v333 = vld [vmem:[#allocation2 + $0x5c] sm:$0x1]
      %v334 = vsel %vm311, 0, %v333
      %335 = vst [vmem:[#allocation2 + $0x5c] sm:$0x1] %v334
      %v336 = vld [vmem:[#allocation2 + $0x68] sm:$0x1]
      %v337 = vsel %vm311, 0, %v336
      %338 = vst [vmem:[#allocation2 + $0x68] sm:$0x1] %v337
      %v339 = vld [vmem:[#allocation2 + $0x74] sm:$0x1]
      %v340 = vsel %vm311, 0, %v339
      %341 = vst [vmem:[#allocation2 + $0x74] sm:$0x1] %v340
      %v342 = vld [vmem:[#allocation2 + $0x80] sm:$0x1]
      %v343 = vsel %vm311, 0, %v342
      %344 = vst [vmem:[#allocation2 + $0x80] sm:$0x1] %v343
      %v345 = vld [vmem:[#allocation2 + $0x8c] sm:$0x1]
      %v346 = vsel %vm311, 0, %v345
      %347 = vst [vmem:[#allocation2 + $0x8c] sm:$0x1] %v346
      %v348 = vld [vmem:[#allocation2 + $0x98] sm:$0x1]
      %v349 = vsel %vm311, 0, %v348
      %350 = vst [vmem:[#allocation2 + $0x98] sm:$0x1] %v349
      %v351 = vld [vmem:[#allocation2 + $0xa4] sm:$0x1]
      %v352 = vsel %vm311, 0, %v351
      %353 = vst [vmem:[#allocation2 + $0xa4] sm:$0x1] %v352
      %v354 = vld [vmem:[#allocation2 + $0xb0] sm:$0x1]
      %v355 = vsel %vm311, 0, %v354
      %356 = vst [vmem:[#allocation2 + $0xb0] sm:$0x1] %v355
      %v357 = vld [vmem:[#allocation2 + $0xbc] sm:$0x1]
      %v358 = vsel %vm311, 0, %v357
      %359 = vst [vmem:[#allocation2 + $0xbc] sm:$0x1] %v358
      %v360 = vld [vmem:[#allocation2 + $0xc8] sm:$0x1]
      %v361 = vsel %vm311, 0, %v360
      %362 = vst [vmem:[#allocation2 + $0xc8] sm:$0x1] %v361
      %v363 = vld [vmem:[#allocation2 + $0xd4] sm:$0x1]
      %v364 = vsel %vm311, 0, %v363
      %365 = vst [vmem:[#allocation2 + $0xd4] sm:$0x1] %v364
      %v366 = vld [vmem:[%s239] sm:$0xff]
      %v367 = vld [vmem:[%s239 + $0x8] sm:$0xff]
      %v368 = vld [vmem:[%s239 + $0x10] sm:$0xff]
      %v369 = vld [vmem:[%s239 + $0x18] sm:$0xff]
      %v370 = vld [vmem:[%s239 + $0x20] sm:$0xff]
      %v371 = vld [vmem:[%s239 + $0x28] sm:$0xff]
      %v372 = vld [vmem:[%s239 + $0x30] sm:$0xff]
      %v373 = vld [vmem:[%s239 + $0x38] sm:$0xff]
      %v374 = vld [vmem:[%s239 + $0x40] sm:$0xff]
      %v375 = vld [vmem:[%s239 + $0x48] sm:$0xff]
      %v376 = vld [vmem:[%s239 + $0x50] sm:$0xff]
      %v377 = vld [vmem:[%s239 + $0x58] sm:$0xff]
      %v378 = vld [vmem:[%s239 + $0x60] sm:$0xff]
      %v379 = vld [vmem:[%s239 + $0x68] sm:$0xff]
      %v380 = vld [vmem:[%s239 + $0x70] sm:$0xff]
      %v381 = vld [vmem:[%s239 + $0x78] sm:$0xff]
      %v382 = vld [vmem:[%s239 + $0x80] sm:$0xff]
      %v383 = vld [vmem:[%s239 + $0x88] sm:$0xff]
      %v384 = vld [vmem:[%s239 + $0x90] sm:$0xff]
      %v385 = vld [vmem:[%s239 + $0x98] sm:$0xff]
      %v386 = vld [vmem:[%s239 + $0xa0] sm:$0xff]
      %v387 = vld [vmem:[%s239 + $0xa8] sm:$0xff]
      %v388 = vld [vmem:[%s239 + $0xb0] sm:$0xff]
      %v389 = vld [vmem:[%s239 + $0xb8] sm:$0xff]
      %v390 = vld [vmem:[%s239 + $0xc0] sm:$0xff]
      %v391 = vld [vmem:[%s239 + $0xc8] sm:$0xff]
      %v392 = vld [vmem:[%s239 + $0xd0] sm:$0xff]
      %v393 = vld [vmem:[%s239 + $0xd8] sm:$0xff]
      %v394 = vld [vmem:[%s239 + $0xe0] sm:$0xff]
      %v395 = vld [vmem:[%s239 + $0xe8] sm:$0xff]
      %v396 = vld [vmem:[%s239 + $0xf0] sm:$0xff]
      %v397 = vld [vmem:[%s239 + $0xf8] sm:$0xff]
      %v398 = vld [vmem:[%s2] sm:$0xf]
      %v399 = vld [vmem:[%s2 + $0x4] sm:$0xf]
      %v400 = vld [vmem:[%s2 + $0x8] sm:$0xf]
      %v401 = vld [vmem:[%s2 + $0xc] sm:$0xf]
      %v402 = vld [vmem:[%s2 + $0x10] sm:$0xf]
      %v403 = vld [vmem:[%s2 + $0x14] sm:$0xf]
      %v404 = vld [vmem:[%s2 + $0x18] sm:$0xf]
      %v405 = vld [vmem:[%s2 + $0x1c] sm:$0xf]
      %v406 = vld [vmem:[%s2 + $0x20] sm:$0xf]
      %v407 = vld [vmem:[%s2 + $0x24] sm:$0xf]
      %v408 = vld [vmem:[%s2 + $0x28] sm:$0xf]
      %v409 = vld [vmem:[%s2 + $0x2c] sm:$0xf]
      %v410 = vld [vmem:[%s2 + $0x30] sm:$0xf]
      %v411 = vld [vmem:[%s2 + $0x34] sm:$0xf]
      %v412 = vld [vmem:[%s2 + $0x38] sm:$0xf]
      %v413 = vld [vmem:[%s2 + $0x3c] sm:$0xf]
      %v414 = vld [vmem:[%s2 + $0x40] sm:$0xf]
      %v415 = vld [vmem:[%s2 + $0x44] sm:$0xf]
      %v416 = vld [vmem:[%s2 + $0x48] sm:$0xf]
      %v417 = vld [vmem:[%s2 + $0x4c] sm:$0xf]
      %v418 = vld [vmem:[%s2 + $0x50] sm:$0xf]
      %v419 = vld [vmem:[%s2 + $0x54] sm:$0xf]
      %v420 = vld [vmem:[%s2 + $0x58] sm:$0xf]
      %v421 = vld [vmem:[%s2 + $0x5c] sm:$0xf]
      %v422 = vld [vmem:[%s2 + $0x60] sm:$0xf]
      %v423 = vld [vmem:[%s2 + $0x64] sm:$0xf]
      %v424 = vld [vmem:[%s2 + $0x68] sm:$0xf]
      %v425 = vld [vmem:[%s2 + $0x6c] sm:$0xf]
      %v426 = vld [vmem:[%s2 + $0x70] sm:$0xf]
      %v427 = vld [vmem:[%s2 + $0x74] sm:$0xf]
      %v428 = vld [vmem:[%s2 + $0x78] sm:$0xf]
      %v429 = vld [vmem:[%s2 + $0x7c] sm:$0xf]
      %v462 = vunpack.c.l.b16 %v366
      %v463 = vunpack.c.h.b16 %v366
      %v464 = vunpack.c.l.b16 %v367
      %v465 = vunpack.c.h.b16 %v367
      %v466 = vunpack.c.l.b16 %v368
      %v467 = vunpack.c.h.b16 %v368
      %v468 = vunpack.c.l.b16 %v369
      %v469 = vunpack.c.h.b16 %v369
      %v470 = vunpack.c.l.b16 %v370
      %v471 = vunpack.c.h.b16 %v370
      %v472 = vunpack.c.l.b16 %v371
      %v473 = vunpack.c.h.b16 %v371
      %v474 = vunpack.c.l.b16 %v372
      %v475 = vunpack.c.h.b16 %v372
      %v476 = vunpack.c.l.b16 %v373
      %v477 = vunpack.c.h.b16 %v373
      %v478 = vunpack.c.l.b16 %v374
      %v479 = vunpack.c.h.b16 %v374
      %v480 = vunpack.c.l.b16 %v375
      %v481 = vunpack.c.h.b16 %v375
      %v482 = vunpack.c.l.b16 %v376
      %v483 = vunpack.c.h.b16 %v376
      %v484 = vunpack.c.l.b16 %v377
      %v485 = vunpack.c.h.b16 %v377
      %v486 = vunpack.c.l.b16 %v378
      %v487 = vunpack.c.h.b16 %v378
      %v488 = vunpack.c.l.b16 %v379
      %v489 = vunpack.c.h.b16 %v379
      %v490 = vunpack.c.l.b16 %v380
      %v491 = vunpack.c.h.b16 %v380
      %v492 = vunpack.c.l.b16 %v381
      %v493 = vunpack.c.h.b16 %v381
      %v494 = vunpack.c.l.b16 %v382
      %v495 = vunpack.c.h.b16 %v382
      %v496 = vunpack.c.l.b16 %v383
      %v497 = vunpack.c.h.b16 %v383
      %v498 = vunpack.c.l.b16 %v384
      %v499 = vunpack.c.h.b16 %v384
      %v500 = vunpack.c.l.b16 %v385
      %v501 = vunpack.c.h.b16 %v385
      %v502 = vunpack.c.l.b16 %v386
      %v503 = vunpack.c.h.b16 %v386
      %v504 = vunpack.c.l.b16 %v387
      %v505 = vunpack.c.h.b16 %v387
      %v506 = vunpack.c.l.b16 %v388
      %v507 = vunpack.c.h.b16 %v388
      %v508 = vunpack.c.l.b16 %v389
      %v509 = vunpack.c.h.b16 %v389
      %v510 = vunpack.c.l.b16 %v390
      %v511 = vunpack.c.h.b16 %v390
      %v512 = vunpack.c.l.b16 %v391
      %v513 = vunpack.c.h.b16 %v391
      %v514 = vunpack.c.l.b16 %v392
      %v515 = vunpack.c.h.b16 %v392
      %v516 = vunpack.c.l.b16 %v393
      %v517 = vunpack.c.h.b16 %v393
      %v518 = vunpack.c.l.b16 %v394
      %v519 = vunpack.c.h.b16 %v394
      %v520 = vunpack.c.l.b16 %v395
      %v521 = vunpack.c.h.b16 %v395
      %v522 = vunpack.c.l.b16 %v396
      %v523 = vunpack.c.h.b16 %v396
      %v524 = vunpack.c.l.b16 %v397
      %v525 = vunpack.c.h.b16 %v397
      %v526 = vpack.c.b16 %v464, %v462
      %v527 = vpack.c.b16 %v465, %v463
      %v528 = vpack.c.b16 %v468, %v466
      %v529 = vpack.c.b16 %v469, %v467
      %v530 = vpack.c.b16 %v472, %v470
      %v531 = vpack.c.b16 %v473, %v471
      %v532 = vpack.c.b16 %v476, %v474
      %v533 = vpack.c.b16 %v477, %v475
      %v534 = vpack.c.b16 %v480, %v478
      %v535 = vpack.c.b16 %v481, %v479
      %v536 = vpack.c.b16 %v484, %v482
      %v537 = vpack.c.b16 %v485, %v483
      %v538 = vpack.c.b16 %v488, %v486
      %v539 = vpack.c.b16 %v489, %v487
      %v540 = vpack.c.b16 %v492, %v490
      %v541 = vpack.c.b16 %v493, %v491
      %v542 = vpack.c.b16 %v496, %v494
      %v543 = vpack.c.b16 %v497, %v495
      %v544 = vpack.c.b16 %v500, %v498
      %v545 = vpack.c.b16 %v501, %v499
      %v546 = vpack.c.b16 %v504, %v502
      %v547 = vpack.c.b16 %v505, %v503
      %v548 = vpack.c.b16 %v508, %v506
      %v549 = vpack.c.b16 %v509, %v507
      %v550 = vpack.c.b16 %v512, %v510
      %v551 = vpack.c.b16 %v513, %v511
      %v552 = vpack.c.b16 %v516, %v514
      %v553 = vpack.c.b16 %v517, %v515
      %v554 = vpack.c.b16 %v520, %v518
      %v555 = vpack.c.b16 %v521, %v519
      %v556 = vpack.c.b16 %v524, %v522
      %v557 = vpack.c.b16 %v525, %v523
      %v622 = vunpack.c.l.b16 %v398
      %v623 = vunpack.c.l.b16 %v399
      %v624 = vunpack.c.l.b16 %v400
      %v625 = vunpack.c.l.b16 %v401
      %v626 = vunpack.c.l.b16 %v402
      %v627 = vunpack.c.l.b16 %v403
      %v628 = vunpack.c.l.b16 %v404
      %v629 = vunpack.c.l.b16 %v405
      %v630 = vunpack.c.l.b16 %v406
      %v631 = vunpack.c.l.b16 %v407
      %v632 = vunpack.c.l.b16 %v408
      %v633 = vunpack.c.l.b16 %v409
      %v634 = vunpack.c.l.b16 %v410
      %v635 = vunpack.c.l.b16 %v411
      %v636 = vunpack.c.l.b16 %v412
      %v637 = vunpack.c.l.b16 %v413
      %v638 = vunpack.c.l.b16 %v414
      %v639 = vunpack.c.l.b16 %v415
      %v640 = vunpack.c.l.b16 %v416
      %v641 = vunpack.c.l.b16 %v417
      %v642 = vunpack.c.l.b16 %v418
      %v643 = vunpack.c.l.b16 %v419
      %v644 = vunpack.c.l.b16 %v420
      %v645 = vunpack.c.l.b16 %v421
      %v646 = vunpack.c.l.b16 %v422
      %v647 = vunpack.c.l.b16 %v423
      %v648 = vunpack.c.l.b16 %v424
      %v649 = vunpack.c.l.b16 %v425
      %v650 = vunpack.c.l.b16 %v426
      %v651 = vunpack.c.l.b16 %v427
      %v652 = vunpack.c.l.b16 %v428
      %v653 = vunpack.c.l.b16 %v429
      %v654 = vpack.c.b16 %v623, %v622
      %v655 = vpack.c.b16 %v625, %v624
      %v656 = vpack.c.b16 %v627, %v626
      %v657 = vpack.c.b16 %v629, %v628
      %v658 = vpack.c.b16 %v631, %v630
      %v659 = vpack.c.b16 %v633, %v632
      %v660 = vpack.c.b16 %v635, %v634
      %v661 = vpack.c.b16 %v637, %v636
      %v662 = vpack.c.b16 %v639, %v638
      %v663 = vpack.c.b16 %v641, %v640
      %v664 = vpack.c.b16 %v643, %v642
      %v665 = vpack.c.b16 %v645, %v644
      %v666 = vpack.c.b16 %v647, %v646
      %v667 = vpack.c.b16 %v649, %v648
      %v668 = vpack.c.b16 %v651, %v650
      %v669 = vpack.c.b16 %v653, %v652
      %686 = vmatprep.subr.bf16.mxu0 0
      %687 = vmatpush1.bf16.msra.mxu0 %v654
      %688 = vmatprep.subr.bf16.mxu0 0
      %689 = vmatpush1.bf16.msra.mxu0 %v655
      %690 = vmatprep.subr.bf16.mxu0 0
      %691 = vmatpush1.bf16.msra.mxu0 %v656
      %692 = vmatprep.subr.bf16.mxu0 0
      %693 = vmatpush1.bf16.msra.mxu0 %v657
      %694 = vmatprep.subr.bf16.mxu0 0
      %695 = vmatpush1.bf16.msra.mxu0 %v658
      %696 = vmatprep.subr.bf16.mxu0 0
      %697 = vmatpush1.bf16.msra.mxu0 %v659
      %698 = vmatprep.subr.bf16.mxu0 0
      %699 = vmatpush1.bf16.msra.mxu0 %v660
      %700 = vmatprep.subr.bf16.mxu0 0
      %701 = vmatpush1.bf16.msra.mxu0 %v661
      %702 = vmatprep.subr.bf16.mxu0 0
      %703 = vmatpush1.bf16.msra.mxu0 %v662
      %704 = vmatprep.subr.bf16.mxu0 0
      %705 = vmatpush1.bf16.msra.mxu0 %v663
      %706 = vmatprep.subr.bf16.mxu0 0
      %707 = vmatpush1.bf16.msra.mxu0 %v664
      %708 = vmatprep.subr.bf16.mxu0 0
      %709 = vmatpush1.bf16.msra.mxu0 %v665
      %710 = vmatprep.subr.bf16.mxu0 0
      %711 = vmatpush1.bf16.msra.mxu0 %v666
      %712 = vmatprep.subr.bf16.mxu0 0
      %713 = vmatpush1.bf16.msra.mxu0 %v667
      %714 = vmatprep.subr.bf16.mxu0 0
      %715 = vmatpush1.bf16.msra.mxu0 %v668
      %716 = vmatprep.subr.bf16.mxu0 0
      %717 = vmatpush1.bf16.msra.mxu0 %v669
      %718 = vmatprep.mubr.bf16.mxu0 %v527
      %719 = vmatmul.mubr.bf16.gmra.mrb[0].mxu0 %v526
      %v720 = vpop.f32.mrb[0].mxu0
      %v721 = vadd.f32 0.0, %v720
      %v722 = vpop.f32.mrb[0].mxu0
      %v723 = vpop.f32.mrb[0].mxu0
      %v724 = vadd.f32 0.0, %v723
      %v725 = vpop.f32.mrb[0].mxu0
      %726 = vmatprep.mubr.bf16.mxu0 %v529
      %727 = vmatmul.mubr.bf16.gmra.mrb[0].mxu0 %v528
      %v728 = vpop.f32.mrb[0].mxu0
      %v729 = vadd.f32 0.0, %v728
      %v730 = vpop.f32.mrb[0].mxu0
      %v731 = vpop.f32.mrb[0].mxu0
      %v732 = vadd.f32 0.0, %v731
      %v733 = vpop.f32.mrb[0].mxu0
      %734 = vmatprep.mubr.bf16.mxu0 %v531
      %735 = vmatmul.mubr.bf16.gmra.mrb[0].mxu0 %v530
      %v736 = vpop.f32.mrb[0].mxu0
      %v737 = vadd.f32 0.0, %v736
      %v738 = vpop.f32.mrb[0].mxu0
      %v739 = vpop.f32.mrb[0].mxu0
      %v740 = vadd.f32 0.0, %v739
      %v741 = vpop.f32.mrb[0].mxu0
      %742 = vmatprep.mubr.bf16.mxu0 %v533
      %743 = vmatmul.mubr.bf16.gmra.mrb[0].mxu0 %v532
      %v744 = vpop.f32.mrb[0].mxu0
      %v745 = vadd.f32 0.0, %v744
      %v746 = vpop.f32.mrb[0].mxu0
      %v747 = vpop.f32.mrb[0].mxu0
      %v748 = vadd.f32 0.0, %v747
      %v749 = vpop.f32.mrb[0].mxu0
      %750 = vmatprep.mubr.bf16.mxu0 %v535
      %751 = vmatmul.mubr.bf16.gmra.mrb[0].mxu0 %v534
      %v752 = vpop.f32.mrb[0].mxu0
      %v753 = vadd.f32 0.0, %v752
      %v754 = vpop.f32.mrb[0].mxu0
      %v755 = vpop.f32.mrb[0].mxu0
      %v756 = vadd.f32 0.0, %v755
      %v757 = vpop.f32.mrb[0].mxu0
      %758 = vmatprep.mubr.bf16.mxu0 %v537
      %759 = vmatmul.mubr.bf16.gmra.mrb[0].mxu0 %v536
      %v760 = vpop.f32.mrb[0].mxu0
      %v761 = vadd.f32 0.0, %v760
      %v762 = vpop.f32.mrb[0].mxu0
      %v763 = vpop.f32.mrb[0].mxu0
      %v764 = vadd.f32 0.0, %v763
      %v765 = vpop.f32.mrb[0].mxu0
      %766 = vmatprep.mubr.bf16.mxu0 %v539
      %767 = vmatmul.mubr.bf16.gmra.mrb[0].mxu0 %v538
      %v768 = vpop.f32.mrb[0].mxu0
      %v769 = vadd.f32 0.0, %v768
      %v770 = vpop.f32.mrb[0].mxu0
      %v771 = vpop.f32.mrb[0].mxu0
      %v772 = vadd.f32 0.0, %v771
      %v773 = vpop.f32.mrb[0].mxu0
      %774 = vmatprep.mubr.bf16.mxu0 %v541
      %775 = vmatmul.mubr.bf16.gmra.mrb[0].mxu0 %v540
      %v776 = vpop.f32.mrb[0].mxu0
      %v777 = vadd.f32 0.0, %v776
      %v778 = vpop.f32.mrb[0].mxu0
      %v779 = vpop.f32.mrb[0].mxu0
      %v780 = vadd.f32 0.0, %v779
      %v781 = vpop.f32.mrb[0].mxu0
      %782 = vmatprep.mubr.bf16.mxu0 %v543
      %783 = vmatmul.mubr.bf16.gmra.mrb[0].mxu0 %v542
      %v784 = vpop.f32.mrb[0].mxu0
      %v785 = vadd.f32 0.0, %v784
      %v786 = vpop.f32.mrb[0].mxu0
      %v787 = vpop.f32.mrb[0].mxu0
      %v788 = vadd.f32 0.0, %v787
      %v789 = vpop.f32.mrb[0].mxu0
      %790 = vmatprep.mubr.bf16.mxu0 %v545
      %791 = vmatmul.mubr.bf16.gmra.mrb[0].mxu0 %v544
      %v792 = vpop.f32.mrb[0].mxu0
      %v793 = vadd.f32 0.0, %v792
      %v794 = vpop.f32.mrb[0].mxu0
      %v795 = vpop.f32.mrb[0].mxu0
      %v796 = vadd.f32 0.0, %v795
      %v797 = vpop.f32.mrb[0].mxu0
      %798 = vmatprep.mubr.bf16.mxu0 %v547
      %799 = vmatmul.mubr.bf16.gmra.mrb[0].mxu0 %v546
      %v800 = vpop.f32.mrb[0].mxu0
      %v801 = vadd.f32 0.0, %v800
      %v802 = vpop.f32.mrb[0].mxu0
      %v803 = vpop.f32.mrb[0].mxu0
      %v804 = vadd.f32 0.0, %v803
      %v805 = vpop.f32.mrb[0].mxu0
      %806 = vmatprep.mubr.bf16.mxu0 %v549
      %807 = vmatmul.mubr.bf16.gmra.mrb[0].mxu0 %v548
      %v808 = vpop.f32.mrb[0].mxu0
      %v809 = vadd.f32 0.0, %v808
      %v810 = vpop.f32.mrb[0].mxu0
      %v811 = vpop.f32.mrb[0].mxu0
      %v812 = vadd.f32 0.0, %v811
      %v813 = vpop.f32.mrb[0].mxu0
      %814 = vmatprep.mubr.bf16.mxu0 %v551
      %815 = vmatmul.mubr.bf16.gmra.mrb[0].mxu0 %v550
      %v816 = vpop.f32.mrb[0].mxu0
      %v817 = vadd.f32 0.0, %v816
      %v818 = vpop.f32.mrb[0].mxu0
      %v819 = vpop.f32.mrb[0].mxu0
      %v820 = vadd.f32 0.0, %v819
      %v821 = vpop.f32.mrb[0].mxu0
      %822 = vmatprep.mubr.bf16.mxu0 %v553
      %823 = vmatmul.mubr.bf16.gmra.mrb[0].mxu0 %v552
      %v824 = vpop.f32.mrb[0].mxu0
      %v825 = vadd.f32 0.0, %v824
      %v826 = vpop.f32.mrb[0].mxu0
      %v827 = vpop.f32.mrb[0].mxu0
      %v828 = vadd.f32 0.0, %v827
      %v829 = vpop.f32.mrb[0].mxu0
      %830 = vmatprep.mubr.bf16.mxu0 %v555
      %831 = vmatmul.mubr.bf16.gmra.mrb[0].mxu0 %v554
      %v832 = vpop.f32.mrb[0].mxu0
      %v833 = vadd.f32 0.0, %v832
      %v834 = vpop.f32.mrb[0].mxu0
      %v835 = vpop.f32.mrb[0].mxu0
      %v836 = vadd.f32 0.0, %v835
      %v837 = vpop.f32.mrb[0].mxu0
      %838 = vmatprep.mubr.bf16.mxu0 %v557
      %839 = vmatmul.mubr.bf16.gmra.mrb[0].mxu0 %v556
      %v840 = vpop.f32.mrb[0].mxu0
      %v841 = vadd.f32 0.0, %v840
      %v842 = vpop.f32.mrb[0].mxu0
      %v843 = vpop.f32.mrb[0].mxu0
      %v844 = vadd.f32 0.0, %v843
      %v845 = vpop.f32.mrb[0].mxu0
      %846 = vdwg.mxu0
      %v847 = vld [vmem:[%s234] sm:$0xf]
      %v848 = vld [vmem:[%s234 + $0x4] sm:$0xf]
      %v849 = vld [vmem:[%s234 + $0x8] sm:$0xf]
      %v850 = vld [vmem:[%s234 + $0xc] sm:$0xf]
      %v851 = vld [vmem:[%s234 + $0x10] sm:$0xf]
      %v852 = vld [vmem:[%s234 + $0x14] sm:$0xf]
      %v853 = vld [vmem:[%s234 + $0x18] sm:$0xf]
      %v854 = vld [vmem:[%s234 + $0x1c] sm:$0xf]
      %v855 = vld [vmem:[%s234 + $0x20] sm:$0xf]
      %v856 = vld [vmem:[%s234 + $0x24] sm:$0xf]
      %v857 = vld [vmem:[%s234 + $0x28] sm:$0xf]
      %v858 = vld [vmem:[%s234 + $0x2c] sm:$0xf]
      %v859 = vld [vmem:[%s234 + $0x30] sm:$0xf]
      %v860 = vld [vmem:[%s234 + $0x34] sm:$0xf]
      %v861 = vld [vmem:[%s234 + $0x38] sm:$0xf]
      %v862 = vld [vmem:[%s234 + $0x3c] sm:$0xf]
      %v863 = vld [vmem:[%s234 + $0x40] sm:$0xf]
      %v864 = vld [vmem:[%s234 + $0x44] sm:$0xf]
      %v865 = vld [vmem:[%s234 + $0x48] sm:$0xf]
      %v866 = vld [vmem:[%s234 + $0x4c] sm:$0xf]
      %v867 = vld [vmem:[%s234 + $0x50] sm:$0xf]
      %v868 = vld [vmem:[%s234 + $0x54] sm:$0xf]
      %v869 = vld [vmem:[%s234 + $0x58] sm:$0xf]
      %v870 = vld [vmem:[%s234 + $0x5c] sm:$0xf]
      %v871 = vld [vmem:[%s234 + $0x60] sm:$0xf]
      %v872 = vld [vmem:[%s234 + $0x64] sm:$0xf]
      %v873 = vld [vmem:[%s234 + $0x68] sm:$0xf]
      %v874 = vld [vmem:[%s234 + $0x6c] sm:$0xf]
      %v875 = vld [vmem:[%s234 + $0x70] sm:$0xf]
      %v876 = vld [vmem:[%s234 + $0x74] sm:$0xf]
      %v877 = vld [vmem:[%s234 + $0x78] sm:$0xf]
      %v878 = vld [vmem:[%s234 + $0x7c] sm:$0xf]
      %v879 = vunpack.c.l.bf16 %v847
      %v880 = vunpack.c.l.bf16 %v848
      %v881 = vunpack.c.l.bf16 %v849
      %v882 = vunpack.c.l.bf16 %v850
      %v883 = vunpack.c.l.bf16 %v851
      %v884 = vunpack.c.l.bf16 %v852
      %v885 = vunpack.c.l.bf16 %v853
      %v886 = vunpack.c.l.bf16 %v854
      %v887 = vunpack.c.l.bf16 %v855
      %v888 = vunpack.c.l.bf16 %v856
      %v889 = vunpack.c.l.bf16 %v857
      %v890 = vunpack.c.l.bf16 %v858
      %v891 = vunpack.c.l.bf16 %v859
      %v892 = vunpack.c.l.bf16 %v860
      %v893 = vunpack.c.l.bf16 %v861
      %v894 = vunpack.c.l.bf16 %v862
      %v895 = vunpack.c.l.bf16 %v863
      %v896 = vunpack.c.l.bf16 %v864
      %v897 = vunpack.c.l.bf16 %v865
      %v898 = vunpack.c.l.bf16 %v866
      %v899 = vunpack.c.l.bf16 %v867
      %v900 = vunpack.c.l.bf16 %v868
      %v901 = vunpack.c.l.bf16 %v869
      %v902 = vunpack.c.l.bf16 %v870
      %v903 = vunpack.c.l.bf16 %v871
      %v904 = vunpack.c.l.bf16 %v872
      %v905 = vunpack.c.l.bf16 %v873
      %v906 = vunpack.c.l.bf16 %v874
      %v907 = vunpack.c.l.bf16 %v875
      %v908 = vunpack.c.l.bf16 %v876
      %v909 = vunpack.c.l.bf16 %v877
      %v910 = vunpack.c.l.bf16 %v878
      %v911 = vmul.f32 %v879, 0.25
      %v912 = vmul.f32 %v880, 0.25
      %v913 = vmul.f32 %v881, 0.25
      %v914 = vmul.f32 %v882, 0.25
      %v915 = vmul.f32 %v883, 0.25
      %v916 = vmul.f32 %v884, 0.25
      %v917 = vmul.f32 %v885, 0.25
      %v918 = vmul.f32 %v886, 0.25
      %v919 = vmul.f32 %v887, 0.25
      %v920 = vmul.f32 %v888, 0.25
      %v921 = vmul.f32 %v889, 0.25
      %v922 = vmul.f32 %v890, 0.25
      %v923 = vmul.f32 %v891, 0.25
      %v924 = vmul.f32 %v892, 0.25
      %v925 = vmul.f32 %v893, 0.25
      %v926 = vmul.f32 %v894, 0.25
      %v927 = vmul.f32 %v895, 0.25
      %v928 = vmul.f32 %v896, 0.25
      %v929 = vmul.f32 %v897, 0.25
      %v930 = vmul.f32 %v898, 0.25
      %v931 = vmul.f32 %v899, 0.25
      %v932 = vmul.f32 %v900, 0.25
      %v933 = vmul.f32 %v901, 0.25
      %v934 = vmul.f32 %v902, 0.25
      %v935 = vmul.f32 %v903, 0.25
      %v936 = vmul.f32 %v904, 0.25
      %v937 = vmul.f32 %v905, 0.25
      %v938 = vmul.f32 %v906, 0.25
      %v939 = vmul.f32 %v907, 0.25
      %v940 = vmul.f32 %v908, 0.25
      %v941 = vmul.f32 %v879, 0.75
      %v942 = vmul.f32 %v880, 0.75
      %v943 = vmul.f32 %v881, 0.75
      %v944 = vmul.f32 %v882, 0.75
      %v945 = vmul.f32 %v883, 0.75
      %v946 = vmul.f32 %v884, 0.75
      %v947 = vmul.f32 %v885, 0.75
      %v948 = vmul.f32 %v886, 0.75
      %v949 = vmul.f32 %v887, 0.75
      %v950 = vmul.f32 %v888, 0.75
      %v951 = vmul.f32 %v889, 0.75
      %v952 = vmul.f32 %v890, 0.75
      %v953 = vmul.f32 %v891, 0.75
      %v954 = vmul.f32 %v892, 0.75
      %v955 = vmul.f32 %v893, 0.75
      %v956 = vmul.f32 %v894, 0.75
      %v957 = vmul.f32 %v895, 0.75
      %v958 = vmul.f32 %v896, 0.75
      %v959 = vmul.f32 %v897, 0.75
      %v960 = vmul.f32 %v898, 0.75
      %v961 = vmul.f32 %v899, 0.75
      %v962 = vmul.f32 %v900, 0.75
      %v963 = vmul.f32 %v901, 0.75
      %v964 = vmul.f32 %v902, 0.75
      %v965 = vmul.f32 %v903, 0.75
      %v966 = vmul.f32 %v904, 0.75
      %v967 = vmul.f32 %v905, 0.75
      %v968 = vmul.f32 %v906, 0.75
      %v969 = vmul.f32 %v907, 0.75
      %v970 = vmul.f32 %v908, 0.75
      %v971 = vmul.f32 %v909, 0.75
      %v972 = vmul.f32 %v910, 0.75
      %v973 = vadd.f32 %v911, %v941
      %v974 = vadd.f32 %v912, %v942
      %v975 = vadd.f32 %v911, %v943
      %v976 = vadd.f32 %v912, %v944
      %v977 = vadd.f32 %v913, %v945
      %v978 = vadd.f32 %v914, %v946
      %v979 = vadd.f32 %v915, %v947
      %v980 = vadd.f32 %v916, %v948
      %v981 = vadd.f32 %v917, %v949
      %v982 = vadd.f32 %v918, %v950
      %v983 = vadd.f32 %v919, %v951
      %v984 = vadd.f32 %v920, %v952
      %v985 = vadd.f32 %v921, %v953
      %v986 = vadd.f32 %v922, %v954
      %v987 = vadd.f32 %v923, %v955
      %v988 = vadd.f32 %v924, %v956
      %v989 = vadd.f32 %v925, %v957
      %v990 = vadd.f32 %v926, %v958
      %v991 = vadd.f32 %v927, %v959
      %v992 = vadd.f32 %v928, %v960
      %v993 = vadd.f32 %v929, %v961
      %v994 = vadd.f32 %v930, %v962
      %v995 = vadd.f32 %v931, %v963
      %v996 = vadd.f32 %v932, %v964
      %v997 = vadd.f32 %v933, %v965
      %v998 = vadd.f32 %v934, %v966
      %v999 = vadd.f32 %v935, %v967
      %v1000 = vadd.f32 %v936, %v968
      %v1001 = vadd.f32 %v937, %v969
      %v1002 = vadd.f32 %v938, %v970
      %v1003 = vadd.f32 %v939, %v971
      %v1004 = vadd.f32 %v940, %v972
      %v1005 = vmul.f32 %v909, 0.25
      %v1006 = vmul.f32 %v910, 0.25
      %v1007 = vadd.f32 %v941, %v913
      %v1008 = vadd.f32 %v942, %v914
      %v1009 = vadd.f32 %v943, %v915
      %v1010 = vadd.f32 %v944, %v916
      %v1011 = vadd.f32 %v945, %v917
      %v1012 = vadd.f32 %v946, %v918
      %v1013 = vadd.f32 %v947, %v919
      %v1014 = vadd.f32 %v948, %v920
      %v1015 = vadd.f32 %v949, %v921
      %v1016 = vadd.f32 %v950, %v922
      %v1017 = vadd.f32 %v951, %v923
      %v1018 = vadd.f32 %v952, %v924
      %v1019 = vadd.f32 %v953, %v925
      %v1020 = vadd.f32 %v954, %v926
      %v1021 = vadd.f32 %v955, %v927
      %v1022 = vadd.f32 %v956, %v928
      %v1023 = vadd.f32 %v957, %v929
      %v1024 = vadd.f32 %v958, %v930
      %v1025 = vadd.f32 %v959, %v931
      %v1026 = vadd.f32 %v960, %v932
      %v1027 = vadd.f32 %v961, %v933
      %v1028 = vadd.f32 %v962, %v934
      %v1029 = vadd.f32 %v963, %v935
      %v1030 = vadd.f32 %v964, %v936
      %v1031 = vadd.f32 %v965, %v937
      %v1032 = vadd.f32 %v966, %v938
      %v1033 = vadd.f32 %v967, %v939
      %v1034 = vadd.f32 %v968, %v940
      %v1035 = vadd.f32 %v969, %v1005
      %v1036 = vadd.f32 %v970, %v1006
      %v1037 = vadd.f32 %v971, %v1005
      %v1038 = vadd.f32 %v972, %v1006
      %vm1071 = vcmask 1040384
      %v1072 = vrot.slane %v973, 7
      %v1073 = vrot.slane %v974, 7
      %v1074 = vsel %vm1071, %v1072, %v1073
      %v1075 = vrot.slane %v975, 7
      %v1076 = vrot.slane %v976, 7
      %v1077 = vsel %vm1071, %v1075, %v1076
      %v1078 = vrot.slane %v977, 7
      %v1079 = vrot.slane %v978, 7
      %v1080 = vsel %vm1071, %v1078, %v1079
      %v1081 = vrot.slane %v979, 7
      %v1082 = vrot.slane %v980, 7
      %v1083 = vsel %vm1071, %v1081, %v1082
      %v1084 = vrot.slane %v981, 7
      %v1085 = vrot.slane %v982, 7
      %v1086 = vsel %vm1071, %v1084, %v1085
      %v1087 = vrot.slane %v983, 7
      %v1088 = vrot.slane %v984, 7
      %v1089 = vsel %vm1071, %v1087, %v1088
      %v1090 = vrot.slane %v985, 7
      %v1091 = vrot.slane %v986, 7
      %v1092 = vsel %vm1071, %v1090, %v1091
      %v1093 = vrot.slane %v987, 7
      %v1094 = vrot.slane %v988, 7
      %v1095 = vsel %vm1071, %v1093, %v1094
      %v1096 = vrot.slane %v989, 7
      %v1097 = vrot.slane %v990, 7
      %v1098 = vsel %vm1071, %v1096, %v1097
      %v1099 = vrot.slane %v991, 7
      %v1100 = vrot.slane %v992, 7
      %v1101 = vsel %vm1071, %v1099, %v1100
      %v1102 = vrot.slane %v993, 7
      %v1103 = vrot.slane %v994, 7
      %v1104 = vsel %vm1071, %v1102, %v1103
      %v1105 = vrot.slane %v995, 7
      %v1106 = vrot.slane %v996, 7
      %v1107 = vsel %vm1071, %v1105, %v1106
      %v1108 = vrot.slane %v997, 7
      %v1109 = vrot.slane %v998, 7
      %v1110 = vsel %vm1071, %v1108, %v1109
      %v1111 = vrot.slane %v999, 7
      %v1112 = vrot.slane %v1000, 7
      %v1113 = vsel %vm1071, %v1111, %v1112
      %v1114 = vrot.slane %v1001, 7
      %v1115 = vrot.slane %v1002, 7
      %v1116 = vsel %vm1071, %v1114, %v1115
      %v1117 = vrot.slane %v1003, 7
      %v1118 = vrot.slane %v1004, 7
      %v1119 = vsel %vm1071, %v1117, %v1118
      %v1152 = vsel %vm1071, %v973, %v1072
      %v1153 = vsel %vm1071, %v975, %v1075
      %v1154 = vsel %vm1071, %v977, %v1078
      %v1155 = vsel %vm1071, %v979, %v1081
      %v1156 = vsel %vm1071, %v981, %v1084
      %v1157 = vsel %vm1071, %v983, %v1087
      %v1158 = vsel %vm1071, %v985, %v1090
      %v1159 = vsel %vm1071, %v987, %v1093
      %v1160 = vsel %vm1071, %v989, %v1096
      %v1161 = vsel %vm1071, %v991, %v1099
      %v1162 = vsel %vm1071, %v993, %v1102
      %v1163 = vsel %vm1071, %v995, %v1105
      %v1164 = vsel %vm1071, %v997, %v1108
      %v1165 = vsel %vm1071, %v999, %v1111
      %v1166 = vsel %vm1071, %v1001, %v1114
      %v1167 = vsel %vm1071, %v1003, %v1117
      %vm1168 = vcmask 1046528
      %v1169 = vrot.slane %v973, 1
      %v1170 = vrot.slane %v974, 1
      %v1171 = vsel %vm1168, %v1169, %v1170
      %v1172 = vrot.slane %v975, 1
      %v1173 = vrot.slane %v976, 1
      %v1174 = vsel %vm1168, %v1172, %v1173
      %v1175 = vrot.slane %v977, 1
      %v1176 = vrot.slane %v978, 1
      %v1177 = vsel %vm1168, %v1175, %v1176
      %v1178 = vrot.slane %v979, 1
      %v1179 = vrot.slane %v980, 1
      %v1180 = vsel %vm1168, %v1178, %v1179
      %v1181 = vrot.slane %v981, 1
      %v1182 = vrot.slane %v982, 1
      %v1183 = vsel %vm1168, %v1181, %v1182
      %v1184 = vrot.slane %v983, 1
      %v1185 = vrot.slane %v984, 1
      %v1186 = vsel %vm1168, %v1184, %v1185
      %v1187 = vrot.slane %v985, 1
      %v1188 = vrot.slane %v986, 1
      %v1189 = vsel %vm1168, %v1187, %v1188
      %v1190 = vrot.slane %v987, 1
      %v1191 = vrot.slane %v988, 1
      %v1192 = vsel %vm1168, %v1190, %v1191
      %v1193 = vrot.slane %v989, 1
      %v1194 = vrot.slane %v990, 1
      %v1195 = vsel %vm1168, %v1193, %v1194
      %v1196 = vrot.slane %v991, 1
      %v1197 = vrot.slane %v992, 1
      %v1198 = vsel %vm1168, %v1196, %v1197
      %v1199 = vrot.slane %v993, 1
      %v1200 = vrot.slane %v994, 1
      %v1201 = vsel %vm1168, %v1199, %v1200
      %v1202 = vrot.slane %v995, 1
      %v1203 = vrot.slane %v996, 1
      %v1204 = vsel %vm1168, %v1202, %v1203
      %v1205 = vrot.slane %v997, 1
      %v1206 = vrot.slane %v998, 1
      %v1207 = vsel %vm1168, %v1205, %v1206
      %v1208 = vrot.slane %v999, 1
      %v1209 = vrot.slane %v1000, 1
      %v1210 = vsel %vm1168, %v1208, %v1209
      %v1211 = vrot.slane %v1001, 1
      %v1212 = vrot.slane %v1002, 1
      %v1213 = vsel %vm1168, %v1211, %v1212
      %v1214 = vrot.slane %v1003, 1
      %v1215 = vrot.slane %v1004, 1
      %v1216 = vsel %vm1168, %v1214, %v1215
      %v1249 = vsel %vm1168, %v1170, %v974
      %v1250 = vsel %vm1168, %v1173, %v976
      %v1251 = vsel %vm1168, %v1176, %v978
      %v1252 = vsel %vm1168, %v1179, %v980
      %v1253 = vsel %vm1168, %v1182, %v982
      %v1254 = vsel %vm1168, %v1185, %v984
      %v1255 = vsel %vm1168, %v1188, %v986
      %v1256 = vsel %vm1168, %v1191, %v988
      %v1257 = vsel %vm1168, %v1194, %v990
      %v1258 = vsel %vm1168, %v1197, %v992
      %v1259 = vsel %vm1168, %v1200, %v994
      %v1260 = vsel %vm1168, %v1203, %v996
      %v1261 = vsel %vm1168, %v1206, %v998
      %v1262 = vsel %vm1168, %v1209, %v1000
      %v1263 = vsel %vm1168, %v1212, %v1002
      %v1264 = vsel %vm1168, %v1215, %v1004
      %v1265 = vmul.f32 %v1152, 0.25
      %v1266 = vmul.f32 %v1074, 0.25
      %v1267 = vmul.f32 %v1153, 0.25
      %v1268 = vmul.f32 %v1077, 0.25
      %v1269 = vmul.f32 %v1154, 0.25
      %v1270 = vmul.f32 %v1080, 0.25
      %v1271 = vmul.f32 %v1155, 0.25
      %v1272 = vmul.f32 %v1083, 0.25
      %v1273 = vmul.f32 %v1156, 0.25
      %v1274 = vmul.f32 %v1086, 0.25
      %v1275 = vmul.f32 %v1157, 0.25
      %v1276 = vmul.f32 %v1089, 0.25
      %v1277 = vmul.f32 %v1158, 0.25
      %v1278 = vmul.f32 %v1092, 0.25
      %v1279 = vmul.f32 %v1159, 0.25
      %v1280 = vmul.f32 %v1095, 0.25
      %v1281 = vmul.f32 %v1160, 0.25
      %v1282 = vmul.f32 %v1098, 0.25
      %v1283 = vmul.f32 %v1161, 0.25
      %v1284 = vmul.f32 %v1101, 0.25
      %v1285 = vmul.f32 %v1162, 0.25
      %v1286 = vmul.f32 %v1104, 0.25
      %v1287 = vmul.f32 %v1163, 0.25
      %v1288 = vmul.f32 %v1107, 0.25
      %v1289 = vmul.f32 %v1164, 0.25
      %v1290 = vmul.f32 %v1110, 0.25
      %v1291 = vmul.f32 %v1165, 0.25
      %v1292 = vmul.f32 %v1113, 0.25
      %v1293 = vmul.f32 %v1166, 0.25
      %v1294 = vmul.f32 %v1116, 0.25
      %v1295 = vmul.f32 %v1167, 0.25
      %v1296 = vmul.f32 %v1119, 0.25
      %v1297 = vmul.f32 %v973, 0.75
      %v1298 = vmul.f32 %v974, 0.75
      %v1299 = vmul.f32 %v975, 0.75
      %v1300 = vmul.f32 %v976, 0.75
      %v1301 = vmul.f32 %v977, 0.75
      %v1302 = vmul.f32 %v978, 0.75
      %v1303 = vmul.f32 %v979, 0.75
      %v1304 = vmul.f32 %v980, 0.75
      %v1305 = vmul.f32 %v981, 0.75
      %v1306 = vmul.f32 %v982, 0.75
      %v1307 = vmul.f32 %v983, 0.75
      %v1308 = vmul.f32 %v984, 0.75
      %v1309 = vmul.f32 %v985, 0.75
      %v1310 = vmul.f32 %v986, 0.75
      %v1311 = vmul.f32 %v987, 0.75
      %v1312 = vmul.f32 %v988, 0.75
      %v1313 = vmul.f32 %v989, 0.75
      %v1314 = vmul.f32 %v990, 0.75
      %v1315 = vmul.f32 %v991, 0.75
      %v1316 = vmul.f32 %v992, 0.75
      %v1317 = vmul.f32 %v993, 0.75
      %v1318 = vmul.f32 %v994, 0.75
      %v1319 = vmul.f32 %v995, 0.75
      %v1320 = vmul.f32 %v996, 0.75
      %v1321 = vmul.f32 %v997, 0.75
      %v1322 = vmul.f32 %v998, 0.75
      %v1323 = vmul.f32 %v999, 0.75
      %v1324 = vmul.f32 %v1000, 0.75
      %v1325 = vmul.f32 %v1001, 0.75
      %v1326 = vmul.f32 %v1002, 0.75
      %v1327 = vmul.f32 %v1003, 0.75
      %v1328 = vmul.f32 %v1004, 0.75
      %v1329 = vadd.f32 %v1265, %v1297
      %v1330 = vadd.f32 %v1266, %v1298
      %v1331 = vadd.f32 %v1267, %v1299
      %v1332 = vadd.f32 %v1268, %v1300
      %v1333 = vadd.f32 %v1269, %v1301
      %v1334 = vadd.f32 %v1270, %v1302
      %v1335 = vadd.f32 %v1271, %v1303
      %v1336 = vadd.f32 %v1272, %v1304
      %v1337 = vadd.f32 %v1273, %v1305
      %v1338 = vadd.f32 %v1274, %v1306
      %v1339 = vadd.f32 %v1275, %v1307
      %v1340 = vadd.f32 %v1276, %v1308
      %v1341 = vadd.f32 %v1277, %v1309
      %v1342 = vadd.f32 %v1278, %v1310
      %v1343 = vadd.f32 %v1279, %v1311
      %v1344 = vadd.f32 %v1280, %v1312
      %v1345 = vadd.f32 %v1281, %v1313
      %v1346 = vadd.f32 %v1282, %v1314
      %v1347 = vadd.f32 %v1283, %v1315
      %v1348 = vadd.f32 %v1284, %v1316
      %v1349 = vadd.f32 %v1285, %v1317
      %v1350 = vadd.f32 %v1286, %v1318
      %v1351 = vadd.f32 %v1287, %v1319
      %v1352 = vadd.f32 %v1288, %v1320
      %v1353 = vadd.f32 %v1289, %v1321
      %v1354 = vadd.f32 %v1290, %v1322
      %v1355 = vadd.f32 %v1291, %v1323
      %v1356 = vadd.f32 %v1292, %v1324
      %v1357 = vadd.f32 %v1293, %v1325
      %v1358 = vadd.f32 %v1294, %v1326
      %v1359 = vadd.f32 %v1295, %v1327
      %v1360 = vadd.f32 %v1296, %v1328
      %v1361 = vmul.f32 %v1171, 0.25
      %v1362 = vmul.f32 %v1249, 0.25
      %v1363 = vmul.f32 %v1174, 0.25
      %v1364 = vmul.f32 %v1250, 0.25
      %v1365 = vmul.f32 %v1177, 0.25
      %v1366 = vmul.f32 %v1251, 0.25
      %v1367 = vmul.f32 %v1180, 0.25
      %v1368 = vmul.f32 %v1252, 0.25
      %v1369 = vmul.f32 %v1183, 0.25
      %v1370 = vmul.f32 %v1253, 0.25
      %v1371 = vmul.f32 %v1186, 0.25
      %v1372 = vmul.f32 %v1254, 0.25
      %v1373 = vmul.f32 %v1189, 0.25
      %v1374 = vmul.f32 %v1255, 0.25
      %v1375 = vmul.f32 %v1192, 0.25
      %v1376 = vmul.f32 %v1256, 0.25
      %v1377 = vmul.f32 %v1195, 0.25
      %v1378 = vmul.f32 %v1257, 0.25
      %v1379 = vmul.f32 %v1198, 0.25
      %v1380 = vmul.f32 %v1258, 0.25
      %v1381 = vmul.f32 %v1201, 0.25
      %v1382 = vmul.f32 %v1259, 0.25
      %v1383 = vmul.f32 %v1204, 0.25
      %v1384 = vmul.f32 %v1260, 0.25
      %v1385 = vmul.f32 %v1207, 0.25
      %v1386 = vmul.f32 %v1261, 0.25
      %v1387 = vmul.f32 %v1210, 0.25
      %v1388 = vmul.f32 %v1262, 0.25
      %v1389 = vmul.f32 %v1213, 0.25
      %v1390 = vmul.f32 %v1263, 0.25
      %v1391 = vmul.f32 %v1216, 0.25
      %v1392 = vmul.f32 %v1264, 0.25
      %v1393 = vadd.f32 %v1297, %v1361
      %v1394 = vadd.f32 %v1298, %v1362
      %v1395 = vadd.f32 %v1299, %v1363
      %v1396 = vadd.f32 %v1300, %v1364
      %v1397 = vadd.f32 %v1301, %v1365
      %v1398 = vadd.f32 %v1302, %v1366
      %v1399 = vadd.f32 %v1303, %v1367
      %v1400 = vadd.f32 %v1304, %v1368
      %v1401 = vadd.f32 %v1305, %v1369
      %v1402 = vadd.f32 %v1306, %v1370
      %v1403 = vadd.f32 %v1307, %v1371
      %v1404 = vadd.f32 %v1308, %v1372
      %v1405 = vadd.f32 %v1309, %v1373
      %v1406 = vadd.f32 %v1310, %v1374
      %v1407 = vadd.f32 %v1311, %v1375
      %v1408 = vadd.f32 %v1312, %v1376
      %v1409 = vadd.f32 %v1313, %v1377
      %v1410 = vadd.f32 %v1314, %v1378
      %v1411 = vadd.f32 %v1315, %v1379
      %v1412 = vadd.f32 %v1316, %v1380
      %v1413 = vadd.f32 %v1317, %v1381
      %v1414 = vadd.f32 %v1318, %v1382
      %v1415 = vadd.f32 %v1319, %v1383
      %v1416 = vadd.f32 %v1320, %v1384
      %v1417 = vadd.f32 %v1321, %v1385
      %v1418 = vadd.f32 %v1322, %v1386
      %v1419 = vadd.f32 %v1323, %v1387
      %v1420 = vadd.f32 %v1324, %v1388
      %v1421 = vadd.f32 %v1325, %v1389
      %v1422 = vadd.f32 %v1326, %v1390
      %v1423 = vadd.f32 %v1327, %v1391
      %v1424 = vadd.f32 %v1328, %v1392
      %v1457 = vrot.slane %v1007, 7
      %v1458 = vrot.slane %v1008, 7
      %v1459 = vsel %vm1071, %v1457, %v1458
      %v1460 = vrot.slane %v1009, 7
      %v1461 = vrot.slane %v1010, 7
      %v1462 = vsel %vm1071, %v1460, %v1461
      %v1463 = vrot.slane %v1011, 7
      %v1464 = vrot.slane %v1012, 7
      %v1465 = vsel %vm1071, %v1463, %v1464
      %v1466 = vrot.slane %v1013, 7
      %v1467 = vrot.slane %v1014, 7
      %v1468 = vsel %vm1071, %v1466, %v1467
      %v1469 = vrot.slane %v1015, 7
      %v1470 = vrot.slane %v1016, 7
      %v1471 = vsel %vm1071, %v1469, %v1470
      %v1472 = vrot.slane %v1017, 7
      %v1473 = vrot.slane %v1018, 7
      %v1474 = vsel %vm1071, %v1472, %v1473
      %v1475 = vrot.slane %v1019, 7
      %v1476 = vrot.slane %v1020, 7
      %v1477 = vsel %vm1071, %v1475, %v1476
      %v1478 = vrot.slane %v1021, 7
      %v1479 = vrot.slane %v1022, 7
      %v1480 = vsel %vm1071, %v1478, %v1479
      %v1481 = vrot.slane %v1023, 7
      %v1482 = vrot.slane %v1024, 7
      %v1483 = vsel %vm1071, %v1481, %v1482
      %v1484 = vrot.slane %v1025, 7
      %v1485 = vrot.slane %v1026, 7
      %v1486 = vsel %vm1071, %v1484, %v1485
      %v1487 = vrot.slane %v1027, 7
      %v1488 = vrot.slane %v1028, 7
      %v1489 = vsel %vm1071, %v1487, %v1488
      %v1490 = vrot.slane %v1029, 7
      %v1491 = vrot.slane %v1030, 7
      %v1492 = vsel %vm1071, %v1490, %v1491
      %v1493 = vrot.slane %v1031, 7
      %v1494 = vrot.slane %v1032, 7
      %v1495 = vsel %vm1071, %v1493, %v1494
      %v1496 = vrot.slane %v1033, 7
      %v1497 = vrot.slane %v1034, 7
      %v1498 = vsel %vm1071, %v1496, %v1497
      %v1499 = vrot.slane %v1035, 7
      %v1500 = vrot.slane %v1036, 7
      %v1501 = vsel %vm1071, %v1499, %v1500
      %v1502 = vrot.slane %v1037, 7
      %v1503 = vrot.slane %v1038, 7
      %v1504 = vsel %vm1071, %v1502, %v1503
      %v1537 = vsel %vm1071, %v1007, %v1457
      %v1538 = vsel %vm1071, %v1009, %v1460
      %v1539 = vsel %vm1071, %v1011, %v1463
      %v1540 = vsel %vm1071, %v1013, %v1466
      %v1541 = vsel %vm1071, %v1015, %v1469
      %v1542 = vsel %vm1071, %v1017, %v1472
      %v1543 = vsel %vm1071, %v1019, %v1475
      %v1544 = vsel %vm1071, %v1021, %v1478
      %v1545 = vsel %vm1071, %v1023, %v1481
      %v1546 = vsel %vm1071, %v1025, %v1484
      %v1547 = vsel %vm1071, %v1027, %v1487
      %v1548 = vsel %vm1071, %v1029, %v1490
      %v1549 = vsel %vm1071, %v1031, %v1493
      %v1550 = vsel %vm1071, %v1033, %v1496
      %v1551 = vsel %vm1071, %v1035, %v1499
      %v1552 = vsel %vm1071, %v1037, %v1502
      %v1553 = vrot.slane %v1007, 1
      %v1554 = vrot.slane %v1008, 1
      %v1555 = vsel %vm1168, %v1553, %v1554
      %v1556 = vrot.slane %v1009, 1
      %v1557 = vrot.slane %v1010, 1
      %v1558 = vsel %vm1168, %v1556, %v1557
      %v1559 = vrot.slane %v1011, 1
      %v1560 = vrot.slane %v1012, 1
      %v1561 = vsel %vm1168, %v1559, %v1560
      %v1562 = vrot.slane %v1013, 1
      %v1563 = vrot.slane %v1014, 1
      %v1564 = vsel %vm1168, %v1562, %v1563
      %v1565 = vrot.slane %v1015, 1
      %v1566 = vrot.slane %v1016, 1
      %v1567 = vsel %vm1168, %v1565, %v1566
      %v1568 = vrot.slane %v1017, 1
      %v1569 = vrot.slane %v1018, 1
      %v1570 = vsel %vm1168, %v1568, %v1569
      %v1571 = vrot.slane %v1019, 1
      %v1572 = vrot.slane %v1020, 1
      %v1573 = vsel %vm1168, %v1571, %v1572
      %v1574 = vrot.slane %v1021, 1
      %v1575 = vrot.slane %v1022, 1
      %v1576 = vsel %vm1168, %v1574, %v1575
      %v1577 = vrot.slane %v1023, 1
      %v1578 = vrot.slane %v1024, 1
      %v1579 = vsel %vm1168, %v1577, %v1578
      %v1580 = vrot.slane %v1025, 1
      %v1581 = vrot.slane %v1026, 1
      %v1582 = vsel %vm1168, %v1580, %v1581
      %v1583 = vrot.slane %v1027, 1
      %v1584 = vrot.slane %v1028, 1
      %v1585 = vsel %vm1168, %v1583, %v1584
      %v1586 = vrot.slane %v1029, 1
      %v1587 = vrot.slane %v1030, 1
      %v1588 = vsel %vm1168, %v1586, %v1587
      %v1589 = vrot.slane %v1031, 1
      %v1590 = vrot.slane %v1032, 1
      %v1591 = vsel %vm1168, %v1589, %v1590
      %v1592 = vrot.slane %v1033, 1
      %v1593 = vrot.slane %v1034, 1
      %v1594 = vsel %vm1168, %v1592, %v1593
      %v1595 = vrot.slane %v1035, 1
      %v1596 = vrot.slane %v1036, 1
      %v1597 = vsel %vm1168, %v1595, %v1596
      %v1598 = vrot.slane %v1037, 1
      %v1599 = vrot.slane %v1038, 1
      %v1600 = vsel %vm1168, %v1598, %v1599
      %v1633 = vsel %vm1168, %v1554, %v1008
      %v1634 = vsel %vm1168, %v1557, %v1010
      %v1635 = vsel %vm1168, %v1560, %v1012
      %v1636 = vsel %vm1168, %v1563, %v1014
      %v1637 = vsel %vm1168, %v1566, %v1016
      %v1638 = vsel %vm1168, %v1569, %v1018
      %v1639 = vsel %vm1168, %v1572, %v1020
      %v1640 = vsel %vm1168, %v1575, %v1022
      %v1641 = vsel %vm1168, %v1578, %v1024
      %v1642 = vsel %vm1168, %v1581, %v1026
      %v1643 = vsel %vm1168, %v1584, %v1028
      %v1644 = vsel %vm1168, %v1587, %v1030
      %v1645 = vsel %vm1168, %v1590, %v1032
      %v1646 = vsel %vm1168, %v1593, %v1034
      %v1647 = vsel %vm1168, %v1596, %v1036
      %v1648 = vsel %vm1168, %v1599, %v1038
      %v1649 = vmul.f32 %v1537, 0.25
      %v1650 = vmul.f32 %v1459, 0.25
      %v1651 = vmul.f32 %v1538, 0.25
      %v1652 = vmul.f32 %v1462, 0.25
      %v1653 = vmul.f32 %v1539, 0.25
      %v1654 = vmul.f32 %v1465, 0.25
      %v1655 = vmul.f32 %v1540, 0.25
      %v1656 = vmul.f32 %v1468, 0.25
      %v1657 = vmul.f32 %v1541, 0.25
      %v1658 = vmul.f32 %v1471, 0.25
      %v1659 = vmul.f32 %v1542, 0.25
      %v1660 = vmul.f32 %v1474, 0.25
      %v1661 = vmul.f32 %v1543, 0.25
      %v1662 = vmul.f32 %v1477, 0.25
      %v1663 = vmul.f32 %v1544, 0.25
      %v1664 = vmul.f32 %v1480, 0.25
      %v1665 = vmul.f32 %v1545, 0.25
      %v1666 = vmul.f32 %v1483, 0.25
      %v1667 = vmul.f32 %v1546, 0.25
      %v1668 = vmul.f32 %v1486, 0.25
      %v1669 = vmul.f32 %v1547, 0.25
      %v1670 = vmul.f32 %v1489, 0.25
      %v1671 = vmul.f32 %v1548, 0.25
      %v1672 = vmul.f32 %v1492, 0.25
      %v1673 = vmul.f32 %v1549, 0.25
      %v1674 = vmul.f32 %v1495, 0.25
      %v1675 = vmul.f32 %v1550, 0.25
      %v1676 = vmul.f32 %v1498, 0.25
      %v1677 = vmul.f32 %v1551, 0.25
      %v1678 = vmul.f32 %v1501, 0.25
      %v1679 = vmul.f32 %v1552, 0.25
      %v1680 = vmul.f32 %v1504, 0.25
      %v1681 = vmul.f32 %v1007, 0.75
      %v1682 = vmul.f32 %v1008, 0.75
      %v1683 = vmul.f32 %v1009, 0.75
      %v1684 = vmul.f32 %v1010, 0.75
      %v1685 = vmul.f32 %v1011, 0.75
      %v1686 = vmul.f32 %v1012, 0.75
      %v1687 = vmul.f32 %v1013, 0.75
      %v1688 = vmul.f32 %v1014, 0.75
      %v1689 = vmul.f32 %v1015, 0.75
      %v1690 = vmul.f32 %v1016, 0.75
      %v1691 = vmul.f32 %v1017, 0.75
      %v1692 = vmul.f32 %v1018, 0.75
      %v1693 = vmul.f32 %v1019, 0.75
      %v1694 = vmul.f32 %v1020, 0.75
      %v1695 = vmul.f32 %v1021, 0.75
      %v1696 = vmul.f32 %v1022, 0.75
      %v1697 = vmul.f32 %v1023, 0.75
      %v1698 = vmul.f32 %v1024, 0.75
      %v1699 = vmul.f32 %v1025, 0.75
      %v1700 = vmul.f32 %v1026, 0.75
      %v1701 = vmul.f32 %v1027, 0.75
      %v1702 = vmul.f32 %v1028, 0.75
      %v1703 = vmul.f32 %v1029, 0.75
      %v1704 = vmul.f32 %v1030, 0.75
      %v1705 = vmul.f32 %v1031, 0.75
      %v1706 = vmul.f32 %v1032, 0.75
      %v1707 = vmul.f32 %v1033, 0.75
      %v1708 = vmul.f32 %v1034, 0.75
      %v1709 = vmul.f32 %v1035, 0.75
      %v1710 = vmul.f32 %v1036, 0.75
      %v1711 = vmul.f32 %v1037, 0.75
      %v1712 = vmul.f32 %v1038, 0.75
      %v1713 = vadd.f32 %v1649, %v1681
      %v1714 = vadd.f32 %v1650, %v1682
      %v1715 = vadd.f32 %v1651, %v1683
      %v1716 = vadd.f32 %v1652, %v1684
      %v1717 = vadd.f32 %v1653, %v1685
      %v1718 = vadd.f32 %v1654, %v1686
      %v1719 = vadd.f32 %v1655, %v1687
      %v1720 = vadd.f32 %v1656, %v1688
      %v1721 = vadd.f32 %v1657, %v1689
      %v1722 = vadd.f32 %v1658, %v1690
      %v1723 = vadd.f32 %v1659, %v1691
      %v1724 = vadd.f32 %v1660, %v1692
      %v1725 = vadd.f32 %v1661, %v1693
      %v1726 = vadd.f32 %v1662, %v1694
      %v1727 = vadd.f32 %v1663, %v1695
      %v1728 = vadd.f32 %v1664, %v1696
      %v1729 = vadd.f32 %v1665, %v1697
      %v1730 = vadd.f32 %v1666, %v1698
      %v1731 = vadd.f32 %v1667, %v1699
      %v1732 = vadd.f32 %v1668, %v1700
      %v1733 = vadd.f32 %v1669, %v1701
      %v1734 = vadd.f32 %v1670, %v1702
      %v1735 = vadd.f32 %v1671, %v1703
      %v1736 = vadd.f32 %v1672, %v1704
      %v1737 = vadd.f32 %v1673, %v1705
      %v1738 = vadd.f32 %v1674, %v1706
      %v1739 = vadd.f32 %v1675, %v1707
      %v1740 = vadd.f32 %v1676, %v1708
      %v1741 = vadd.f32 %v1677, %v1709
      %v1742 = vadd.f32 %v1678, %v1710
      %v1743 = vadd.f32 %v1679, %v1711
      %v1744 = vadd.f32 %v1680, %v1712
      %v1745 = vmul.f32 %v1555, 0.25
      %v1746 = vmul.f32 %v1633, 0.25
      %v1747 = vmul.f32 %v1558, 0.25
      %v1748 = vmul.f32 %v1634, 0.25
      %v1749 = vmul.f32 %v1561, 0.25
      %v1750 = vmul.f32 %v1635, 0.25
      %v1751 = vmul.f32 %v1564, 0.25
      %v1752 = vmul.f32 %v1636, 0.25
      %v1753 = vmul.f32 %v1567, 0.25
      %v1754 = vmul.f32 %v1637, 0.25
      %v1755 = vmul.f32 %v1570, 0.25
      %v1756 = vmul.f32 %v1638, 0.25
      %v1757 = vmul.f32 %v1573, 0.25
      %v1758 = vmul.f32 %v1639, 0.25
      %v1759 = vmul.f32 %v1576, 0.25
      %v1760 = vmul.f32 %v1640, 0.25
      %v1761 = vmul.f32 %v1579, 0.25
      %v1762 = vmul.f32 %v1641, 0.25
      %v1763 = vmul.f32 %v1582, 0.25
      %v1764 = vmul.f32 %v1642, 0.25
      %v1765 = vmul.f32 %v1585, 0.25
      %v1766 = vmul.f32 %v1643, 0.25
      %v1767 = vmul.f32 %v1588, 0.25
      %v1768 = vmul.f32 %v1644, 0.25
      %v1769 = vmul.f32 %v1591, 0.25
      %v1770 = vmul.f32 %v1645, 0.25
      %v1771 = vmul.f32 %v1594, 0.25
      %v1772 = vmul.f32 %v1646, 0.25
      %v1773 = vmul.f32 %v1597, 0.25
      %v1774 = vmul.f32 %v1647, 0.25
      %v1775 = vmul.f32 %v1600, 0.25
      %v1776 = vmul.f32 %v1648, 0.25
      %v1777 = vadd.f32 %v1681, %v1745
      %v1778 = vadd.f32 %v1682, %v1746
      %v1779 = vadd.f32 %v1683, %v1747
      %v1780 = vadd.f32 %v1684, %v1748
      %v1781 = vadd.f32 %v1685, %v1749
      %v1782 = vadd.f32 %v1686, %v1750
      %v1783 = vadd.f32 %v1687, %v1751
      %v1784 = vadd.f32 %v1688, %v1752
      %v1785 = vadd.f32 %v1689, %v1753
      %v1786 = vadd.f32 %v1690, %v1754
      %v1787 = vadd.f32 %v1691, %v1755
      %v1788 = vadd.f32 %v1692, %v1756
      %v1789 = vadd.f32 %v1693, %v1757
      %v1790 = vadd.f32 %v1694, %v1758
      %v1791 = vadd.f32 %v1695, %v1759
      %v1792 = vadd.f32 %v1696, %v1760
      %v1793 = vadd.f32 %v1697, %v1761
      %v1794 = vadd.f32 %v1698, %v1762
      %v1795 = vadd.f32 %v1699, %v1763
      %v1796 = vadd.f32 %v1700, %v1764
      %v1797 = vadd.f32 %v1701, %v1765
      %v1798 = vadd.f32 %v1702, %v1766
      %v1799 = vadd.f32 %v1703, %v1767
      %v1800 = vadd.f32 %v1704, %v1768
      %v1801 = vadd.f32 %v1705, %v1769
      %v1802 = vadd.f32 %v1706, %v1770
      %v1803 = vadd.f32 %v1707, %v1771
      %v1804 = vadd.f32 %v1708, %v1772
      %v1805 = vadd.f32 %v1709, %v1773
      %v1806 = vadd.f32 %v1710, %v1774
      %v1807 = vadd.f32 %v1711, %v1775
      %v1808 = vadd.f32 %v1712, %v1776
      %1841 = vrot.lane.b32.xlu0 %v1393, 32
      %v1842 = vpop.permute.xlu0 %1841
      %1843 = vrot.lane.b32.xlu0 %v1394, 32
      %v1844 = vpop.permute.xlu0 %1843
      %1845 = vrot.lane.b32.xlu0 %v1395, 32
      %v1846 = vpop.permute.xlu0 %1845
      %1847 = vrot.lane.b32.xlu0 %v1396, 32
      %v1848 = vpop.permute.xlu0 %1847
      %1849 = vrot.lane.b32.xlu0 %v1397, 32
      %v1850 = vpop.permute.xlu0 %1849
      %1851 = vrot.lane.b32.xlu0 %v1398, 32
      %v1852 = vpop.permute.xlu0 %1851
      %1853 = vrot.lane.b32.xlu0 %v1399, 32
      %v1854 = vpop.permute.xlu0 %1853
      %1855 = vrot.lane.b32.xlu0 %v1400, 32
      %v1856 = vpop.permute.xlu0 %1855
      %1857 = vrot.lane.b32.xlu0 %v1401, 32
      %v1858 = vpop.permute.xlu0 %1857
      %1859 = vrot.lane.b32.xlu0 %v1402, 32
      %v1860 = vpop.permute.xlu0 %1859
      %1861 = vrot.lane.b32.xlu0 %v1403, 32
      %v1862 = vpop.permute.xlu0 %1861
      %1863 = vrot.lane.b32.xlu0 %v1404, 32
      %v1864 = vpop.permute.xlu0 %1863
      %1865 = vrot.lane.b32.xlu0 %v1405, 32
      %v1866 = vpop.permute.xlu0 %1865
      %1867 = vrot.lane.b32.xlu0 %v1406, 32
      %v1868 = vpop.permute.xlu0 %1867
      %1869 = vrot.lane.b32.xlu0 %v1407, 32
      %v1870 = vpop.permute.xlu0 %1869
      %1871 = vrot.lane.b32.xlu0 %v1408, 32
      %v1872 = vpop.permute.xlu0 %1871
      %1873 = vrot.lane.b32.xlu0 %v1409, 32
      %v1874 = vpop.permute.xlu0 %1873
      %1875 = vrot.lane.b32.xlu0 %v1410, 32
      %v1876 = vpop.permute.xlu0 %1875
      %1877 = vrot.lane.b32.xlu0 %v1411, 32
      %v1878 = vpop.permute.xlu0 %1877
      %1879 = vrot.lane.b32.xlu0 %v1412, 32
      %v1880 = vpop.permute.xlu0 %1879
      %1881 = vrot.lane.b32.xlu0 %v1413, 32
      %v1882 = vpop.permute.xlu0 %1881
      %1883 = vrot.lane.b32.xlu0 %v1414, 32
      %v1884 = vpop.permute.xlu0 %1883
      %1885 = vrot.lane.b32.xlu0 %v1415, 32
      %v1886 = vpop.permute.xlu0 %1885
      %1887 = vrot.lane.b32.xlu0 %v1416, 32
      %v1888 = vpop.permute.xlu0 %1887
      %1889 = vrot.lane.b32.xlu0 %v1417, 32
      %v1890 = vpop.permute.xlu0 %1889
      %1891 = vrot.lane.b32.xlu0 %v1418, 32
      %v1892 = vpop.permute.xlu0 %1891
      %1893 = vrot.lane.b32.xlu0 %v1419, 32
      %v1894 = vpop.permute.xlu0 %1893
      %1895 = vrot.lane.b32.xlu0 %v1420, 32
      %v1896 = vpop.permute.xlu0 %1895
      %1897 = vrot.lane.b32.xlu0 %v1421, 32
      %v1898 = vpop.permute.xlu0 %1897
      %1899 = vrot.lane.b32.xlu0 %v1422, 32
      %v1900 = vpop.permute.xlu0 %1899
      %1901 = vrot.lane.b32.xlu0 %v1423, 32
      %v1902 = vpop.permute.xlu0 %1901
      %1903 = vrot.lane.b32.xlu0 %v1424, 32
      %v1904 = vpop.permute.xlu0 %1903
      %1969 = vrot.lane.b32.xlu0 %v1713, 64
      %v1970 = vpop.permute.xlu0 %1969
      %1971 = vrot.lane.b32.xlu0 %v1714, 64
      %v1972 = vpop.permute.xlu0 %1971
      %1973 = vrot.lane.b32.xlu0 %v1715, 64
      %v1974 = vpop.permute.xlu0 %1973
      %1975 = vrot.lane.b32.xlu0 %v1716, 64
      %v1976 = vpop.permute.xlu0 %1975
      %1977 = vrot.lane.b32.xlu0 %v1717, 64
      %v1978 = vpop.permute.xlu0 %1977
      %1979 = vrot.lane.b32.xlu0 %v1718, 64
      %v1980 = vpop.permute.xlu0 %1979
      %1981 = vrot.lane.b32.xlu0 %v1719, 64
      %v1982 = vpop.permute.xlu0 %1981
      %1983 = vrot.lane.b32.xlu0 %v1720, 64
      %v1984 = vpop.permute.xlu0 %1983
      %1985 = vrot.lane.b32.xlu0 %v1721, 64
      %v1986 = vpop.permute.xlu0 %1985
      %1987 = vrot.lane.b32.xlu0 %v1722, 64
      %v1988 = vpop.permute.xlu0 %1987
      %1989 = vrot.lane.b32.xlu0 %v1723, 64
      %v1990 = vpop.permute.xlu0 %1989
      %1991 = vrot.lane.b32.xlu0 %v1724, 64
      %v1992 = vpop.permute.xlu0 %1991
      %1993 = vrot.lane.b32.xlu0 %v1725, 64
      %v1994 = vpop.permute.xlu0 %1993
      %1995 = vrot.lane.b32.xlu0 %v1726, 64
      %v1996 = vpop.permute.xlu0 %1995
      %1997 = vrot.lane.b32.xlu0 %v1727, 64
      %v1998 = vpop.permute.xlu0 %1997
      %1999 = vrot.lane.b32.xlu0 %v1728, 64
      %v2000 = vpop.permute.xlu0 %1999
      %2001 = vrot.lane.b32.xlu0 %v1729, 64
      %v2002 = vpop.permute.xlu0 %2001
      %2003 = vrot.lane.b32.xlu0 %v1730, 64
      %v2004 = vpop.permute.xlu0 %2003
      %2005 = vrot.lane.b32.xlu0 %v1731, 64
      %v2006 = vpop.permute.xlu0 %2005
      %2007 = vrot.lane.b32.xlu0 %v1732, 64
      %v2008 = vpop.permute.xlu0 %2007
      %2009 = vrot.lane.b32.xlu0 %v1733, 64
      %v2010 = vpop.permute.xlu0 %2009
      %2011 = vrot.lane.b32.xlu0 %v1734, 64
      %v2012 = vpop.permute.xlu0 %2011
      %2013 = vrot.lane.b32.xlu0 %v1735, 64
      %v2014 = vpop.permute.xlu0 %2013
      %2015 = vrot.lane.b32.xlu0 %v1736, 64
      %v2016 = vpop.permute.xlu0 %2015
      %2017 = vrot.lane.b32.xlu0 %v1737, 64
      %v2018 = vpop.permute.xlu0 %2017
      %2019 = vrot.lane.b32.xlu0 %v1738, 64
      %v2020 = vpop.permute.xlu0 %2019
      %2021 = vrot.lane.b32.xlu0 %v1739, 64
      %v2022 = vpop.permute.xlu0 %2021
      %2023 = vrot.lane.b32.xlu0 %v1740, 64
      %v2024 = vpop.permute.xlu0 %2023
      %2025 = vrot.lane.b32.xlu0 %v1741, 64
      %v2026 = vpop.permute.xlu0 %2025
      %2027 = vrot.lane.b32.xlu0 %v1742, 64
      %v2028 = vpop.permute.xlu0 %2027
      %2029 = vrot.lane.b32.xlu0 %v1743, 64
      %v2030 = vpop.permute.xlu0 %2029
      %2031 = vrot.lane.b32.xlu0 %v1744, 64
      %v2032 = vpop.permute.xlu0 %2031
      %2097 = vrot.lane.b32.xlu0 %v1777, 96
      %v2098 = vpop.permute.xlu0 %2097
      %2099 = vrot.lane.b32.xlu0 %v1778, 96
      %v2100 = vpop.permute.xlu0 %2099
      %2101 = vrot.lane.b32.xlu0 %v1779, 96
      %v2102 = vpop.permute.xlu0 %2101
      %2103 = vrot.lane.b32.xlu0 %v1780, 96
      %v2104 = vpop.permute.xlu0 %2103
      %2105 = vrot.lane.b32.xlu0 %v1781, 96
      %v2106 = vpop.permute.xlu0 %2105
      %2107 = vrot.lane.b32.xlu0 %v1782, 96
      %v2108 = vpop.permute.xlu0 %2107
      %2109 = vrot.lane.b32.xlu0 %v1783, 96
      %v2110 = vpop.permute.xlu0 %2109
      %2111 = vrot.lane.b32.xlu0 %v1784, 96
      %v2112 = vpop.permute.xlu0 %2111
      %2113 = vrot.lane.b32.xlu0 %v1785, 96
      %v2114 = vpop.permute.xlu0 %2113
      %2115 = vrot.lane.b32.xlu0 %v1786, 96
      %v2116 = vpop.permute.xlu0 %2115
      %2117 = vrot.lane.b32.xlu0 %v1787, 96
      %v2118 = vpop.permute.xlu0 %2117
      %2119 = vrot.lane.b32.xlu0 %v1788, 96
      %v2120 = vpop.permute.xlu0 %2119
      %2121 = vrot.lane.b32.xlu0 %v1789, 96
      %v2122 = vpop.permute.xlu0 %2121
      %2123 = vrot.lane.b32.xlu0 %v1790, 96
      %v2124 = vpop.permute.xlu0 %2123
      %2125 = vrot.lane.b32.xlu0 %v1791, 96
      %v2126 = vpop.permute.xlu0 %2125
      %2127 = vrot.lane.b32.xlu0 %v1792, 96
      %v2128 = vpop.permute.xlu0 %2127
      %2129 = vrot.lane.b32.xlu0 %v1793, 96
      %v2130 = vpop.permute.xlu0 %2129
      %2131 = vrot.lane.b32.xlu0 %v1794, 96
      %v2132 = vpop.permute.xlu0 %2131
      %2133 = vrot.lane.b32.xlu0 %v1795, 96
      %v2134 = vpop.permute.xlu0 %2133
      %2135 = vrot.lane.b32.xlu0 %v1796, 96
      %v2136 = vpop.permute.xlu0 %2135
      %2137 = vrot.lane.b32.xlu0 %v1797, 96
      %v2138 = vpop.permute.xlu0 %2137
      %2139 = vrot.lane.b32.xlu0 %v1798, 96
      %v2140 = vpop.permute.xlu0 %2139
      %2141 = vrot.lane.b32.xlu0 %v1799, 96
      %v2142 = vpop.permute.xlu0 %2141
      %2143 = vrot.lane.b32.xlu0 %v1800, 96
      %v2144 = vpop.permute.xlu0 %2143
      %2145 = vrot.lane.b32.xlu0 %v1801, 96
      %v2146 = vpop.permute.xlu0 %2145
      %2147 = vrot.lane.b32.xlu0 %v1802, 96
      %v2148 = vpop.permute.xlu0 %2147
      %2149 = vrot.lane.b32.xlu0 %v1803, 96
      %v2150 = vpop.permute.xlu0 %2149
      %2151 = vrot.lane.b32.xlu0 %v1804, 96
      %v2152 = vpop.permute.xlu0 %2151
      %2153 = vrot.lane.b32.xlu0 %v1805, 96
      %v2154 = vpop.permute.xlu0 %2153
      %2155 = vrot.lane.b32.xlu0 %v1806, 96
      %v2156 = vpop.permute.xlu0 %2155
      %2157 = vrot.lane.b32.xlu0 %v1807, 96
      %v2158 = vpop.permute.xlu0 %2157
      %2159 = vrot.lane.b32.xlu0 %v1808, 96
      %v2160 = vpop.permute.xlu0 %2159
      %vm2193 = vcmask 261120
      %v2194 = vsel %vm2193, %v1329, %v1842
      %v2195 = vsel %vm2193, %v1330, %v1844
      %v2196 = vsel %vm2193, %v1331, %v1846
      %v2197 = vsel %vm2193, %v1332, %v1848
      %v2198 = vsel %vm2193, %v1333, %v1850
      %v2199 = vsel %vm2193, %v1334, %v1852
      %v2200 = vsel %vm2193, %v1335, %v1854
      %v2201 = vsel %vm2193, %v1336, %v1856
      %v2202 = vsel %vm2193, %v1337, %v1858
      %v2203 = vsel %vm2193, %v1338, %v1860
      %v2204 = vsel %vm2193, %v1339, %v1862
      %v2205 = vsel %vm2193, %v1340, %v1864
      %v2206 = vsel %vm2193, %v1341, %v1866
      %v2207 = vsel %vm2193, %v1342, %v1868
      %v2208 = vsel %vm2193, %v1343, %v1870
      %v2209 = vsel %vm2193, %v1344, %v1872
      %v2210 = vsel %vm2193, %v1345, %v1874
      %v2211 = vsel %vm2193, %v1346, %v1876
      %v2212 = vsel %vm2193, %v1347, %v1878
      %v2213 = vsel %vm2193, %v1348, %v1880
      %v2214 = vsel %vm2193, %v1349, %v1882
      %v2215 = vsel %vm2193, %v1350, %v1884
      %v2216 = vsel %vm2193, %v1351, %v1886
      %v2217 = vsel %vm2193, %v1352, %v1888
      %v2218 = vsel %vm2193, %v1353, %v1890
      %v2219 = vsel %vm2193, %v1354, %v1892
      %v2220 = vsel %vm2193, %v1355, %v1894
      %v2221 = vsel %vm2193, %v1356, %v1896
      %v2222 = vsel %vm2193, %v1357, %v1898
      %v2223 = vsel %vm2193, %v1358, %v1900
      %v2224 = vsel %vm2193, %v1359, %v1902
      %v2225 = vsel %vm2193, %v1360, %v1904
      %vm2226 = vcmask 523264
      %v2227 = vsel %vm2226, %v2194, %v1970
      %v2228 = vsel %vm2226, %v2195, %v1972
      %v2229 = vsel %vm2226, %v2196, %v1974
      %v2230 = vsel %vm2226, %v2197, %v1976
      %v2231 = vsel %vm2226, %v2198, %v1978
      %v2232 = vsel %vm2226, %v2199, %v1980
      %v2233 = vsel %vm2226, %v2200, %v1982
      %v2234 = vsel %vm2226, %v2201, %v1984
      %v2235 = vsel %vm2226, %v2202, %v1986
      %v2236 = vsel %vm2226, %v2203, %v1988
      %v2237 = vsel %vm2226, %v2204, %v1990
      %v2238 = vsel %vm2226, %v2205, %v1992
      %v2239 = vsel %vm2226, %v2206, %v1994
      %v2240 = vsel %vm2226, %v2207, %v1996
      %v2241 = vsel %vm2226, %v2208, %v1998
      %v2242 = vsel %vm2226, %v2209, %v2000
      %v2243 = vsel %vm2226, %v2210, %v2002
      %v2244 = vsel %vm2226, %v2211, %v2004
      %v2245 = vsel %vm2226, %v2212, %v2006
      %v2246 = vsel %vm2226, %v2213, %v2008
      %v2247 = vsel %vm2226, %v2214, %v2010
      %v2248 = vsel %vm2226, %v2215, %v2012
      %v2249 = vsel %vm2226, %v2216, %v2014
      %v2250 = vsel %vm2226, %v2217, %v2016
      %v2251 = vsel %vm2226, %v2218, %v2018
      %v2252 = vsel %vm2226, %v2219, %v2020
      %v2253 = vsel %vm2226, %v2220, %v2022
      %v2254 = vsel %vm2226, %v2221, %v2024
      %v2255 = vsel %vm2226, %v2222, %v2026
      %v2256 = vsel %vm2226, %v2223, %v2028
      %v2257 = vsel %vm2226, %v2224, %v2030
      %v2258 = vsel %vm2226, %v2225, %v2032
      %vm2259 = vcmask 785408
      %v2260 = vsel %vm2259, %v2227, %v2098
      %v2261 = vsel %vm2259, %v2228, %v2100
      %v2262 = vsel %vm2259, %v2229, %v2102
      %v2263 = vsel %vm2259, %v2230, %v2104
      %v2264 = vsel %vm2259, %v2231, %v2106
      %v2265 = vsel %vm2259, %v2232, %v2108
      %v2266 = vsel %vm2259, %v2233, %v2110
      %v2267 = vsel %vm2259, %v2234, %v2112
      %v2268 = vsel %vm2259, %v2235, %v2114
      %v2269 = vsel %vm2259, %v2236, %v2116
      %v2270 = vsel %vm2259, %v2237, %v2118
      %v2271 = vsel %vm2259, %v2238, %v2120
      %v2272 = vsel %vm2259, %v2239, %v2122
      %v2273 = vsel %vm2259, %v2240, %v2124
      %v2274 = vsel %vm2259, %v2241, %v2126
      %v2275 = vsel %vm2259, %v2242, %v2128
      %v2276 = vsel %vm2259, %v2243, %v2130
      %v2277 = vsel %vm2259, %v2244, %v2132
      %v2278 = vsel %vm2259, %v2245, %v2134
      %v2279 = vsel %vm2259, %v2246, %v2136
      %v2280 = vsel %vm2259, %v2247, %v2138
      %v2281 = vsel %vm2259, %v2248, %v2140
      %v2282 = vsel %vm2259, %v2249, %v2142
      %v2283 = vsel %vm2259, %v2250, %v2144
      %v2284 = vsel %vm2259, %v2251, %v2146
      %v2285 = vsel %vm2259, %v2252, %v2148
      %v2286 = vsel %vm2259, %v2253, %v2150
      %v2287 = vsel %vm2259, %v2254, %v2152
      %v2288 = vsel %vm2259, %v2255, %v2154
      %v2289 = vsel %vm2259, %v2256, %v2156
      %v2290 = vsel %vm2259, %v2257, %v2158
      %v2291 = vsel %vm2259, %v2258, %v2160
      %v2292 = vadd.f32 %v721, %v2260
      %v2293 = vadd.f32 %v724, %v2261
      %v2294 = vadd.f32 %v729, %v2262
      %v2295 = vadd.f32 %v732, %v2263
      %v2296 = vadd.f32 %v737, %v2264
      %v2297 = vadd.f32 %v740, %v2265
      %v2298 = vadd.f32 %v745, %v2266
      %v2299 = vadd.f32 %v748, %v2267
      %v2300 = vadd.f32 %v753, %v2268
      %v2301 = vadd.f32 %v756, %v2269
      %v2302 = vadd.f32 %v761, %v2270
      %v2303 = vadd.f32 %v764, %v2271
      %v2304 = vadd.f32 %v769, %v2272
      %v2305 = vadd.f32 %v772, %v2273
      %v2306 = vadd.f32 %v777, %v2274
      %v2307 = vadd.f32 %v780, %v2275
      %v2308 = vadd.f32 %v785, %v2276
      %v2309 = vadd.f32 %v788, %v2277
      %v2310 = vadd.f32 %v793, %v2278
      %v2311 = vadd.f32 %v796, %v2279
      %v2312 = vadd.f32 %v801, %v2280
      %v2313 = vadd.f32 %v804, %v2281
      %v2314 = vadd.f32 %v809, %v2282
      %v2315 = vadd.f32 %v812, %v2283
      %v2316 = vadd.f32 %v817, %v2284
      %v2317 = vadd.f32 %v820, %v2285
      %v2318 = vadd.f32 %v825, %v2286
      %v2319 = vadd.f32 %v828, %v2287
      %v2320 = vadd.f32 %v833, %v2288
      %v2321 = vadd.f32 %v836, %v2289
      %v2322 = vadd.f32 %v841, %v2290
      %v2323 = vadd.f32 %v844, %v2291
      %v2324 = vpack.c.bf16 %v2293, %v2292
      %v2325 = vpack.c.bf16 %v2295, %v2294
      %v2326 = vpack.c.bf16 %v2297, %v2296
      %v2327 = vpack.c.bf16 %v2299, %v2298
      %v2328 = vpack.c.bf16 %v2301, %v2300
      %v2329 = vpack.c.bf16 %v2303, %v2302
      %v2330 = vpack.c.bf16 %v2305, %v2304
      %v2331 = vpack.c.bf16 %v2307, %v2306
      %v2332 = vpack.c.bf16 %v2309, %v2308
      %v2333 = vpack.c.bf16 %v2311, %v2310
      %v2334 = vpack.c.bf16 %v2313, %v2312
      %v2335 = vpack.c.bf16 %v2315, %v2314
      %v2336 = vpack.c.bf16 %v2317, %v2316
      %v2337 = vpack.c.bf16 %v2319, %v2318
      %v2338 = vpack.c.bf16 %v2321, %v2320
      %v2339 = vpack.c.bf16 %v2323, %v2322
      %v2356 = vunpack.c.l.b16 %v2324
      %v2357 = vunpack.c.h.b16 %v2324
      %v2358 = vunpack.c.l.b16 %v2325
      %v2359 = vunpack.c.h.b16 %v2325
      %v2360 = vunpack.c.l.b16 %v2326
      %v2361 = vunpack.c.h.b16 %v2326
      %v2362 = vunpack.c.l.b16 %v2327
      %v2363 = vunpack.c.h.b16 %v2327
      %v2364 = vunpack.c.l.b16 %v2328
      %v2365 = vunpack.c.h.b16 %v2328
      %v2366 = vunpack.c.l.b16 %v2329
      %v2367 = vunpack.c.h.b16 %v2329
      %v2368 = vunpack.c.l.b16 %v2330
      %v2369 = vunpack.c.h.b16 %v2330
      %v2370 = vunpack.c.l.b16 %v2331
      %v2371 = vunpack.c.h.b16 %v2331
      %v2372 = vunpack.c.l.b16 %v2332
      %v2373 = vunpack.c.h.b16 %v2332
      %v2374 = vunpack.c.l.b16 %v2333
      %v2375 = vunpack.c.h.b16 %v2333
      %v2376 = vunpack.c.l.b16 %v2334
      %v2377 = vunpack.c.h.b16 %v2334
      %v2378 = vunpack.c.l.b16 %v2335
      %v2379 = vunpack.c.h.b16 %v2335
      %v2380 = vunpack.c.l.b16 %v2336
      %v2381 = vunpack.c.h.b16 %v2336
      %v2382 = vunpack.c.l.b16 %v2337
      %v2383 = vunpack.c.h.b16 %v2337
      %v2384 = vunpack.c.l.b16 %v2338
      %v2385 = vunpack.c.h.b16 %v2338
      %v2386 = vunpack.c.l.b16 %v2339
      %v2387 = vunpack.c.h.b16 %v2339
      %v2388 = vpack.c.b16 %v2356, %v2356
      %v2389 = vpack.c.b16 %v2357, %v2357
      %v2390 = vpack.c.b16 %v2358, %v2358
      %v2391 = vpack.c.b16 %v2359, %v2359
      %v2392 = vpack.c.b16 %v2360, %v2360
      %v2393 = vpack.c.b16 %v2361, %v2361
      %v2394 = vpack.c.b16 %v2362, %v2362
      %v2395 = vpack.c.b16 %v2363, %v2363
      %v2396 = vpack.c.b16 %v2364, %v2364
      %v2397 = vpack.c.b16 %v2365, %v2365
      %v2398 = vpack.c.b16 %v2366, %v2366
      %v2399 = vpack.c.b16 %v2367, %v2367
      %v2400 = vpack.c.b16 %v2368, %v2368
      %v2401 = vpack.c.b16 %v2369, %v2369
      %v2402 = vpack.c.b16 %v2370, %v2370
      %v2403 = vpack.c.b16 %v2371, %v2371
      %v2404 = vpack.c.b16 %v2372, %v2372
      %v2405 = vpack.c.b16 %v2373, %v2373
      %v2406 = vpack.c.b16 %v2374, %v2374
      %v2407 = vpack.c.b16 %v2375, %v2375
      %v2408 = vpack.c.b16 %v2376, %v2376
      %v2409 = vpack.c.b16 %v2377, %v2377
      %v2410 = vpack.c.b16 %v2378, %v2378
      %v2411 = vpack.c.b16 %v2379, %v2379
      %v2412 = vpack.c.b16 %v2380, %v2380
      %v2413 = vpack.c.b16 %v2381, %v2381
      %v2414 = vpack.c.b16 %v2382, %v2382
      %v2415 = vpack.c.b16 %v2383, %v2383
      %v2416 = vpack.c.b16 %v2384, %v2384
      %v2417 = vpack.c.b16 %v2385, %v2385
      %v2418 = vpack.c.b16 %v2386, %v2386
      %v2419 = vpack.c.b16 %v2387, %v2387
      %vm2420 = vsmask.f32 4368
      %vm2421 = vmor %vm254, %vm2420
      %v2423 = vshrl.u32 %v2388, 16
      %v2425 = vrot.slane %v2423, 7
      %v2426 = vshll.u32 %v2388, 16
      %v2428 = vor.u32 %v2425, %v2426
      %v2429 = vrot.slane %v2425, 4
      %v2431 = vshrl.u32 %v2389, 16
      %v2433 = vrot.slane %v2431, 7
      %v2434 = vshll.u32 %v2389, 16
      %v2436 = vor.u32 %v2433, %v2434
      %v2437 = vsel %vm2421, %v2429, %v2436
      %v2438 = vrot.slane %v2433, 4
      %v2440 = vshrl.u32 %v2390, 16
      %v2442 = vrot.slane %v2440, 7
      %v2443 = vshll.u32 %v2390, 16
      %v2445 = vor.u32 %v2442, %v2443
      %v2446 = vrot.slane %v2442, 4
      %v2448 = vshrl.u32 %v2391, 16
      %v2450 = vrot.slane %v2448, 7
      %v2451 = vshll.u32 %v2391, 16
      %v2453 = vor.u32 %v2450, %v2451
      %v2454 = vsel %vm2421, %v2446, %v2453
      %v2455 = vrot.slane %v2450, 4
      %v2457 = vshrl.u32 %v2392, 16
      %v2459 = vrot.slane %v2457, 7
      %v2460 = vshll.u32 %v2392, 16
      %v2462 = vor.u32 %v2459, %v2460
      %v2463 = vrot.slane %v2459, 4
      %v2465 = vshrl.u32 %v2393, 16
      %v2467 = vrot.slane %v2465, 7
      %v2468 = vshll.u32 %v2393, 16
      %v2470 = vor.u32 %v2467, %v2468
      %v2471 = vsel %vm2421, %v2463, %v2470
      %v2472 = vrot.slane %v2467, 4
      %v2474 = vshrl.u32 %v2394, 16
      %v2476 = vrot.slane %v2474, 7
      %v2477 = vshll.u32 %v2394, 16
      %v2479 = vor.u32 %v2476, %v2477
      %v2480 = vrot.slane %v2476, 4
      %v2482 = vshrl.u32 %v2395, 16
      %v2484 = vrot.slane %v2482, 7
      %v2485 = vshll.u32 %v2395, 16
      %v2487 = vor.u32 %v2484, %v2485
      %v2488 = vsel %vm2421, %v2480, %v2487
      %v2489 = vrot.slane %v2484, 4
      %v2491 = vshrl.u32 %v2396, 16
      %v2493 = vrot.slane %v2491, 7
      %v2494 = vshll.u32 %v2396, 16
      %v2496 = vor.u32 %v2493, %v2494
      %v2497 = vrot.slane %v2493, 4
      %v2499 = vshrl.u32 %v2397, 16
      %v2501 = vrot.slane %v2499, 7
      %v2502 = vshll.u32 %v2397, 16
      %v2504 = vor.u32 %v2501, %v2502
      %v2505 = vsel %vm2421, %v2497, %v2504
      %v2506 = vrot.slane %v2501, 4
      %v2508 = vshrl.u32 %v2398, 16
      %v2510 = vrot.slane %v2508, 7
      %v2511 = vshll.u32 %v2398, 16
      %v2513 = vor.u32 %v2510, %v2511
      %v2514 = vrot.slane %v2510, 4
      %v2516 = vshrl.u32 %v2399, 16
      %v2518 = vrot.slane %v2516, 7
      %v2519 = vshll.u32 %v2399, 16
      %v2521 = vor.u32 %v2518, %v2519
      %v2522 = vsel %vm2421, %v2514, %v2521
      %v2523 = vrot.slane %v2518, 4
      %v2525 = vshrl.u32 %v2400, 16
      %v2527 = vrot.slane %v2525, 7
      %v2528 = vshll.u32 %v2400, 16
      %v2530 = vor.u32 %v2527, %v2528
      %v2531 = vrot.slane %v2527, 4
      %v2533 = vshrl.u32 %v2401, 16
      %v2535 = vrot.slane %v2533, 7
      %v2536 = vshll.u32 %v2401, 16
      %v2538 = vor.u32 %v2535, %v2536
      %v2539 = vsel %vm2421, %v2531, %v2538
      %v2540 = vrot.slane %v2535, 4
      %v2542 = vshrl.u32 %v2402, 16
      %v2544 = vrot.slane %v2542, 7
      %v2545 = vshll.u32 %v2402, 16
      %v2547 = vor.u32 %v2544, %v2545
      %v2548 = vrot.slane %v2544, 4
      %v2550 = vshrl.u32 %v2403, 16
      %v2552 = vrot.slane %v2550, 7
      %v2553 = vshll.u32 %v2403, 16
      %v2555 = vor.u32 %v2552, %v2553
      %v2556 = vsel %vm2421, %v2548, %v2555
      %v2557 = vrot.slane %v2552, 4
      %v2559 = vshrl.u32 %v2404, 16
      %v2561 = vrot.slane %v2559, 7
      %v2562 = vshll.u32 %v2404, 16
      %v2564 = vor.u32 %v2561, %v2562
      %v2565 = vrot.slane %v2561, 4
      %v2567 = vshrl.u32 %v2405, 16
      %v2569 = vrot.slane %v2567, 7
      %v2570 = vshll.u32 %v2405, 16
      %v2572 = vor.u32 %v2569, %v2570
      %v2573 = vsel %vm2421, %v2565, %v2572
      %v2574 = vrot.slane %v2569, 4
      %v2576 = vshrl.u32 %v2406, 16
      %v2578 = vrot.slane %v2576, 7
      %v2579 = vshll.u32 %v2406, 16
      %v2581 = vor.u32 %v2578, %v2579
      %v2582 = vrot.slane %v2578, 4
      %v2584 = vshrl.u32 %v2407, 16
      %v2586 = vrot.slane %v2584, 7
      %v2587 = vshll.u32 %v2407, 16
      %v2589 = vor.u32 %v2586, %v2587
      %v2590 = vsel %vm2421, %v2582, %v2589
      %v2591 = vrot.slane %v2586, 4
      %v2593 = vshrl.u32 %v2408, 16
      %v2595 = vrot.slane %v2593, 7
      %v2596 = vshll.u32 %v2408, 16
      %v2598 = vor.u32 %v2595, %v2596
      %v2599 = vrot.slane %v2595, 4
      %v2601 = vshrl.u32 %v2409, 16
      %v2603 = vrot.slane %v2601, 7
      %v2604 = vshll.u32 %v2409, 16
      %v2606 = vor.u32 %v2603, %v2604
      %v2607 = vsel %vm2421, %v2599, %v2606
      %v2608 = vrot.slane %v2603, 4
      %v2610 = vshrl.u32 %v2410, 16
      %v2612 = vrot.slane %v2610, 7
      %v2613 = vshll.u32 %v2410, 16
      %v2615 = vor.u32 %v2612, %v2613
      %v2616 = vrot.slane %v2612, 4
      %v2618 = vshrl.u32 %v2411, 16
      %v2620 = vrot.slane %v2618, 7
      %v2621 = vshll.u32 %v2411, 16
      %v2623 = vor.u32 %v2620, %v2621
      %v2624 = vsel %vm2421, %v2616, %v2623
      %v2625 = vrot.slane %v2620, 4
      %v2627 = vshrl.u32 %v2412, 16
      %v2629 = vrot.slane %v2627, 7
      %v2630 = vshll.u32 %v2412, 16
      %v2632 = vor.u32 %v2629, %v2630
      %v2633 = vrot.slane %v2629, 4
      %v2635 = vshrl.u32 %v2413, 16
      %v2637 = vrot.slane %v2635, 7
      %v2638 = vshll.u32 %v2413, 16
      %v2640 = vor.u32 %v2637, %v2638
      %v2641 = vsel %vm2421, %v2633, %v2640
      %v2642 = vrot.slane %v2637, 4
      %v2644 = vshrl.u32 %v2414, 16
      %v2646 = vrot.slane %v2644, 7
      %v2647 = vshll.u32 %v2414, 16
      %v2649 = vor.u32 %v2646, %v2647
      %v2650 = vrot.slane %v2646, 4
      %v2652 = vshrl.u32 %v2415, 16
      %v2654 = vrot.slane %v2652, 7
      %v2655 = vshll.u32 %v2415, 16
      %v2657 = vor.u32 %v2654, %v2655
      %v2658 = vsel %vm2421, %v2650, %v2657
      %v2659 = vrot.slane %v2654, 4
      %v2661 = vshrl.u32 %v2416, 16
      %v2663 = vrot.slane %v2661, 7
      %v2664 = vshll.u32 %v2416, 16
      %v2666 = vor.u32 %v2663, %v2664
      %v2667 = vrot.slane %v2663, 4
      %v2669 = vshrl.u32 %v2417, 16
      %v2671 = vrot.slane %v2669, 7
      %v2672 = vshll.u32 %v2417, 16
      %v2674 = vor.u32 %v2671, %v2672
      %v2675 = vsel %vm2421, %v2667, %v2674
      %v2676 = vrot.slane %v2671, 4
      %v2678 = vshrl.u32 %v2418, 16
      %v2680 = vrot.slane %v2678, 7
      %v2681 = vshll.u32 %v2418, 16
      %v2683 = vor.u32 %v2680, %v2681
      %v2684 = vrot.slane %v2680, 4
      %v2686 = vshrl.u32 %v2419, 16
      %v2688 = vrot.slane %v2686, 7
      %v2689 = vshll.u32 %v2419, 16
      %v2691 = vor.u32 %v2688, %v2689
      %v2692 = vsel %vm2421, %v2684, %v2691
      %v2693 = vrot.slane %v2688, 4
      %s2742 = scalar_lea.vmem [#allocation2], 12
      %vm2743 = vcmask 1043456
      %vm2744 = vmand %vm2743, %vm310
      %v2745 = vld [vmem:[%s2742] sm:$0xf]
      %v2746 = vsel %vm2744, %v2428, %v2745
      %2747 = vst [vmem:[%s2742] sm:$0xf] %v2746
      %2748 = vst [vmem:[%s2742 + $0x4] sm:$0xf] %v2437
      %v2749 = vld [vmem:[%s2742 + $0x8] sm:$0x1]
      %v2750 = vsel %vm255, %v2438, %v2749
      %2751 = vst [vmem:[%s2742 + $0x8] sm:$0x1] %v2750
      %v2752 = vld [vmem:[%s2742 + $0xc] sm:$0xf]
      %v2753 = vsel %vm2744, %v2445, %v2752
      %2754 = vst [vmem:[%s2742 + $0xc] sm:$0xf] %v2753
      %2755 = vst [vmem:[%s2742 + $0x10] sm:$0xf] %v2454
      %v2756 = vld [vmem:[%s2742 + $0x14] sm:$0x1]
      %v2757 = vsel %vm255, %v2455, %v2756
      %2758 = vst [vmem:[%s2742 + $0x14] sm:$0x1] %v2757
      %v2759 = vld [vmem:[%s2742 + $0x18] sm:$0xf]
      %v2760 = vsel %vm2744, %v2462, %v2759
      %2761 = vst [vmem:[%s2742 + $0x18] sm:$0xf] %v2760
      %2762 = vst [vmem:[%s2742 + $0x1c] sm:$0xf] %v2471
      %v2763 = vld [vmem:[%s2742 + $0x20] sm:$0x1]
      %v2764 = vsel %vm255, %v2472, %v2763
      %2765 = vst [vmem:[%s2742 + $0x20] sm:$0x1] %v2764
      %v2766 = vld [vmem:[%s2742 + $0x24] sm:$0xf]
      %v2767 = vsel %vm2744, %v2479, %v2766
      %2768 = vst [vmem:[%s2742 + $0x24] sm:$0xf] %v2767
      %2769 = vst [vmem:[%s2742 + $0x28] sm:$0xf] %v2488
      %v2770 = vld [vmem:[%s2742 + $0x2c] sm:$0x1]
      %v2771 = vsel %vm255, %v2489, %v2770
      %2772 = vst [vmem:[%s2742 + $0x2c] sm:$0x1] %v2771
      %v2773 = vld [vmem:[%s2742 + $0x30] sm:$0xf]
      %v2774 = vsel %vm2744, %v2496, %v2773
      %2775 = vst [vmem:[%s2742 + $0x30] sm:$0xf] %v2774
      %2776 = vst [vmem:[%s2742 + $0x34] sm:$0xf] %v2505
      %v2777 = vld [vmem:[%s2742 + $0x38] sm:$0x1]
      %v2778 = vsel %vm255, %v2506, %v2777
      %2779 = vst [vmem:[%s2742 + $0x38] sm:$0x1] %v2778
      %v2780 = vld [vmem:[%s2742 + $0x3c] sm:$0xf]
      %v2781 = vsel %vm2744, %v2513, %v2780
      %2782 = vst [vmem:[%s2742 + $0x3c] sm:$0xf] %v2781
      %2783 = vst [vmem:[%s2742 + $0x40] sm:$0xf] %v2522
      %v2784 = vld [vmem:[%s2742 + $0x44] sm:$0x1]
      %v2785 = vsel %vm255, %v2523, %v2784
      %2786 = vst [vmem:[%s2742 + $0x44] sm:$0x1] %v2785
      %v2787 = vld [vmem:[%s2742 + $0x48] sm:$0xf]
      %v2788 = vsel %vm2744, %v2530, %v2787
      %2789 = vst [vmem:[%s2742 + $0x48] sm:$0xf] %v2788
      %2790 = vst [vmem:[%s2742 + $0x4c] sm:$0xf] %v2539
      %v2791 = vld [vmem:[%s2742 + $0x50] sm:$0x1]
      %v2792 = vsel %vm255, %v2540, %v2791
      %2793 = vst [vmem:[%s2742 + $0x50] sm:$0x1] %v2792
      %v2794 = vld [vmem:[%s2742 + $0x54] sm:$0xf]
      %v2795 = vsel %vm2744, %v2547, %v2794
      %2796 = vst [vmem:[%s2742 + $0x54] sm:$0xf] %v2795
      %2797 = vst [vmem:[%s2742 + $0x58] sm:$0xf] %v2556
      %v2798 = vld [vmem:[%s2742 + $0x5c] sm:$0x1]
      %v2799 = vsel %vm255, %v2557, %v2798
      %2800 = vst [vmem:[%s2742 + $0x5c] sm:$0x1] %v2799
      %v2801 = vld [vmem:[%s2742 + $0x60] sm:$0xf]
      %v2802 = vsel %vm2744, %v2564, %v2801
      %2803 = vst [vmem:[%s2742 + $0x60] sm:$0xf] %v2802
      %2804 = vst [vmem:[%s2742 + $0x64] sm:$0xf] %v2573
      %v2805 = vld [vmem:[%s2742 + $0x68] sm:$0x1]
      %v2806 = vsel %vm255, %v2574, %v2805
      %2807 = vst [vmem:[%s2742 + $0x68] sm:$0x1] %v2806
      %v2808 = vld [vmem:[%s2742 + $0x6c] sm:$0xf]
      %v2809 = vsel %vm2744, %v2581, %v2808
      %2810 = vst [vmem:[%s2742 + $0x6c] sm:$0xf] %v2809
      %2811 = vst [vmem:[%s2742 + $0x70] sm:$0xf] %v2590
      %v2812 = vld [vmem:[%s2742 + $0x74] sm:$0x1]
      %v2813 = vsel %vm255, %v2591, %v2812
      %2814 = vst [vmem:[%s2742 + $0x74] sm:$0x1] %v2813
      %v2815 = vld [vmem:[%s2742 + $0x78] sm:$0xf]
      %v2816 = vsel %vm2744, %v2598, %v2815
      %2817 = vst [vmem:[%s2742 + $0x78] sm:$0xf] %v2816
      %2818 = vst [vmem:[%s2742 + $0x7c] sm:$0xf] %v2607
      %v2819 = vld [vmem:[%s2742 + $0x80] sm:$0x1]
      %v2820 = vsel %vm255, %v2608, %v2819
      %2821 = vst [vmem:[%s2742 + $0x80] sm:$0x1] %v2820
      %v2822 = vld [vmem:[%s2742 + $0x84] sm:$0xf]
      %v2823 = vsel %vm2744, %v2615, %v2822
      %2824 = vst [vmem:[%s2742 + $0x84] sm:$0xf] %v2823
      %2825 = vst [vmem:[%s2742 + $0x88] sm:$0xf] %v2624
      %v2826 = vld [vmem:[%s2742 + $0x8c] sm:$0x1]
      %v2827 = vsel %vm255, %v2625, %v2826
      %2828 = vst [vmem:[%s2742 + $0x8c] sm:$0x1] %v2827
      %v2829 = vld [vmem:[%s2742 + $0x90] sm:$0xf]
      %v2830 = vsel %vm2744, %v2632, %v2829
      %2831 = vst [vmem:[%s2742 + $0x90] sm:$0xf] %v2830
      %2832 = vst [vmem:[%s2742 + $0x94] sm:$0xf] %v2641
      %v2833 = vld [vmem:[%s2742 + $0x98] sm:$0x1]
      %v2834 = vsel %vm255, %v2642, %v2833
      %2835 = vst [vmem:[%s2742 + $0x98] sm:$0x1] %v2834
      %v2836 = vld [vmem:[%s2742 + $0x9c] sm:$0xf]
      %v2837 = vsel %vm2744, %v2649, %v2836
      %2838 = vst [vmem:[%s2742 + $0x9c] sm:$0xf] %v2837
      %2839 = vst [vmem:[%s2742 + $0xa0] sm:$0xf] %v2658
      %v2840 = vld [vmem:[%s2742 + $0xa4] sm:$0x1]
      %v2841 = vsel %vm255, %v2659, %v2840
      %2842 = vst [vmem:[%s2742 + $0xa4] sm:$0x1] %v2841
      %v2843 = vld [vmem:[%s2742 + $0xa8] sm:$0xf]
      %v2844 = vsel %vm2744, %v2666, %v2843
      %2845 = vst [vmem:[%s2742 + $0xa8] sm:$0xf] %v2844
      %2846 = vst [vmem:[%s2742 + $0xac] sm:$0xf] %v2675
      %v2847 = vld [vmem:[%s2742 + $0xb0] sm:$0x1]
      %v2848 = vsel %vm255, %v2676, %v2847
      %2849 = vst [vmem:[%s2742 + $0xb0] sm:$0x1] %v2848
      %v2850 = vld [vmem:[%s2742 + $0xb4] sm:$0xf]
      %v2851 = vsel %vm2744, %v2683, %v2850
      %2852 = vst [vmem:[%s2742 + $0xb4] sm:$0xf] %v2851
      %2853 = vst [vmem:[%s2742 + $0xb8] sm:$0xf] %v2692
      %v2854 = vld [vmem:[%s2742 + $0xbc] sm:$0x1]
      %v2855 = vsel %vm255, %v2693, %v2854
      %2856 = vst [vmem:[%s2742 + $0xbc] sm:$0x1] %v2855
      %v2857 = vld [vmem:[#allocation2] sm:$0xf]
      %v2858 = vld [vmem:[#allocation2 + $0x4] sm:$0xf]
      %v2859 = vld [vmem:[#allocation2 + $0xc] sm:$0xf]
      %v2860 = vld [vmem:[#allocation2 + $0x10] sm:$0xf]
      %v2861 = vld [vmem:[#allocation2 + $0x18] sm:$0xf]
      %v2862 = vld [vmem:[#allocation2 + $0x1c] sm:$0xf]
      %v2863 = vld [vmem:[#allocation2 + $0x24] sm:$0xf]
      %v2864 = vld [vmem:[#allocation2 + $0x28] sm:$0xf]
      %v2865 = vld [vmem:[#allocation2 + $0x30] sm:$0xf]
      %v2866 = vld [vmem:[#allocation2 + $0x34] sm:$0xf]
      %v2867 = vld [vmem:[#allocation2 + $0x3c] sm:$0xf]
      %v2868 = vld [vmem:[#allocation2 + $0x40] sm:$0xf]
      %v2869 = vld [vmem:[#allocation2 + $0x48] sm:$0xf]
      %v2870 = vld [vmem:[#allocation2 + $0x4c] sm:$0xf]
      %v2871 = vld [vmem:[#allocation2 + $0x54] sm:$0xf]
      %v2872 = vld [vmem:[#allocation2 + $0x58] sm:$0xf]
      %v2873 = vld [vmem:[#allocation2 + $0x60] sm:$0xf]
      %v2874 = vld [vmem:[#allocation2 + $0x64] sm:$0xf]
      %v2875 = vld [vmem:[#allocation2 + $0x6c] sm:$0xf]
      %v2876 = vld [vmem:[#allocation2 + $0x70] sm:$0xf]
      %v2877 = vld [vmem:[#allocation2 + $0x78] sm:$0xf]
      %v2878 = vld [vmem:[#allocation2 + $0x7c] sm:$0xf]
      %v2879 = vld [vmem:[#allocation2 + $0x84] sm:$0xf]
      %v2880 = vld [vmem:[#allocation2 + $0x88] sm:$0xf]
      %v2881 = vld [vmem:[#allocation2 + $0x90] sm:$0xf]
      %v2882 = vld [vmem:[#allocation2 + $0x94] sm:$0xf]
      %v2883 = vld [vmem:[#allocation2 + $0x9c] sm:$0xf]
      %v2884 = vld [vmem:[#allocation2 + $0xa0] sm:$0xf]
      %v2885 = vld [vmem:[#allocation2 + $0xa8] sm:$0xf]
      %v2886 = vld [vmem:[#allocation2 + $0xac] sm:$0xf]
      %v2887 = vld [vmem:[#allocation2 + $0xb4] sm:$0xf]
      %v2888 = vld [vmem:[#allocation2 + $0xb8] sm:$0xf]
      %v2889 = vld [vmem:[%s3] sm:$0xf]
      %v2890 = vld [vmem:[%s3 + $0x4] sm:$0xf]
      %v2891 = vld [vmem:[%s3 + $0x8] sm:$0xf]
      %v2892 = vld [vmem:[%s3 + $0xc] sm:$0xf]
      %v2893 = vld [vmem:[%s3 + $0x10] sm:$0xf]
      %v2894 = vld [vmem:[%s3 + $0x14] sm:$0xf]
      %v2895 = vld [vmem:[%s3 + $0x18] sm:$0xf]
      %v2896 = vld [vmem:[%s3 + $0x1c] sm:$0xf]
      %v2897 = vld [vmem:[%s3 + $0x20] sm:$0xf]
      %v2898 = vld [vmem:[%s3 + $0x24] sm:$0xf]
      %v2899 = vld [vmem:[%s3 + $0x28] sm:$0xf]
      %v2900 = vld [vmem:[%s3 + $0x2c] sm:$0xf]
      %v2901 = vld [vmem:[%s3 + $0x30] sm:$0xf]
      %v2902 = vld [vmem:[%s3 + $0x34] sm:$0xf]
      %v2903 = vld [vmem:[%s3 + $0x38] sm:$0xf]
      %v2904 = vld [vmem:[%s3 + $0x3c] sm:$0xf]
      %v2905 = vld [vmem:[#allocation2 + $0x8] sm:$0x1]
      %v2906 = vld [vmem:[#allocation2 + $0x14] sm:$0x1]
      %v2907 = vld [vmem:[#allocation2 + $0x20] sm:$0x1]
      %v2908 = vld [vmem:[#allocation2 + $0x2c] sm:$0x1]
      %v2909 = vld [vmem:[#allocation2 + $0x38] sm:$0x1]
      %v2910 = vld [vmem:[#allocation2 + $0x44] sm:$0x1]
      %v2911 = vld [vmem:[#allocation2 + $0x50] sm:$0x1]
      %v2912 = vld [vmem:[#allocation2 + $0x5c] sm:$0x1]
      %v2913 = vld [vmem:[#allocation2 + $0x68] sm:$0x1]
      %v2914 = vld [vmem:[#allocation2 + $0x74] sm:$0x1]
      %v2915 = vld [vmem:[#allocation2 + $0x80] sm:$0x1]
      %v2916 = vld [vmem:[#allocation2 + $0x8c] sm:$0x1]
      %v2917 = vld [vmem:[#allocation2 + $0x98] sm:$0x1]
      %v2918 = vld [vmem:[#allocation2 + $0xa4] sm:$0x1]
      %v2919 = vld [vmem:[#allocation2 + $0xb0] sm:$0x1]
      %v2920 = vld [vmem:[#allocation2 + $0xbc] sm:$0x1]
      %vm2921 = vsmask.f32 3328
      %vm2922 = vsmask.f32 7440
      %vm2923 = vmor %vm2921, %vm2922
      %v2925 = vshrl.u32 %v2857, 16
      %v2927 = vrot.slane %v2925, 4
      %v2928 = vshll.u32 %v2857, 16
      %v2930 = vrot.slane %v2928, 5
      %v2931 = vor.u32 %v2927, %v2930
      %v2932 = vrot.slane %v2931, 4
      %v2934 = vshll.u32 %v2858, 16
      %v2936 = vrot.slane %v2934, 5
      %v2937 = vsel %vm2923, %v2932, %v2936
      %v2938 = vshrl.u32 %v2858, 16
      %v2940 = vrot.slane %v2938, 4
      %v2941 = vor.u32 %v2940, %v2936
      %v2942 = vrot.slane %v2941, 4
      %v2944 = vshll.u32 %v2905, 16
      %v2946 = vrot.slane %v2944, 5
      %v2947 = vsel %vm2923, %v2942, %v2946
      %v2949 = vshrl.u32 %v2859, 16
      %v2951 = vrot.slane %v2949, 4
      %v2952 = vshll.u32 %v2859, 16
      %v2954 = vrot.slane %v2952, 5
      %v2955 = vor.u32 %v2951, %v2954
      %v2956 = vrot.slane %v2955, 4
      %v2958 = vshll.u32 %v2860, 16
      %v2960 = vrot.slane %v2958, 5
      %v2961 = vsel %vm2923, %v2956, %v2960
      %v2962 = vshrl.u32 %v2860, 16
      %v2964 = vrot.slane %v2962, 4
      %v2965 = vor.u32 %v2964, %v2960
      %v2966 = vrot.slane %v2965, 4
      %v2968 = vshll.u32 %v2906, 16
      %v2970 = vrot.slane %v2968, 5
      %v2971 = vsel %vm2923, %v2966, %v2970
      %v2973 = vshrl.u32 %v2861, 16
      %v2975 = vrot.slane %v2973, 4
      %v2976 = vshll.u32 %v2861, 16
      %v2978 = vrot.slane %v2976, 5
      %v2979 = vor.u32 %v2975, %v2978
      %v2980 = vrot.slane %v2979, 4
      %v2982 = vshll.u32 %v2862, 16
      %v2984 = vrot.slane %v2982, 5
      %v2985 = vsel %vm2923, %v2980, %v2984
      %v2986 = vshrl.u32 %v2862, 16
      %v2988 = vrot.slane %v2986, 4
      %v2989 = vor.u32 %v2988, %v2984
      %v2990 = vrot.slane %v2989, 4
      %v2992 = vshll.u32 %v2907, 16
      %v2994 = vrot.slane %v2992, 5
      %v2995 = vsel %vm2923, %v2990, %v2994
      %v2997 = vshrl.u32 %v2863, 16
      %v2999 = vrot.slane %v2997, 4
      %v3000 = vshll.u32 %v2863, 16
      %v3002 = vrot.slane %v3000, 5
      %v3003 = vor.u32 %v2999, %v3002
      %v3004 = vrot.slane %v3003, 4
      %v3006 = vshll.u32 %v2864, 16
      %v3008 = vrot.slane %v3006, 5
      %v3009 = vsel %vm2923, %v3004, %v3008
      %v3010 = vshrl.u32 %v2864, 16
      %v3012 = vrot.slane %v3010, 4
      %v3013 = vor.u32 %v3012, %v3008
      %v3014 = vrot.slane %v3013, 4
      %v3016 = vshll.u32 %v2908, 16
      %v3018 = vrot.slane %v3016, 5
      %v3019 = vsel %vm2923, %v3014, %v3018
      %v3021 = vshrl.u32 %v2865, 16
      %v3023 = vrot.slane %v3021, 4
      %v3024 = vshll.u32 %v2865, 16
      %v3026 = vrot.slane %v3024, 5
      %v3027 = vor.u32 %v3023, %v3026
      %v3028 = vrot.slane %v3027, 4
      %v3030 = vshll.u32 %v2866, 16
      %v3032 = vrot.slane %v3030, 5
      %v3033 = vsel %vm2923, %v3028, %v3032
      %v3034 = vshrl.u32 %v2866, 16
      %v3036 = vrot.slane %v3034, 4
      %v3037 = vor.u32 %v3036, %v3032
      %v3038 = vrot.slane %v3037, 4
      %v3040 = vshll.u32 %v2909, 16
      %v3042 = vrot.slane %v3040, 5
      %v3043 = vsel %vm2923, %v3038, %v3042
      %v3045 = vshrl.u32 %v2867, 16
      %v3047 = vrot.slane %v3045, 4
      %v3048 = vshll.u32 %v2867, 16
      %v3050 = vrot.slane %v3048, 5
      %v3051 = vor.u32 %v3047, %v3050
      %v3052 = vrot.slane %v3051, 4
      %v3054 = vshll.u32 %v2868, 16
      %v3056 = vrot.slane %v3054, 5
      %v3057 = vsel %vm2923, %v3052, %v3056
      %v3058 = vshrl.u32 %v2868, 16
      %v3060 = vrot.slane %v3058, 4
      %v3061 = vor.u32 %v3060, %v3056
      %v3062 = vrot.slane %v3061, 4
      %v3064 = vshll.u32 %v2910, 16
      %v3066 = vrot.slane %v3064, 5
      %v3067 = vsel %vm2923, %v3062, %v3066
      %v3069 = vshrl.u32 %v2869, 16
      %v3071 = vrot.slane %v3069, 4
      %v3072 = vshll.u32 %v2869, 16
      %v3074 = vrot.slane %v3072, 5
      %v3075 = vor.u32 %v3071, %v3074
      %v3076 = vrot.slane %v3075, 4
      %v3078 = vshll.u32 %v2870, 16
      %v3080 = vrot.slane %v3078, 5
      %v3081 = vsel %vm2923, %v3076, %v3080
      %v3082 = vshrl.u32 %v2870, 16
      %v3084 = vrot.slane %v3082, 4
      %v3085 = vor.u32 %v3084, %v3080
      %v3086 = vrot.slane %v3085, 4
      %v3088 = vshll.u32 %v2911, 16
      %v3090 = vrot.slane %v3088, 5
      %v3091 = vsel %vm2923, %v3086, %v3090
      %v3093 = vshrl.u32 %v2871, 16
      %v3095 = vrot.slane %v3093, 4
      %v3096 = vshll.u32 %v2871, 16
      %v3098 = vrot.slane %v3096, 5
      %v3099 = vor.u32 %v3095, %v3098
      %v3100 = vrot.slane %v3099, 4
      %v3102 = vshll.u32 %v2872, 16
      %v3104 = vrot.slane %v3102, 5
      %v3105 = vsel %vm2923, %v3100, %v3104
      %v3106 = vshrl.u32 %v2872, 16
      %v3108 = vrot.slane %v3106, 4
      %v3109 = vor.u32 %v3108, %v3104
      %v3110 = vrot.slane %v3109, 4
      %v3112 = vshll.u32 %v2912, 16
      %v3114 = vrot.slane %v3112, 5
      %v3115 = vsel %vm2923, %v3110, %v3114
      %v3117 = vshrl.u32 %v2873, 16
      %v3119 = vrot.slane %v3117, 4
      %v3120 = vshll.u32 %v2873, 16
      %v3122 = vrot.slane %v3120, 5
      %v3123 = vor.u32 %v3119, %v3122
      %v3124 = vrot.slane %v3123, 4
      %v3126 = vshll.u32 %v2874, 16
      %v3128 = vrot.slane %v3126, 5
      %v3129 = vsel %vm2923, %v3124, %v3128
      %v3130 = vshrl.u32 %v2874, 16
      %v3132 = vrot.slane %v3130, 4
      %v3133 = vor.u32 %v3132, %v3128
      %v3134 = vrot.slane %v3133, 4
      %v3136 = vshll.u32 %v2913, 16
      %v3138 = vrot.slane %v3136, 5
      %v3139 = vsel %vm2923, %v3134, %v3138
      %v3141 = vshrl.u32 %v2875, 16
      %v3143 = vrot.slane %v3141, 4
      %v3144 = vshll.u32 %v2875, 16
      %v3146 = vrot.slane %v3144, 5
      %v3147 = vor.u32 %v3143, %v3146
      %v3148 = vrot.slane %v3147, 4
      %v3150 = vshll.u32 %v2876, 16
      %v3152 = vrot.slane %v3150, 5
      %v3153 = vsel %vm2923, %v3148, %v3152
      %v3154 = vshrl.u32 %v2876, 16
      %v3156 = vrot.slane %v3154, 4
      %v3157 = vor.u32 %v3156, %v3152
      %v3158 = vrot.slane %v3157, 4
      %v3160 = vshll.u32 %v2914, 16
      %v3162 = vrot.slane %v3160, 5
      %v3163 = vsel %vm2923, %v3158, %v3162
      %v3165 = vshrl.u32 %v2877, 16
      %v3167 = vrot.slane %v3165, 4
      %v3168 = vshll.u32 %v2877, 16
      %v3170 = vrot.slane %v3168, 5
      %v3171 = vor.u32 %v3167, %v3170
      %v3172 = vrot.slane %v3171, 4
      %v3174 = vshll.u32 %v2878, 16
      %v3176 = vrot.slane %v3174, 5
      %v3177 = vsel %vm2923, %v3172, %v3176
      %v3178 = vshrl.u32 %v2878, 16
      %v3180 = vrot.slane %v3178, 4
      %v3181 = vor.u32 %v3180, %v3176
      %v3182 = vrot.slane %v3181, 4
      %v3184 = vshll.u32 %v2915, 16
      %v3186 = vrot.slane %v3184, 5
      %v3187 = vsel %vm2923, %v3182, %v3186
      %v3189 = vshrl.u32 %v2879, 16
      %v3191 = vrot.slane %v3189, 4
      %v3192 = vshll.u32 %v2879, 16
      %v3194 = vrot.slane %v3192, 5
      %v3195 = vor.u32 %v3191, %v3194
      %v3196 = vrot.slane %v3195, 4
      %v3198 = vshll.u32 %v2880, 16
      %v3200 = vrot.slane %v3198, 5
      %v3201 = vsel %vm2923, %v3196, %v3200
      %v3202 = vshrl.u32 %v2880, 16
      %v3204 = vrot.slane %v3202, 4
      %v3205 = vor.u32 %v3204, %v3200
      %v3206 = vrot.slane %v3205, 4
      %v3208 = vshll.u32 %v2916, 16
      %v3210 = vrot.slane %v3208, 5
      %v3211 = vsel %vm2923, %v3206, %v3210
      %v3213 = vshrl.u32 %v2881, 16
      %v3215 = vrot.slane %v3213, 4
      %v3216 = vshll.u32 %v2881, 16
      %v3218 = vrot.slane %v3216, 5
      %v3219 = vor.u32 %v3215, %v3218
      %v3220 = vrot.slane %v3219, 4
      %v3222 = vshll.u32 %v2882, 16
      %v3224 = vrot.slane %v3222, 5
      %v3225 = vsel %vm2923, %v3220, %v3224
      %v3226 = vshrl.u32 %v2882, 16
      %v3228 = vrot.slane %v3226, 4
      %v3229 = vor.u32 %v3228, %v3224
      %v3230 = vrot.slane %v3229, 4
      %v3232 = vshll.u32 %v2917, 16
      %v3234 = vrot.slane %v3232, 5
      %v3235 = vsel %vm2923, %v3230, %v3234
      %v3237 = vshrl.u32 %v2883, 16
      %v3239 = vrot.slane %v3237, 4
      %v3240 = vshll.u32 %v2883, 16
      %v3242 = vrot.slane %v3240, 5
      %v3243 = vor.u32 %v3239, %v3242
      %v3244 = vrot.slane %v3243, 4
      %v3246 = vshll.u32 %v2884, 16
      %v3248 = vrot.slane %v3246, 5
      %v3249 = vsel %vm2923, %v3244, %v3248
      %v3250 = vshrl.u32 %v2884, 16
      %v3252 = vrot.slane %v3250, 4
      %v3253 = vor.u32 %v3252, %v3248
      %v3254 = vrot.slane %v3253, 4
      %v3256 = vshll.u32 %v2918, 16
      %v3258 = vrot.slane %v3256, 5
      %v3259 = vsel %vm2923, %v3254, %v3258
      %v3261 = vshrl.u32 %v2885, 16
      %v3263 = vrot.slane %v3261, 4
      %v3264 = vshll.u32 %v2885, 16
      %v3266 = vrot.slane %v3264, 5
      %v3267 = vor.u32 %v3263, %v3266
      %v3268 = vrot.slane %v3267, 4
      %v3270 = vshll.u32 %v2886, 16
      %v3272 = vrot.slane %v3270, 5
      %v3273 = vsel %vm2923, %v3268, %v3272
      %v3274 = vshrl.u32 %v2886, 16
      %v3276 = vrot.slane %v3274, 4
      %v3277 = vor.u32 %v3276, %v3272
      %v3278 = vrot.slane %v3277, 4
      %v3280 = vshll.u32 %v2919, 16
      %v3282 = vrot.slane %v3280, 5
      %v3283 = vsel %vm2923, %v3278, %v3282
      %v3285 = vshrl.u32 %v2887, 16
      %v3287 = vrot.slane %v3285, 4
      %v3288 = vshll.u32 %v2887, 16
      %v3290 = vrot.slane %v3288, 5
      %v3291 = vor.u32 %v3287, %v3290
      %v3292 = vrot.slane %v3291, 4
      %v3294 = vshll.u32 %v2888, 16
      %v3296 = vrot.slane %v3294, 5
      %v3297 = vsel %vm2923, %v3292, %v3296
      %v3298 = vshrl.u32 %v2888, 16
      %v3300 = vrot.slane %v3298, 4
      %v3301 = vor.u32 %v3300, %v3296
      %v3302 = vrot.slane %v3301, 4
      %v3304 = vshll.u32 %v2920, 16
      %v3306 = vrot.slane %v3304, 5
      %v3307 = vsel %vm2923, %v3302, %v3306
      %s3308 = scalar_lea.vmem %s3, 64
      %v3309 = vld [vmem:[%s3308] sm:$0xf]
      %v3310 = vld [vmem:[%s3308 + $0x4] sm:$0xf]
      %v3311 = vld [vmem:[%s3308 + $0x8] sm:$0xf]
      %v3312 = vld [vmem:[%s3308 + $0xc] sm:$0xf]
      %v3313 = vld [vmem:[%s3308 + $0x10] sm:$0xf]
      %v3314 = vld [vmem:[%s3308 + $0x14] sm:$0xf]
      %v3315 = vld [vmem:[%s3308 + $0x18] sm:$0xf]
      %v3316 = vld [vmem:[%s3308 + $0x1c] sm:$0xf]
      %v3317 = vld [vmem:[%s3308 + $0x20] sm:$0xf]
      %v3318 = vld [vmem:[%s3308 + $0x24] sm:$0xf]
      %v3319 = vld [vmem:[%s3308 + $0x28] sm:$0xf]
      %v3320 = vld [vmem:[%s3308 + $0x2c] sm:$0xf]
      %v3321 = vld [vmem:[%s3308 + $0x30] sm:$0xf]
      %v3322 = vld [vmem:[%s3308 + $0x34] sm:$0xf]
      %v3323 = vld [vmem:[%s3308 + $0x38] sm:$0xf]
      %v3324 = vld [vmem:[%s3308 + $0x3c] sm:$0xf]
      %v3325 = vunpack.c.l.b16 %v2937
      %v3326 = vunpack.c.l.b16 %v2947
      %v3327 = vunpack.c.l.b16 %v2961
      %v3328 = vunpack.c.l.b16 %v2971
      %v3329 = vunpack.c.l.b16 %v2985
      %v3330 = vunpack.c.l.b16 %v2995
      %v3331 = vunpack.c.l.b16 %v3009
      %v3332 = vunpack.c.l.b16 %v3019
      %v3333 = vunpack.c.l.b16 %v3033
      %v3334 = vunpack.c.l.b16 %v3043
      %v3335 = vunpack.c.l.b16 %v3057
      %v3336 = vunpack.c.l.b16 %v3067
      %v3337 = vunpack.c.l.b16 %v3081
      %v3338 = vunpack.c.l.b16 %v3091
      %v3339 = vunpack.c.l.b16 %v3105
      %v3340 = vunpack.c.l.b16 %v3115
      %v3341 = vunpack.c.l.b16 %v3129
      %v3342 = vunpack.c.l.b16 %v3139
      %v3343 = vunpack.c.l.b16 %v3153
      %v3344 = vunpack.c.l.b16 %v3163
      %v3345 = vunpack.c.l.b16 %v3177
      %v3346 = vunpack.c.l.b16 %v3187
      %v3347 = vunpack.c.l.b16 %v3201
      %v3348 = vunpack.c.l.b16 %v3211
      %v3349 = vunpack.c.l.b16 %v3225
      %v3350 = vunpack.c.l.b16 %v3235
      %v3351 = vunpack.c.l.b16 %v3249
      %v3352 = vunpack.c.l.b16 %v3259
      %v3353 = vunpack.c.l.b16 %v3273
      %v3354 = vunpack.c.l.b16 %v3283
      %v3355 = vunpack.c.l.b16 %v3297
      %v3356 = vunpack.c.l.b16 %v3307
      %v3357 = vpack.c.b16 %v3326, %v3325
      %v3358 = vpack.c.b16 %v3328, %v3327
      %v3359 = vpack.c.b16 %v3330, %v3329
      %v3360 = vpack.c.b16 %v3332, %v3331
      %v3361 = vpack.c.b16 %v3334, %v3333
      %v3362 = vpack.c.b16 %v3336, %v3335
      %v3363 = vpack.c.b16 %v3338, %v3337
      %v3364 = vpack.c.b16 %v3340, %v3339
      %v3365 = vpack.c.b16 %v3342, %v3341
      %v3366 = vpack.c.b16 %v3344, %v3343
      %v3367 = vpack.c.b16 %v3346, %v3345
      %v3368 = vpack.c.b16 %v3348, %v3347
      %v3369 = vpack.c.b16 %v3350, %v3349
      %v3370 = vpack.c.b16 %v3352, %v3351
      %v3371 = vpack.c.b16 %v3354, %v3353
      %v3372 = vpack.c.b16 %v3356, %v3355
      %v3405 = vunpack.c.l.b16 %v3309
      %v3406 = vunpack.c.l.b16 %v3310
      %v3407 = vunpack.c.l.b16 %v3311
      %v3408 = vunpack.c.l.b16 %v3312
      %v3409 = vunpack.c.l.b16 %v3313
      %v3410 = vunpack.c.l.b16 %v3314
      %v3411 = vunpack.c.l.b16 %v3315
      %v3412 = vunpack.c.l.b16 %v3316
      %v3413 = vunpack.c.l.b16 %v3317
      %v3414 = vunpack.c.l.b16 %v3318
      %v3415 = vunpack.c.l.b16 %v3319
      %v3416 = vunpack.c.l.b16 %v3320
      %v3417 = vunpack.c.l.b16 %v3321
      %v3418 = vunpack.c.l.b16 %v3322
      %v3419 = vunpack.c.l.b16 %v3323
      %v3420 = vunpack.c.l.b16 %v3324
      %v3421 = vpack.c.b16 %v3406, %v3405
      %v3422 = vpack.c.b16 %v3408, %v3407
      %v3423 = vpack.c.b16 %v3410, %v3409
      %v3424 = vpack.c.b16 %v3412, %v3411
      %v3425 = vpack.c.b16 %v3414, %v3413
      %v3426 = vpack.c.b16 %v3416, %v3415
      %v3427 = vpack.c.b16 %v3418, %v3417
      %v3428 = vpack.c.b16 %v3420, %v3419
      %3437 = vmatprep.subr.bf16.mxu0 0
      %3438 = vmatpush1.bf16.msra.mxu0 %v3421
      %3439 = vmatprep.subr.bf16.mxu0 0
      %3440 = vmatpush1.bf16.msra.mxu0 %v3422
      %3441 = vmatprep.subr.bf16.mxu0 0
      %3442 = vmatpush1.bf16.msra.mxu0 %v3423
      %3443 = vmatprep.subr.bf16.mxu0 0
      %3444 = vmatpush1.bf16.msra.mxu0 %v3424
      %3445 = vmatprep.subr.bf16.mxu0 0
      %3446 = vmatpush1.bf16.msra.mxu0 %v3425
      %3447 = vmatprep.subr.bf16.mxu0 0
      %3448 = vmatpush1.bf16.msra.mxu0 %v3426
      %3449 = vmatprep.subr.bf16.mxu0 0
      %3450 = vmatpush1.bf16.msra.mxu0 %v3427
      %3451 = vmatprep.subr.bf16.mxu0 0
      %3452 = vmatpush1.bf16.msra.mxu0 %v3428
      %3453 = vmatprep.subr.bf16.mxu0 0
      %3454 = vmatpush1.bf16.msra.mxu0 0
      %3455 = vmatprep.subr.bf16.mxu0 0
      %3456 = vmatpush1.bf16.msra.mxu0 0
      %3457 = vmatprep.subr.bf16.mxu0 0
      %3458 = vmatpush1.bf16.msra.mxu0 0
      %3459 = vmatprep.subr.bf16.mxu0 0
      %3460 = vmatpush1.bf16.msra.mxu0 0
      %3461 = vmatprep.subr.bf16.mxu0 0
      %3462 = vmatpush1.bf16.msra.mxu0 0
      %3463 = vmatprep.subr.bf16.mxu0 0
      %3464 = vmatpush1.bf16.msra.mxu0 0
      %3465 = vmatprep.subr.bf16.mxu0 0
      %3466 = vmatpush1.bf16.msra.mxu0 0
      %3467 = vmatprep.subr.bf16.mxu0 0
      %3468 = vmatpush1.bf16.msra.mxu0 0
      %3469 = vmatprep.mubr.bf16.mxu0 0
      %3470 = vmatmul.mubr.bf16.gmra.mrb[0].mxu0 %v3357
      %v3471 = vpop.f32.mrb[0].mxu0
      %v3472 = vadd.f32 0.0, %v3471
      %v3473 = vpop.f32.mrb[0].mxu0
      %v3474 = vpop.f32.mrb[0].mxu0
      %v3475 = vadd.f32 0.0, %v3474
      %v3476 = vpop.f32.mrb[0].mxu0
      %3477 = vmatprep.mubr.bf16.mxu0 0
      %3478 = vmatmul.mubr.bf16.gmra.mrb[0].mxu0 %v3358
      %v3479 = vpop.f32.mrb[0].mxu0
      %v3480 = vadd.f32 0.0, %v3479
      %v3481 = vpop.f32.mrb[0].mxu0
      %v3482 = vpop.f32.mrb[0].mxu0
      %v3483 = vadd.f32 0.0, %v3482
      %v3484 = vpop.f32.mrb[0].mxu0
      %3485 = vmatprep.mubr.bf16.mxu0 0
      %3486 = vmatmul.mubr.bf16.gmra.mrb[0].mxu0 %v3359
      %v3487 = vpop.f32.mrb[0].mxu0
      %v3488 = vadd.f32 0.0, %v3487
      %v3489 = vpop.f32.mrb[0].mxu0
      %v3490 = vpop.f32.mrb[0].mxu0
      %v3491 = vadd.f32 0.0, %v3490
      %v3492 = vpop.f32.mrb[0].mxu0
      %3493 = vmatprep.mubr.bf16.mxu0 0
      %3494 = vmatmul.mubr.bf16.gmra.mrb[0].mxu0 %v3360
      %v3495 = vpop.f32.mrb[0].mxu0
      %v3496 = vadd.f32 0.0, %v3495
      %v3497 = vpop.f32.mrb[0].mxu0
      %v3498 = vpop.f32.mrb[0].mxu0
      %v3499 = vadd.f32 0.0, %v3498
      %v3500 = vpop.f32.mrb[0].mxu0
      %3501 = vmatprep.mubr.bf16.mxu0 0
      %3502 = vmatmul.mubr.bf16.gmra.mrb[0].mxu0 %v3361
      %v3503 = vpop.f32.mrb[0].mxu0
      %v3504 = vadd.f32 0.0, %v3503
      %v3505 = vpop.f32.mrb[0].mxu0
      %v3506 = vpop.f32.mrb[0].mxu0
      %v3507 = vadd.f32 0.0, %v3506
      %v3508 = vpop.f32.mrb[0].mxu0
      %3509 = vmatprep.mubr.bf16.mxu0 0
      %3510 = vmatmul.mubr.bf16.gmra.mrb[0].mxu0 %v3362
      %v3511 = vpop.f32.mrb[0].mxu0
      %v3512 = vadd.f32 0.0, %v3511
      %v3513 = vpop.f32.mrb[0].mxu0
      %v3514 = vpop.f32.mrb[0].mxu0
      %v3515 = vadd.f32 0.0, %v3514
      %v3516 = vpop.f32.mrb[0].mxu0
      %3517 = vmatprep.mubr.bf16.mxu0 0
      %3518 = vmatmul.mubr.bf16.gmra.mrb[0].mxu0 %v3363
      %v3519 = vpop.f32.mrb[0].mxu0
      %v3520 = vadd.f32 0.0, %v3519
      %v3521 = vpop.f32.mrb[0].mxu0
      %v3522 = vpop.f32.mrb[0].mxu0
      %v3523 = vadd.f32 0.0, %v3522
      %v3524 = vpop.f32.mrb[0].mxu0
      %3525 = vmatprep.mubr.bf16.mxu0 0
      %3526 = vmatmul.mubr.bf16.gmra.mrb[0].mxu0 %v3364
      %v3527 = vpop.f32.mrb[0].mxu0
      %v3528 = vadd.f32 0.0, %v3527
      %v3529 = vpop.f32.mrb[0].mxu0
      %v3530 = vpop.f32.mrb[0].mxu0
      %v3531 = vadd.f32 0.0, %v3530
      %v3532 = vpop.f32.mrb[0].mxu0
      %3533 = vmatprep.mubr.bf16.mxu0 0
      %3534 = vmatmul.mubr.bf16.gmra.mrb[0].mxu0 %v3365
      %v3535 = vpop.f32.mrb[0].mxu0
      %v3536 = vadd.f32 0.0, %v3535
      %v3537 = vpop.f32.mrb[0].mxu0
      %v3538 = vpop.f32.mrb[0].mxu0
      %v3539 = vadd.f32 0.0, %v3538
      %v3540 = vpop.f32.mrb[0].mxu0
      %3541 = vmatprep.mubr.bf16.mxu0 0
      %3542 = vmatmul.mubr.bf16.gmra.mrb[0].mxu0 %v3366
      %v3543 = vpop.f32.mrb[0].mxu0
      %v3544 = vadd.f32 0.0, %v3543
      %v3545 = vpop.f32.mrb[0].mxu0
      %v3546 = vpop.f32.mrb[0].mxu0
      %v3547 = vadd.f32 0.0, %v3546
      %v3548 = vpop.f32.mrb[0].mxu0
      %3549 = vmatprep.mubr.bf16.mxu0 0
      %3550 = vmatmul.mubr.bf16.gmra.mrb[0].mxu0 %v3367
      %v3551 = vpop.f32.mrb[0].mxu0
      %v3552 = vadd.f32 0.0, %v3551
      %v3553 = vpop.f32.mrb[0].mxu0
      %v3554 = vpop.f32.mrb[0].mxu0
      %v3555 = vadd.f32 0.0, %v3554
      %v3556 = vpop.f32.mrb[0].mxu0
      %3557 = vmatprep.mubr.bf16.mxu0 0
      %3558 = vmatmul.mubr.bf16.gmra.mrb[0].mxu0 %v3368
      %v3559 = vpop.f32.mrb[0].mxu0
      %v3560 = vadd.f32 0.0, %v3559
      %v3561 = vpop.f32.mrb[0].mxu0
      %v3562 = vpop.f32.mrb[0].mxu0
      %v3563 = vadd.f32 0.0, %v3562
      %v3564 = vpop.f32.mrb[0].mxu0
      %3565 = vmatprep.mubr.bf16.mxu0 0
      %3566 = vmatmul.mubr.bf16.gmra.mrb[0].mxu0 %v3369
      %v3567 = vpop.f32.mrb[0].mxu0
      %v3568 = vadd.f32 0.0, %v3567
      %v3569 = vpop.f32.mrb[0].mxu0
      %v3570 = vpop.f32.mrb[0].mxu0
      %v3571 = vadd.f32 0.0, %v3570
      %v3572 = vpop.f32.mrb[0].mxu0
      %3573 = vmatprep.mubr.bf16.mxu0 0
      %3574 = vmatmul.mubr.bf16.gmra.mrb[0].mxu0 %v3370
      %v3575 = vpop.f32.mrb[0].mxu0
      %v3576 = vadd.f32 0.0, %v3575
      %v3577 = vpop.f32.mrb[0].mxu0
      %v3578 = vpop.f32.mrb[0].mxu0
      %v3579 = vadd.f32 0.0, %v3578
      %v3580 = vpop.f32.mrb[0].mxu0
      %3581 = vmatprep.mubr.bf16.mxu0 0
      %3582 = vmatmul.mubr.bf16.gmra.mrb[0].mxu0 %v3371
      %v3583 = vpop.f32.mrb[0].mxu0
      %v3584 = vadd.f32 0.0, %v3583
      %v3585 = vpop.f32.mrb[0].mxu0
      %v3586 = vpop.f32.mrb[0].mxu0
      %v3587 = vadd.f32 0.0, %v3586
      %v3588 = vpop.f32.mrb[0].mxu0
      %3589 = vmatprep.mubr.bf16.mxu0 0
      %3590 = vmatmul.mubr.bf16.gmra.mrb[0].mxu0 %v3372
      %v3591 = vpop.f32.mrb[0].mxu0
      %v3592 = vadd.f32 0.0, %v3591
      %v3593 = vpop.f32.mrb[0].mxu0
      %v3594 = vpop.f32.mrb[0].mxu0
      %v3595 = vadd.f32 0.0, %v3594
      %v3596 = vpop.f32.mrb[0].mxu0
      %3597 = vdwg.mxu0
      %v3630 = vunpack.c.l.b16 %v2857
      %v3631 = vunpack.c.l.b16 %v2858
      %v3632 = vunpack.c.l.b16 %v2859
      %v3633 = vunpack.c.l.b16 %v2860
      %v3634 = vunpack.c.l.b16 %v2861
      %v3635 = vunpack.c.l.b16 %v2862
      %v3636 = vunpack.c.l.b16 %v2863
      %v3637 = vunpack.c.l.b16 %v2864
      %v3638 = vunpack.c.l.b16 %v2865
      %v3639 = vunpack.c.l.b16 %v2866
      %v3640 = vunpack.c.l.b16 %v2867
      %v3641 = vunpack.c.l.b16 %v2868
      %v3642 = vunpack.c.l.b16 %v2869
      %v3643 = vunpack.c.l.b16 %v2870
      %v3644 = vunpack.c.l.b16 %v2871
      %v3645 = vunpack.c.l.b16 %v2872
      %v3646 = vunpack.c.l.b16 %v2873
      %v3647 = vunpack.c.l.b16 %v2874
      %v3648 = vunpack.c.l.b16 %v2875
      %v3649 = vunpack.c.l.b16 %v2876
      %v3650 = vunpack.c.l.b16 %v2877
      %v3651 = vunpack.c.l.b16 %v2878
      %v3652 = vunpack.c.l.b16 %v2879
      %v3653 = vunpack.c.l.b16 %v2880
      %v3654 = vunpack.c.l.b16 %v2881
      %v3655 = vunpack.c.l.b16 %v2882
      %v3656 = vunpack.c.l.b16 %v2883
      %v3657 = vunpack.c.l.b16 %v2884
      %v3658 = vunpack.c.l.b16 %v2885
      %v3659 = vunpack.c.l.b16 %v2886
      %v3660 = vunpack.c.l.b16 %v2887
      %v3661 = vunpack.c.l.b16 %v2888
      %v3662 = vpack.c.b16 %v3631, %v3630
      %v3663 = vpack.c.b16 %v3633, %v3632
      %v3664 = vpack.c.b16 %v3635, %v3634
      %v3665 = vpack.c.b16 %v3637, %v3636
      %v3666 = vpack.c.b16 %v3639, %v3638
      %v3667 = vpack.c.b16 %v3641, %v3640
      %v3668 = vpack.c.b16 %v3643, %v3642
      %v3669 = vpack.c.b16 %v3645, %v3644
      %v3670 = vpack.c.b16 %v3647, %v3646
      %v3671 = vpack.c.b16 %v3649, %v3648
      %v3672 = vpack.c.b16 %v3651, %v3650
      %v3673 = vpack.c.b16 %v3653, %v3652
      %v3674 = vpack.c.b16 %v3655, %v3654
      %v3675 = vpack.c.b16 %v3657, %v3656
      %v3676 = vpack.c.b16 %v3659, %v3658
      %v3677 = vpack.c.b16 %v3661, %v3660
      %v3710 = vunpack.c.l.b16 %v2889
      %v3711 = vunpack.c.l.b16 %v2890
      %v3712 = vunpack.c.l.b16 %v2891
      %v3713 = vunpack.c.l.b16 %v2892
      %v3714 = vunpack.c.l.b16 %v2893
      %v3715 = vunpack.c.l.b16 %v2894
      %v3716 = vunpack.c.l.b16 %v2895
      %v3717 = vunpack.c.l.b16 %v2896
      %v3718 = vunpack.c.l.b16 %v2897
      %v3719 = vunpack.c.l.b16 %v2898
      %v3720 = vunpack.c.l.b16 %v2899
      %v3721 = vunpack.c.l.b16 %v2900
      %v3722 = vunpack.c.l.b16 %v2901
      %v3723 = vunpack.c.l.b16 %v2902
      %v3724 = vunpack.c.l.b16 %v2903
      %v3725 = vunpack.c.l.b16 %v2904
      %v3726 = vpack.c.b16 %v3711, %v3710
      %v3727 = vpack.c.b16 %v3713, %v3712
      %v3728 = vpack.c.b16 %v3715, %v3714
      %v3729 = vpack.c.b16 %v3717, %v3716
      %v3730 = vpack.c.b16 %v3719, %v3718
      %v3731 = vpack.c.b16 %v3721, %v3720
      %v3732 = vpack.c.b16 %v3723, %v3722
      %v3733 = vpack.c.b16 %v3725, %v3724
      %3742 = vmatprep.subr.bf16.mxu0 0
      %3743 = vmatpush1.bf16.msra.mxu0 %v3726
      %3744 = vmatprep.subr.bf16.mxu0 0
      %3745 = vmatpush1.bf16.msra.mxu0 %v3727
      %3746 = vmatprep.subr.bf16.mxu0 0
      %3747 = vmatpush1.bf16.msra.mxu0 %v3728
      %3748 = vmatprep.subr.bf16.mxu0 0
      %3749 = vmatpush1.bf16.msra.mxu0 %v3729
      %3750 = vmatprep.subr.bf16.mxu0 0
      %3751 = vmatpush1.bf16.msra.mxu0 %v3730
      %3752 = vmatprep.subr.bf16.mxu0 0
      %3753 = vmatpush1.bf16.msra.mxu0 %v3731
      %3754 = vmatprep.subr.bf16.mxu0 0
      %3755 = vmatpush1.bf16.msra.mxu0 %v3732
      %3756 = vmatprep.subr.bf16.mxu0 0
      %3757 = vmatpush1.bf16.msra.mxu0 %v3733
      %3758 = vmatprep.subr.bf16.mxu0 0
      %3759 = vmatpush1.bf16.msra.mxu0 0
      %3760 = vmatprep.subr.bf16.mxu0 0
      %3761 = vmatpush1.bf16.msra.mxu0 0
      %3762 = vmatprep.subr.bf16.mxu0 0
      %3763 = vmatpush1.bf16.msra.mxu0 0
      %3764 = vmatprep.subr.bf16.mxu0 0
      %3765 = vmatpush1.bf16.msra.mxu0 0
      %3766 = vmatprep.subr.bf16.mxu0 0
      %3767 = vmatpush1.bf16.msra.mxu0 0
      %3768 = vmatprep.subr.bf16.mxu0 0
      %3769 = vmatpush1.bf16.msra.mxu0 0
      %3770 = vmatprep.subr.bf16.mxu0 0
      %3771 = vmatpush1.bf16.msra.mxu0 0
      %3772 = vmatprep.subr.bf16.mxu0 0
      %3773 = vmatpush1.bf16.msra.mxu0 0
      %3774 = vmatprep.mubr.bf16.mxu0 0
      %3775 = vmatmul.mubr.bf16.gmra.mrb[0].mxu0 %v3662
      %v3776 = vpop.f32.mrb[0].mxu0
      %v3777 = vadd.f32 %v3472, %v3776
      %v3778 = vpop.f32.mrb[0].mxu0
      %v3779 = vpop.f32.mrb[0].mxu0
      %v3780 = vadd.f32 %v3475, %v3779
      %v3781 = vpop.f32.mrb[0].mxu0
      %3782 = vmatprep.mubr.bf16.mxu0 0
      %3783 = vmatmul.mubr.bf16.gmra.mrb[0].mxu0 %v3663
      %v3784 = vpop.f32.mrb[0].mxu0
      %v3785 = vadd.f32 %v3480, %v3784
      %v3786 = vpop.f32.mrb[0].mxu0
      %v3787 = vpop.f32.mrb[0].mxu0
      %v3788 = vadd.f32 %v3483, %v3787
      %v3789 = vpop.f32.mrb[0].mxu0
      %3790 = vmatprep.mubr.bf16.mxu0 0
      %3791 = vmatmul.mubr.bf16.gmra.mrb[0].mxu0 %v3664
      %v3792 = vpop.f32.mrb[0].mxu0
      %v3793 = vadd.f32 %v3488, %v3792
      %v3794 = vpop.f32.mrb[0].mxu0
      %v3795 = vpop.f32.mrb[0].mxu0
      %v3796 = vadd.f32 %v3491, %v3795
      %v3797 = vpop.f32.mrb[0].mxu0
      %3798 = vmatprep.mubr.bf16.mxu0 0
      %3799 = vmatmul.mubr.bf16.gmra.mrb[0].mxu0 %v3665
      %v3800 = vpop.f32.mrb[0].mxu0
      %v3801 = vadd.f32 %v3496, %v3800
      %v3802 = vpop.f32.mrb[0].mxu0
      %v3803 = vpop.f32.mrb[0].mxu0
      %v3804 = vadd.f32 %v3499, %v3803
      %v3805 = vpop.f32.mrb[0].mxu0
      %3806 = vmatprep.mubr.bf16.mxu0 0
      %3807 = vmatmul.mubr.bf16.gmra.mrb[0].mxu0 %v3666
      %v3808 = vpop.f32.mrb[0].mxu0
      %v3809 = vadd.f32 %v3504, %v3808
      %v3810 = vpop.f32.mrb[0].mxu0
      %v3811 = vpop.f32.mrb[0].mxu0
      %v3812 = vadd.f32 %v3507, %v3811
      %v3813 = vpop.f32.mrb[0].mxu0
      %3814 = vmatprep.mubr.bf16.mxu0 0
      %3815 = vmatmul.mubr.bf16.gmra.mrb[0].mxu0 %v3667
      %v3816 = vpop.f32.mrb[0].mxu0
      %v3817 = vadd.f32 %v3512, %v3816
      %v3818 = vpop.f32.mrb[0].mxu0
      %v3819 = vpop.f32.mrb[0].mxu0
      %v3820 = vadd.f32 %v3515, %v3819
      %v3821 = vpop.f32.mrb[0].mxu0
      %3822 = vmatprep.mubr.bf16.mxu0 0
      %3823 = vmatmul.mubr.bf16.gmra.mrb[0].mxu0 %v3668
      %v3824 = vpop.f32.mrb[0].mxu0
      %v3825 = vadd.f32 %v3520, %v3824
      %v3826 = vpop.f32.mrb[0].mxu0
      %v3827 = vpop.f32.mrb[0].mxu0
      %v3828 = vadd.f32 %v3523, %v3827
      %v3829 = vpop.f32.mrb[0].mxu0
      %3830 = vmatprep.mubr.bf16.mxu0 0
      %3831 = vmatmul.mubr.bf16.gmra.mrb[0].mxu0 %v3669
      %v3832 = vpop.f32.mrb[0].mxu0
      %v3833 = vadd.f32 %v3528, %v3832
      %v3834 = vpop.f32.mrb[0].mxu0
      %v3835 = vpop.f32.mrb[0].mxu0
      %v3836 = vadd.f32 %v3531, %v3835
      %v3837 = vpop.f32.mrb[0].mxu0
      %3838 = vmatprep.mubr.bf16.mxu0 0
      %3839 = vmatmul.mubr.bf16.gmra.mrb[0].mxu0 %v3670
      %v3840 = vpop.f32.mrb[0].mxu0
      %v3841 = vadd.f32 %v3536, %v3840
      %v3842 = vpop.f32.mrb[0].mxu0
      %v3843 = vpop.f32.mrb[0].mxu0
      %v3844 = vadd.f32 %v3539, %v3843
      %v3845 = vpop.f32.mrb[0].mxu0
      %3846 = vmatprep.mubr.bf16.mxu0 0
      %3847 = vmatmul.mubr.bf16.gmra.mrb[0].mxu0 %v3671
      %v3848 = vpop.f32.mrb[0].mxu0
      %v3849 = vadd.f32 %v3544, %v3848
      %v3850 = vpop.f32.mrb[0].mxu0
      %v3851 = vpop.f32.mrb[0].mxu0
      %v3852 = vadd.f32 %v3547, %v3851
      %v3853 = vpop.f32.mrb[0].mxu0
      %3854 = vmatprep.mubr.bf16.mxu0 0
      %3855 = vmatmul.mubr.bf16.gmra.mrb[0].mxu0 %v3672
      %v3856 = vpop.f32.mrb[0].mxu0
      %v3857 = vadd.f32 %v3552, %v3856
      %v3858 = vpop.f32.mrb[0].mxu0
      %v3859 = vpop.f32.mrb[0].mxu0
      %v3860 = vadd.f32 %v3555, %v3859
      %v3861 = vpop.f32.mrb[0].mxu0
      %3862 = vmatprep.mubr.bf16.mxu0 0
      %3863 = vmatmul.mubr.bf16.gmra.mrb[0].mxu0 %v3673
      %v3864 = vpop.f32.mrb[0].mxu0
      %v3865 = vadd.f32 %v3560, %v3864
      %v3866 = vpop.f32.mrb[0].mxu0
      %v3867 = vpop.f32.mrb[0].mxu0
      %v3868 = vadd.f32 %v3563, %v3867
      %v3869 = vpop.f32.mrb[0].mxu0
      %3870 = vmatprep.mubr.bf16.mxu0 0
      %3871 = vmatmul.mubr.bf16.gmra.mrb[0].mxu0 %v3674
      %v3872 = vpop.f32.mrb[0].mxu0
      %v3873 = vadd.f32 %v3568, %v3872
      %v3874 = vpop.f32.mrb[0].mxu0
      %v3875 = vpop.f32.mrb[0].mxu0
      %v3876 = vadd.f32 %v3571, %v3875
      %v3877 = vpop.f32.mrb[0].mxu0
      %3878 = vmatprep.mubr.bf16.mxu0 0
      %3879 = vmatmul.mubr.bf16.gmra.mrb[0].mxu0 %v3675
      %v3880 = vpop.f32.mrb[0].mxu0
      %v3881 = vadd.f32 %v3576, %v3880
      %v3882 = vpop.f32.mrb[0].mxu0
      %v3883 = vpop.f32.mrb[0].mxu0
      %v3884 = vadd.f32 %v3579, %v3883
      %v3885 = vpop.f32.mrb[0].mxu0
      %3886 = vmatprep.mubr.bf16.mxu0 0
      %3887 = vmatmul.mubr.bf16.gmra.mrb[0].mxu0 %v3676
      %v3888 = vpop.f32.mrb[0].mxu0
      %v3889 = vadd.f32 %v3584, %v3888
      %v3890 = vpop.f32.mrb[0].mxu0
      %v3891 = vpop.f32.mrb[0].mxu0
      %v3892 = vadd.f32 %v3587, %v3891
      %v3893 = vpop.f32.mrb[0].mxu0
      %3894 = vmatprep.mubr.bf16.mxu0 0
      %3895 = vmatmul.mubr.bf16.gmra.mrb[0].mxu0 %v3677
      %v3896 = vpop.f32.mrb[0].mxu0
      %v3897 = vadd.f32 %v3592, %v3896
      %v3898 = vpop.f32.mrb[0].mxu0
      %v3899 = vpop.f32.mrb[0].mxu0
      %v3900 = vadd.f32 %v3595, %v3899
      %v3901 = vpop.f32.mrb[0].mxu0
      %3902 = vdwg.mxu0
      %v3903 = vld [vmem:[#allocation2] sm:$0xe]
      %v3904 = vld [vmem:[#allocation2 + $0xc] sm:$0xe]
      %v3905 = vld [vmem:[#allocation2 + $0x18] sm:$0xe]
      %v3906 = vld [vmem:[#allocation2 + $0x24] sm:$0xe]
      %v3907 = vld [vmem:[#allocation2 + $0x30] sm:$0xe]
      %v3908 = vld [vmem:[#allocation2 + $0x3c] sm:$0xe]
      %v3909 = vld [vmem:[#allocation2 + $0x48] sm:$0xe]
      %v3910 = vld [vmem:[#allocation2 + $0x54] sm:$0xe]
      %v3911 = vld [vmem:[#allocation2 + $0x60] sm:$0xe]
      %v3912 = vld [vmem:[#allocation2 + $0x6c] sm:$0xe]
      %v3913 = vld [vmem:[#allocation2 + $0x78] sm:$0xe]
      %v3914 = vld [vmem:[#allocation2 + $0x84] sm:$0xe]
      %v3915 = vld [vmem:[#allocation2 + $0x90] sm:$0xe]
      %v3916 = vld [vmem:[#allocation2 + $0x9c] sm:$0xe]
      %v3917 = vld [vmem:[#allocation2 + $0xa8] sm:$0xe]
      %v3918 = vld [vmem:[#allocation2 + $0xb4] sm:$0xe]
      %vm3951 = vcmask 1042432
      %vm3952 = vcmask 1046532
      %vm3953 = vmor %vm3951, %vm3952
      %v3954 = vrot.slane %v3903, 5
      %v3955 = vrot.slane %v3954, 4
      %v3956 = vrot.slane %v2858, 5
      %v3957 = vsel %vm3953, %v3955, %v3956
      %v3958 = vrot.slane %v3956, 4
      %v3959 = vrot.slane %v2905, 5
      %v3960 = vsel %vm3953, %v3958, %v3959
      %v3961 = vrot.slane %v3904, 5
      %v3962 = vrot.slane %v3961, 4
      %v3963 = vrot.slane %v2860, 5
      %v3964 = vsel %vm3953, %v3962, %v3963
      %v3965 = vrot.slane %v3963, 4
      %v3966 = vrot.slane %v2906, 5
      %v3967 = vsel %vm3953, %v3965, %v3966
      %v3968 = vrot.slane %v3905, 5
      %v3969 = vrot.slane %v3968, 4
      %v3970 = vrot.slane %v2862, 5
      %v3971 = vsel %vm3953, %v3969, %v3970
      %v3972 = vrot.slane %v3970, 4
      %v3973 = vrot.slane %v2907, 5
      %v3974 = vsel %vm3953, %v3972, %v3973
      %v3975 = vrot.slane %v3906, 5
      %v3976 = vrot.slane %v3975, 4
      %v3977 = vrot.slane %v2864, 5
      %v3978 = vsel %vm3953, %v3976, %v3977
      %v3979 = vrot.slane %v3977, 4
      %v3980 = vrot.slane %v2908, 5
      %v3981 = vsel %vm3953, %v3979, %v3980
      %v3982 = vrot.slane %v3907, 5
      %v3983 = vrot.slane %v3982, 4
      %v3984 = vrot.slane %v2866, 5
      %v3985 = vsel %vm3953, %v3983, %v3984
      %v3986 = vrot.slane %v3984, 4
      %v3987 = vrot.slane %v2909, 5
      %v3988 = vsel %vm3953, %v3986, %v3987
      %v3989 = vrot.slane %v3908, 5
      %v3990 = vrot.slane %v3989, 4
      %v3991 = vrot.slane %v2868, 5
      %v3992 = vsel %vm3953, %v3990, %v3991
      %v3993 = vrot.slane %v3991, 4
      %v3994 = vrot.slane %v2910, 5
      %v3995 = vsel %vm3953, %v3993, %v3994
      %v3996 = vrot.slane %v3909, 5
      %v3997 = vrot.slane %v3996, 4
      %v3998 = vrot.slane %v2870, 5
      %v3999 = vsel %vm3953, %v3997, %v3998
      %v4000 = vrot.slane %v3998, 4
      %v4001 = vrot.slane %v2911, 5
      %v4002 = vsel %vm3953, %v4000, %v4001
      %v4003 = vrot.slane %v3910, 5
      %v4004 = vrot.slane %v4003, 4
      %v4005 = vrot.slane %v2872, 5
      %v4006 = vsel %vm3953, %v4004, %v4005
      %v4007 = vrot.slane %v4005, 4
      %v4008 = vrot.slane %v2912, 5
      %v4009 = vsel %vm3953, %v4007, %v4008
      %v4010 = vrot.slane %v3911, 5
      %v4011 = vrot.slane %v4010, 4
      %v4012 = vrot.slane %v2874, 5
      %v4013 = vsel %vm3953, %v4011, %v4012
      %v4014 = vrot.slane %v4012, 4
      %v4015 = vrot.slane %v2913, 5
      %v4016 = vsel %vm3953, %v4014, %v4015
      %v4017 = vrot.slane %v3912, 5
      %v4018 = vrot.slane %v4017, 4
      %v4019 = vrot.slane %v2876, 5
      %v4020 = vsel %vm3953, %v4018, %v4019
      %v4021 = vrot.slane %v4019, 4
      %v4022 = vrot.slane %v2914, 5
      %v4023 = vsel %vm3953, %v4021, %v4022
      %v4024 = vrot.slane %v3913, 5
      %v4025 = vrot.slane %v4024, 4
      %v4026 = vrot.slane %v2878, 5
      %v4027 = vsel %vm3953, %v4025, %v4026
      %v4028 = vrot.slane %v4026, 4
      %v4029 = vrot.slane %v2915, 5
      %v4030 = vsel %vm3953, %v4028, %v4029
      %v4031 = vrot.slane %v3914, 5
      %v4032 = vrot.slane %v4031, 4
      %v4033 = vrot.slane %v2880, 5
      %v4034 = vsel %vm3953, %v4032, %v4033
      %v4035 = vrot.slane %v4033, 4
      %v4036 = vrot.slane %v2916, 5
      %v4037 = vsel %vm3953, %v4035, %v4036
      %v4038 = vrot.slane %v3915, 5
      %v4039 = vrot.slane %v4038, 4
      %v4040 = vrot.slane %v2882, 5
      %v4041 = vsel %vm3953, %v4039, %v4040
      %v4042 = vrot.slane %v4040, 4
      %v4043 = vrot.slane %v2917, 5
      %v4044 = vsel %vm3953, %v4042, %v4043
      %v4045 = vrot.slane %v3916, 5
      %v4046 = vrot.slane %v4045, 4
      %v4047 = vrot.slane %v2884, 5
      %v4048 = vsel %vm3953, %v4046, %v4047
      %v4049 = vrot.slane %v4047, 4
      %v4050 = vrot.slane %v2918, 5
      %v4051 = vsel %vm3953, %v4049, %v4050
      %v4052 = vrot.slane %v3917, 5
      %v4053 = vrot.slane %v4052, 4
      %v4054 = vrot.slane %v2886, 5
      %v4055 = vsel %vm3953, %v4053, %v4054
      %v4056 = vrot.slane %v4054, 4
      %v4057 = vrot.slane %v2919, 5
      %v4058 = vsel %vm3953, %v4056, %v4057
      %v4059 = vrot.slane %v3918, 5
      %v4060 = vrot.slane %v4059, 4
      %v4061 = vrot.slane %v2888, 5
      %v4062 = vsel %vm3953, %v4060, %v4061
      %v4063 = vrot.slane %v4061, 4
      %v4064 = vrot.slane %v2920, 5
      %v4065 = vsel %vm3953, %v4063, %v4064
      %s4066 = scalar_lea.vmem %s3, 128
      %v4067 = vld [vmem:[%s4066] sm:$0xf]
      %v4068 = vld [vmem:[%s4066 + $0x4] sm:$0xf]
      %v4069 = vld [vmem:[%s4066 + $0x8] sm:$0xf]
      %v4070 = vld [vmem:[%s4066 + $0xc] sm:$0xf]
      %v4071 = vld [vmem:[%s4066 + $0x10] sm:$0xf]
      %v4072 = vld [vmem:[%s4066 + $0x14] sm:$0xf]
      %v4073 = vld [vmem:[%s4066 + $0x18] sm:$0xf]
      %v4074 = vld [vmem:[%s4066 + $0x1c] sm:$0xf]
      %v4075 = vld [vmem:[%s4066 + $0x20] sm:$0xf]
      %v4076 = vld [vmem:[%s4066 + $0x24] sm:$0xf]
      %v4077 = vld [vmem:[%s4066 + $0x28] sm:$0xf]
      %v4078 = vld [vmem:[%s4066 + $0x2c] sm:$0xf]
      %v4079 = vld [vmem:[%s4066 + $0x30] sm:$0xf]
      %v4080 = vld [vmem:[%s4066 + $0x34] sm:$0xf]
      %v4081 = vld [vmem:[%s4066 + $0x38] sm:$0xf]
      %v4082 = vld [vmem:[%s4066 + $0x3c] sm:$0xf]
      %v4083 = vunpack.c.l.b16 %v3957
      %v4084 = vunpack.c.l.b16 %v3960
      %v4085 = vunpack.c.l.b16 %v3964
      %v4086 = vunpack.c.l.b16 %v3967
      %v4087 = vunpack.c.l.b16 %v3971
      %v4088 = vunpack.c.l.b16 %v3974
      %v4089 = vunpack.c.l.b16 %v3978
      %v4090 = vunpack.c.l.b16 %v3981
      %v4091 = vunpack.c.l.b16 %v3985
      %v4092 = vunpack.c.l.b16 %v3988
      %v4093 = vunpack.c.l.b16 %v3992
      %v4094 = vunpack.c.l.b16 %v3995
      %v4095 = vunpack.c.l.b16 %v3999
      %v4096 = vunpack.c.l.b16 %v4002
      %v4097 = vunpack.c.l.b16 %v4006
      %v4098 = vunpack.c.l.b16 %v4009
      %v4099 = vunpack.c.l.b16 %v4013
      %v4100 = vunpack.c.l.b16 %v4016
      %v4101 = vunpack.c.l.b16 %v4020
      %v4102 = vunpack.c.l.b16 %v4023
      %v4103 = vunpack.c.l.b16 %v4027
      %v4104 = vunpack.c.l.b16 %v4030
      %v4105 = vunpack.c.l.b16 %v4034
      %v4106 = vunpack.c.l.b16 %v4037
      %v4107 = vunpack.c.l.b16 %v4041
      %v4108 = vunpack.c.l.b16 %v4044
      %v4109 = vunpack.c.l.b16 %v4048
      %v4110 = vunpack.c.l.b16 %v4051
      %v4111 = vunpack.c.l.b16 %v4055
      %v4112 = vunpack.c.l.b16 %v4058
      %v4113 = vunpack.c.l.b16 %v4062
      %v4114 = vunpack.c.l.b16 %v4065
      %v4115 = vpack.c.b16 %v4084, %v4083
      %v4116 = vpack.c.b16 %v4086, %v4085
      %v4117 = vpack.c.b16 %v4088, %v4087
      %v4118 = vpack.c.b16 %v4090, %v4089
      %v4119 = vpack.c.b16 %v4092, %v4091
      %v4120 = vpack.c.b16 %v4094, %v4093
      %v4121 = vpack.c.b16 %v4096, %v4095
      %v4122 = vpack.c.b16 %v4098, %v4097
      %v4123 = vpack.c.b16 %v4100, %v4099
      %v4124 = vpack.c.b16 %v4102, %v4101
      %v4125 = vpack.c.b16 %v4104, %v4103
      %v4126 = vpack.c.b16 %v4106, %v4105
      %v4127 = vpack.c.b16 %v4108, %v4107
      %v4128 = vpack.c.b16 %v4110, %v4109
      %v4129 = vpack.c.b16 %v4112, %v4111
      %v4130 = vpack.c.b16 %v4114, %v4113
      %v4163 = vunpack.c.l.b16 %v4067
      %v4164 = vunpack.c.l.b16 %v4068
      %v4165 = vunpack.c.l.b16 %v4069
      %v4166 = vunpack.c.l.b16 %v4070
      %v4167 = vunpack.c.l.b16 %v4071
      %v4168 = vunpack.c.l.b16 %v4072
      %v4169 = vunpack.c.l.b16 %v4073
      %v4170 = vunpack.c.l.b16 %v4074
      %v4171 = vunpack.c.l.b16 %v4075
      %v4172 = vunpack.c.l.b16 %v4076
      %v4173 = vunpack.c.l.b16 %v4077
      %v4174 = vunpack.c.l.b16 %v4078
      %v4175 = vunpack.c.l.b16 %v4079
      %v4176 = vunpack.c.l.b16 %v4080
      %v4177 = vunpack.c.l.b16 %v4081
      %v4178 = vunpack.c.l.b16 %v4082
      %v4179 = vpack.c.b16 %v4164, %v4163
      %v4180 = vpack.c.b16 %v4166, %v4165
      %v4181 = vpack.c.b16 %v4168, %v4167
      %v4182 = vpack.c.b16 %v4170, %v4169
      %v4183 = vpack.c.b16 %v4172, %v4171
      %v4184 = vpack.c.b16 %v4174, %v4173
      %v4185 = vpack.c.b16 %v4176, %v4175
      %v4186 = vpack.c.b16 %v4178, %v4177
      %4195 = vmatprep.subr.bf16.mxu0 0
      %4196 = vmatpush1.bf16.msra.mxu0 %v4179
      %4197 = vmatprep.subr.bf16.mxu0 0
      %4198 = vmatpush1.bf16.msra.mxu0 %v4180
      %4199 = vmatprep.subr.bf16.mxu0 0
      %4200 = vmatpush1.bf16.msra.mxu0 %v4181
      %4201 = vmatprep.subr.bf16.mxu0 0
      %4202 = vmatpush1.bf16.msra.mxu0 %v4182
      %4203 = vmatprep.subr.bf16.mxu0 0
      %4204 = vmatpush1.bf16.msra.mxu0 %v4183
      %4205 = vmatprep.subr.bf16.mxu0 0
      %4206 = vmatpush1.bf16.msra.mxu0 %v4184
      %4207 = vmatprep.subr.bf16.mxu0 0
      %4208 = vmatpush1.bf16.msra.mxu0 %v4185
      %4209 = vmatprep.subr.bf16.mxu0 0
      %4210 = vmatpush1.bf16.msra.mxu0 %v4186
      %4211 = vmatprep.subr.bf16.mxu0 0
      %4212 = vmatpush1.bf16.msra.mxu0 0
      %4213 = vmatprep.subr.bf16.mxu0 0
      %4214 = vmatpush1.bf16.msra.mxu0 0
      %4215 = vmatprep.subr.bf16.mxu0 0
      %4216 = vmatpush1.bf16.msra.mxu0 0
      %4217 = vmatprep.subr.bf16.mxu0 0
      %4218 = vmatpush1.bf16.msra.mxu0 0
      %4219 = vmatprep.subr.bf16.mxu0 0
      %4220 = vmatpush1.bf16.msra.mxu0 0
      %4221 = vmatprep.subr.bf16.mxu0 0
      %4222 = vmatpush1.bf16.msra.mxu0 0
      %4223 = vmatprep.subr.bf16.mxu0 0
      %4224 = vmatpush1.bf16.msra.mxu0 0
      %4225 = vmatprep.subr.bf16.mxu0 0
      %4226 = vmatpush1.bf16.msra.mxu0 0
      %4227 = vmatprep.mubr.bf16.mxu0 0
      %4228 = vmatmul.mubr.bf16.gmra.mrb[0].mxu0 %v4115
      %v4229 = vpop.f32.mrb[0].mxu0
      %v4230 = vadd.f32 0.0, %v4229
      %v4231 = vpop.f32.mrb[0].mxu0
      %v4232 = vpop.f32.mrb[0].mxu0
      %v4233 = vadd.f32 0.0, %v4232
      %v4234 = vpop.f32.mrb[0].mxu0
      %4235 = vmatprep.mubr.bf16.mxu0 0
      %4236 = vmatmul.mubr.bf16.gmra.mrb[0].mxu0 %v4116
      %v4237 = vpop.f32.mrb[0].mxu0
      %v4238 = vadd.f32 0.0, %v4237
      %v4239 = vpop.f32.mrb[0].mxu0
      %v4240 = vpop.f32.mrb[0].mxu0
      %v4241 = vadd.f32 0.0, %v4240
      %v4242 = vpop.f32.mrb[0].mxu0
      %4243 = vmatprep.mubr.bf16.mxu0 0
      %4244 = vmatmul.mubr.bf16.gmra.mrb[0].mxu0 %v4117
      %v4245 = vpop.f32.mrb[0].mxu0
      %v4246 = vadd.f32 0.0, %v4245
      %v4247 = vpop.f32.mrb[0].mxu0
      %v4248 = vpop.f32.mrb[0].mxu0
      %v4249 = vadd.f32 0.0, %v4248
      %v4250 = vpop.f32.mrb[0].mxu0
      %4251 = vmatprep.mubr.bf16.mxu0 0
      %4252 = vmatmul.mubr.bf16.gmra.mrb[0].mxu0 %v4118
      %v4253 = vpop.f32.mrb[0].mxu0
      %v4254 = vadd.f32 0.0, %v4253
      %v4255 = vpop.f32.mrb[0].mxu0
      %v4256 = vpop.f32.mrb[0].mxu0
      %v4257 = vadd.f32 0.0, %v4256
      %v4258 = vpop.f32.mrb[0].mxu0
      %4259 = vmatprep.mubr.bf16.mxu0 0
      %4260 = vmatmul.mubr.bf16.gmra.mrb[0].mxu0 %v4119
      %v4261 = vpop.f32.mrb[0].mxu0
      %v4262 = vadd.f32 0.0, %v4261
      %v4263 = vpop.f32.mrb[0].mxu0
      %v4264 = vpop.f32.mrb[0].mxu0
      %v4265 = vadd.f32 0.0, %v4264
      %v4266 = vpop.f32.mrb[0].mxu0
      %4267 = vmatprep.mubr.bf16.mxu0 0
      %4268 = vmatmul.mubr.bf16.gmra.mrb[0].mxu0 %v4120
      %v4269 = vpop.f32.mrb[0].mxu0
      %v4270 = vadd.f32 0.0, %v4269
      %v4271 = vpop.f32.mrb[0].mxu0
      %v4272 = vpop.f32.mrb[0].mxu0
      %v4273 = vadd.f32 0.0, %v4272
      %v4274 = vpop.f32.mrb[0].mxu0
      %4275 = vmatprep.mubr.bf16.mxu0 0
      %4276 = vmatmul.mubr.bf16.gmra.mrb[0].mxu0 %v4121
      %v4277 = vpop.f32.mrb[0].mxu0
      %v4278 = vadd.f32 0.0, %v4277
      %v4279 = vpop.f32.mrb[0].mxu0
      %v4280 = vpop.f32.mrb[0].mxu0
      %v4281 = vadd.f32 0.0, %v4280
      %v4282 = vpop.f32.mrb[0].mxu0
      %4283 = vmatprep.mubr.bf16.mxu0 0
      %4284 = vmatmul.mubr.bf16.gmra.mrb[0].mxu0 %v4122
      %v4285 = vpop.f32.mrb[0].mxu0
      %v4286 = vadd.f32 0.0, %v4285
      %v4287 = vpop.f32.mrb[0].mxu0
      %v4288 = vpop.f32.mrb[0].mxu0
      %v4289 = vadd.f32 0.0, %v4288
      %v4290 = vpop.f32.mrb[0].mxu0
      %4291 = vmatprep.mubr.bf16.mxu0 0
      %4292 = vmatmul.mubr.bf16.gmra.mrb[0].mxu0 %v4123
      %v4293 = vpop.f32.mrb[0].mxu0
      %v4294 = vadd.f32 0.0, %v4293
      %v4295 = vpop.f32.mrb[0].mxu0
      %v4296 = vpop.f32.mrb[0].mxu0
      %v4297 = vadd.f32 0.0, %v4296
      %v4298 = vpop.f32.mrb[0].mxu0
      %4299 = vmatprep.mubr.bf16.mxu0 0
      %4300 = vmatmul.mubr.bf16.gmra.mrb[0].mxu0 %v4124
      %v4301 = vpop.f32.mrb[0].mxu0
      %v4302 = vadd.f32 0.0, %v4301
      %v4303 = vpop.f32.mrb[0].mxu0
      %v4304 = vpop.f32.mrb[0].mxu0
      %v4305 = vadd.f32 0.0, %v4304
      %v4306 = vpop.f32.mrb[0].mxu0
      %4307 = vmatprep.mubr.bf16.mxu0 0
      %4308 = vmatmul.mubr.bf16.gmra.mrb[0].mxu0 %v4125
      %v4309 = vpop.f32.mrb[0].mxu0
      %v4310 = vadd.f32 0.0, %v4309
      %v4311 = vpop.f32.mrb[0].mxu0
      %v4312 = vpop.f32.mrb[0].mxu0
      %v4313 = vadd.f32 0.0, %v4312
      %v4314 = vpop.f32.mrb[0].mxu0
      %4315 = vmatprep.mubr.bf16.mxu0 0
      %4316 = vmatmul.mubr.bf16.gmra.mrb[0].mxu0 %v4126
      %v4317 = vpop.f32.mrb[0].mxu0
      %v4318 = vadd.f32 0.0, %v4317
      %v4319 = vpop.f32.mrb[0].mxu0
      %v4320 = vpop.f32.mrb[0].mxu0
      %v4321 = vadd.f32 0.0, %v4320
      %v4322 = vpop.f32.mrb[0].mxu0
      %4323 = vmatprep.mubr.bf16.mxu0 0
      %4324 = vmatmul.mubr.bf16.gmra.mrb[0].mxu0 %v4127
      %v4325 = vpop.f32.mrb[0].mxu0
      %v4326 = vadd.f32 0.0, %v4325
      %v4327 = vpop.f32.mrb[0].mxu0
      %v4328 = vpop.f32.mrb[0].mxu0
      %v4329 = vadd.f32 0.0, %v4328
      %v4330 = vpop.f32.mrb[0].mxu0
      %4331 = vmatprep.mubr.bf16.mxu0 0
      %4332 = vmatmul.mubr.bf16.gmra.mrb[0].mxu0 %v4128
      %v4333 = vpop.f32.mrb[0].mxu0
      %v4334 = vadd.f32 0.0, %v4333
      %v4335 = vpop.f32.mrb[0].mxu0
      %v4336 = vpop.f32.mrb[0].mxu0
      %v4337 = vadd.f32 0.0, %v4336
      %v4338 = vpop.f32.mrb[0].mxu0
      %4339 = vmatprep.mubr.bf16.mxu0 0
      %4340 = vmatmul.mubr.bf16.gmra.mrb[0].mxu0 %v4129
      %v4341 = vpop.f32.mrb[0].mxu0
      %v4342 = vadd.f32 0.0, %v4341
      %v4343 = vpop.f32.mrb[0].mxu0
      %v4344 = vpop.f32.mrb[0].mxu0
      %v4345 = vadd.f32 0.0, %v4344
      %v4346 = vpop.f32.mrb[0].mxu0
      %4347 = vmatprep.mubr.bf16.mxu0 0
      %4348 = vmatmul.mubr.bf16.gmra.mrb[0].mxu0 %v4130
      %v4349 = vpop.f32.mrb[0].mxu0
      %v4350 = vadd.f32 0.0, %v4349
      %v4351 = vpop.f32.mrb[0].mxu0
      %v4352 = vpop.f32.mrb[0].mxu0
      %v4353 = vadd.f32 0.0, %v4352
      %v4354 = vpop.f32.mrb[0].mxu0
      %4355 = vdwg.mxu0
      %v4356 = vadd.f32 %v3777, %v4230
      %v4357 = vadd.f32 %v3780, %v4233
      %v4358 = vadd.f32 %v3785, %v4238
      %v4359 = vadd.f32 %v3788, %v4241
      %v4360 = vadd.f32 %v3793, %v4246
      %v4361 = vadd.f32 %v3796, %v4249
      %v4362 = vadd.f32 %v3801, %v4254
      %v4363 = vadd.f32 %v3804, %v4257
      %v4364 = vadd.f32 %v3809, %v4262
      %v4365 = vadd.f32 %v3812, %v4265
      %v4366 = vadd.f32 %v3817, %v4270
      %v4367 = vadd.f32 %v3820, %v4273
      %v4368 = vadd.f32 %v3825, %v4278
      %v4369 = vadd.f32 %v3828, %v4281
      %v4370 = vadd.f32 %v3833, %v4286
      %v4371 = vadd.f32 %v3836, %v4289
      %v4372 = vadd.f32 %v3841, %v4294
      %v4373 = vadd.f32 %v3844, %v4297
      %v4374 = vadd.f32 %v3849, %v4302
      %v4375 = vadd.f32 %v3852, %v4305
      %v4376 = vadd.f32 %v3857, %v4310
      %v4377 = vadd.f32 %v3860, %v4313
      %v4378 = vadd.f32 %v3865, %v4318
      %v4379 = vadd.f32 %v3868, %v4321
      %v4380 = vadd.f32 %v3873, %v4326
      %v4381 = vadd.f32 %v3876, %v4329
      %v4382 = vadd.f32 %v3881, %v4334
      %v4383 = vadd.f32 %v3884, %v4337
      %v4384 = vadd.f32 %v3889, %v4342
      %v4385 = vadd.f32 %v3892, %v4345
      %v4386 = vadd.f32 %v3897, %v4350
      %v4387 = vadd.f32 %v3900, %v4353
      %v4388 = vld [vmem:[%s2742] sm:$0xf]
      %v4389 = vld [vmem:[%s2742 + $0x4] sm:$0xf]
      %v4390 = vld [vmem:[%s2742 + $0xc] sm:$0xf]
      %v4391 = vld [vmem:[%s2742 + $0x10] sm:$0xf]
      %v4392 = vld [vmem:[%s2742 + $0x18] sm:$0xf]
      %v4393 = vld [vmem:[%s2742 + $0x1c] sm:$0xf]
      %v4394 = vld [vmem:[%s2742 + $0x24] sm:$0xf]
      %v4395 = vld [vmem:[%s2742 + $0x28] sm:$0xf]
      %v4396 = vld [vmem:[%s2742 + $0x30] sm:$0xf]
      %v4397 = vld [vmem:[%s2742 + $0x34] sm:$0xf]
      %v4398 = vld [vmem:[%s2742 + $0x3c] sm:$0xf]
      %v4399 = vld [vmem:[%s2742 + $0x40] sm:$0xf]
      %v4400 = vld [vmem:[%s2742 + $0x48] sm:$0xf]
      %v4401 = vld [vmem:[%s2742 + $0x4c] sm:$0xf]
      %v4402 = vld [vmem:[%s2742 + $0x54] sm:$0xf]
      %v4403 = vld [vmem:[%s2742 + $0x58] sm:$0xf]
      %v4404 = vld [vmem:[%s2742 + $0x60] sm:$0xf]
      %v4405 = vld [vmem:[%s2742 + $0x64] sm:$0xf]
      %v4406 = vld [vmem:[%s2742 + $0x6c] sm:$0xf]
      %v4407 = vld [vmem:[%s2742 + $0x70] sm:$0xf]
      %v4408 = vld [vmem:[%s2742 + $0x78] sm:$0xf]
      %v4409 = vld [vmem:[%s2742 + $0x7c] sm:$0xf]
      %v4410 = vld [vmem:[%s2742 + $0x84] sm:$0xf]
      %v4411 = vld [vmem:[%s2742 + $0x88] sm:$0xf]
      %v4412 = vld [vmem:[%s2742 + $0x90] sm:$0xf]
      %v4413 = vld [vmem:[%s2742 + $0x94] sm:$0xf]
      %v4414 = vld [vmem:[%s2742 + $0x9c] sm:$0xf]
      %v4415 = vld [vmem:[%s2742 + $0xa0] sm:$0xf]
      %v4416 = vld [vmem:[%s2742 + $0xa8] sm:$0xf]
      %v4417 = vld [vmem:[%s2742 + $0xac] sm:$0xf]
      %v4418 = vld [vmem:[%s2742 + $0xb4] sm:$0xf]
      %v4419 = vld [vmem:[%s2742 + $0xb8] sm:$0xf]
      %s4420 = scalar_lea.vmem %s3, 192
      %v4421 = vld [vmem:[%s4420] sm:$0xf]
      %v4422 = vld [vmem:[%s4420 + $0x4] sm:$0xf]
      %v4423 = vld [vmem:[%s4420 + $0x8] sm:$0xf]
      %v4424 = vld [vmem:[%s4420 + $0xc] sm:$0xf]
      %v4425 = vld [vmem:[%s4420 + $0x10] sm:$0xf]
      %v4426 = vld [vmem:[%s4420 + $0x14] sm:$0xf]
      %v4427 = vld [vmem:[%s4420 + $0x18] sm:$0xf]
      %v4428 = vld [vmem:[%s4420 + $0x1c] sm:$0xf]
      %v4429 = vld [vmem:[%s4420 + $0x20] sm:$0xf]
      %v4430 = vld [vmem:[%s4420 + $0x24] sm:$0xf]
      %v4431 = vld [vmem:[%s4420 + $0x28] sm:$0xf]
      %v4432 = vld [vmem:[%s4420 + $0x2c] sm:$0xf]
      %v4433 = vld [vmem:[%s4420 + $0x30] sm:$0xf]
      %v4434 = vld [vmem:[%s4420 + $0x34] sm:$0xf]
      %v4435 = vld [vmem:[%s4420 + $0x38] sm:$0xf]
      %v4436 = vld [vmem:[%s4420 + $0x3c] sm:$0xf]
      %v4469 = vunpack.c.l.b16 %v4388
      %v4470 = vunpack.c.l.b16 %v4389
      %v4471 = vunpack.c.l.b16 %v4390
      %v4472 = vunpack.c.l.b16 %v4391
      %v4473 = vunpack.c.l.b16 %v4392
      %v4474 = vunpack.c.l.b16 %v4393
      %v4475 = vunpack.c.l.b16 %v4394
      %v4476 = vunpack.c.l.b16 %v4395
      %v4477 = vunpack.c.l.b16 %v4396
      %v4478 = vunpack.c.l.b16 %v4397
      %v4479 = vunpack.c.l.b16 %v4398
      %v4480 = vunpack.c.l.b16 %v4399
      %v4481 = vunpack.c.l.b16 %v4400
      %v4482 = vunpack.c.l.b16 %v4401
      %v4483 = vunpack.c.l.b16 %v4402
      %v4484 = vunpack.c.l.b16 %v4403
      %v4485 = vunpack.c.l.b16 %v4404
      %v4486 = vunpack.c.l.b16 %v4405
      %v4487 = vunpack.c.l.b16 %v4406
      %v4488 = vunpack.c.l.b16 %v4407
      %v4489 = vunpack.c.l.b16 %v4408
      %v4490 = vunpack.c.l.b16 %v4409
      %v4491 = vunpack.c.l.b16 %v4410
      %v4492 = vunpack.c.l.b16 %v4411
      %v4493 = vunpack.c.l.b16 %v4412
      %v4494 = vunpack.c.l.b16 %v4413
      %v4495 = vunpack.c.l.b16 %v4414
      %v4496 = vunpack.c.l.b16 %v4415
      %v4497 = vunpack.c.l.b16 %v4416
      %v4498 = vunpack.c.l.b16 %v4417
      %v4499 = vunpack.c.l.b16 %v4418
      %v4500 = vunpack.c.l.b16 %v4419
      %v4501 = vpack.c.b16 %v4470, %v4469
      %v4502 = vpack.c.b16 %v4472, %v4471
      %v4503 = vpack.c.b16 %v4474, %v4473
      %v4504 = vpack.c.b16 %v4476, %v4475
      %v4505 = vpack.c.b16 %v4478, %v4477
      %v4506 = vpack.c.b16 %v4480, %v4479
      %v4507 = vpack.c.b16 %v4482, %v4481
      %v4508 = vpack.c.b16 %v4484, %v4483
      %v4509 = vpack.c.b16 %v4486, %v4485
      %v4510 = vpack.c.b16 %v4488, %v4487
      %v4511 = vpack.c.b16 %v4490, %v4489
      %v4512 = vpack.c.b16 %v4492, %v4491
      %v4513 = vpack.c.b16 %v4494, %v4493
      %v4514 = vpack.c.b16 %v4496, %v4495
      %v4515 = vpack.c.b16 %v4498, %v4497
      %v4516 = vpack.c.b16 %v4500, %v4499
      %v4549 = vunpack.c.l.b16 %v4421
      %v4550 = vunpack.c.l.b16 %v4422
      %v4551 = vunpack.c.l.b16 %v4423
      %v4552 = vunpack.c.l.b16 %v4424
      %v4553 = vunpack.c.l.b16 %v4425
      %v4554 = vunpack.c.l.b16 %v4426
      %v4555 = vunpack.c.l.b16 %v4427
      %v4556 = vunpack.c.l.b16 %v4428
      %v4557 = vunpack.c.l.b16 %v4429
      %v4558 = vunpack.c.l.b16 %v4430
      %v4559 = vunpack.c.l.b16 %v4431
      %v4560 = vunpack.c.l.b16 %v4432
      %v4561 = vunpack.c.l.b16 %v4433
      %v4562 = vunpack.c.l.b16 %v4434
      %v4563 = vunpack.c.l.b16 %v4435
      %v4564 = vunpack.c.l.b16 %v4436
      %v4565 = vpack.c.b16 %v4550, %v4549
      %v4566 = vpack.c.b16 %v4552, %v4551
      %v4567 = vpack.c.b16 %v4554, %v4553
      %v4568 = vpack.c.b16 %v4556, %v4555
      %v4569 = vpack.c.b16 %v4558, %v4557
      %v4570 = vpack.c.b16 %v4560, %v4559
      %v4571 = vpack.c.b16 %v4562, %v4561
      %v4572 = vpack.c.b16 %v4564, %v4563
      %4581 = vmatprep.subr.bf16.mxu0 0
      %4582 = vmatpush1.bf16.msra.mxu0 %v4565
      %4583 = vmatprep.subr.bf16.mxu0 0
      %4584 = vmatpush1.bf16.msra.mxu0 %v4566
      %4585 = vmatprep.subr.bf16.mxu0 0
      %4586 = vmatpush1.bf16.msra.mxu0 %v4567
      %4587 = vmatprep.subr.bf16.mxu0 0
      %4588 = vmatpush1.bf16.msra.mxu0 %v4568
      %4589 = vmatprep.subr.bf16.mxu0 0
      %4590 = vmatpush1.bf16.msra.mxu0 %v4569
      %4591 = vmatprep.subr.bf16.mxu0 0
      %4592 = vmatpush1.bf16.msra.mxu0 %v4570
      %4593 = vmatprep.subr.bf16.mxu0 0
      %4594 = vmatpush1.bf16.msra.mxu0 %v4571
      %4595 = vmatprep.subr.bf16.mxu0 0
      %4596 = vmatpush1.bf16.msra.mxu0 %v4572
      %4597 = vmatprep.subr.bf16.mxu0 0
      %4598 = vmatpush1.bf16.msra.mxu0 0
      %4599 = vmatprep.subr.bf16.mxu0 0
      %4600 = vmatpush1.bf16.msra.mxu0 0
      %4601 = vmatprep.subr.bf16.mxu0 0
      %4602 = vmatpush1.bf16.msra.mxu0 0
      %4603 = vmatprep.subr.bf16.mxu0 0
      %4604 = vmatpush1.bf16.msra.mxu0 0
      %4605 = vmatprep.subr.bf16.mxu0 0
      %4606 = vmatpush1.bf16.msra.mxu0 0
      %4607 = vmatprep.subr.bf16.mxu0 0
      %4608 = vmatpush1.bf16.msra.mxu0 0
      %4609 = vmatprep.subr.bf16.mxu0 0
      %4610 = vmatpush1.bf16.msra.mxu0 0
      %4611 = vmatprep.subr.bf16.mxu0 0
      %4612 = vmatpush1.bf16.msra.mxu0 0
      %4613 = vmatprep.mubr.bf16.mxu0 0
      %4614 = vmatmul.mubr.bf16.gmra.mrb[0].mxu0 %v4501
      %v4615 = vpop.f32.mrb[0].mxu0
      %v4616 = vadd.f32 0.0, %v4615
      %v4617 = vpop.f32.mrb[0].mxu0
      %v4618 = vpop.f32.mrb[0].mxu0
      %v4619 = vadd.f32 0.0, %v4618
      %v4620 = vpop.f32.mrb[0].mxu0
      %4621 = vmatprep.mubr.bf16.mxu0 0
      %4622 = vmatmul.mubr.bf16.gmra.mrb[0].mxu0 %v4502
      %v4623 = vpop.f32.mrb[0].mxu0
      %v4624 = vadd.f32 0.0, %v4623
      %v4625 = vpop.f32.mrb[0].mxu0
      %v4626 = vpop.f32.mrb[0].mxu0
      %v4627 = vadd.f32 0.0, %v4626
      %v4628 = vpop.f32.mrb[0].mxu0
      %4629 = vmatprep.mubr.bf16.mxu0 0
      %4630 = vmatmul.mubr.bf16.gmra.mrb[0].mxu0 %v4503
      %v4631 = vpop.f32.mrb[0].mxu0
      %v4632 = vadd.f32 0.0, %v4631
      %v4633 = vpop.f32.mrb[0].mxu0
      %v4634 = vpop.f32.mrb[0].mxu0
      %v4635 = vadd.f32 0.0, %v4634
      %v4636 = vpop.f32.mrb[0].mxu0
      %4637 = vmatprep.mubr.bf16.mxu0 0
      %4638 = vmatmul.mubr.bf16.gmra.mrb[0].mxu0 %v4504
      %v4639 = vpop.f32.mrb[0].mxu0
      %v4640 = vadd.f32 0.0, %v4639
      %v4641 = vpop.f32.mrb[0].mxu0
      %v4642 = vpop.f32.mrb[0].mxu0
      %v4643 = vadd.f32 0.0, %v4642
      %v4644 = vpop.f32.mrb[0].mxu0
      %4645 = vmatprep.mubr.bf16.mxu0 0
      %4646 = vmatmul.mubr.bf16.gmra.mrb[0].mxu0 %v4505
      %v4647 = vpop.f32.mrb[0].mxu0
      %v4648 = vadd.f32 0.0, %v4647
      %v4649 = vpop.f32.mrb[0].mxu0
      %v4650 = vpop.f32.mrb[0].mxu0
      %v4651 = vadd.f32 0.0, %v4650
      %v4652 = vpop.f32.mrb[0].mxu0
      %4653 = vmatprep.mubr.bf16.mxu0 0
      %4654 = vmatmul.mubr.bf16.gmra.mrb[0].mxu0 %v4506
      %v4655 = vpop.f32.mrb[0].mxu0
      %v4656 = vadd.f32 0.0, %v4655
      %v4657 = vpop.f32.mrb[0].mxu0
      %v4658 = vpop.f32.mrb[0].mxu0
      %v4659 = vadd.f32 0.0, %v4658
      %v4660 = vpop.f32.mrb[0].mxu0
      %4661 = vmatprep.mubr.bf16.mxu0 0
      %4662 = vmatmul.mubr.bf16.gmra.mrb[0].mxu0 %v4507
      %v4663 = vpop.f32.mrb[0].mxu0
      %v4664 = vadd.f32 0.0, %v4663
      %v4665 = vpop.f32.mrb[0].mxu0
      %v4666 = vpop.f32.mrb[0].mxu0
      %v4667 = vadd.f32 0.0, %v4666
      %v4668 = vpop.f32.mrb[0].mxu0
      %4669 = vmatprep.mubr.bf16.mxu0 0
      %4670 = vmatmul.mubr.bf16.gmra.mrb[0].mxu0 %v4508
      %v4671 = vpop.f32.mrb[0].mxu0
      %v4672 = vadd.f32 0.0, %v4671
      %v4673 = vpop.f32.mrb[0].mxu0
      %v4674 = vpop.f32.mrb[0].mxu0
      %v4675 = vadd.f32 0.0, %v4674
      %v4676 = vpop.f32.mrb[0].mxu0
      %4677 = vmatprep.mubr.bf16.mxu0 0
      %4678 = vmatmul.mubr.bf16.gmra.mrb[0].mxu0 %v4509
      %v4679 = vpop.f32.mrb[0].mxu0
      %v4680 = vadd.f32 0.0, %v4679
      %v4681 = vpop.f32.mrb[0].mxu0
      %v4682 = vpop.f32.mrb[0].mxu0
      %v4683 = vadd.f32 0.0, %v4682
      %v4684 = vpop.f32.mrb[0].mxu0
      %4685 = vmatprep.mubr.bf16.mxu0 0
      %4686 = vmatmul.mubr.bf16.gmra.mrb[0].mxu0 %v4510
      %v4687 = vpop.f32.mrb[0].mxu0
      %v4688 = vadd.f32 0.0, %v4687
      %v4689 = vpop.f32.mrb[0].mxu0
      %v4690 = vpop.f32.mrb[0].mxu0
      %v4691 = vadd.f32 0.0, %v4690
      %v4692 = vpop.f32.mrb[0].mxu0
      %4693 = vmatprep.mubr.bf16.mxu0 0
      %4694 = vmatmul.mubr.bf16.gmra.mrb[0].mxu0 %v4511
      %v4695 = vpop.f32.mrb[0].mxu0
      %v4696 = vadd.f32 0.0, %v4695
      %v4697 = vpop.f32.mrb[0].mxu0
      %v4698 = vpop.f32.mrb[0].mxu0
      %v4699 = vadd.f32 0.0, %v4698
      %v4700 = vpop.f32.mrb[0].mxu0
      %4701 = vmatprep.mubr.bf16.mxu0 0
      %4702 = vmatmul.mubr.bf16.gmra.mrb[0].mxu0 %v4512
      %v4703 = vpop.f32.mrb[0].mxu0
      %v4704 = vadd.f32 0.0, %v4703
      %v4705 = vpop.f32.mrb[0].mxu0
      %v4706 = vpop.f32.mrb[0].mxu0
      %v4707 = vadd.f32 0.0, %v4706
      %v4708 = vpop.f32.mrb[0].mxu0
      %4709 = vmatprep.mubr.bf16.mxu0 0
      %4710 = vmatmul.mubr.bf16.gmra.mrb[0].mxu0 %v4513
      %v4711 = vpop.f32.mrb[0].mxu0
      %v4712 = vadd.f32 0.0, %v4711
      %v4713 = vpop.f32.mrb[0].mxu0
      %v4714 = vpop.f32.mrb[0].mxu0
      %v4715 = vadd.f32 0.0, %v4714
      %v4716 = vpop.f32.mrb[0].mxu0
      %4717 = vmatprep.mubr.bf16.mxu0 0
      %4718 = vmatmul.mubr.bf16.gmra.mrb[0].mxu0 %v4514
      %v4719 = vpop.f32.mrb[0].mxu0
      %v4720 = vadd.f32 0.0, %v4719
      %v4721 = vpop.f32.mrb[0].mxu0
      %v4722 = vpop.f32.mrb[0].mxu0
      %v4723 = vadd.f32 0.0, %v4722
      %v4724 = vpop.f32.mrb[0].mxu0
      %4725 = vmatprep.mubr.bf16.mxu0 0
      %4726 = vmatmul.mubr.bf16.gmra.mrb[0].mxu0 %v4515
      %v4727 = vpop.f32.mrb[0].mxu0
      %v4728 = vadd.f32 0.0, %v4727
      %v4729 = vpop.f32.mrb[0].mxu0
      %v4730 = vpop.f32.mrb[0].mxu0
      %v4731 = vadd.f32 0.0, %v4730
      %v4732 = vpop.f32.mrb[0].mxu0
      %4733 = vmatprep.mubr.bf16.mxu0 0
      %4734 = vmatmul.mubr.bf16.gmra.mrb[0].mxu0 %v4516
      %v4735 = vpop.f32.mrb[0].mxu0
      %v4736 = vadd.f32 0.0, %v4735
      %v4737 = vpop.f32.mrb[0].mxu0
      %v4738 = vpop.f32.mrb[0].mxu0
      %v4739 = vadd.f32 0.0, %v4738
      %v4740 = vpop.f32.mrb[0].mxu0
      %4741 = vdwg.mxu0
      %v4742 = vadd.f32 %v4356, %v4616
      %v4743 = vadd.f32 %v4357, %v4619
      %v4744 = vadd.f32 %v4358, %v4624
      %v4745 = vadd.f32 %v4359, %v4627
      %v4746 = vadd.f32 %v4360, %v4632
      %v4747 = vadd.f32 %v4361, %v4635
      %v4748 = vadd.f32 %v4362, %v4640
      %v4749 = vadd.f32 %v4363, %v4643
      %v4750 = vadd.f32 %v4364, %v4648
      %v4751 = vadd.f32 %v4365, %v4651
      %v4752 = vadd.f32 %v4366, %v4656
      %v4753 = vadd.f32 %v4367, %v4659
      %v4754 = vadd.f32 %v4368, %v4664
      %v4755 = vadd.f32 %v4369, %v4667
      %v4756 = vadd.f32 %v4370, %v4672
      %v4757 = vadd.f32 %v4371, %v4675
      %v4758 = vadd.f32 %v4372, %v4680
      %v4759 = vadd.f32 %v4373, %v4683
      %v4760 = vadd.f32 %v4374, %v4688
      %v4761 = vadd.f32 %v4375, %v4691
      %v4762 = vadd.f32 %v4376, %v4696
      %v4763 = vadd.f32 %v4377, %v4699
      %v4764 = vadd.f32 %v4378, %v4704
      %v4765 = vadd.f32 %v4379, %v4707
      %v4766 = vadd.f32 %v4380, %v4712
      %v4767 = vadd.f32 %v4381, %v4715
      %v4768 = vadd.f32 %v4382, %v4720
      %v4769 = vadd.f32 %v4383, %v4723
      %v4770 = vadd.f32 %v4384, %v4728
      %v4771 = vadd.f32 %v4385, %v4731
      %v4772 = vadd.f32 %v4386, %v4736
      %v4773 = vadd.f32 %v4387, %v4739
      %v4774 = vld [vmem:[%s2742] sm:$0xf]
      %v4775 = vld [vmem:[%s2742 + $0x4] sm:$0xf]
      %v4776 = vld [vmem:[%s2742 + $0x8] sm:$0x1]
      %v4777 = vld [vmem:[%s2742 + $0xc] sm:$0xf]
      %v4778 = vld [vmem:[%s2742 + $0x10] sm:$0xf]
      %v4779 = vld [vmem:[%s2742 + $0x14] sm:$0x1]
      %v4780 = vld [vmem:[%s2742 + $0x18] sm:$0xf]
      %v4781 = vld [vmem:[%s2742 + $0x1c] sm:$0xf]
      %v4782 = vld [vmem:[%s2742 + $0x20] sm:$0x1]
      %v4783 = vld [vmem:[%s2742 + $0x24] sm:$0xf]
      %v4784 = vld [vmem:[%s2742 + $0x28] sm:$0xf]
      %v4785 = vld [vmem:[%s2742 + $0x2c] sm:$0x1]
      %v4786 = vld [vmem:[%s2742 + $0x30] sm:$0xf]
      %v4787 = vld [vmem:[%s2742 + $0x34] sm:$0xf]
      %v4788 = vld [vmem:[%s2742 + $0x38] sm:$0x1]
      %v4789 = vld [vmem:[%s2742 + $0x3c] sm:$0xf]
      %v4790 = vld [vmem:[%s2742 + $0x40] sm:$0xf]
      %v4791 = vld [vmem:[%s2742 + $0x44] sm:$0x1]
      %v4792 = vld [vmem:[%s2742 + $0x48] sm:$0xf]
      %v4793 = vld [vmem:[%s2742 + $0x4c] sm:$0xf]
      %v4794 = vld [vmem:[%s2742 + $0x50] sm:$0x1]
      %v4795 = vld [vmem:[%s2742 + $0x54] sm:$0xf]
      %v4796 = vld [vmem:[%s2742 + $0x58] sm:$0xf]
      %v4797 = vld [vmem:[%s2742 + $0x5c] sm:$0x1]
      %v4798 = vld [vmem:[%s2742 + $0x60] sm:$0xf]
      %v4799 = vld [vmem:[%s2742 + $0x64] sm:$0xf]
      %v4800 = vld [vmem:[%s2742 + $0x68] sm:$0x1]
      %v4801 = vld [vmem:[%s2742 + $0x6c] sm:$0xf]
      %v4802 = vld [vmem:[%s2742 + $0x70] sm:$0xf]
      %v4803 = vld [vmem:[%s2742 + $0x74] sm:$0x1]
      %v4804 = vld [vmem:[%s2742 + $0x78] sm:$0xf]
      %v4805 = vld [vmem:[%s2742 + $0x7c] sm:$0xf]
      %v4806 = vld [vmem:[%s2742 + $0x80] sm:$0x1]
      %v4807 = vld [vmem:[%s2742 + $0x84] sm:$0xf]
      %v4808 = vld [vmem:[%s2742 + $0x88] sm:$0xf]
      %v4809 = vld [vmem:[%s2742 + $0x8c] sm:$0x1]
      %v4810 = vld [vmem:[%s2742 + $0x90] sm:$0xf]
      %v4811 = vld [vmem:[%s2742 + $0x94] sm:$0xf]
      %v4812 = vld [vmem:[%s2742 + $0x98] sm:$0x1]
      %v4813 = vld [vmem:[%s2742 + $0x9c] sm:$0xf]
      %v4814 = vld [vmem:[%s2742 + $0xa0] sm:$0xf]
      %v4815 = vld [vmem:[%s2742 + $0xa4] sm:$0x1]
      %v4816 = vld [vmem:[%s2742 + $0xa8] sm:$0xf]
      %v4817 = vld [vmem:[%s2742 + $0xac] sm:$0xf]
      %v4818 = vld [vmem:[%s2742 + $0xb0] sm:$0x1]
      %v4819 = vld [vmem:[%s2742 + $0xb4] sm:$0xf]
      %v4820 = vld [vmem:[%s2742 + $0xb8] sm:$0xf]
      %v4821 = vld [vmem:[%s2742 + $0xbc] sm:$0x1]
      %v4823 = vshrl.u32 %v4774, 16
      %v4825 = vrot.slane %v4823, 4
      %v4826 = vshll.u32 %v4774, 16
      %v4828 = vrot.slane %v4826, 5
      %v4829 = vor.u32 %v4825, %v4828
      %v4830 = vrot.slane %v4829, 4
      %v4832 = vshll.u32 %v4775, 16
      %v4834 = vrot.slane %v4832, 5
      %v4835 = vsel %vm2923, %v4830, %v4834
      %v4836 = vshrl.u32 %v4775, 16
      %v4838 = vrot.slane %v4836, 4
      %v4839 = vor.u32 %v4838, %v4834
      %v4840 = vrot.slane %v4839, 4
      %v4842 = vshll.u32 %v4776, 16
      %v4844 = vrot.slane %v4842, 5
      %v4845 = vsel %vm2923, %v4840, %v4844
      %v4847 = vshrl.u32 %v4777, 16
      %v4849 = vrot.slane %v4847, 4
      %v4850 = vshll.u32 %v4777, 16
      %v4852 = vrot.slane %v4850, 5
      %v4853 = vor.u32 %v4849, %v4852
      %v4854 = vrot.slane %v4853, 4
      %v4856 = vshll.u32 %v4778, 16
      %v4858 = vrot.slane %v4856, 5
      %v4859 = vsel %vm2923, %v4854, %v4858
      %v4860 = vshrl.u32 %v4778, 16
      %v4862 = vrot.slane %v4860, 4
      %v4863 = vor.u32 %v4862, %v4858
      %v4864 = vrot.slane %v4863, 4
      %v4866 = vshll.u32 %v4779, 16
      %v4868 = vrot.slane %v4866, 5
      %v4869 = vsel %vm2923, %v4864, %v4868
      %v4871 = vshrl.u32 %v4780, 16
      %v4873 = vrot.slane %v4871, 4
      %v4874 = vshll.u32 %v4780, 16
      %v4876 = vrot.slane %v4874, 5
      %v4877 = vor.u32 %v4873, %v4876
      %v4878 = vrot.slane %v4877, 4
      %v4880 = vshll.u32 %v4781, 16
      %v4882 = vrot.slane %v4880, 5
      %v4883 = vsel %vm2923, %v4878, %v4882
      %v4884 = vshrl.u32 %v4781, 16
      %v4886 = vrot.slane %v4884, 4
      %v4887 = vor.u32 %v4886, %v4882
      %v4888 = vrot.slane %v4887, 4
      %v4890 = vshll.u32 %v4782, 16
      %v4892 = vrot.slane %v4890, 5
      %v4893 = vsel %vm2923, %v4888, %v4892
      %v4895 = vshrl.u32 %v4783, 16
      %v4897 = vrot.slane %v4895, 4
      %v4898 = vshll.u32 %v4783, 16
      %v4900 = vrot.slane %v4898, 5
      %v4901 = vor.u32 %v4897, %v4900
      %v4902 = vrot.slane %v4901, 4
      %v4904 = vshll.u32 %v4784, 16
      %v4906 = vrot.slane %v4904, 5
      %v4907 = vsel %vm2923, %v4902, %v4906
      %v4908 = vshrl.u32 %v4784, 16
      %v4910 = vrot.slane %v4908, 4
      %v4911 = vor.u32 %v4910, %v4906
      %v4912 = vrot.slane %v4911, 4
      %v4914 = vshll.u32 %v4785, 16
      %v4916 = vrot.slane %v4914, 5
      %v4917 = vsel %vm2923, %v4912, %v4916
      %v4919 = vshrl.u32 %v4786, 16
      %v4921 = vrot.slane %v4919, 4
      %v4922 = vshll.u32 %v4786, 16
      %v4924 = vrot.slane %v4922, 5
      %v4925 = vor.u32 %v4921, %v4924
      %v4926 = vrot.slane %v4925, 4
      %v4928 = vshll.u32 %v4787, 16
      %v4930 = vrot.slane %v4928, 5
      %v4931 = vsel %vm2923, %v4926, %v4930
      %v4932 = vshrl.u32 %v4787, 16
      %v4934 = vrot.slane %v4932, 4
      %v4935 = vor.u32 %v4934, %v4930
      %v4936 = vrot.slane %v4935, 4
      %v4938 = vshll.u32 %v4788, 16
      %v4940 = vrot.slane %v4938, 5
      %v4941 = vsel %vm2923, %v4936, %v4940
      %v4943 = vshrl.u32 %v4789, 16
      %v4945 = vrot.slane %v4943, 4
      %v4946 = vshll.u32 %v4789, 16
      %v4948 = vrot.slane %v4946, 5
      %v4949 = vor.u32 %v4945, %v4948
      %v4950 = vrot.slane %v4949, 4
      %v4952 = vshll.u32 %v4790, 16
      %v4954 = vrot.slane %v4952, 5
      %v4955 = vsel %vm2923, %v4950, %v4954
      %v4956 = vshrl.u32 %v4790, 16
      %v4958 = vrot.slane %v4956, 4
      %v4959 = vor.u32 %v4958, %v4954
      %v4960 = vrot.slane %v4959, 4
      %v4962 = vshll.u32 %v4791, 16
      %v4964 = vrot.slane %v4962, 5
      %v4965 = vsel %vm2923, %v4960, %v4964
      %v4967 = vshrl.u32 %v4792, 16
      %v4969 = vrot.slane %v4967, 4
      %v4970 = vshll.u32 %v4792, 16
      %v4972 = vrot.slane %v4970, 5
      %v4973 = vor.u32 %v4969, %v4972
      %v4974 = vrot.slane %v4973, 4
      %v4976 = vshll.u32 %v4793, 16
      %v4978 = vrot.slane %v4976, 5
      %v4979 = vsel %vm2923, %v4974, %v4978
      %v4980 = vshrl.u32 %v4793, 16
      %v4982 = vrot.slane %v4980, 4
      %v4983 = vor.u32 %v4982, %v4978
      %v4984 = vrot.slane %v4983, 4
      %v4986 = vshll.u32 %v4794, 16
      %v4988 = vrot.slane %v4986, 5
      %v4989 = vsel %vm2923, %v4984, %v4988
      %v4991 = vshrl.u32 %v4795, 16
      %v4993 = vrot.slane %v4991, 4
      %v4994 = vshll.u32 %v4795, 16
      %v4996 = vrot.slane %v4994, 5
      %v4997 = vor.u32 %v4993, %v4996
      %v4998 = vrot.slane %v4997, 4
      %v5000 = vshll.u32 %v4796, 16
      %v5002 = vrot.slane %v5000, 5
      %v5003 = vsel %vm2923, %v4998, %v5002
      %v5004 = vshrl.u32 %v4796, 16
      %v5006 = vrot.slane %v5004, 4
      %v5007 = vor.u32 %v5006, %v5002
      %v5008 = vrot.slane %v5007, 4
      %v5010 = vshll.u32 %v4797, 16
      %v5012 = vrot.slane %v5010, 5
      %v5013 = vsel %vm2923, %v5008, %v5012
      %v5015 = vshrl.u32 %v4798, 16
      %v5017 = vrot.slane %v5015, 4
      %v5018 = vshll.u32 %v4798, 16
      %v5020 = vrot.slane %v5018, 5
      %v5021 = vor.u32 %v5017, %v5020
      %v5022 = vrot.slane %v5021, 4
      %v5024 = vshll.u32 %v4799, 16
      %v5026 = vrot.slane %v5024, 5
      %v5027 = vsel %vm2923, %v5022, %v5026
      %v5028 = vshrl.u32 %v4799, 16
      %v5030 = vrot.slane %v5028, 4
      %v5031 = vor.u32 %v5030, %v5026
      %v5032 = vrot.slane %v5031, 4
      %v5034 = vshll.u32 %v4800, 16
      %v5036 = vrot.slane %v5034, 5
      %v5037 = vsel %vm2923, %v5032, %v5036
      %v5039 = vshrl.u32 %v4801, 16
      %v5041 = vrot.slane %v5039, 4
      %v5042 = vshll.u32 %v4801, 16
      %v5044 = vrot.slane %v5042, 5
      %v5045 = vor.u32 %v5041, %v5044
      %v5046 = vrot.slane %v5045, 4
      %v5048 = vshll.u32 %v4802, 16
      %v5050 = vrot.slane %v5048, 5
      %v5051 = vsel %vm2923, %v5046, %v5050
      %v5052 = vshrl.u32 %v4802, 16
      %v5054 = vrot.slane %v5052, 4
      %v5055 = vor.u32 %v5054, %v5050
      %v5056 = vrot.slane %v5055, 4
      %v5058 = vshll.u32 %v4803, 16
      %v5060 = vrot.slane %v5058, 5
      %v5061 = vsel %vm2923, %v5056, %v5060
      %v5063 = vshrl.u32 %v4804, 16
      %v5065 = vrot.slane %v5063, 4
      %v5066 = vshll.u32 %v4804, 16
      %v5068 = vrot.slane %v5066, 5
      %v5069 = vor.u32 %v5065, %v5068
      %v5070 = vrot.slane %v5069, 4
      %v5072 = vshll.u32 %v4805, 16
      %v5074 = vrot.slane %v5072, 5
      %v5075 = vsel %vm2923, %v5070, %v5074
      %v5076 = vshrl.u32 %v4805, 16
      %v5078 = vrot.slane %v5076, 4
      %v5079 = vor.u32 %v5078, %v5074
      %v5080 = vrot.slane %v5079, 4
      %v5082 = vshll.u32 %v4806, 16
      %v5084 = vrot.slane %v5082, 5
      %v5085 = vsel %vm2923, %v5080, %v5084
      %v5087 = vshrl.u32 %v4807, 16
      %v5089 = vrot.slane %v5087, 4
      %v5090 = vshll.u32 %v4807, 16
      %v5092 = vrot.slane %v5090, 5
      %v5093 = vor.u32 %v5089, %v5092
      %v5094 = vrot.slane %v5093, 4
      %v5096 = vshll.u32 %v4808, 16
      %v5098 = vrot.slane %v5096, 5
      %v5099 = vsel %vm2923, %v5094, %v5098
      %v5100 = vshrl.u32 %v4808, 16
      %v5102 = vrot.slane %v5100, 4
      %v5103 = vor.u32 %v5102, %v5098
      %v5104 = vrot.slane %v5103, 4
      %v5106 = vshll.u32 %v4809, 16
      %v5108 = vrot.slane %v5106, 5
      %v5109 = vsel %vm2923, %v5104, %v5108
      %v5111 = vshrl.u32 %v4810, 16
      %v5113 = vrot.slane %v5111, 4
      %v5114 = vshll.u32 %v4810, 16
      %v5116 = vrot.slane %v5114, 5
      %v5117 = vor.u32 %v5113, %v5116
      %v5118 = vrot.slane %v5117, 4
      %v5120 = vshll.u32 %v4811, 16
      %v5122 = vrot.slane %v5120, 5
      %v5123 = vsel %vm2923, %v5118, %v5122
      %v5124 = vshrl.u32 %v4811, 16
      %v5126 = vrot.slane %v5124, 4
      %v5127 = vor.u32 %v5126, %v5122
      %v5128 = vrot.slane %v5127, 4
      %v5130 = vshll.u32 %v4812, 16
      %v5132 = vrot.slane %v5130, 5
      %v5133 = vsel %vm2923, %v5128, %v5132
      %v5135 = vshrl.u32 %v4813, 16
      %v5137 = vrot.slane %v5135, 4
      %v5138 = vshll.u32 %v4813, 16
      %v5140 = vrot.slane %v5138, 5
      %v5141 = vor.u32 %v5137, %v5140
      %v5142 = vrot.slane %v5141, 4
      %v5144 = vshll.u32 %v4814, 16
      %v5146 = vrot.slane %v5144, 5
      %v5147 = vsel %vm2923, %v5142, %v5146
      %v5148 = vshrl.u32 %v4814, 16
      %v5150 = vrot.slane %v5148, 4
      %v5151 = vor.u32 %v5150, %v5146
      %v5152 = vrot.slane %v5151, 4
      %v5154 = vshll.u32 %v4815, 16
      %v5156 = vrot.slane %v5154, 5
      %v5157 = vsel %vm2923, %v5152, %v5156
      %v5159 = vshrl.u32 %v4816, 16
      %v5161 = vrot.slane %v5159, 4
      %v5162 = vshll.u32 %v4816, 16
      %v5164 = vrot.slane %v5162, 5
      %v5165 = vor.u32 %v5161, %v5164
      %v5166 = vrot.slane %v5165, 4
      %v5168 = vshll.u32 %v4817, 16
      %v5170 = vrot.slane %v5168, 5
      %v5171 = vsel %vm2923, %v5166, %v5170
      %v5172 = vshrl.u32 %v4817, 16
      %v5174 = vrot.slane %v5172, 4
      %v5175 = vor.u32 %v5174, %v5170
      %v5176 = vrot.slane %v5175, 4
      %v5178 = vshll.u32 %v4818, 16
      %v5180 = vrot.slane %v5178, 5
      %v5181 = vsel %vm2923, %v5176, %v5180
      %v5183 = vshrl.u32 %v4819, 16
      %v5185 = vrot.slane %v5183, 4
      %v5186 = vshll.u32 %v4819, 16
      %v5188 = vrot.slane %v5186, 5
      %v5189 = vor.u32 %v5185, %v5188
      %v5190 = vrot.slane %v5189, 4
      %v5192 = vshll.u32 %v4820, 16
      %v5194 = vrot.slane %v5192, 5
      %v5195 = vsel %vm2923, %v5190, %v5194
      %v5196 = vshrl.u32 %v4820, 16
      %v5198 = vrot.slane %v5196, 4
      %v5199 = vor.u32 %v5198, %v5194
      %v5200 = vrot.slane %v5199, 4
      %v5202 = vshll.u32 %v4821, 16
      %v5204 = vrot.slane %v5202, 5
      %v5205 = vsel %vm2923, %v5200, %v5204
      %s5206 = scalar_lea.vmem %s3, 256
      %v5207 = vld [vmem:[%s5206] sm:$0xf]
      %v5208 = vld [vmem:[%s5206 + $0x4] sm:$0xf]
      %v5209 = vld [vmem:[%s5206 + $0x8] sm:$0xf]
      %v5210 = vld [vmem:[%s5206 + $0xc] sm:$0xf]
      %v5211 = vld [vmem:[%s5206 + $0x10] sm:$0xf]
      %v5212 = vld [vmem:[%s5206 + $0x14] sm:$0xf]
      %v5213 = vld [vmem:[%s5206 + $0x18] sm:$0xf]
      %v5214 = vld [vmem:[%s5206 + $0x1c] sm:$0xf]
      %v5215 = vld [vmem:[%s5206 + $0x20] sm:$0xf]
      %v5216 = vld [vmem:[%s5206 + $0x24] sm:$0xf]
      %v5217 = vld [vmem:[%s5206 + $0x28] sm:$0xf]
      %v5218 = vld [vmem:[%s5206 + $0x2c] sm:$0xf]
      %v5219 = vld [vmem:[%s5206 + $0x30] sm:$0xf]
      %v5220 = vld [vmem:[%s5206 + $0x34] sm:$0xf]
      %v5221 = vld [vmem:[%s5206 + $0x38] sm:$0xf]
      %v5222 = vld [vmem:[%s5206 + $0x3c] sm:$0xf]
      %v5223 = vunpack.c.l.b16 %v4835
      %v5224 = vunpack.c.l.b16 %v4845
      %v5225 = vunpack.c.l.b16 %v4859
      %v5226 = vunpack.c.l.b16 %v4869
      %v5227 = vunpack.c.l.b16 %v4883
      %v5228 = vunpack.c.l.b16 %v4893
      %v5229 = vunpack.c.l.b16 %v4907
      %v5230 = vunpack.c.l.b16 %v4917
      %v5231 = vunpack.c.l.b16 %v4931
      %v5232 = vunpack.c.l.b16 %v4941
      %v5233 = vunpack.c.l.b16 %v4955
      %v5234 = vunpack.c.l.b16 %v4965
      %v5235 = vunpack.c.l.b16 %v4979
      %v5236 = vunpack.c.l.b16 %v4989
      %v5237 = vunpack.c.l.b16 %v5003
      %v5238 = vunpack.c.l.b16 %v5013
      %v5239 = vunpack.c.l.b16 %v5027
      %v5240 = vunpack.c.l.b16 %v5037
      %v5241 = vunpack.c.l.b16 %v5051
      %v5242 = vunpack.c.l.b16 %v5061
      %v5243 = vunpack.c.l.b16 %v5075
      %v5244 = vunpack.c.l.b16 %v5085
      %v5245 = vunpack.c.l.b16 %v5099
      %v5246 = vunpack.c.l.b16 %v5109
      %v5247 = vunpack.c.l.b16 %v5123
      %v5248 = vunpack.c.l.b16 %v5133
      %v5249 = vunpack.c.l.b16 %v5147
      %v5250 = vunpack.c.l.b16 %v5157
      %v5251 = vunpack.c.l.b16 %v5171
      %v5252 = vunpack.c.l.b16 %v5181
      %v5253 = vunpack.c.l.b16 %v5195
      %v5254 = vunpack.c.l.b16 %v5205
      %v5255 = vpack.c.b16 %v5224, %v5223
      %v5256 = vpack.c.b16 %v5226, %v5225
      %v5257 = vpack.c.b16 %v5228, %v5227
      %v5258 = vpack.c.b16 %v5230, %v5229
      %v5259 = vpack.c.b16 %v5232, %v5231
      %v5260 = vpack.c.b16 %v5234, %v5233
      %v5261 = vpack.c.b16 %v5236, %v5235
      %v5262 = vpack.c.b16 %v5238, %v5237
      %v5263 = vpack.c.b16 %v5240, %v5239
      %v5264 = vpack.c.b16 %v5242, %v5241
      %v5265 = vpack.c.b16 %v5244, %v5243
      %v5266 = vpack.c.b16 %v5246, %v5245
      %v5267 = vpack.c.b16 %v5248, %v5247
      %v5268 = vpack.c.b16 %v5250, %v5249
      %v5269 = vpack.c.b16 %v5252, %v5251
      %v5270 = vpack.c.b16 %v5254, %v5253
      %v5303 = vunpack.c.l.b16 %v5207
      %v5304 = vunpack.c.l.b16 %v5208
      %v5305 = vunpack.c.l.b16 %v5209
      %v5306 = vunpack.c.l.b16 %v5210
      %v5307 = vunpack.c.l.b16 %v5211
      %v5308 = vunpack.c.l.b16 %v5212
      %v5309 = vunpack.c.l.b16 %v5213
      %v5310 = vunpack.c.l.b16 %v5214
      %v5311 = vunpack.c.l.b16 %v5215
      %v5312 = vunpack.c.l.b16 %v5216
      %v5313 = vunpack.c.l.b16 %v5217
      %v5314 = vunpack.c.l.b16 %v5218
      %v5315 = vunpack.c.l.b16 %v5219
      %v5316 = vunpack.c.l.b16 %v5220
      %v5317 = vunpack.c.l.b16 %v5221
      %v5318 = vunpack.c.l.b16 %v5222
      %v5319 = vpack.c.b16 %v5304, %v5303
      %v5320 = vpack.c.b16 %v5306, %v5305
      %v5321 = vpack.c.b16 %v5308, %v5307
      %v5322 = vpack.c.b16 %v5310, %v5309
      %v5323 = vpack.c.b16 %v5312, %v5311
      %v5324 = vpack.c.b16 %v5314, %v5313
      %v5325 = vpack.c.b16 %v5316, %v5315
      %v5326 = vpack.c.b16 %v5318, %v5317
      %5335 = vmatprep.subr.bf16.mxu0 0
      %5336 = vmatpush1.bf16.msra.mxu0 %v5319
      %5337 = vmatprep.subr.bf16.mxu0 0
      %5338 = vmatpush1.bf16.msra.mxu0 %v5320
      %5339 = vmatprep.subr.bf16.mxu0 0
      %5340 = vmatpush1.bf16.msra.mxu0 %v5321
      %5341 = vmatprep.subr.bf16.mxu0 0
      %5342 = vmatpush1.bf16.msra.mxu0 %v5322
      %5343 = vmatprep.subr.bf16.mxu0 0
      %5344 = vmatpush1.bf16.msra.mxu0 %v5323
      %5345 = vmatprep.subr.bf16.mxu0 0
      %5346 = vmatpush1.bf16.msra.mxu0 %v5324
      %5347 = vmatprep.subr.bf16.mxu0 0
      %5348 = vmatpush1.bf16.msra.mxu0 %v5325
      %5349 = vmatprep.subr.bf16.mxu0 0
      %5350 = vmatpush1.bf16.msra.mxu0 %v5326
      %5351 = vmatprep.subr.bf16.mxu0 0
      %5352 = vmatpush1.bf16.msra.mxu0 0
      %5353 = vmatprep.subr.bf16.mxu0 0
      %5354 = vmatpush1.bf16.msra.mxu0 0
      %5355 = vmatprep.subr.bf16.mxu0 0
      %5356 = vmatpush1.bf16.msra.mxu0 0
      %5357 = vmatprep.subr.bf16.mxu0 0
      %5358 = vmatpush1.bf16.msra.mxu0 0
      %5359 = vmatprep.subr.bf16.mxu0 0
      %5360 = vmatpush1.bf16.msra.mxu0 0
      %5361 = vmatprep.subr.bf16.mxu0 0
      %5362 = vmatpush1.bf16.msra.mxu0 0
      %5363 = vmatprep.subr.bf16.mxu0 0
      %5364 = vmatpush1.bf16.msra.mxu0 0
      %5365 = vmatprep.subr.bf16.mxu0 0
      %5366 = vmatpush1.bf16.msra.mxu0 0
      %5367 = vmatprep.mubr.bf16.mxu0 0
      %5368 = vmatmul.mubr.bf16.gmra.mrb[0].mxu0 %v5255
      %v5369 = vpop.f32.mrb[0].mxu0
      %v5370 = vadd.f32 0.0, %v5369
      %v5371 = vpop.f32.mrb[0].mxu0
      %v5372 = vpop.f32.mrb[0].mxu0
      %v5373 = vadd.f32 0.0, %v5372
      %v5374 = vpop.f32.mrb[0].mxu0
      %5375 = vmatprep.mubr.bf16.mxu0 0
      %5376 = vmatmul.mubr.bf16.gmra.mrb[0].mxu0 %v5256
      %v5377 = vpop.f32.mrb[0].mxu0
      %v5378 = vadd.f32 0.0, %v5377
      %v5379 = vpop.f32.mrb[0].mxu0
      %v5380 = vpop.f32.mrb[0].mxu0
      %v5381 = vadd.f32 0.0, %v5380
      %v5382 = vpop.f32.mrb[0].mxu0
      %5383 = vmatprep.mubr.bf16.mxu0 0
      %5384 = vmatmul.mubr.bf16.gmra.mrb[0].mxu0 %v5257
      %v5385 = vpop.f32.mrb[0].mxu0
      %v5386 = vadd.f32 0.0, %v5385
      %v5387 = vpop.f32.mrb[0].mxu0
      %v5388 = vpop.f32.mrb[0].mxu0
      %v5389 = vadd.f32 0.0, %v5388
      %v5390 = vpop.f32.mrb[0].mxu0
      %5391 = vmatprep.mubr.bf16.mxu0 0
      %5392 = vmatmul.mubr.bf16.gmra.mrb[0].mxu0 %v5258
      %v5393 = vpop.f32.mrb[0].mxu0
      %v5394 = vadd.f32 0.0, %v5393
      %v5395 = vpop.f32.mrb[0].mxu0
      %v5396 = vpop.f32.mrb[0].mxu0
      %v5397 = vadd.f32 0.0, %v5396
      %v5398 = vpop.f32.mrb[0].mxu0
      %5399 = vmatprep.mubr.bf16.mxu0 0
      %5400 = vmatmul.mubr.bf16.gmra.mrb[0].mxu0 %v5259
      %v5401 = vpop.f32.mrb[0].mxu0
      %v5402 = vadd.f32 0.0, %v5401
      %v5403 = vpop.f32.mrb[0].mxu0
      %v5404 = vpop.f32.mrb[0].mxu0
      %v5405 = vadd.f32 0.0, %v5404
      %v5406 = vpop.f32.mrb[0].mxu0
      %5407 = vmatprep.mubr.bf16.mxu0 0
      %5408 = vmatmul.mubr.bf16.gmra.mrb[0].mxu0 %v5260
      %v5409 = vpop.f32.mrb[0].mxu0
      %v5410 = vadd.f32 0.0, %v5409
      %v5411 = vpop.f32.mrb[0].mxu0
      %v5412 = vpop.f32.mrb[0].mxu0
      %v5413 = vadd.f32 0.0, %v5412
      %v5414 = vpop.f32.mrb[0].mxu0
      %5415 = vmatprep.mubr.bf16.mxu0 0
      %5416 = vmatmul.mubr.bf16.gmra.mrb[0].mxu0 %v5261
      %v5417 = vpop.f32.mrb[0].mxu0
      %v5418 = vadd.f32 0.0, %v5417
      %v5419 = vpop.f32.mrb[0].mxu0
      %v5420 = vpop.f32.mrb[0].mxu0
      %v5421 = vadd.f32 0.0, %v5420
      %v5422 = vpop.f32.mrb[0].mxu0
      %5423 = vmatprep.mubr.bf16.mxu0 0
      %5424 = vmatmul.mubr.bf16.gmra.mrb[0].mxu0 %v5262
      %v5425 = vpop.f32.mrb[0].mxu0
      %v5426 = vadd.f32 0.0, %v5425
      %v5427 = vpop.f32.mrb[0].mxu0
      %v5428 = vpop.f32.mrb[0].mxu0
      %v5429 = vadd.f32 0.0, %v5428
      %v5430 = vpop.f32.mrb[0].mxu0
      %5431 = vmatprep.mubr.bf16.mxu0 0
      %5432 = vmatmul.mubr.bf16.gmra.mrb[0].mxu0 %v5263
      %v5433 = vpop.f32.mrb[0].mxu0
      %v5434 = vadd.f32 0.0, %v5433
      %v5435 = vpop.f32.mrb[0].mxu0
      %v5436 = vpop.f32.mrb[0].mxu0
      %v5437 = vadd.f32 0.0, %v5436
      %v5438 = vpop.f32.mrb[0].mxu0
      %5439 = vmatprep.mubr.bf16.mxu0 0
      %5440 = vmatmul.mubr.bf16.gmra.mrb[0].mxu0 %v5264
      %v5441 = vpop.f32.mrb[0].mxu0
      %v5442 = vadd.f32 0.0, %v5441
      %v5443 = vpop.f32.mrb[0].mxu0
      %v5444 = vpop.f32.mrb[0].mxu0
      %v5445 = vadd.f32 0.0, %v5444
      %v5446 = vpop.f32.mrb[0].mxu0
      %5447 = vmatprep.mubr.bf16.mxu0 0
      %5448 = vmatmul.mubr.bf16.gmra.mrb[0].mxu0 %v5265
      %v5449 = vpop.f32.mrb[0].mxu0
      %v5450 = vadd.f32 0.0, %v5449
      %v5451 = vpop.f32.mrb[0].mxu0
      %v5452 = vpop.f32.mrb[0].mxu0
      %v5453 = vadd.f32 0.0, %v5452
      %v5454 = vpop.f32.mrb[0].mxu0
      %5455 = vmatprep.mubr.bf16.mxu0 0
      %5456 = vmatmul.mubr.bf16.gmra.mrb[0].mxu0 %v5266
      %v5457 = vpop.f32.mrb[0].mxu0
      %v5458 = vadd.f32 0.0, %v5457
      %v5459 = vpop.f32.mrb[0].mxu0
      %v5460 = vpop.f32.mrb[0].mxu0
      %v5461 = vadd.f32 0.0, %v5460
      %v5462 = vpop.f32.mrb[0].mxu0
      %5463 = vmatprep.mubr.bf16.mxu0 0
      %5464 = vmatmul.mubr.bf16.gmra.mrb[0].mxu0 %v5267
      %v5465 = vpop.f32.mrb[0].mxu0
      %v5466 = vadd.f32 0.0, %v5465
      %v5467 = vpop.f32.mrb[0].mxu0
      %v5468 = vpop.f32.mrb[0].mxu0
      %v5469 = vadd.f32 0.0, %v5468
      %v5470 = vpop.f32.mrb[0].mxu0
      %5471 = vmatprep.mubr.bf16.mxu0 0
      %5472 = vmatmul.mubr.bf16.gmra.mrb[0].mxu0 %v5268
      %v5473 = vpop.f32.mrb[0].mxu0
      %v5474 = vadd.f32 0.0, %v5473
      %v5475 = vpop.f32.mrb[0].mxu0
      %v5476 = vpop.f32.mrb[0].mxu0
      %v5477 = vadd.f32 0.0, %v5476
      %v5478 = vpop.f32.mrb[0].mxu0
      %5479 = vmatprep.mubr.bf16.mxu0 0
      %5480 = vmatmul.mubr.bf16.gmra.mrb[0].mxu0 %v5269
      %v5481 = vpop.f32.mrb[0].mxu0
      %v5482 = vadd.f32 0.0, %v5481
      %v5483 = vpop.f32.mrb[0].mxu0
      %v5484 = vpop.f32.mrb[0].mxu0
      %v5485 = vadd.f32 0.0, %v5484
      %v5486 = vpop.f32.mrb[0].mxu0
      %5487 = vmatprep.mubr.bf16.mxu0 0
      %5488 = vmatmul.mubr.bf16.gmra.mrb[0].mxu0 %v5270
      %v5489 = vpop.f32.mrb[0].mxu0
      %v5490 = vadd.f32 0.0, %v5489
      %v5491 = vpop.f32.mrb[0].mxu0
      %v5492 = vpop.f32.mrb[0].mxu0
      %v5493 = vadd.f32 0.0, %v5492
      %v5494 = vpop.f32.mrb[0].mxu0
      %5495 = vdwg.mxu0
      %v5496 = vadd.f32 %v4742, %v5370
      %v5497 = vadd.f32 %v4743, %v5373
      %v5498 = vadd.f32 %v4744, %v5378
      %v5499 = vadd.f32 %v4745, %v5381
      %v5500 = vadd.f32 %v4746, %v5386
      %v5501 = vadd.f32 %v4747, %v5389
      %v5502 = vadd.f32 %v4748, %v5394
      %v5503 = vadd.f32 %v4749, %v5397
      %v5504 = vadd.f32 %v4750, %v5402
      %v5505 = vadd.f32 %v4751, %v5405
      %v5506 = vadd.f32 %v4752, %v5410
      %v5507 = vadd.f32 %v4753, %v5413
      %v5508 = vadd.f32 %v4754, %v5418
      %v5509 = vadd.f32 %v4755, %v5421
      %v5510 = vadd.f32 %v4756, %v5426
      %v5511 = vadd.f32 %v4757, %v5429
      %v5512 = vadd.f32 %v4758, %v5434
      %v5513 = vadd.f32 %v4759, %v5437
      %v5514 = vadd.f32 %v4760, %v5442
      %v5515 = vadd.f32 %v4761, %v5445
      %v5516 = vadd.f32 %v4762, %v5450
      %v5517 = vadd.f32 %v4763, %v5453
      %v5518 = vadd.f32 %v4764, %v5458
      %v5519 = vadd.f32 %v4765, %v5461
      %v5520 = vadd.f32 %v4766, %v5466
      %v5521 = vadd.f32 %v4767, %v5469
      %v5522 = vadd.f32 %v4768, %v5474
      %v5523 = vadd.f32 %v4769, %v5477
      %v5524 = vadd.f32 %v4770, %v5482
      %v5525 = vadd.f32 %v4771, %v5485
      %v5526 = vadd.f32 %v4772, %v5490
      %v5527 = vadd.f32 %v4773, %v5493
      %v5528 = vld [vmem:[%s2742] sm:$0xe]
      %v5529 = vld [vmem:[%s2742 + $0xc] sm:$0xe]
      %v5530 = vld [vmem:[%s2742 + $0x18] sm:$0xe]
      %v5531 = vld [vmem:[%s2742 + $0x24] sm:$0xe]
      %v5532 = vld [vmem:[%s2742 + $0x30] sm:$0xe]
      %v5533 = vld [vmem:[%s2742 + $0x3c] sm:$0xe]
      %v5534 = vld [vmem:[%s2742 + $0x48] sm:$0xe]
      %v5535 = vld [vmem:[%s2742 + $0x54] sm:$0xe]
      %v5536 = vld [vmem:[%s2742 + $0x60] sm:$0xe]
      %v5537 = vld [vmem:[%s2742 + $0x6c] sm:$0xe]
      %v5538 = vld [vmem:[%s2742 + $0x78] sm:$0xe]
      %v5539 = vld [vmem:[%s2742 + $0x84] sm:$0xe]
      %v5540 = vld [vmem:[%s2742 + $0x90] sm:$0xe]
      %v5541 = vld [vmem:[%s2742 + $0x9c] sm:$0xe]
      %v5542 = vld [vmem:[%s2742 + $0xa8] sm:$0xe]
      %v5543 = vld [vmem:[%s2742 + $0xb4] sm:$0xe]
      %v5592 = vrot.slane %v5528, 5
      %v5593 = vrot.slane %v5592, 4
      %v5594 = vrot.slane %v4775, 5
      %v5595 = vsel %vm3953, %v5593, %v5594
      %v5596 = vrot.slane %v5594, 4
      %v5597 = vrot.slane %v4776, 5
      %v5598 = vsel %vm3953, %v5596, %v5597
      %v5599 = vrot.slane %v5529, 5
      %v5600 = vrot.slane %v5599, 4
      %v5601 = vrot.slane %v4778, 5
      %v5602 = vsel %vm3953, %v5600, %v5601
      %v5603 = vrot.slane %v5601, 4
      %v5604 = vrot.slane %v4779, 5
      %v5605 = vsel %vm3953, %v5603, %v5604
      %v5606 = vrot.slane %v5530, 5
      %v5607 = vrot.slane %v5606, 4
      %v5608 = vrot.slane %v4781, 5
      %v5609 = vsel %vm3953, %v5607, %v5608
      %v5610 = vrot.slane %v5608, 4
      %v5611 = vrot.slane %v4782, 5
      %v5612 = vsel %vm3953, %v5610, %v5611
      %v5613 = vrot.slane %v5531, 5
      %v5614 = vrot.slane %v5613, 4
      %v5615 = vrot.slane %v4784, 5
      %v5616 = vsel %vm3953, %v5614, %v5615
      %v5617 = vrot.slane %v5615, 4
      %v5618 = vrot.slane %v4785, 5
      %v5619 = vsel %vm3953, %v5617, %v5618
      %v5620 = vrot.slane %v5532, 5
      %v5621 = vrot.slane %v5620, 4
      %v5622 = vrot.slane %v4787, 5
      %v5623 = vsel %vm3953, %v5621, %v5622
      %v5624 = vrot.slane %v5622, 4
      %v5625 = vrot.slane %v4788, 5
      %v5626 = vsel %vm3953, %v5624, %v5625
      %v5627 = vrot.slane %v5533, 5
      %v5628 = vrot.slane %v5627, 4
      %v5629 = vrot.slane %v4790, 5
      %v5630 = vsel %vm3953, %v5628, %v5629
      %v5631 = vrot.slane %v5629, 4
      %v5632 = vrot.slane %v4791, 5
      %v5633 = vsel %vm3953, %v5631, %v5632
      %v5634 = vrot.slane %v5534, 5
      %v5635 = vrot.slane %v5634, 4
      %v5636 = vrot.slane %v4793, 5
      %v5637 = vsel %vm3953, %v5635, %v5636
      %v5638 = vrot.slane %v5636, 4
      %v5639 = vrot.slane %v4794, 5
      %v5640 = vsel %vm3953, %v5638, %v5639
      %v5641 = vrot.slane %v5535, 5
      %v5642 = vrot.slane %v5641, 4
      %v5643 = vrot.slane %v4796, 5
      %v5644 = vsel %vm3953, %v5642, %v5643
      %v5645 = vrot.slane %v5643, 4
      %v5646 = vrot.slane %v4797, 5
      %v5647 = vsel %vm3953, %v5645, %v5646
      %v5648 = vrot.slane %v5536, 5
      %v5649 = vrot.slane %v5648, 4
      %v5650 = vrot.slane %v4799, 5
      %v5651 = vsel %vm3953, %v5649, %v5650
      %v5652 = vrot.slane %v5650, 4
      %v5653 = vrot.slane %v4800, 5
      %v5654 = vsel %vm3953, %v5652, %v5653
      %v5655 = vrot.slane %v5537, 5
      %v5656 = vrot.slane %v5655, 4
      %v5657 = vrot.slane %v4802, 5
      %v5658 = vsel %vm3953, %v5656, %v5657
      %v5659 = vrot.slane %v5657, 4
      %v5660 = vrot.slane %v4803, 5
      %v5661 = vsel %vm3953, %v5659, %v5660
      %v5662 = vrot.slane %v5538, 5
      %v5663 = vrot.slane %v5662, 4
      %v5664 = vrot.slane %v4805, 5
      %v5665 = vsel %vm3953, %v5663, %v5664
      %v5666 = vrot.slane %v5664, 4
      %v5667 = vrot.slane %v4806, 5
      %v5668 = vsel %vm3953, %v5666, %v5667
      %v5669 = vrot.slane %v5539, 5
      %v5670 = vrot.slane %v5669, 4
      %v5671 = vrot.slane %v4808, 5
      %v5672 = vsel %vm3953, %v5670, %v5671
      %v5673 = vrot.slane %v5671, 4
      %v5674 = vrot.slane %v4809, 5
      %v5675 = vsel %vm3953, %v5673, %v5674
      %v5676 = vrot.slane %v5540, 5
      %v5677 = vrot.slane %v5676, 4
      %v5678 = vrot.slane %v4811, 5
      %v5679 = vsel %vm3953, %v5677, %v5678
      %v5680 = vrot.slane %v5678, 4
      %v5681 = vrot.slane %v4812, 5
      %v5682 = vsel %vm3953, %v5680, %v5681
      %v5683 = vrot.slane %v5541, 5
      %v5684 = vrot.slane %v5683, 4
      %v5685 = vrot.slane %v4814, 5
      %v5686 = vsel %vm3953, %v5684, %v5685
      %v5687 = vrot.slane %v5685, 4
      %v5688 = vrot.slane %v4815, 5
      %v5689 = vsel %vm3953, %v5687, %v5688
      %v5690 = vrot.slane %v5542, 5
      %v5691 = vrot.slane %v5690, 4
      %v5692 = vrot.slane %v4817, 5
      %v5693 = vsel %vm3953, %v5691, %v5692
      %v5694 = vrot.slane %v5692, 4
      %v5695 = vrot.slane %v4818, 5
      %v5696 = vsel %vm3953, %v5694, %v5695
      %v5697 = vrot.slane %v5543, 5
      %v5698 = vrot.slane %v5697, 4
      %v5699 = vrot.slane %v4820, 5
      %v5700 = vsel %vm3953, %v5698, %v5699
      %v5701 = vrot.slane %v5699, 4
      %v5702 = vrot.slane %v4821, 5
      %v5703 = vsel %vm3953, %v5701, %v5702
      %s5704 = scalar_lea.vmem %s3, 320
      %v5705 = vld [vmem:[%s5704] sm:$0xf]
      %v5706 = vld [vmem:[%s5704 + $0x4] sm:$0xf]
      %v5707 = vld [vmem:[%s5704 + $0x8] sm:$0xf]
      %v5708 = vld [vmem:[%s5704 + $0xc] sm:$0xf]
      %v5709 = vld [vmem:[%s5704 + $0x10] sm:$0xf]
      %v5710 = vld [vmem:[%s5704 + $0x14] sm:$0xf]
      %v5711 = vld [vmem:[%s5704 + $0x18] sm:$0xf]
      %v5712 = vld [vmem:[%s5704 + $0x1c] sm:$0xf]
      %v5713 = vld [vmem:[%s5704 + $0x20] sm:$0xf]
      %v5714 = vld [vmem:[%s5704 + $0x24] sm:$0xf]
      %v5715 = vld [vmem:[%s5704 + $0x28] sm:$0xf]
      %v5716 = vld [vmem:[%s5704 + $0x2c] sm:$0xf]
      %v5717 = vld [vmem:[%s5704 + $0x30] sm:$0xf]
      %v5718 = vld [vmem:[%s5704 + $0x34] sm:$0xf]
      %v5719 = vld [vmem:[%s5704 + $0x38] sm:$0xf]
      %v5720 = vld [vmem:[%s5704 + $0x3c] sm:$0xf]
      %v5721 = vunpack.c.l.b16 %v5595
      %v5722 = vunpack.c.l.b16 %v5598
      %v5723 = vunpack.c.l.b16 %v5602
      %v5724 = vunpack.c.l.b16 %v5605
      %v5725 = vunpack.c.l.b16 %v5609
      %v5726 = vunpack.c.l.b16 %v5612
      %v5727 = vunpack.c.l.b16 %v5616
      %v5728 = vunpack.c.l.b16 %v5619
      %v5729 = vunpack.c.l.b16 %v5623
      %v5730 = vunpack.c.l.b16 %v5626
      %v5731 = vunpack.c.l.b16 %v5630
      %v5732 = vunpack.c.l.b16 %v5633
      %v5733 = vunpack.c.l.b16 %v5637
      %v5734 = vunpack.c.l.b16 %v5640
      %v5735 = vunpack.c.l.b16 %v5644
      %v5736 = vunpack.c.l.b16 %v5647
      %v5737 = vunpack.c.l.b16 %v5651
      %v5738 = vunpack.c.l.b16 %v5654
      %v5739 = vunpack.c.l.b16 %v5658
      %v5740 = vunpack.c.l.b16 %v5661
      %v5741 = vunpack.c.l.b16 %v5665
      %v5742 = vunpack.c.l.b16 %v5668
      %v5743 = vunpack.c.l.b16 %v5672
      %v5744 = vunpack.c.l.b16 %v5675
      %v5745 = vunpack.c.l.b16 %v5679
      %v5746 = vunpack.c.l.b16 %v5682
      %v5747 = vunpack.c.l.b16 %v5686
      %v5748 = vunpack.c.l.b16 %v5689
      %v5749 = vunpack.c.l.b16 %v5693
      %v5750 = vunpack.c.l.b16 %v5696
      %v5751 = vunpack.c.l.b16 %v5700
      %v5752 = vunpack.c.l.b16 %v5703
      %v5753 = vpack.c.b16 %v5722, %v5721
      %v5754 = vpack.c.b16 %v5724, %v5723
      %v5755 = vpack.c.b16 %v5726, %v5725
      %v5756 = vpack.c.b16 %v5728, %v5727
      %v5757 = vpack.c.b16 %v5730, %v5729
      %v5758 = vpack.c.b16 %v5732, %v5731
      %v5759 = vpack.c.b16 %v5734, %v5733
      %v5760 = vpack.c.b16 %v5736, %v5735
      %v5761 = vpack.c.b16 %v5738, %v5737
      %v5762 = vpack.c.b16 %v5740, %v5739
      %v5763 = vpack.c.b16 %v5742, %v5741
      %v5764 = vpack.c.b16 %v5744, %v5743
      %v5765 = vpack.c.b16 %v5746, %v5745
      %v5766 = vpack.c.b16 %v5748, %v5747
      %v5767 = vpack.c.b16 %v5750, %v5749
      %v5768 = vpack.c.b16 %v5752, %v5751
      %v5801 = vunpack.c.l.b16 %v5705
      %v5802 = vunpack.c.l.b16 %v5706
      %v5803 = vunpack.c.l.b16 %v5707
      %v5804 = vunpack.c.l.b16 %v5708
      %v5805 = vunpack.c.l.b16 %v5709
      %v5806 = vunpack.c.l.b16 %v5710
      %v5807 = vunpack.c.l.b16 %v5711
      %v5808 = vunpack.c.l.b16 %v5712
      %v5809 = vunpack.c.l.b16 %v5713
      %v5810 = vunpack.c.l.b16 %v5714
      %v5811 = vunpack.c.l.b16 %v5715
      %v5812 = vunpack.c.l.b16 %v5716
      %v5813 = vunpack.c.l.b16 %v5717
      %v5814 = vunpack.c.l.b16 %v5718
      %v5815 = vunpack.c.l.b16 %v5719
      %v5816 = vunpack.c.l.b16 %v5720
      %v5817 = vpack.c.b16 %v5802, %v5801
      %v5818 = vpack.c.b16 %v5804, %v5803
      %v5819 = vpack.c.b16 %v5806, %v5805
      %v5820 = vpack.c.b16 %v5808, %v5807
      %v5821 = vpack.c.b16 %v5810, %v5809
      %v5822 = vpack.c.b16 %v5812, %v5811
      %v5823 = vpack.c.b16 %v5814, %v5813
      %v5824 = vpack.c.b16 %v5816, %v5815
      %5833 = vmatprep.subr.bf16.mxu0 0
      %5834 = vmatpush1.bf16.msra.mxu0 %v5817
      %5835 = vmatprep.subr.bf16.mxu0 0
      %5836 = vmatpush1.bf16.msra.mxu0 %v5818
      %5837 = vmatprep.subr.bf16.mxu0 0
      %5838 = vmatpush1.bf16.msra.mxu0 %v5819
      %5839 = vmatprep.subr.bf16.mxu0 0
      %5840 = vmatpush1.bf16.msra.mxu0 %v5820
      %5841 = vmatprep.subr.bf16.mxu0 0
      %5842 = vmatpush1.bf16.msra.mxu0 %v5821
      %5843 = vmatprep.subr.bf16.mxu0 0
      %5844 = vmatpush1.bf16.msra.mxu0 %v5822
      %5845 = vmatprep.subr.bf16.mxu0 0
      %5846 = vmatpush1.bf16.msra.mxu0 %v5823
      %5847 = vmatprep.subr.bf16.mxu0 0
      %5848 = vmatpush1.bf16.msra.mxu0 %v5824
      %5849 = vmatprep.subr.bf16.mxu0 0
      %5850 = vmatpush1.bf16.msra.mxu0 0
      %5851 = vmatprep.subr.bf16.mxu0 0
      %5852 = vmatpush1.bf16.msra.mxu0 0
      %5853 = vmatprep.subr.bf16.mxu0 0
      %5854 = vmatpush1.bf16.msra.mxu0 0
      %5855 = vmatprep.subr.bf16.mxu0 0
      %5856 = vmatpush1.bf16.msra.mxu0 0
      %5857 = vmatprep.subr.bf16.mxu0 0
      %5858 = vmatpush1.bf16.msra.mxu0 0
      %5859 = vmatprep.subr.bf16.mxu0 0
      %5860 = vmatpush1.bf16.msra.mxu0 0
      %5861 = vmatprep.subr.bf16.mxu0 0
      %5862 = vmatpush1.bf16.msra.mxu0 0
      %5863 = vmatprep.subr.bf16.mxu0 0
      %5864 = vmatpush1.bf16.msra.mxu0 0
      %5865 = vmatprep.mubr.bf16.mxu0 0
      %5866 = vmatmul.mubr.bf16.gmra.mrb[0].mxu0 %v5753
      %v5867 = vpop.f32.mrb[0].mxu0
      %v5868 = vadd.f32 0.0, %v5867
      %v5869 = vpop.f32.mrb[0].mxu0
      %v5870 = vpop.f32.mrb[0].mxu0
      %v5871 = vadd.f32 0.0, %v5870
      %v5872 = vpop.f32.mrb[0].mxu0
      %5873 = vmatprep.mubr.bf16.mxu0 0
      %5874 = vmatmul.mubr.bf16.gmra.mrb[0].mxu0 %v5754
      %v5875 = vpop.f32.mrb[0].mxu0
      %v5876 = vadd.f32 0.0, %v5875
      %v5877 = vpop.f32.mrb[0].mxu0
      %v5878 = vpop.f32.mrb[0].mxu0
      %v5879 = vadd.f32 0.0, %v5878
      %v5880 = vpop.f32.mrb[0].mxu0
      %5881 = vmatprep.mubr.bf16.mxu0 0
      %5882 = vmatmul.mubr.bf16.gmra.mrb[0].mxu0 %v5755
      %v5883 = vpop.f32.mrb[0].mxu0
      %v5884 = vadd.f32 0.0, %v5883
      %v5885 = vpop.f32.mrb[0].mxu0
      %v5886 = vpop.f32.mrb[0].mxu0
      %v5887 = vadd.f32 0.0, %v5886
      %v5888 = vpop.f32.mrb[0].mxu0
      %5889 = vmatprep.mubr.bf16.mxu0 0
      %5890 = vmatmul.mubr.bf16.gmra.mrb[0].mxu0 %v5756
      %v5891 = vpop.f32.mrb[0].mxu0
      %v5892 = vadd.f32 0.0, %v5891
      %v5893 = vpop.f32.mrb[0].mxu0
      %v5894 = vpop.f32.mrb[0].mxu0
      %v5895 = vadd.f32 0.0, %v5894
      %v5896 = vpop.f32.mrb[0].mxu0
      %5897 = vmatprep.mubr.bf16.mxu0 0
      %5898 = vmatmul.mubr.bf16.gmra.mrb[0].mxu0 %v5757
      %v5899 = vpop.f32.mrb[0].mxu0
      %v5900 = vadd.f32 0.0, %v5899
      %v5901 = vpop.f32.mrb[0].mxu0
      %v5902 = vpop.f32.mrb[0].mxu0
      %v5903 = vadd.f32 0.0, %v5902
      %v5904 = vpop.f32.mrb[0].mxu0
      %5905 = vmatprep.mubr.bf16.mxu0 0
      %5906 = vmatmul.mubr.bf16.gmra.mrb[0].mxu0 %v5758
      %v5907 = vpop.f32.mrb[0].mxu0
      %v5908 = vadd.f32 0.0, %v5907
      %v5909 = vpop.f32.mrb[0].mxu0
      %v5910 = vpop.f32.mrb[0].mxu0
      %v5911 = vadd.f32 0.0, %v5910
      %v5912 = vpop.f32.mrb[0].mxu0
      %5913 = vmatprep.mubr.bf16.mxu0 0
      %5914 = vmatmul.mubr.bf16.gmra.mrb[0].mxu0 %v5759
      %v5915 = vpop.f32.mrb[0].mxu0
      %v5916 = vadd.f32 0.0, %v5915
      %v5917 = vpop.f32.mrb[0].mxu0
      %v5918 = vpop.f32.mrb[0].mxu0
      %v5919 = vadd.f32 0.0, %v5918
      %v5920 = vpop.f32.mrb[0].mxu0
      %5921 = vmatprep.mubr.bf16.mxu0 0
      %5922 = vmatmul.mubr.bf16.gmra.mrb[0].mxu0 %v5760
      %v5923 = vpop.f32.mrb[0].mxu0
      %v5924 = vadd.f32 0.0, %v5923
      %v5925 = vpop.f32.mrb[0].mxu0
      %v5926 = vpop.f32.mrb[0].mxu0
      %v5927 = vadd.f32 0.0, %v5926
      %v5928 = vpop.f32.mrb[0].mxu0
      %5929 = vmatprep.mubr.bf16.mxu0 0
      %5930 = vmatmul.mubr.bf16.gmra.mrb[0].mxu0 %v5761
      %v5931 = vpop.f32.mrb[0].mxu0
      %v5932 = vadd.f32 0.0, %v5931
      %v5933 = vpop.f32.mrb[0].mxu0
      %v5934 = vpop.f32.mrb[0].mxu0
      %v5935 = vadd.f32 0.0, %v5934
      %v5936 = vpop.f32.mrb[0].mxu0
      %5937 = vmatprep.mubr.bf16.mxu0 0
      %5938 = vmatmul.mubr.bf16.gmra.mrb[0].mxu0 %v5762
      %v5939 = vpop.f32.mrb[0].mxu0
      %v5940 = vadd.f32 0.0, %v5939
      %v5941 = vpop.f32.mrb[0].mxu0
      %v5942 = vpop.f32.mrb[0].mxu0
      %v5943 = vadd.f32 0.0, %v5942
      %v5944 = vpop.f32.mrb[0].mxu0
      %5945 = vmatprep.mubr.bf16.mxu0 0
      %5946 = vmatmul.mubr.bf16.gmra.mrb[0].mxu0 %v5763
      %v5947 = vpop.f32.mrb[0].mxu0
      %v5948 = vadd.f32 0.0, %v5947
      %v5949 = vpop.f32.mrb[0].mxu0
      %v5950 = vpop.f32.mrb[0].mxu0
      %v5951 = vadd.f32 0.0, %v5950
      %v5952 = vpop.f32.mrb[0].mxu0
      %5953 = vmatprep.mubr.bf16.mxu0 0
      %5954 = vmatmul.mubr.bf16.gmra.mrb[0].mxu0 %v5764
      %v5955 = vpop.f32.mrb[0].mxu0
      %v5956 = vadd.f32 0.0, %v5955
      %v5957 = vpop.f32.mrb[0].mxu0
      %v5958 = vpop.f32.mrb[0].mxu0
      %v5959 = vadd.f32 0.0, %v5958
      %v5960 = vpop.f32.mrb[0].mxu0
      %5961 = vmatprep.mubr.bf16.mxu0 0
      %5962 = vmatmul.mubr.bf16.gmra.mrb[0].mxu0 %v5765
      %v5963 = vpop.f32.mrb[0].mxu0
      %v5964 = vadd.f32 0.0, %v5963
      %v5965 = vpop.f32.mrb[0].mxu0
      %v5966 = vpop.f32.mrb[0].mxu0
      %v5967 = vadd.f32 0.0, %v5966
      %v5968 = vpop.f32.mrb[0].mxu0
      %5969 = vmatprep.mubr.bf16.mxu0 0
      %5970 = vmatmul.mubr.bf16.gmra.mrb[0].mxu0 %v5766
      %v5971 = vpop.f32.mrb[0].mxu0
      %v5972 = vadd.f32 0.0, %v5971
      %v5973 = vpop.f32.mrb[0].mxu0
      %v5974 = vpop.f32.mrb[0].mxu0
      %v5975 = vadd.f32 0.0, %v5974
      %v5976 = vpop.f32.mrb[0].mxu0
      %5977 = vmatprep.mubr.bf16.mxu0 0
      %5978 = vmatmul.mubr.bf16.gmra.mrb[0].mxu0 %v5767
      %v5979 = vpop.f32.mrb[0].mxu0
      %v5980 = vadd.f32 0.0, %v5979
      %v5981 = vpop.f32.mrb[0].mxu0
      %v5982 = vpop.f32.mrb[0].mxu0
      %v5983 = vadd.f32 0.0, %v5982
      %v5984 = vpop.f32.mrb[0].mxu0
      %5985 = vmatprep.mubr.bf16.mxu0 0
      %5986 = vmatmul.mubr.bf16.gmra.mrb[0].mxu0 %v5768
      %v5987 = vpop.f32.mrb[0].mxu0
      %v5988 = vadd.f32 0.0, %v5987
      %v5989 = vpop.f32.mrb[0].mxu0
      %v5990 = vpop.f32.mrb[0].mxu0
      %v5991 = vadd.f32 0.0, %v5990
      %v5992 = vpop.f32.mrb[0].mxu0
      %5993 = vdwg.mxu0
      %v5994 = vadd.f32 %v5496, %v5868
      %v5995 = vadd.f32 %v5497, %v5871
      %v5996 = vadd.f32 %v5498, %v5876
      %v5997 = vadd.f32 %v5499, %v5879
      %v5998 = vadd.f32 %v5500, %v5884
      %v5999 = vadd.f32 %v5501, %v5887
      %v6000 = vadd.f32 %v5502, %v5892
      %v6001 = vadd.f32 %v5503, %v5895
      %v6002 = vadd.f32 %v5504, %v5900
      %v6003 = vadd.f32 %v5505, %v5903
      %v6004 = vadd.f32 %v5506, %v5908
      %v6005 = vadd.f32 %v5507, %v5911
      %v6006 = vadd.f32 %v5508, %v5916
      %v6007 = vadd.f32 %v5509, %v5919
      %v6008 = vadd.f32 %v5510, %v5924
      %v6009 = vadd.f32 %v5511, %v5927
      %v6010 = vadd.f32 %v5512, %v5932
      %v6011 = vadd.f32 %v5513, %v5935
      %v6012 = vadd.f32 %v5514, %v5940
      %v6013 = vadd.f32 %v5515, %v5943
      %v6014 = vadd.f32 %v5516, %v5948
      %v6015 = vadd.f32 %v5517, %v5951
      %v6016 = vadd.f32 %v5518, %v5956
      %v6017 = vadd.f32 %v5519, %v5959
      %v6018 = vadd.f32 %v5520, %v5964
      %v6019 = vadd.f32 %v5521, %v5967
      %v6020 = vadd.f32 %v5522, %v5972
      %v6021 = vadd.f32 %v5523, %v5975
      %v6022 = vadd.f32 %v5524, %v5980
      %v6023 = vadd.f32 %v5525, %v5983
      %v6024 = vadd.f32 %v5526, %v5988
      %v6025 = vadd.f32 %v5527, %v5991
      %s6026 = scalar_lea.vmem [#allocation2], 24
      %v6027 = vld [vmem:[%s6026] sm:$0xf]
      %v6028 = vld [vmem:[%s6026 + $0x4] sm:$0xf]
      %v6029 = vld [vmem:[%s6026 + $0xc] sm:$0xf]
      %v6030 = vld [vmem:[%s6026 + $0x10] sm:$0xf]
      %v6031 = vld [vmem:[%s6026 + $0x18] sm:$0xf]
      %v6032 = vld [vmem:[%s6026 + $0x1c] sm:$0xf]
      %v6033 = vld [vmem:[%s6026 + $0x24] sm:$0xf]
      %v6034 = vld [vmem:[%s6026 + $0x28] sm:$0xf]
      %v6035 = vld [vmem:[%s6026 + $0x30] sm:$0xf]
      %v6036 = vld [vmem:[%s6026 + $0x34] sm:$0xf]
      %v6037 = vld [vmem:[%s6026 + $0x3c] sm:$0xf]
      %v6038 = vld [vmem:[%s6026 + $0x40] sm:$0xf]
      %v6039 = vld [vmem:[%s6026 + $0x48] sm:$0xf]
      %v6040 = vld [vmem:[%s6026 + $0x4c] sm:$0xf]
      %v6041 = vld [vmem:[%s6026 + $0x54] sm:$0xf]
      %v6042 = vld [vmem:[%s6026 + $0x58] sm:$0xf]
      %v6043 = vld [vmem:[%s6026 + $0x60] sm:$0xf]
      %v6044 = vld [vmem:[%s6026 + $0x64] sm:$0xf]
      %v6045 = vld [vmem:[%s6026 + $0x6c] sm:$0xf]
      %v6046 = vld [vmem:[%s6026 + $0x70] sm:$0xf]
      %v6047 = vld [vmem:[%s6026 + $0x78] sm:$0xf]
      %v6048 = vld [vmem:[%s6026 + $0x7c] sm:$0xf]
      %v6049 = vld [vmem:[%s6026 + $0x84] sm:$0xf]
      %v6050 = vld [vmem:[%s6026 + $0x88] sm:$0xf]
      %v6051 = vld [vmem:[%s6026 + $0x90] sm:$0xf]
      %v6052 = vld [vmem:[%s6026 + $0x94] sm:$0xf]
      %v6053 = vld [vmem:[%s6026 + $0x9c] sm:$0xf]
      %v6054 = vld [vmem:[%s6026 + $0xa0] sm:$0xf]
      %v6055 = vld [vmem:[%s6026 + $0xa8] sm:$0xf]
      %v6056 = vld [vmem:[%s6026 + $0xac] sm:$0xf]
      %v6057 = vld [vmem:[%s6026 + $0xb4] sm:$0xf]
      %v6058 = vld [vmem:[%s6026 + $0xb8] sm:$0xf]
      %s6059 = scalar_lea.vmem %s3, 384
      %v6060 = vld [vmem:[%s6059] sm:$0xf]
      %v6061 = vld [vmem:[%s6059 + $0x4] sm:$0xf]
      %v6062 = vld [vmem:[%s6059 + $0x8] sm:$0xf]
      %v6063 = vld [vmem:[%s6059 + $0xc] sm:$0xf]
      %v6064 = vld [vmem:[%s6059 + $0x10] sm:$0xf]
      %v6065 = vld [vmem:[%s6059 + $0x14] sm:$0xf]
      %v6066 = vld [vmem:[%s6059 + $0x18] sm:$0xf]
      %v6067 = vld [vmem:[%s6059 + $0x1c] sm:$0xf]
      %v6068 = vld [vmem:[%s6059 + $0x20] sm:$0xf]
      %v6069 = vld [vmem:[%s6059 + $0x24] sm:$0xf]
      %v6070 = vld [vmem:[%s6059 + $0x28] sm:$0xf]
      %v6071 = vld [vmem:[%s6059 + $0x2c] sm:$0xf]
      %v6072 = vld [vmem:[%s6059 + $0x30] sm:$0xf]
      %v6073 = vld [vmem:[%s6059 + $0x34] sm:$0xf]
      %v6074 = vld [vmem:[%s6059 + $0x38] sm:$0xf]
      %v6075 = vld [vmem:[%s6059 + $0x3c] sm:$0xf]
      %v6108 = vunpack.c.l.b16 %v6027
      %v6109 = vunpack.c.l.b16 %v6028
      %v6110 = vunpack.c.l.b16 %v6029
      %v6111 = vunpack.c.l.b16 %v6030
      %v6112 = vunpack.c.l.b16 %v6031
      %v6113 = vunpack.c.l.b16 %v6032
      %v6114 = vunpack.c.l.b16 %v6033
      %v6115 = vunpack.c.l.b16 %v6034
      %v6116 = vunpack.c.l.b16 %v6035
      %v6117 = vunpack.c.l.b16 %v6036
      %v6118 = vunpack.c.l.b16 %v6037
      %v6119 = vunpack.c.l.b16 %v6038
      %v6120 = vunpack.c.l.b16 %v6039
      %v6121 = vunpack.c.l.b16 %v6040
      %v6122 = vunpack.c.l.b16 %v6041
      %v6123 = vunpack.c.l.b16 %v6042
      %v6124 = vunpack.c.l.b16 %v6043
      %v6125 = vunpack.c.l.b16 %v6044
      %v6126 = vunpack.c.l.b16 %v6045
      %v6127 = vunpack.c.l.b16 %v6046
      %v6128 = vunpack.c.l.b16 %v6047
      %v6129 = vunpack.c.l.b16 %v6048
      %v6130 = vunpack.c.l.b16 %v6049
      %v6131 = vunpack.c.l.b16 %v6050
      %v6132 = vunpack.c.l.b16 %v6051
      %v6133 = vunpack.c.l.b16 %v6052
      %v6134 = vunpack.c.l.b16 %v6053
      %v6135 = vunpack.c.l.b16 %v6054
      %v6136 = vunpack.c.l.b16 %v6055
      %v6137 = vunpack.c.l.b16 %v6056
      %v6138 = vunpack.c.l.b16 %v6057
      %v6139 = vunpack.c.l.b16 %v6058
      %v6140 = vpack.c.b16 %v6109, %v6108
      %v6141 = vpack.c.b16 %v6111, %v6110
      %v6142 = vpack.c.b16 %v6113, %v6112
      %v6143 = vpack.c.b16 %v6115, %v6114
      %v6144 = vpack.c.b16 %v6117, %v6116
      %v6145 = vpack.c.b16 %v6119, %v6118
      %v6146 = vpack.c.b16 %v6121, %v6120
      %v6147 = vpack.c.b16 %v6123, %v6122
      %v6148 = vpack.c.b16 %v6125, %v6124
      %v6149 = vpack.c.b16 %v6127, %v6126
      %v6150 = vpack.c.b16 %v6129, %v6128
      %v6151 = vpack.c.b16 %v6131, %v6130
      %v6152 = vpack.c.b16 %v6133, %v6132
      %v6153 = vpack.c.b16 %v6135, %v6134
      %v6154 = vpack.c.b16 %v6137, %v6136
      %v6155 = vpack.c.b16 %v6139, %v6138
      %v6188 = vunpack.c.l.b16 %v6060
      %v6189 = vunpack.c.l.b16 %v6061
      %v6190 = vunpack.c.l.b16 %v6062
      %v6191 = vunpack.c.l.b16 %v6063
      %v6192 = vunpack.c.l.b16 %v6064
      %v6193 = vunpack.c.l.b16 %v6065
      %v6194 = vunpack.c.l.b16 %v6066
      %v6195 = vunpack.c.l.b16 %v6067
      %v6196 = vunpack.c.l.b16 %v6068
      %v6197 = vunpack.c.l.b16 %v6069
      %v6198 = vunpack.c.l.b16 %v6070
      %v6199 = vunpack.c.l.b16 %v6071
      %v6200 = vunpack.c.l.b16 %v6072
      %v6201 = vunpack.c.l.b16 %v6073
      %v6202 = vunpack.c.l.b16 %v6074
      %v6203 = vunpack.c.l.b16 %v6075
      %v6204 = vpack.c.b16 %v6189, %v6188
      %v6205 = vpack.c.b16 %v6191, %v6190
      %v6206 = vpack.c.b16 %v6193, %v6192
      %v6207 = vpack.c.b16 %v6195, %v6194
      %v6208 = vpack.c.b16 %v6197, %v6196
      %v6209 = vpack.c.b16 %v6199, %v6198
      %v6210 = vpack.c.b16 %v6201, %v6200
      %v6211 = vpack.c.b16 %v6203, %v6202
      %6220 = vmatprep.subr.bf16.mxu0 0
      %6221 = vmatpush1.bf16.msra.mxu0 %v6204
      %6222 = vmatprep.subr.bf16.mxu0 0
      %6223 = vmatpush1.bf16.msra.mxu0 %v6205
      %6224 = vmatprep.subr.bf16.mxu0 0
      %6225 = vmatpush1.bf16.msra.mxu0 %v6206
      %6226 = vmatprep.subr.bf16.mxu0 0
      %6227 = vmatpush1.bf16.msra.mxu0 %v6207
      %6228 = vmatprep.subr.bf16.mxu0 0
      %6229 = vmatpush1.bf16.msra.mxu0 %v6208
      %6230 = vmatprep.subr.bf16.mxu0 0
      %6231 = vmatpush1.bf16.msra.mxu0 %v6209
      %6232 = vmatprep.subr.bf16.mxu0 0
      %6233 = vmatpush1.bf16.msra.mxu0 %v6210
      %6234 = vmatprep.subr.bf16.mxu0 0
      %6235 = vmatpush1.bf16.msra.mxu0 %v6211
      %6236 = vmatprep.subr.bf16.mxu0 0
      %6237 = vmatpush1.bf16.msra.mxu0 0
      %6238 = vmatprep.subr.bf16.mxu0 0
      %6239 = vmatpush1.bf16.msra.mxu0 0
      %6240 = vmatprep.subr.bf16.mxu0 0
      %6241 = vmatpush1.bf16.msra.mxu0 0
      %6242 = vmatprep.subr.bf16.mxu0 0
      %6243 = vmatpush1.bf16.msra.mxu0 0
      %6244 = vmatprep.subr.bf16.mxu0 0
      %6245 = vmatpush1.bf16.msra.mxu0 0
      %6246 = vmatprep.subr.bf16.mxu0 0
      %6247 = vmatpush1.bf16.msra.mxu0 0
      %6248 = vmatprep.subr.bf16.mxu0 0
      %6249 = vmatpush1.bf16.msra.mxu0 0
      %6250 = vmatprep.subr.bf16.mxu0 0
      %6251 = vmatpush1.bf16.msra.mxu0 0
      %6252 = vmatprep.mubr.bf16.mxu0 0
      %6253 = vmatmul.mubr.bf16.gmra.mrb[0].mxu0 %v6140
      %v6254 = vpop.f32.mrb[0].mxu0
      %v6255 = vadd.f32 0.0, %v6254
      %v6256 = vpop.f32.mrb[0].mxu0
      %v6257 = vpop.f32.mrb[0].mxu0
      %v6258 = vadd.f32 0.0, %v6257
      %v6259 = vpop.f32.mrb[0].mxu0
      %6260 = vmatprep.mubr.bf16.mxu0 0
      %6261 = vmatmul.mubr.bf16.gmra.mrb[0].mxu0 %v6141
      %v6262 = vpop.f32.mrb[0].mxu0
      %v6263 = vadd.f32 0.0, %v6262
      %v6264 = vpop.f32.mrb[0].mxu0
      %v6265 = vpop.f32.mrb[0].mxu0
      %v6266 = vadd.f32 0.0, %v6265
      %v6267 = vpop.f32.mrb[0].mxu0
      %6268 = vmatprep.mubr.bf16.mxu0 0
      %6269 = vmatmul.mubr.bf16.gmra.mrb[0].mxu0 %v6142
      %v6270 = vpop.f32.mrb[0].mxu0
      %v6271 = vadd.f32 0.0, %v6270
      %v6272 = vpop.f32.mrb[0].mxu0
      %v6273 = vpop.f32.mrb[0].mxu0
      %v6274 = vadd.f32 0.0, %v6273
      %v6275 = vpop.f32.mrb[0].mxu0
      %6276 = vmatprep.mubr.bf16.mxu0 0
      %6277 = vmatmul.mubr.bf16.gmra.mrb[0].mxu0 %v6143
      %v6278 = vpop.f32.mrb[0].mxu0
      %v6279 = vadd.f32 0.0, %v6278
      %v6280 = vpop.f32.mrb[0].mxu0
      %v6281 = vpop.f32.mrb[0].mxu0
      %v6282 = vadd.f32 0.0, %v6281
      %v6283 = vpop.f32.mrb[0].mxu0
      %6284 = vmatprep.mubr.bf16.mxu0 0
      %6285 = vmatmul.mubr.bf16.gmra.mrb[0].mxu0 %v6144
      %v6286 = vpop.f32.mrb[0].mxu0
      %v6287 = vadd.f32 0.0, %v6286
      %v6288 = vpop.f32.mrb[0].mxu0
      %v6289 = vpop.f32.mrb[0].mxu0
      %v6290 = vadd.f32 0.0, %v6289
      %v6291 = vpop.f32.mrb[0].mxu0
      %6292 = vmatprep.mubr.bf16.mxu0 0
      %6293 = vmatmul.mubr.bf16.gmra.mrb[0].mxu0 %v6145
      %v6294 = vpop.f32.mrb[0].mxu0
      %v6295 = vadd.f32 0.0, %v6294
      %v6296 = vpop.f32.mrb[0].mxu0
      %v6297 = vpop.f32.mrb[0].mxu0
      %v6298 = vadd.f32 0.0, %v6297
      %v6299 = vpop.f32.mrb[0].mxu0
      %6300 = vmatprep.mubr.bf16.mxu0 0
      %6301 = vmatmul.mubr.bf16.gmra.mrb[0].mxu0 %v6146
      %v6302 = vpop.f32.mrb[0].mxu0
      %v6303 = vadd.f32 0.0, %v6302
      %v6304 = vpop.f32.mrb[0].mxu0
      %v6305 = vpop.f32.mrb[0].mxu0
      %v6306 = vadd.f32 0.0, %v6305
      %v6307 = vpop.f32.mrb[0].mxu0
      %6308 = vmatprep.mubr.bf16.mxu0 0
      %6309 = vmatmul.mubr.bf16.gmra.mrb[0].mxu0 %v6147
      %v6310 = vpop.f32.mrb[0].mxu0
      %v6311 = vadd.f32 0.0, %v6310
      %v6312 = vpop.f32.mrb[0].mxu0
      %v6313 = vpop.f32.mrb[0].mxu0
      %v6314 = vadd.f32 0.0, %v6313
      %v6315 = vpop.f32.mrb[0].mxu0
      %6316 = vmatprep.mubr.bf16.mxu0 0
      %6317 = vmatmul.mubr.bf16.gmra.mrb[0].mxu0 %v6148
      %v6318 = vpop.f32.mrb[0].mxu0
      %v6319 = vadd.f32 0.0, %v6318
      %v6320 = vpop.f32.mrb[0].mxu0
      %v6321 = vpop.f32.mrb[0].mxu0
      %v6322 = vadd.f32 0.0, %v6321
      %v6323 = vpop.f32.mrb[0].mxu0
      %6324 = vmatprep.mubr.bf16.mxu0 0
      %6325 = vmatmul.mubr.bf16.gmra.mrb[0].mxu0 %v6149
      %v6326 = vpop.f32.mrb[0].mxu0
      %v6327 = vadd.f32 0.0, %v6326
      %v6328 = vpop.f32.mrb[0].mxu0
      %v6329 = vpop.f32.mrb[0].mxu0
      %v6330 = vadd.f32 0.0, %v6329
      %v6331 = vpop.f32.mrb[0].mxu0
      %6332 = vmatprep.mubr.bf16.mxu0 0
      %6333 = vmatmul.mubr.bf16.gmra.mrb[0].mxu0 %v6150
      %v6334 = vpop.f32.mrb[0].mxu0
      %v6335 = vadd.f32 0.0, %v6334
      %v6336 = vpop.f32.mrb[0].mxu0
      %v6337 = vpop.f32.mrb[0].mxu0
      %v6338 = vadd.f32 0.0, %v6337
      %v6339 = vpop.f32.mrb[0].mxu0
      %6340 = vmatprep.mubr.bf16.mxu0 0
      %6341 = vmatmul.mubr.bf16.gmra.mrb[0].mxu0 %v6151
      %v6342 = vpop.f32.mrb[0].mxu0
      %v6343 = vadd.f32 0.0, %v6342
      %v6344 = vpop.f32.mrb[0].mxu0
      %v6345 = vpop.f32.mrb[0].mxu0
      %v6346 = vadd.f32 0.0, %v6345
      %v6347 = vpop.f32.mrb[0].mxu0
      %6348 = vmatprep.mubr.bf16.mxu0 0
      %6349 = vmatmul.mubr.bf16.gmra.mrb[0].mxu0 %v6152
      %v6350 = vpop.f32.mrb[0].mxu0
      %v6351 = vadd.f32 0.0, %v6350
      %v6352 = vpop.f32.mrb[0].mxu0
      %v6353 = vpop.f32.mrb[0].mxu0
      %v6354 = vadd.f32 0.0, %v6353
      %v6355 = vpop.f32.mrb[0].mxu0
      %6356 = vmatprep.mubr.bf16.mxu0 0
      %6357 = vmatmul.mubr.bf16.gmra.mrb[0].mxu0 %v6153
      %v6358 = vpop.f32.mrb[0].mxu0
      %v6359 = vadd.f32 0.0, %v6358
      %v6360 = vpop.f32.mrb[0].mxu0
      %v6361 = vpop.f32.mrb[0].mxu0
      %v6362 = vadd.f32 0.0, %v6361
      %v6363 = vpop.f32.mrb[0].mxu0
      %6364 = vmatprep.mubr.bf16.mxu0 0
      %6365 = vmatmul.mubr.bf16.gmra.mrb[0].mxu0 %v6154
      %v6366 = vpop.f32.mrb[0].mxu0
      %v6367 = vadd.f32 0.0, %v6366
      %v6368 = vpop.f32.mrb[0].mxu0
      %v6369 = vpop.f32.mrb[0].mxu0
      %v6370 = vadd.f32 0.0, %v6369
      %v6371 = vpop.f32.mrb[0].mxu0
      %6372 = vmatprep.mubr.bf16.mxu0 0
      %6373 = vmatmul.mubr.bf16.gmra.mrb[0].mxu0 %v6155
      %v6374 = vpop.f32.mrb[0].mxu0
      %v6375 = vadd.f32 0.0, %v6374
      %v6376 = vpop.f32.mrb[0].mxu0
      %v6377 = vpop.f32.mrb[0].mxu0
      %v6378 = vadd.f32 0.0, %v6377
      %v6379 = vpop.f32.mrb[0].mxu0
      %6380 = vdwg.mxu0
      %v6381 = vadd.f32 %v5994, %v6255
      %v6382 = vadd.f32 %v5995, %v6258
      %v6383 = vadd.f32 %v5996, %v6263
      %v6384 = vadd.f32 %v5997, %v6266
      %v6385 = vadd.f32 %v5998, %v6271
      %v6386 = vadd.f32 %v5999, %v6274
      %v6387 = vadd.f32 %v6000, %v6279
      %v6388 = vadd.f32 %v6001, %v6282
      %v6389 = vadd.f32 %v6002, %v6287
      %v6390 = vadd.f32 %v6003, %v6290
      %v6391 = vadd.f32 %v6004, %v6295
      %v6392 = vadd.f32 %v6005, %v6298
      %v6393 = vadd.f32 %v6006, %v6303
      %v6394 = vadd.f32 %v6007, %v6306
      %v6395 = vadd.f32 %v6008, %v6311
      %v6396 = vadd.f32 %v6009, %v6314
      %v6397 = vadd.f32 %v6010, %v6319
      %v6398 = vadd.f32 %v6011, %v6322
      %v6399 = vadd.f32 %v6012, %v6327
      %v6400 = vadd.f32 %v6013, %v6330
      %v6401 = vadd.f32 %v6014, %v6335
      %v6402 = vadd.f32 %v6015, %v6338
      %v6403 = vadd.f32 %v6016, %v6343
      %v6404 = vadd.f32 %v6017, %v6346
      %v6405 = vadd.f32 %v6018, %v6351
      %v6406 = vadd.f32 %v6019, %v6354
      %v6407 = vadd.f32 %v6020, %v6359
      %v6408 = vadd.f32 %v6021, %v6362
      %v6409 = vadd.f32 %v6022, %v6367
      %v6410 = vadd.f32 %v6023, %v6370
      %v6411 = vadd.f32 %v6024, %v6375
      %v6412 = vadd.f32 %v6025, %v6378
      %v6413 = vld [vmem:[%s6026] sm:$0xf]
      %v6414 = vld [vmem:[%s6026 + $0x4] sm:$0xf]
      %v6415 = vld [vmem:[%s6026 + $0x8] sm:$0x1]
      %v6416 = vld [vmem:[%s6026 + $0xc] sm:$0xf]
      %v6417 = vld [vmem:[%s6026 + $0x10] sm:$0xf]
      %v6418 = vld [vmem:[%s6026 + $0x14] sm:$0x1]
      %v6419 = vld [vmem:[%s6026 + $0x18] sm:$0xf]
      %v6420 = vld [vmem:[%s6026 + $0x1c] sm:$0xf]
      %v6421 = vld [vmem:[%s6026 + $0x20] sm:$0x1]
      %v6422 = vld [vmem:[%s6026 + $0x24] sm:$0xf]
      %v6423 = vld [vmem:[%s6026 + $0x28] sm:$0xf]
      %v6424 = vld [vmem:[%s6026 + $0x2c] sm:$0x1]
      %v6425 = vld [vmem:[%s6026 + $0x30] sm:$0xf]
      %v6426 = vld [vmem:[%s6026 + $0x34] sm:$0xf]
      %v6427 = vld [vmem:[%s6026 + $0x38] sm:$0x1]
      %v6428 = vld [vmem:[%s6026 + $0x3c] sm:$0xf]
      %v6429 = vld [vmem:[%s6026 + $0x40] sm:$0xf]
      %v6430 = vld [vmem:[%s6026 + $0x44] sm:$0x1]
      %v6431 = vld [vmem:[%s6026 + $0x48] sm:$0xf]
      %v6432 = vld [vmem:[%s6026 + $0x4c] sm:$0xf]
      %v6433 = vld [vmem:[%s6026 + $0x50] sm:$0x1]
      %v6434 = vld [vmem:[%s6026 + $0x54] sm:$0xf]
      %v6435 = vld [vmem:[%s6026 + $0x58] sm:$0xf]
      %v6436 = vld [vmem:[%s6026 + $0x5c] sm:$0x1]
      %v6437 = vld [vmem:[%s6026 + $0x60] sm:$0xf]
      %v6438 = vld [vmem:[%s6026 + $0x64] sm:$0xf]
      %v6439 = vld [vmem:[%s6026 + $0x68] sm:$0x1]
      %v6440 = vld [vmem:[%s6026 + $0x6c] sm:$0xf]
      %v6441 = vld [vmem:[%s6026 + $0x70] sm:$0xf]
      %v6442 = vld [vmem:[%s6026 + $0x74] sm:$0x1]
      %v6443 = vld [vmem:[%s6026 + $0x78] sm:$0xf]
      %v6444 = vld [vmem:[%s6026 + $0x7c] sm:$0xf]
      %v6445 = vld [vmem:[%s6026 + $0x80] sm:$0x1]
      %v6446 = vld [vmem:[%s6026 + $0x84] sm:$0xf]
      %v6447 = vld [vmem:[%s6026 + $0x88] sm:$0xf]
      %v6448 = vld [vmem:[%s6026 + $0x8c] sm:$0x1]
      %v6449 = vld [vmem:[%s6026 + $0x90] sm:$0xf]
      %v6450 = vld [vmem:[%s6026 + $0x94] sm:$0xf]
      %v6451 = vld [vmem:[%s6026 + $0x98] sm:$0x1]
      %v6452 = vld [vmem:[%s6026 + $0x9c] sm:$0xf]
      %v6453 = vld [vmem:[%s6026 + $0xa0] sm:$0xf]
      %v6454 = vld [vmem:[%s6026 + $0xa4] sm:$0x1]
      %v6455 = vld [vmem:[%s6026 + $0xa8] sm:$0xf]
      %v6456 = vld [vmem:[%s6026 + $0xac] sm:$0xf]
      %v6457 = vld [vmem:[%s6026 + $0xb0] sm:$0x1]
      %v6458 = vld [vmem:[%s6026 + $0xb4] sm:$0xf]
      %v6459 = vld [vmem:[%s6026 + $0xb8] sm:$0xf]
      %v6460 = vld [vmem:[%s6026 + $0xbc] sm:$0x1]
      %v6462 = vshrl.u32 %v6413, 16
      %v6464 = vrot.slane %v6462, 4
      %v6465 = vshll.u32 %v6413, 16
      %v6467 = vrot.slane %v6465, 5
      %v6468 = vor.u32 %v6464, %v6467
      %v6469 = vrot.slane %v6468, 4
      %v6471 = vshll.u32 %v6414, 16
      %v6473 = vrot.slane %v6471, 5
      %v6474 = vsel %vm2923, %v6469, %v6473
      %v6475 = vshrl.u32 %v6414, 16
      %v6477 = vrot.slane %v6475, 4
      %v6478 = vor.u32 %v6477, %v6473
      %v6479 = vrot.slane %v6478, 4
      %v6481 = vshll.u32 %v6415, 16
      %v6483 = vrot.slane %v6481, 5
      %v6484 = vsel %vm2923, %v6479, %v6483
      %v6486 = vshrl.u32 %v6416, 16
      %v6488 = vrot.slane %v6486, 4
      %v6489 = vshll.u32 %v6416, 16
      %v6491 = vrot.slane %v6489, 5
      %v6492 = vor.u32 %v6488, %v6491
      %v6493 = vrot.slane %v6492, 4
      %v6495 = vshll.u32 %v6417, 16
      %v6497 = vrot.slane %v6495, 5
      %v6498 = vsel %vm2923, %v6493, %v6497
      %v6499 = vshrl.u32 %v6417, 16
      %v6501 = vrot.slane %v6499, 4
      %v6502 = vor.u32 %v6501, %v6497
      %v6503 = vrot.slane %v6502, 4
      %v6505 = vshll.u32 %v6418, 16
      %v6507 = vrot.slane %v6505, 5
      %v6508 = vsel %vm2923, %v6503, %v6507
      %v6510 = vshrl.u32 %v6419, 16
      %v6512 = vrot.slane %v6510, 4
      %v6513 = vshll.u32 %v6419, 16
      %v6515 = vrot.slane %v6513, 5
      %v6516 = vor.u32 %v6512, %v6515
      %v6517 = vrot.slane %v6516, 4
      %v6519 = vshll.u32 %v6420, 16
      %v6521 = vrot.slane %v6519, 5
      %v6522 = vsel %vm2923, %v6517, %v6521
      %v6523 = vshrl.u32 %v6420, 16
      %v6525 = vrot.slane %v6523, 4
      %v6526 = vor.u32 %v6525, %v6521
      %v6527 = vrot.slane %v6526, 4
      %v6529 = vshll.u32 %v6421, 16
      %v6531 = vrot.slane %v6529, 5
      %v6532 = vsel %vm2923, %v6527, %v6531
      %v6534 = vshrl.u32 %v6422, 16
      %v6536 = vrot.slane %v6534, 4
      %v6537 = vshll.u32 %v6422, 16
      %v6539 = vrot.slane %v6537, 5
      %v6540 = vor.u32 %v6536, %v6539
      %v6541 = vrot.slane %v6540, 4
      %v6543 = vshll.u32 %v6423, 16
      %v6545 = vrot.slane %v6543, 5
      %v6546 = vsel %vm2923, %v6541, %v6545
      %v6547 = vshrl.u32 %v6423, 16
      %v6549 = vrot.slane %v6547, 4
      %v6550 = vor.u32 %v6549, %v6545
      %v6551 = vrot.slane %v6550, 4
      %v6553 = vshll.u32 %v6424, 16
      %v6555 = vrot.slane %v6553, 5
      %v6556 = vsel %vm2923, %v6551, %v6555
      %v6558 = vshrl.u32 %v6425, 16
      %v6560 = vrot.slane %v6558, 4
      %v6561 = vshll.u32 %v6425, 16
      %v6563 = vrot.slane %v6561, 5
      %v6564 = vor.u32 %v6560, %v6563
      %v6565 = vrot.slane %v6564, 4
      %v6567 = vshll.u32 %v6426, 16
      %v6569 = vrot.slane %v6567, 5
      %v6570 = vsel %vm2923, %v6565, %v6569
      %v6571 = vshrl.u32 %v6426, 16
      %v6573 = vrot.slane %v6571, 4
      %v6574 = vor.u32 %v6573, %v6569
      %v6575 = vrot.slane %v6574, 4
      %v6577 = vshll.u32 %v6427, 16
      %v6579 = vrot.slane %v6577, 5
      %v6580 = vsel %vm2923, %v6575, %v6579
      %v6582 = vshrl.u32 %v6428, 16
      %v6584 = vrot.slane %v6582, 4
      %v6585 = vshll.u32 %v6428, 16
      %v6587 = vrot.slane %v6585, 5
      %v6588 = vor.u32 %v6584, %v6587
      %v6589 = vrot.slane %v6588, 4
      %v6591 = vshll.u32 %v6429, 16
      %v6593 = vrot.slane %v6591, 5
      %v6594 = vsel %vm2923, %v6589, %v6593
      %v6595 = vshrl.u32 %v6429, 16
      %v6597 = vrot.slane %v6595, 4
      %v6598 = vor.u32 %v6597, %v6593
      %v6599 = vrot.slane %v6598, 4
      %v6601 = vshll.u32 %v6430, 16
      %v6603 = vrot.slane %v6601, 5
      %v6604 = vsel %vm2923, %v6599, %v6603
      %v6606 = vshrl.u32 %v6431, 16
      %v6608 = vrot.slane %v6606, 4
      %v6609 = vshll.u32 %v6431, 16
      %v6611 = vrot.slane %v6609, 5
      %v6612 = vor.u32 %v6608, %v6611
      %v6613 = vrot.slane %v6612, 4
      %v6615 = vshll.u32 %v6432, 16
      %v6617 = vrot.slane %v6615, 5
      %v6618 = vsel %vm2923, %v6613, %v6617
      %v6619 = vshrl.u32 %v6432, 16
      %v6621 = vrot.slane %v6619, 4
      %v6622 = vor.u32 %v6621, %v6617
      %v6623 = vrot.slane %v6622, 4
      %v6625 = vshll.u32 %v6433, 16
      %v6627 = vrot.slane %v6625, 5
      %v6628 = vsel %vm2923, %v6623, %v6627
      %v6630 = vshrl.u32 %v6434, 16
      %v6632 = vrot.slane %v6630, 4
      %v6633 = vshll.u32 %v6434, 16
      %v6635 = vrot.slane %v6633, 5
      %v6636 = vor.u32 %v6632, %v6635
      %v6637 = vrot.slane %v6636, 4
      %v6639 = vshll.u32 %v6435, 16
      %v6641 = vrot.slane %v6639, 5
      %v6642 = vsel %vm2923, %v6637, %v6641
      %v6643 = vshrl.u32 %v6435, 16
      %v6645 = vrot.slane %v6643, 4
      %v6646 = vor.u32 %v6645, %v6641
      %v6647 = vrot.slane %v6646, 4
      %v6649 = vshll.u32 %v6436, 16
      %v6651 = vrot.slane %v6649, 5
      %v6652 = vsel %vm2923, %v6647, %v6651
      %v6654 = vshrl.u32 %v6437, 16
      %v6656 = vrot.slane %v6654, 4
      %v6657 = vshll.u32 %v6437, 16
      %v6659 = vrot.slane %v6657, 5
      %v6660 = vor.u32 %v6656, %v6659
      %v6661 = vrot.slane %v6660, 4
      %v6663 = vshll.u32 %v6438, 16
      %v6665 = vrot.slane %v6663, 5
      %v6666 = vsel %vm2923, %v6661, %v6665
      %v6667 = vshrl.u32 %v6438, 16
      %v6669 = vrot.slane %v6667, 4
      %v6670 = vor.u32 %v6669, %v6665
      %v6671 = vrot.slane %v6670, 4
      %v6673 = vshll.u32 %v6439, 16
      %v6675 = vrot.slane %v6673, 5
      %v6676 = vsel %vm2923, %v6671, %v6675
      %v6678 = vshrl.u32 %v6440, 16
      %v6680 = vrot.slane %v6678, 4
      %v6681 = vshll.u32 %v6440, 16
      %v6683 = vrot.slane %v6681, 5
      %v6684 = vor.u32 %v6680, %v6683
      %v6685 = vrot.slane %v6684, 4
      %v6687 = vshll.u32 %v6441, 16
      %v6689 = vrot.slane %v6687, 5
      %v6690 = vsel %vm2923, %v6685, %v6689
      %v6691 = vshrl.u32 %v6441, 16
      %v6693 = vrot.slane %v6691, 4
      %v6694 = vor.u32 %v6693, %v6689
      %v6695 = vrot.slane %v6694, 4
      %v6697 = vshll.u32 %v6442, 16
      %v6699 = vrot.slane %v6697, 5
      %v6700 = vsel %vm2923, %v6695, %v6699
      %v6702 = vshrl.u32 %v6443, 16
      %v6704 = vrot.slane %v6702, 4
      %v6705 = vshll.u32 %v6443, 16
      %v6707 = vrot.slane %v6705, 5
      %v6708 = vor.u32 %v6704, %v6707
      %v6709 = vrot.slane %v6708, 4
      %v6711 = vshll.u32 %v6444, 16
      %v6713 = vrot.slane %v6711, 5
      %v6714 = vsel %vm2923, %v6709, %v6713
      %v6715 = vshrl.u32 %v6444, 16
      %v6717 = vrot.slane %v6715, 4
      %v6718 = vor.u32 %v6717, %v6713
      %v6719 = vrot.slane %v6718, 4
      %v6721 = vshll.u32 %v6445, 16
      %v6723 = vrot.slane %v6721, 5
      %v6724 = vsel %vm2923, %v6719, %v6723
      %v6726 = vshrl.u32 %v6446, 16
      %v6728 = vrot.slane %v6726, 4
      %v6729 = vshll.u32 %v6446, 16
      %v6731 = vrot.slane %v6729, 5
      %v6732 = vor.u32 %v6728, %v6731
      %v6733 = vrot.slane %v6732, 4
      %v6735 = vshll.u32 %v6447, 16
      %v6737 = vrot.slane %v6735, 5
      %v6738 = vsel %vm2923, %v6733, %v6737
      %v6739 = vshrl.u32 %v6447, 16
      %v6741 = vrot.slane %v6739, 4
      %v6742 = vor.u32 %v6741, %v6737
      %v6743 = vrot.slane %v6742, 4
      %v6745 = vshll.u32 %v6448, 16
      %v6747 = vrot.slane %v6745, 5
      %v6748 = vsel %vm2923, %v6743, %v6747
      %v6750 = vshrl.u32 %v6449, 16
      %v6752 = vrot.slane %v6750, 4
      %v6753 = vshll.u32 %v6449, 16
      %v6755 = vrot.slane %v6753, 5
      %v6756 = vor.u32 %v6752, %v6755
      %v6757 = vrot.slane %v6756, 4
      %v6759 = vshll.u32 %v6450, 16
      %v6761 = vrot.slane %v6759, 5
      %v6762 = vsel %vm2923, %v6757, %v6761
      %v6763 = vshrl.u32 %v6450, 16
      %v6765 = vrot.slane %v6763, 4
      %v6766 = vor.u32 %v6765, %v6761
      %v6767 = vrot.slane %v6766, 4
      %v6769 = vshll.u32 %v6451, 16
      %v6771 = vrot.slane %v6769, 5
      %v6772 = vsel %vm2923, %v6767, %v6771
      %v6774 = vshrl.u32 %v6452, 16
      %v6776 = vrot.slane %v6774, 4
      %v6777 = vshll.u32 %v6452, 16
      %v6779 = vrot.slane %v6777, 5
      %v6780 = vor.u32 %v6776, %v6779
      %v6781 = vrot.slane %v6780, 4
      %v6783 = vshll.u32 %v6453, 16
      %v6785 = vrot.slane %v6783, 5
      %v6786 = vsel %vm2923, %v6781, %v6785
      %v6787 = vshrl.u32 %v6453, 16
      %v6789 = vrot.slane %v6787, 4
      %v6790 = vor.u32 %v6789, %v6785
      %v6791 = vrot.slane %v6790, 4
      %v6793 = vshll.u32 %v6454, 16
      %v6795 = vrot.slane %v6793, 5
      %v6796 = vsel %vm2923, %v6791, %v6795
      %v6798 = vshrl.u32 %v6455, 16
      %v6800 = vrot.slane %v6798, 4
      %v6801 = vshll.u32 %v6455, 16
      %v6803 = vrot.slane %v6801, 5
      %v6804 = vor.u32 %v6800, %v6803
      %v6805 = vrot.slane %v6804, 4
      %v6807 = vshll.u32 %v6456, 16
      %v6809 = vrot.slane %v6807, 5
      %v6810 = vsel %vm2923, %v6805, %v6809
      %v6811 = vshrl.u32 %v6456, 16
      %v6813 = vrot.slane %v6811, 4
      %v6814 = vor.u32 %v6813, %v6809
      %v6815 = vrot.slane %v6814, 4
      %v6817 = vshll.u32 %v6457, 16
      %v6819 = vrot.slane %v6817, 5
      %v6820 = vsel %vm2923, %v6815, %v6819
      %v6822 = vshrl.u32 %v6458, 16
      %v6824 = vrot.slane %v6822, 4
      %v6825 = vshll.u32 %v6458, 16
      %v6827 = vrot.slane %v6825, 5
      %v6828 = vor.u32 %v6824, %v6827
      %v6829 = vrot.slane %v6828, 4
      %v6831 = vshll.u32 %v6459, 16
      %v6833 = vrot.slane %v6831, 5
      %v6834 = vsel %vm2923, %v6829, %v6833
      %v6835 = vshrl.u32 %v6459, 16
      %v6837 = vrot.slane %v6835, 4
      %v6838 = vor.u32 %v6837, %v6833
      %v6839 = vrot.slane %v6838, 4
      %v6841 = vshll.u32 %v6460, 16
      %v6843 = vrot.slane %v6841, 5
      %v6844 = vsel %vm2923, %v6839, %v6843
      %s6845 = scalar_lea.vmem %s3, 448
      %v6846 = vld [vmem:[%s6845] sm:$0xf]
      %v6847 = vld [vmem:[%s6845 + $0x4] sm:$0xf]
      %v6848 = vld [vmem:[%s6845 + $0x8] sm:$0xf]
      %v6849 = vld [vmem:[%s6845 + $0xc] sm:$0xf]
      %v6850 = vld [vmem:[%s6845 + $0x10] sm:$0xf]
      %v6851 = vld [vmem:[%s6845 + $0x14] sm:$0xf]
      %v6852 = vld [vmem:[%s6845 + $0x18] sm:$0xf]
      %v6853 = vld [vmem:[%s6845 + $0x1c] sm:$0xf]
      %v6854 = vld [vmem:[%s6845 + $0x20] sm:$0xf]
      %v6855 = vld [vmem:[%s6845 + $0x24] sm:$0xf]
      %v6856 = vld [vmem:[%s6845 + $0x28] sm:$0xf]
      %v6857 = vld [vmem:[%s6845 + $0x2c] sm:$0xf]
      %v6858 = vld [vmem:[%s6845 + $0x30] sm:$0xf]
      %v6859 = vld [vmem:[%s6845 + $0x34] sm:$0xf]
      %v6860 = vld [vmem:[%s6845 + $0x38] sm:$0xf]
      %v6861 = vld [vmem:[%s6845 + $0x3c] sm:$0xf]
      %v6862 = vunpack.c.l.b16 %v6474
      %v6863 = vunpack.c.l.b16 %v6484
      %v6864 = vunpack.c.l.b16 %v6498
      %v6865 = vunpack.c.l.b16 %v6508
      %v6866 = vunpack.c.l.b16 %v6522
      %v6867 = vunpack.c.l.b16 %v6532
      %v6868 = vunpack.c.l.b16 %v6546
      %v6869 = vunpack.c.l.b16 %v6556
      %v6870 = vunpack.c.l.b16 %v6570
      %v6871 = vunpack.c.l.b16 %v6580
      %v6872 = vunpack.c.l.b16 %v6594
      %v6873 = vunpack.c.l.b16 %v6604
      %v6874 = vunpack.c.l.b16 %v6618
      %v6875 = vunpack.c.l.b16 %v6628
      %v6876 = vunpack.c.l.b16 %v6642
      %v6877 = vunpack.c.l.b16 %v6652
      %v6878 = vunpack.c.l.b16 %v6666
      %v6879 = vunpack.c.l.b16 %v6676
      %v6880 = vunpack.c.l.b16 %v6690
      %v6881 = vunpack.c.l.b16 %v6700
      %v6882 = vunpack.c.l.b16 %v6714
      %v6883 = vunpack.c.l.b16 %v6724
      %v6884 = vunpack.c.l.b16 %v6738
      %v6885 = vunpack.c.l.b16 %v6748
      %v6886 = vunpack.c.l.b16 %v6762
      %v6887 = vunpack.c.l.b16 %v6772
      %v6888 = vunpack.c.l.b16 %v6786
      %v6889 = vunpack.c.l.b16 %v6796
      %v6890 = vunpack.c.l.b16 %v6810
      %v6891 = vunpack.c.l.b16 %v6820
      %v6892 = vunpack.c.l.b16 %v6834
      %v6893 = vunpack.c.l.b16 %v6844
      %v6894 = vpack.c.b16 %v6863, %v6862
      %v6895 = vpack.c.b16 %v6865, %v6864
      %v6896 = vpack.c.b16 %v6867, %v6866
      %v6897 = vpack.c.b16 %v6869, %v6868
      %v6898 = vpack.c.b16 %v6871, %v6870
      %v6899 = vpack.c.b16 %v6873, %v6872
      %v6900 = vpack.c.b16 %v6875, %v6874
      %v6901 = vpack.c.b16 %v6877, %v6876
      %v6902 = vpack.c.b16 %v6879, %v6878
      %v6903 = vpack.c.b16 %v6881, %v6880
      %v6904 = vpack.c.b16 %v6883, %v6882
      %v6905 = vpack.c.b16 %v6885, %v6884
      %v6906 = vpack.c.b16 %v6887, %v6886
      %v6907 = vpack.c.b16 %v6889, %v6888
      %v6908 = vpack.c.b16 %v6891, %v6890
      %v6909 = vpack.c.b16 %v6893, %v6892
      %v6942 = vunpack.c.l.b16 %v6846
      %v6943 = vunpack.c.l.b16 %v6847
      %v6944 = vunpack.c.l.b16 %v6848
      %v6945 = vunpack.c.l.b16 %v6849
      %v6946 = vunpack.c.l.b16 %v6850
      %v6947 = vunpack.c.l.b16 %v6851
      %v6948 = vunpack.c.l.b16 %v6852
      %v6949 = vunpack.c.l.b16 %v6853
      %v6950 = vunpack.c.l.b16 %v6854
      %v6951 = vunpack.c.l.b16 %v6855
      %v6952 = vunpack.c.l.b16 %v6856
      %v6953 = vunpack.c.l.b16 %v6857
      %v6954 = vunpack.c.l.b16 %v6858
      %v6955 = vunpack.c.l.b16 %v6859
      %v6956 = vunpack.c.l.b16 %v6860
      %v6957 = vunpack.c.l.b16 %v6861
      %v6958 = vpack.c.b16 %v6943, %v6942
      %v6959 = vpack.c.b16 %v6945, %v6944
      %v6960 = vpack.c.b16 %v6947, %v6946
      %v6961 = vpack.c.b16 %v6949, %v6948
      %v6962 = vpack.c.b16 %v6951, %v6950
      %v6963 = vpack.c.b16 %v6953, %v6952
      %v6964 = vpack.c.b16 %v6955, %v6954
      %v6965 = vpack.c.b16 %v6957, %v6956
      %6974 = vmatprep.subr.bf16.mxu0 0
      %6975 = vmatpush1.bf16.msra.mxu0 %v6958
      %6976 = vmatprep.subr.bf16.mxu0 0
      %6977 = vmatpush1.bf16.msra.mxu0 %v6959
      %6978 = vmatprep.subr.bf16.mxu0 0
      %6979 = vmatpush1.bf16.msra.mxu0 %v6960
      %6980 = vmatprep.subr.bf16.mxu0 0
      %6981 = vmatpush1.bf16.msra.mxu0 %v6961
      %6982 = vmatprep.subr.bf16.mxu0 0
      %6983 = vmatpush1.bf16.msra.mxu0 %v6962
      %6984 = vmatprep.subr.bf16.mxu0 0
      %6985 = vmatpush1.bf16.msra.mxu0 %v6963
      %6986 = vmatprep.subr.bf16.mxu0 0
      %6987 = vmatpush1.bf16.msra.mxu0 %v6964
      %6988 = vmatprep.subr.bf16.mxu0 0
      %6989 = vmatpush1.bf16.msra.mxu0 %v6965
      %6990 = vmatprep.subr.bf16.mxu0 0
      %6991 = vmatpush1.bf16.msra.mxu0 0
      %6992 = vmatprep.subr.bf16.mxu0 0
      %6993 = vmatpush1.bf16.msra.mxu0 0
      %6994 = vmatprep.subr.bf16.mxu0 0
      %6995 = vmatpush1.bf16.msra.mxu0 0
      %6996 = vmatprep.subr.bf16.mxu0 0
      %6997 = vmatpush1.bf16.msra.mxu0 0
      %6998 = vmatprep.subr.bf16.mxu0 0
      %6999 = vmatpush1.bf16.msra.mxu0 0
      %7000 = vmatprep.subr.bf16.mxu0 0
      %7001 = vmatpush1.bf16.msra.mxu0 0
      %7002 = vmatprep.subr.bf16.mxu0 0
      %7003 = vmatpush1.bf16.msra.mxu0 0
      %7004 = vmatprep.subr.bf16.mxu0 0
      %7005 = vmatpush1.bf16.msra.mxu0 0
      %7006 = vmatprep.mubr.bf16.mxu0 0
      %7007 = vmatmul.mubr.bf16.gmra.mrb[0].mxu0 %v6894
      %v7008 = vpop.f32.mrb[0].mxu0
      %v7009 = vadd.f32 0.0, %v7008
      %v7010 = vpop.f32.mrb[0].mxu0
      %v7011 = vpop.f32.mrb[0].mxu0
      %v7012 = vadd.f32 0.0, %v7011
      %v7013 = vpop.f32.mrb[0].mxu0
      %7014 = vmatprep.mubr.bf16.mxu0 0
      %7015 = vmatmul.mubr.bf16.gmra.mrb[0].mxu0 %v6895
      %v7016 = vpop.f32.mrb[0].mxu0
      %v7017 = vadd.f32 0.0, %v7016
      %v7018 = vpop.f32.mrb[0].mxu0
      %v7019 = vpop.f32.mrb[0].mxu0
      %v7020 = vadd.f32 0.0, %v7019
      %v7021 = vpop.f32.mrb[0].mxu0
      %7022 = vmatprep.mubr.bf16.mxu0 0
      %7023 = vmatmul.mubr.bf16.gmra.mrb[0].mxu0 %v6896
      %v7024 = vpop.f32.mrb[0].mxu0
      %v7025 = vadd.f32 0.0, %v7024
      %v7026 = vpop.f32.mrb[0].mxu0
      %v7027 = vpop.f32.mrb[0].mxu0
      %v7028 = vadd.f32 0.0, %v7027
      %v7029 = vpop.f32.mrb[0].mxu0
      %7030 = vmatprep.mubr.bf16.mxu0 0
      %7031 = vmatmul.mubr.bf16.gmra.mrb[0].mxu0 %v6897
      %v7032 = vpop.f32.mrb[0].mxu0
      %v7033 = vadd.f32 0.0, %v7032
      %v7034 = vpop.f32.mrb[0].mxu0
      %v7035 = vpop.f32.mrb[0].mxu0
      %v7036 = vadd.f32 0.0, %v7035
      %v7037 = vpop.f32.mrb[0].mxu0
      %7038 = vmatprep.mubr.bf16.mxu0 0
      %7039 = vmatmul.mubr.bf16.gmra.mrb[0].mxu0 %v6898
      %v7040 = vpop.f32.mrb[0].mxu0
      %v7041 = vadd.f32 0.0, %v7040
      %v7042 = vpop.f32.mrb[0].mxu0
      %v7043 = vpop.f32.mrb[0].mxu0
      %v7044 = vadd.f32 0.0, %v7043
      %v7045 = vpop.f32.mrb[0].mxu0
      %7046 = vmatprep.mubr.bf16.mxu0 0
      %7047 = vmatmul.mubr.bf16.gmra.mrb[0].mxu0 %v6899
      %v7048 = vpop.f32.mrb[0].mxu0
      %v7049 = vadd.f32 0.0, %v7048
      %v7050 = vpop.f32.mrb[0].mxu0
      %v7051 = vpop.f32.mrb[0].mxu0
      %v7052 = vadd.f32 0.0, %v7051
      %v7053 = vpop.f32.mrb[0].mxu0
      %7054 = vmatprep.mubr.bf16.mxu0 0
      %7055 = vmatmul.mubr.bf16.gmra.mrb[0].mxu0 %v6900
      %v7056 = vpop.f32.mrb[0].mxu0
      %v7057 = vadd.f32 0.0, %v7056
      %v7058 = vpop.f32.mrb[0].mxu0
      %v7059 = vpop.f32.mrb[0].mxu0
      %v7060 = vadd.f32 0.0, %v7059
      %v7061 = vpop.f32.mrb[0].mxu0
      %7062 = vmatprep.mubr.bf16.mxu0 0
      %7063 = vmatmul.mubr.bf16.gmra.mrb[0].mxu0 %v6901
      %v7064 = vpop.f32.mrb[0].mxu0
      %v7065 = vadd.f32 0.0, %v7064
      %v7066 = vpop.f32.mrb[0].mxu0
      %v7067 = vpop.f32.mrb[0].mxu0
      %v7068 = vadd.f32 0.0, %v7067
      %v7069 = vpop.f32.mrb[0].mxu0
      %7070 = vmatprep.mubr.bf16.mxu0 0
      %7071 = vmatmul.mubr.bf16.gmra.mrb[0].mxu0 %v6902
      %v7072 = vpop.f32.mrb[0].mxu0
      %v7073 = vadd.f32 0.0, %v7072
      %v7074 = vpop.f32.mrb[0].mxu0
      %v7075 = vpop.f32.mrb[0].mxu0
      %v7076 = vadd.f32 0.0, %v7075
      %v7077 = vpop.f32.mrb[0].mxu0
      %7078 = vmatprep.mubr.bf16.mxu0 0
      %7079 = vmatmul.mubr.bf16.gmra.mrb[0].mxu0 %v6903
      %v7080 = vpop.f32.mrb[0].mxu0
      %v7081 = vadd.f32 0.0, %v7080
      %v7082 = vpop.f32.mrb[0].mxu0
      %v7083 = vpop.f32.mrb[0].mxu0
      %v7084 = vadd.f32 0.0, %v7083
      %v7085 = vpop.f32.mrb[0].mxu0
      %7086 = vmatprep.mubr.bf16.mxu0 0
      %7087 = vmatmul.mubr.bf16.gmra.mrb[0].mxu0 %v6904
      %v7088 = vpop.f32.mrb[0].mxu0
      %v7089 = vadd.f32 0.0, %v7088
      %v7090 = vpop.f32.mrb[0].mxu0
      %v7091 = vpop.f32.mrb[0].mxu0
      %v7092 = vadd.f32 0.0, %v7091
      %v7093 = vpop.f32.mrb[0].mxu0
      %7094 = vmatprep.mubr.bf16.mxu0 0
      %7095 = vmatmul.mubr.bf16.gmra.mrb[0].mxu0 %v6905
      %v7096 = vpop.f32.mrb[0].mxu0
      %v7097 = vadd.f32 0.0, %v7096
      %v7098 = vpop.f32.mrb[0].mxu0
      %v7099 = vpop.f32.mrb[0].mxu0
      %v7100 = vadd.f32 0.0, %v7099
      %v7101 = vpop.f32.mrb[0].mxu0
      %7102 = vmatprep.mubr.bf16.mxu0 0
      %7103 = vmatmul.mubr.bf16.gmra.mrb[0].mxu0 %v6906
      %v7104 = vpop.f32.mrb[0].mxu0
      %v7105 = vadd.f32 0.0, %v7104
      %v7106 = vpop.f32.mrb[0].mxu0
      %v7107 = vpop.f32.mrb[0].mxu0
      %v7108 = vadd.f32 0.0, %v7107
      %v7109 = vpop.f32.mrb[0].mxu0
      %7110 = vmatprep.mubr.bf16.mxu0 0
      %7111 = vmatmul.mubr.bf16.gmra.mrb[0].mxu0 %v6907
      %v7112 = vpop.f32.mrb[0].mxu0
      %v7113 = vadd.f32 0.0, %v7112
      %v7114 = vpop.f32.mrb[0].mxu0
      %v7115 = vpop.f32.mrb[0].mxu0
      %v7116 = vadd.f32 0.0, %v7115
      %v7117 = vpop.f32.mrb[0].mxu0
      %7118 = vmatprep.mubr.bf16.mxu0 0
      %7119 = vmatmul.mubr.bf16.gmra.mrb[0].mxu0 %v6908
      %v7120 = vpop.f32.mrb[0].mxu0
      %v7121 = vadd.f32 0.0, %v7120
      %v7122 = vpop.f32.mrb[0].mxu0
      %v7123 = vpop.f32.mrb[0].mxu0
      %v7124 = vadd.f32 0.0, %v7123
      %v7125 = vpop.f32.mrb[0].mxu0
      %7126 = vmatprep.mubr.bf16.mxu0 0
      %7127 = vmatmul.mubr.bf16.gmra.mrb[0].mxu0 %v6909
      %v7128 = vpop.f32.mrb[0].mxu0
      %v7129 = vadd.f32 0.0, %v7128
      %v7130 = vpop.f32.mrb[0].mxu0
      %v7131 = vpop.f32.mrb[0].mxu0
      %v7132 = vadd.f32 0.0, %v7131
      %v7133 = vpop.f32.mrb[0].mxu0
      %7134 = vdwg.mxu0
      %v7135 = vadd.f32 %v6381, %v7009
      %v7136 = vadd.f32 %v6382, %v7012
      %v7137 = vadd.f32 %v6383, %v7017
      %v7138 = vadd.f32 %v6384, %v7020
      %v7139 = vadd.f32 %v6385, %v7025
      %v7140 = vadd.f32 %v6386, %v7028
      %v7141 = vadd.f32 %v6387, %v7033
      %v7142 = vadd.f32 %v6388, %v7036
      %v7143 = vadd.f32 %v6389, %v7041
      %v7144 = vadd.f32 %v6390, %v7044
      %v7145 = vadd.f32 %v6391, %v7049
      %v7146 = vadd.f32 %v6392, %v7052
      %v7147 = vadd.f32 %v6393, %v7057
      %v7148 = vadd.f32 %v6394, %v7060
      %v7149 = vadd.f32 %v6395, %v7065
      %v7150 = vadd.f32 %v6396, %v7068
      %v7151 = vadd.f32 %v6397, %v7073
      %v7152 = vadd.f32 %v6398, %v7076
      %v7153 = vadd.f32 %v6399, %v7081
      %v7154 = vadd.f32 %v6400, %v7084
      %v7155 = vadd.f32 %v6401, %v7089
      %v7156 = vadd.f32 %v6402, %v7092
      %v7157 = vadd.f32 %v6403, %v7097
      %v7158 = vadd.f32 %v6404, %v7100
      %v7159 = vadd.f32 %v6405, %v7105
      %v7160 = vadd.f32 %v6406, %v7108
      %v7161 = vadd.f32 %v6407, %v7113
      %v7162 = vadd.f32 %v6408, %v7116
      %v7163 = vadd.f32 %v6409, %v7121
      %v7164 = vadd.f32 %v6410, %v7124
      %v7165 = vadd.f32 %v6411, %v7129
      %v7166 = vadd.f32 %v6412, %v7132
      %v7167 = vld [vmem:[%s6026] sm:$0xe]
      %v7168 = vld [vmem:[%s6026 + $0xc] sm:$0xe]
      %v7169 = vld [vmem:[%s6026 + $0x18] sm:$0xe]
      %v7170 = vld [vmem:[%s6026 + $0x24] sm:$0xe]
      %v7171 = vld [vmem:[%s6026 + $0x30] sm:$0xe]
      %v7172 = vld [vmem:[%s6026 + $0x3c] sm:$0xe]
      %v7173 = vld [vmem:[%s6026 + $0x48] sm:$0xe]
      %v7174 = vld [vmem:[%s6026 + $0x54] sm:$0xe]
      %v7175 = vld [vmem:[%s6026 + $0x60] sm:$0xe]
      %v7176 = vld [vmem:[%s6026 + $0x6c] sm:$0xe]
      %v7177 = vld [vmem:[%s6026 + $0x78] sm:$0xe]
      %v7178 = vld [vmem:[%s6026 + $0x84] sm:$0xe]
      %v7179 = vld [vmem:[%s6026 + $0x90] sm:$0xe]
      %v7180 = vld [vmem:[%s6026 + $0x9c] sm:$0xe]
      %v7181 = vld [vmem:[%s6026 + $0xa8] sm:$0xe]
      %v7182 = vld [vmem:[%s6026 + $0xb4] sm:$0xe]
      %v7231 = vrot.slane %v7167, 5
      %v7232 = vrot.slane %v7231, 4
      %v7233 = vrot.slane %v6414, 5
      %v7234 = vsel %vm3953, %v7232, %v7233
      %v7235 = vrot.slane %v7233, 4
      %v7236 = vrot.slane %v6415, 5
      %v7237 = vsel %vm3953, %v7235, %v7236
      %v7238 = vrot.slane %v7168, 5
      %v7239 = vrot.slane %v7238, 4
      %v7240 = vrot.slane %v6417, 5
      %v7241 = vsel %vm3953, %v7239, %v7240
      %v7242 = vrot.slane %v7240, 4
      %v7243 = vrot.slane %v6418, 5
      %v7244 = vsel %vm3953, %v7242, %v7243
      %v7245 = vrot.slane %v7169, 5
      %v7246 = vrot.slane %v7245, 4
      %v7247 = vrot.slane %v6420, 5
      %v7248 = vsel %vm3953, %v7246, %v7247
      %v7249 = vrot.slane %v7247, 4
      %v7250 = vrot.slane %v6421, 5
      %v7251 = vsel %vm3953, %v7249, %v7250
      %v7252 = vrot.slane %v7170, 5
      %v7253 = vrot.slane %v7252, 4
      %v7254 = vrot.slane %v6423, 5
      %v7255 = vsel %vm3953, %v7253, %v7254
      %v7256 = vrot.slane %v7254, 4
      %v7257 = vrot.slane %v6424, 5
      %v7258 = vsel %vm3953, %v7256, %v7257
      %v7259 = vrot.slane %v7171, 5
      %v7260 = vrot.slane %v7259, 4
      %v7261 = vrot.slane %v6426, 5
      %v7262 = vsel %vm3953, %v7260, %v7261
      %v7263 = vrot.slane %v7261, 4
      %v7264 = vrot.slane %v6427, 5
      %v7265 = vsel %vm3953, %v7263, %v7264
      %v7266 = vrot.slane %v7172, 5
      %v7267 = vrot.slane %v7266, 4
      %v7268 = vrot.slane %v6429, 5
      %v7269 = vsel %vm3953, %v7267, %v7268
      %v7270 = vrot.slane %v7268, 4
      %v7271 = vrot.slane %v6430, 5
      %v7272 = vsel %vm3953, %v7270, %v7271
      %v7273 = vrot.slane %v7173, 5
      %v7274 = vrot.slane %v7273, 4
      %v7275 = vrot.slane %v6432, 5
      %v7276 = vsel %vm3953, %v7274, %v7275
      %v7277 = vrot.slane %v7275, 4
      %v7278 = vrot.slane %v6433, 5
      %v7279 = vsel %vm3953, %v7277, %v7278
      %v7280 = vrot.slane %v7174, 5
      %v7281 = vrot.slane %v7280, 4
      %v7282 = vrot.slane %v6435, 5
      %v7283 = vsel %vm3953, %v7281, %v7282
      %v7284 = vrot.slane %v7282, 4
      %v7285 = vrot.slane %v6436, 5
      %v7286 = vsel %vm3953, %v7284, %v7285
      %v7287 = vrot.slane %v7175, 5
      %v7288 = vrot.slane %v7287, 4
      %v7289 = vrot.slane %v6438, 5
      %v7290 = vsel %vm3953, %v7288, %v7289
      %v7291 = vrot.slane %v7289, 4
      %v7292 = vrot.slane %v6439, 5
      %v7293 = vsel %vm3953, %v7291, %v7292
      %v7294 = vrot.slane %v7176, 5
      %v7295 = vrot.slane %v7294, 4
      %v7296 = vrot.slane %v6441, 5
      %v7297 = vsel %vm3953, %v7295, %v7296
      %v7298 = vrot.slane %v7296, 4
      %v7299 = vrot.slane %v6442, 5
      %v7300 = vsel %vm3953, %v7298, %v7299
      %v7301 = vrot.slane %v7177, 5
      %v7302 = vrot.slane %v7301, 4
      %v7303 = vrot.slane %v6444, 5
      %v7304 = vsel %vm3953, %v7302, %v7303
      %v7305 = vrot.slane %v7303, 4
      %v7306 = vrot.slane %v6445, 5
      %v7307 = vsel %vm3953, %v7305, %v7306
      %v7308 = vrot.slane %v7178, 5
      %v7309 = vrot.slane %v7308, 4
      %v7310 = vrot.slane %v6447, 5
      %v7311 = vsel %vm3953, %v7309, %v7310
      %v7312 = vrot.slane %v7310, 4
      %v7313 = vrot.slane %v6448, 5
      %v7314 = vsel %vm3953, %v7312, %v7313
      %v7315 = vrot.slane %v7179, 5
      %v7316 = vrot.slane %v7315, 4
      %v7317 = vrot.slane %v6450, 5
      %v7318 = vsel %vm3953, %v7316, %v7317
      %v7319 = vrot.slane %v7317, 4
      %v7320 = vrot.slane %v6451, 5
      %v7321 = vsel %vm3953, %v7319, %v7320
      %v7322 = vrot.slane %v7180, 5
      %v7323 = vrot.slane %v7322, 4
      %v7324 = vrot.slane %v6453, 5
      %v7325 = vsel %vm3953, %v7323, %v7324
      %v7326 = vrot.slane %v7324, 4
      %v7327 = vrot.slane %v6454, 5
      %v7328 = vsel %vm3953, %v7326, %v7327
      %v7329 = vrot.slane %v7181, 5
      %v7330 = vrot.slane %v7329, 4
      %v7331 = vrot.slane %v6456, 5
      %v7332 = vsel %vm3953, %v7330, %v7331
      %v7333 = vrot.slane %v7331, 4
      %v7334 = vrot.slane %v6457, 5
      %v7335 = vsel %vm3953, %v7333, %v7334
      %v7336 = vrot.slane %v7182, 5
      %v7337 = vrot.slane %v7336, 4
      %v7338 = vrot.slane %v6459, 5
      %v7339 = vsel %vm3953, %v7337, %v7338
      %v7340 = vrot.slane %v7338, 4
      %v7341 = vrot.slane %v6460, 5
      %v7342 = vsel %vm3953, %v7340, %v7341
      %s7343 = scalar_lea.vmem %s3, 512
      %v7344 = vld [vmem:[%s7343] sm:$0xf]
      %v7345 = vld [vmem:[%s7343 + $0x4] sm:$0xf]
      %v7346 = vld [vmem:[%s7343 + $0x8] sm:$0xf]
      %v7347 = vld [vmem:[%s7343 + $0xc] sm:$0xf]
      %v7348 = vld [vmem:[%s7343 + $0x10] sm:$0xf]
      %v7349 = vld [vmem:[%s7343 + $0x14] sm:$0xf]
      %v7350 = vld [vmem:[%s7343 + $0x18] sm:$0xf]
      %v7351 = vld [vmem:[%s7343 + $0x1c] sm:$0xf]
      %v7352 = vld [vmem:[%s7343 + $0x20] sm:$0xf]
      %v7353 = vld [vmem:[%s7343 + $0x24] sm:$0xf]
      %v7354 = vld [vmem:[%s7343 + $0x28] sm:$0xf]
      %v7355 = vld [vmem:[%s7343 + $0x2c] sm:$0xf]
      %v7356 = vld [vmem:[%s7343 + $0x30] sm:$0xf]
      %v7357 = vld [vmem:[%s7343 + $0x34] sm:$0xf]
      %v7358 = vld [vmem:[%s7343 + $0x38] sm:$0xf]
      %v7359 = vld [vmem:[%s7343 + $0x3c] sm:$0xf]
      %v7360 = vunpack.c.l.b16 %v7234
      %v7361 = vunpack.c.l.b16 %v7237
      %v7362 = vunpack.c.l.b16 %v7241
      %v7363 = vunpack.c.l.b16 %v7244
      %v7364 = vunpack.c.l.b16 %v7248
      %v7365 = vunpack.c.l.b16 %v7251
      %v7366 = vunpack.c.l.b16 %v7255
      %v7367 = vunpack.c.l.b16 %v7258
      %v7368 = vunpack.c.l.b16 %v7262
      %v7369 = vunpack.c.l.b16 %v7265
      %v7370 = vunpack.c.l.b16 %v7269
      %v7371 = vunpack.c.l.b16 %v7272
      %v7372 = vunpack.c.l.b16 %v7276
      %v7373 = vunpack.c.l.b16 %v7279
      %v7374 = vunpack.c.l.b16 %v7283
      %v7375 = vunpack.c.l.b16 %v7286
      %v7376 = vunpack.c.l.b16 %v7290
      %v7377 = vunpack.c.l.b16 %v7293
      %v7378 = vunpack.c.l.b16 %v7297
      %v7379 = vunpack.c.l.b16 %v7300
      %v7380 = vunpack.c.l.b16 %v7304
      %v7381 = vunpack.c.l.b16 %v7307
      %v7382 = vunpack.c.l.b16 %v7311
      %v7383 = vunpack.c.l.b16 %v7314
      %v7384 = vunpack.c.l.b16 %v7318
      %v7385 = vunpack.c.l.b16 %v7321
      %v7386 = vunpack.c.l.b16 %v7325
      %v7387 = vunpack.c.l.b16 %v7328
      %v7388 = vunpack.c.l.b16 %v7332
      %v7389 = vunpack.c.l.b16 %v7335
      %v7390 = vunpack.c.l.b16 %v7339
      %v7391 = vunpack.c.l.b16 %v7342
      %v7392 = vpack.c.b16 %v7361, %v7360
      %v7393 = vpack.c.b16 %v7363, %v7362
      %v7394 = vpack.c.b16 %v7365, %v7364
      %v7395 = vpack.c.b16 %v7367, %v7366
      %v7396 = vpack.c.b16 %v7369, %v7368
      %v7397 = vpack.c.b16 %v7371, %v7370
      %v7398 = vpack.c.b16 %v7373, %v7372
      %v7399 = vpack.c.b16 %v7375, %v7374
      %v7400 = vpack.c.b16 %v7377, %v7376
      %v7401 = vpack.c.b16 %v7379, %v7378
      %v7402 = vpack.c.b16 %v7381, %v7380
      %v7403 = vpack.c.b16 %v7383, %v7382
      %v7404 = vpack.c.b16 %v7385, %v7384
      %v7405 = vpack.c.b16 %v7387, %v7386
      %v7406 = vpack.c.b16 %v7389, %v7388
      %v7407 = vpack.c.b16 %v7391, %v7390
      %v7440 = vunpack.c.l.b16 %v7344
      %v7441 = vunpack.c.l.b16 %v7345
      %v7442 = vunpack.c.l.b16 %v7346
      %v7443 = vunpack.c.l.b16 %v7347
      %v7444 = vunpack.c.l.b16 %v7348
      %v7445 = vunpack.c.l.b16 %v7349
      %v7446 = vunpack.c.l.b16 %v7350
      %v7447 = vunpack.c.l.b16 %v7351
      %v7448 = vunpack.c.l.b16 %v7352
      %v7449 = vunpack.c.l.b16 %v7353
      %v7450 = vunpack.c.l.b16 %v7354
      %v7451 = vunpack.c.l.b16 %v7355
      %v7452 = vunpack.c.l.b16 %v7356
      %v7453 = vunpack.c.l.b16 %v7357
      %v7454 = vunpack.c.l.b16 %v7358
      %v7455 = vunpack.c.l.b16 %v7359
      %v7456 = vpack.c.b16 %v7441, %v7440
      %v7457 = vpack.c.b16 %v7443, %v7442
      %v7458 = vpack.c.b16 %v7445, %v7444
      %v7459 = vpack.c.b16 %v7447, %v7446
      %v7460 = vpack.c.b16 %v7449, %v7448
      %v7461 = vpack.c.b16 %v7451, %v7450
      %v7462 = vpack.c.b16 %v7453, %v7452
      %v7463 = vpack.c.b16 %v7455, %v7454
      %7472 = vmatprep.subr.bf16.mxu0 0
      %7473 = vmatpush1.bf16.msra.mxu0 %v7456
      %7474 = vmatprep.subr.bf16.mxu0 0
      %7475 = vmatpush1.bf16.msra.mxu0 %v7457
      %7476 = vmatprep.subr.bf16.mxu0 0
      %7477 = vmatpush1.bf16.msra.mxu0 %v7458
      %7478 = vmatprep.subr.bf16.mxu0 0
      %7479 = vmatpush1.bf16.msra.mxu0 %v7459
      %7480 = vmatprep.subr.bf16.mxu0 0
      %7481 = vmatpush1.bf16.msra.mxu0 %v7460
      %7482 = vmatprep.subr.bf16.mxu0 0
      %7483 = vmatpush1.bf16.msra.mxu0 %v7461
      %7484 = vmatprep.subr.bf16.mxu0 0
      %7485 = vmatpush1.bf16.msra.mxu0 %v7462
      %7486 = vmatprep.subr.bf16.mxu0 0
      %7487 = vmatpush1.bf16.msra.mxu0 %v7463
      %7488 = vmatprep.subr.bf16.mxu0 0
      %7489 = vmatpush1.bf16.msra.mxu0 0
      %7490 = vmatprep.subr.bf16.mxu0 0
      %7491 = vmatpush1.bf16.msra.mxu0 0
      %7492 = vmatprep.subr.bf16.mxu0 0
      %7493 = vmatpush1.bf16.msra.mxu0 0
      %7494 = vmatprep.subr.bf16.mxu0 0
      %7495 = vmatpush1.bf16.msra.mxu0 0
      %7496 = vmatprep.subr.bf16.mxu0 0
      %7497 = vmatpush1.bf16.msra.mxu0 0
      %7498 = vmatprep.subr.bf16.mxu0 0
      %7499 = vmatpush1.bf16.msra.mxu0 0
      %7500 = vmatprep.subr.bf16.mxu0 0
      %7501 = vmatpush1.bf16.msra.mxu0 0
      %7502 = vmatprep.subr.bf16.mxu0 0
      %7503 = vmatpush1.bf16.msra.mxu0 0
      %7504 = vmatprep.mubr.bf16.mxu0 0
      %7505 = vmatmul.mubr.bf16.gmra.mrb[0].mxu0 %v7392
      %v7506 = vpop.f32.mrb[0].mxu0
      %v7507 = vadd.f32 0.0, %v7506
      %v7508 = vpop.f32.mrb[0].mxu0
      %v7509 = vpop.f32.mrb[0].mxu0
      %v7510 = vadd.f32 0.0, %v7509
      %v7511 = vpop.f32.mrb[0].mxu0
      %7512 = vmatprep.mubr.bf16.mxu0 0
      %7513 = vmatmul.mubr.bf16.gmra.mrb[0].mxu0 %v7393
      %v7514 = vpop.f32.mrb[0].mxu0
      %v7515 = vadd.f32 0.0, %v7514
      %v7516 = vpop.f32.mrb[0].mxu0
      %v7517 = vpop.f32.mrb[0].mxu0
      %v7518 = vadd.f32 0.0, %v7517
      %v7519 = vpop.f32.mrb[0].mxu0
      %7520 = vmatprep.mubr.bf16.mxu0 0
      %7521 = vmatmul.mubr.bf16.gmra.mrb[0].mxu0 %v7394
      %v7522 = vpop.f32.mrb[0].mxu0
      %v7523 = vadd.f32 0.0, %v7522
      %v7524 = vpop.f32.mrb[0].mxu0
      %v7525 = vpop.f32.mrb[0].mxu0
      %v7526 = vadd.f32 0.0, %v7525
      %v7527 = vpop.f32.mrb[0].mxu0
      %7528 = vmatprep.mubr.bf16.mxu0 0
      %7529 = vmatmul.mubr.bf16.gmra.mrb[0].mxu0 %v7395
      %v7530 = vpop.f32.mrb[0].mxu0
      %v7531 = vadd.f32 0.0, %v7530
      %v7532 = vpop.f32.mrb[0].mxu0
      %v7533 = vpop.f32.mrb[0].mxu0
      %v7534 = vadd.f32 0.0, %v7533
      %v7535 = vpop.f32.mrb[0].mxu0
      %7536 = vmatprep.mubr.bf16.mxu0 0
      %7537 = vmatmul.mubr.bf16.gmra.mrb[0].mxu0 %v7396
      %v7538 = vpop.f32.mrb[0].mxu0
      %v7539 = vadd.f32 0.0, %v7538
      %v7540 = vpop.f32.mrb[0].mxu0
      %v7541 = vpop.f32.mrb[0].mxu0
      %v7542 = vadd.f32 0.0, %v7541
      %v7543 = vpop.f32.mrb[0].mxu0
      %7544 = vmatprep.mubr.bf16.mxu0 0
      %7545 = vmatmul.mubr.bf16.gmra.mrb[0].mxu0 %v7397
      %v7546 = vpop.f32.mrb[0].mxu0
      %v7547 = vadd.f32 0.0, %v7546
      %v7548 = vpop.f32.mrb[0].mxu0
      %v7549 = vpop.f32.mrb[0].mxu0
      %v7550 = vadd.f32 0.0, %v7549
      %v7551 = vpop.f32.mrb[0].mxu0
      %7552 = vmatprep.mubr.bf16.mxu0 0
      %7553 = vmatmul.mubr.bf16.gmra.mrb[0].mxu0 %v7398
      %v7554 = vpop.f32.mrb[0].mxu0
      %v7555 = vadd.f32 0.0, %v7554
      %v7556 = vpop.f32.mrb[0].mxu0
      %v7557 = vpop.f32.mrb[0].mxu0
      %v7558 = vadd.f32 0.0, %v7557
      %v7559 = vpop.f32.mrb[0].mxu0
      %7560 = vmatprep.mubr.bf16.mxu0 0
      %7561 = vmatmul.mubr.bf16.gmra.mrb[0].mxu0 %v7399
      %v7562 = vpop.f32.mrb[0].mxu0
      %v7563 = vadd.f32 0.0, %v7562
      %v7564 = vpop.f32.mrb[0].mxu0
      %v7565 = vpop.f32.mrb[0].mxu0
      %v7566 = vadd.f32 0.0, %v7565
      %v7567 = vpop.f32.mrb[0].mxu0
      %7568 = vmatprep.mubr.bf16.mxu0 0
      %7569 = vmatmul.mubr.bf16.gmra.mrb[0].mxu0 %v7400
      %v7570 = vpop.f32.mrb[0].mxu0
      %v7571 = vadd.f32 0.0, %v7570
      %v7572 = vpop.f32.mrb[0].mxu0
      %v7573 = vpop.f32.mrb[0].mxu0
      %v7574 = vadd.f32 0.0, %v7573
      %v7575 = vpop.f32.mrb[0].mxu0
      %7576 = vmatprep.mubr.bf16.mxu0 0
      %7577 = vmatmul.mubr.bf16.gmra.mrb[0].mxu0 %v7401
      %v7578 = vpop.f32.mrb[0].mxu0
      %v7579 = vadd.f32 0.0, %v7578
      %v7580 = vpop.f32.mrb[0].mxu0
      %v7581 = vpop.f32.mrb[0].mxu0
      %v7582 = vadd.f32 0.0, %v7581
      %v7583 = vpop.f32.mrb[0].mxu0
      %7584 = vmatprep.mubr.bf16.mxu0 0
      %7585 = vmatmul.mubr.bf16.gmra.mrb[0].mxu0 %v7402
      %v7586 = vpop.f32.mrb[0].mxu0
      %v7587 = vadd.f32 0.0, %v7586
      %v7588 = vpop.f32.mrb[0].mxu0
      %v7589 = vpop.f32.mrb[0].mxu0
      %v7590 = vadd.f32 0.0, %v7589
      %v7591 = vpop.f32.mrb[0].mxu0
      %7592 = vmatprep.mubr.bf16.mxu0 0
      %7593 = vmatmul.mubr.bf16.gmra.mrb[0].mxu0 %v7403
      %v7594 = vpop.f32.mrb[0].mxu0
      %v7595 = vadd.f32 0.0, %v7594
      %v7596 = vpop.f32.mrb[0].mxu0
      %v7597 = vpop.f32.mrb[0].mxu0
      %v7598 = vadd.f32 0.0, %v7597
      %v7599 = vpop.f32.mrb[0].mxu0
      %7600 = vmatprep.mubr.bf16.mxu0 0
      %7601 = vmatmul.mubr.bf16.gmra.mrb[0].mxu0 %v7404
      %v7602 = vpop.f32.mrb[0].mxu0
      %v7603 = vadd.f32 0.0, %v7602
      %v7604 = vpop.f32.mrb[0].mxu0
      %v7605 = vpop.f32.mrb[0].mxu0
      %v7606 = vadd.f32 0.0, %v7605
      %v7607 = vpop.f32.mrb[0].mxu0
      %7608 = vmatprep.mubr.bf16.mxu0 0
      %7609 = vmatmul.mubr.bf16.gmra.mrb[0].mxu0 %v7405
      %v7610 = vpop.f32.mrb[0].mxu0
      %v7611 = vadd.f32 0.0, %v7610
      %v7612 = vpop.f32.mrb[0].mxu0
      %v7613 = vpop.f32.mrb[0].mxu0
      %v7614 = vadd.f32 0.0, %v7613
      %v7615 = vpop.f32.mrb[0].mxu0
      %7616 = vmatprep.mubr.bf16.mxu0 0
      %7617 = vmatmul.mubr.bf16.gmra.mrb[0].mxu0 %v7406
      %v7618 = vpop.f32.mrb[0].mxu0
      %v7619 = vadd.f32 0.0, %v7618
      %v7620 = vpop.f32.mrb[0].mxu0
      %v7621 = vpop.f32.mrb[0].mxu0
      %v7622 = vadd.f32 0.0, %v7621
      %v7623 = vpop.f32.mrb[0].mxu0
      %7624 = vmatprep.mubr.bf16.mxu0 0
      %7625 = vmatmul.mubr.bf16.gmra.mrb[0].mxu0 %v7407
      %v7626 = vpop.f32.mrb[0].mxu0
      %v7627 = vadd.f32 0.0, %v7626
      %v7628 = vpop.f32.mrb[0].mxu0
      %v7629 = vpop.f32.mrb[0].mxu0
      %v7630 = vadd.f32 0.0, %v7629
      %v7631 = vpop.f32.mrb[0].mxu0
      %7632 = vdwg.mxu0
      %v7633 = vadd.f32 %v7135, %v7507
      %v7634 = vadd.f32 %v7136, %v7510
      %v7635 = vadd.f32 %v7137, %v7515
      %v7636 = vadd.f32 %v7138, %v7518
      %v7637 = vadd.f32 %v7139, %v7523
      %v7638 = vadd.f32 %v7140, %v7526
      %v7639 = vadd.f32 %v7141, %v7531
      %v7640 = vadd.f32 %v7142, %v7534
      %v7641 = vadd.f32 %v7143, %v7539
      %v7642 = vadd.f32 %v7144, %v7542
      %v7643 = vadd.f32 %v7145, %v7547
      %v7644 = vadd.f32 %v7146, %v7550
      %v7645 = vadd.f32 %v7147, %v7555
      %v7646 = vadd.f32 %v7148, %v7558
      %v7647 = vadd.f32 %v7149, %v7563
      %v7648 = vadd.f32 %v7150, %v7566
      %v7649 = vadd.f32 %v7151, %v7571
      %v7650 = vadd.f32 %v7152, %v7574
      %v7651 = vadd.f32 %v7153, %v7579
      %v7652 = vadd.f32 %v7154, %v7582
      %v7653 = vadd.f32 %v7155, %v7587
      %v7654 = vadd.f32 %v7156, %v7590
      %v7655 = vadd.f32 %v7157, %v7595
      %v7656 = vadd.f32 %v7158, %v7598
      %v7657 = vadd.f32 %v7159, %v7603
      %v7658 = vadd.f32 %v7160, %v7606
      %v7659 = vadd.f32 %v7161, %v7611
      %v7660 = vadd.f32 %v7162, %v7614
      %v7661 = vadd.f32 %v7163, %v7619
      %v7662 = vadd.f32 %v7164, %v7622
      %v7663 = vadd.f32 %v7165, %v7627
      %v7664 = vadd.f32 %v7166, %v7630
      %v7665 = vld [vmem:[%s4] sm:$0x1]
      %v7667 = vlaneseq
      %v7668 = vshrl.u32 %v7667, 7
      %v7669 = vsub.s32 0, %v7668
      %v7670 = vrot.slane %v7665, %v7669
      %v7672 = vadd.f32 %v7633, %v7670
      %v7673 = vadd.f32 %v7634, %v7670
      %v7674 = vadd.f32 %v7635, %v7670
      %v7675 = vadd.f32 %v7636, %v7670
      %v7676 = vadd.f32 %v7637, %v7670
      %v7677 = vadd.f32 %v7638, %v7670
      %v7678 = vadd.f32 %v7639, %v7670
      %v7679 = vadd.f32 %v7640, %v7670
      %v7680 = vadd.f32 %v7641, %v7670
      %v7681 = vadd.f32 %v7642, %v7670
      %v7682 = vadd.f32 %v7643, %v7670
      %v7683 = vadd.f32 %v7644, %v7670
      %v7684 = vadd.f32 %v7645, %v7670
      %v7685 = vadd.f32 %v7646, %v7670
      %v7686 = vadd.f32 %v7647, %v7670
      %v7687 = vadd.f32 %v7648, %v7670
      %v7688 = vadd.f32 %v7649, %v7670
      %v7689 = vadd.f32 %v7650, %v7670
      %v7690 = vadd.f32 %v7651, %v7670
      %v7691 = vadd.f32 %v7652, %v7670
      %v7692 = vadd.f32 %v7653, %v7670
      %v7693 = vadd.f32 %v7654, %v7670
      %v7694 = vadd.f32 %v7655, %v7670
      %v7695 = vadd.f32 %v7656, %v7670
      %v7696 = vadd.f32 %v7657, %v7670
      %v7697 = vadd.f32 %v7658, %v7670
      %v7698 = vadd.f32 %v7659, %v7670
      %v7699 = vadd.f32 %v7660, %v7670
      %v7700 = vadd.f32 %v7661, %v7670
      %v7701 = vadd.f32 %v7662, %v7670
      %v7702 = vadd.f32 %v7663, %v7670
      %v7703 = vadd.f32 %v7664, %v7670
      %v7704 = vmax.f32 %v7672, 0.0
      %v7705 = vmax.f32 %v7673, 0.0
      %v7706 = vmax.f32 %v7674, 0.0
      %v7707 = vmax.f32 %v7675, 0.0
      %v7708 = vmax.f32 %v7676, 0.0
      %v7709 = vmax.f32 %v7677, 0.0
      %v7710 = vmax.f32 %v7678, 0.0
      %v7711 = vmax.f32 %v7679, 0.0
      %v7712 = vmax.f32 %v7680, 0.0
      %v7713 = vmax.f32 %v7681, 0.0
      %v7714 = vmax.f32 %v7682, 0.0
      %v7715 = vmax.f32 %v7683, 0.0
      %v7716 = vmax.f32 %v7684, 0.0
      %v7717 = vmax.f32 %v7685, 0.0
      %v7718 = vmax.f32 %v7686, 0.0
      %v7719 = vmax.f32 %v7687, 0.0
      %v7720 = vmax.f32 %v7688, 0.0
      %v7721 = vmax.f32 %v7689, 0.0
      %v7722 = vmax.f32 %v7690, 0.0
      %v7723 = vmax.f32 %v7691, 0.0
      %v7724 = vmax.f32 %v7692, 0.0
      %v7725 = vmax.f32 %v7693, 0.0
      %v7726 = vmax.f32 %v7694, 0.0
      %v7727 = vmax.f32 %v7695, 0.0
      %v7728 = vmax.f32 %v7696, 0.0
      %v7729 = vmax.f32 %v7697, 0.0
      %v7730 = vmax.f32 %v7698, 0.0
      %v7731 = vmax.f32 %v7699, 0.0
      %v7732 = vmax.f32 %v7700, 0.0
      %v7733 = vmax.f32 %v7701, 0.0
      %v7734 = vmax.f32 %v7702, 0.0
      %v7735 = vmax.f32 %v7703, 0.0
      %v7736 = vmin.f32 %v7704, 6.0
      %v7737 = vmin.f32 %v7705, 6.0
      %v7738 = vmin.f32 %v7706, 6.0
      %v7739 = vmin.f32 %v7707, 6.0
      %v7740 = vmin.f32 %v7708, 6.0
      %v7741 = vmin.f32 %v7709, 6.0
      %v7742 = vmin.f32 %v7710, 6.0
      %v7743 = vmin.f32 %v7711, 6.0
      %v7744 = vmin.f32 %v7712, 6.0
      %v7745 = vmin.f32 %v7713, 6.0
      %v7746 = vmin.f32 %v7714, 6.0
      %v7747 = vmin.f32 %v7715, 6.0
      %v7748 = vmin.f32 %v7716, 6.0
      %v7749 = vmin.f32 %v7717, 6.0
      %v7750 = vmin.f32 %v7718, 6.0
      %v7751 = vmin.f32 %v7719, 6.0
      %v7752 = vmin.f32 %v7720, 6.0
      %v7753 = vmin.f32 %v7721, 6.0
      %v7754 = vmin.f32 %v7722, 6.0
      %v7755 = vmin.f32 %v7723, 6.0
      %v7756 = vmin.f32 %v7724, 6.0
      %v7757 = vmin.f32 %v7725, 6.0
      %v7758 = vmin.f32 %v7726, 6.0
      %v7759 = vmin.f32 %v7727, 6.0
      %v7760 = vmin.f32 %v7728, 6.0
      %v7761 = vmin.f32 %v7729, 6.0
      %v7762 = vmin.f32 %v7730, 6.0
      %v7763 = vmin.f32 %v7731, 6.0
      %v7764 = vmin.f32 %v7732, 6.0
      %v7765 = vmin.f32 %v7733, 6.0
      %v7766 = vmin.f32 %v7734, 6.0
      %v7767 = vmin.f32 %v7735, 6.0
      %7768 = vst [vmem:[%s244] sm:$0xff] %v7736
      %7769 = vst [vmem:[%s244 + $0x8] sm:$0xff] %v7737
      %7770 = vst [vmem:[%s244 + $0x10] sm:$0xff] %v7738
      %7771 = vst [vmem:[%s244 + $0x18] sm:$0xff] %v7739
      %7772 = vst [vmem:[%s244 + $0x20] sm:$0xff] %v7740
      %7773 = vst [vmem:[%s244 + $0x28] sm:$0xff] %v7741
      %7774 = vst [vmem:[%s244 + $0x30] sm:$0xff] %v7742
      %7775 = vst [vmem:[%s244 + $0x38] sm:$0xff] %v7743
      %7776 = vst [vmem:[%s244 + $0x40] sm:$0xff] %v7744
      %7777 = vst [vmem:[%s244 + $0x48] sm:$0xff] %v7745
      %7778 = vst [vmem:[%s244 + $0x50] sm:$0xff] %v7746
      %7779 = vst [vmem:[%s244 + $0x58] sm:$0xff] %v7747
      %7780 = vst [vmem:[%s244 + $0x60] sm:$0xff] %v7748
      %7781 = vst [vmem:[%s244 + $0x68] sm:$0xff] %v7749
      %7782 = vst [vmem:[%s244 + $0x70] sm:$0xff] %v7750
      %7783 = vst [vmem:[%s244 + $0x78] sm:$0xff] %v7751
      %7784 = vst [vmem:[%s244 + $0x80] sm:$0xff] %v7752
      %7785 = vst [vmem:[%s244 + $0x88] sm:$0xff] %v7753
      %7786 = vst [vmem:[%s244 + $0x90] sm:$0xff] %v7754
      %7787 = vst [vmem:[%s244 + $0x98] sm:$0xff] %v7755
      %7788 = vst [vmem:[%s244 + $0xa0] sm:$0xff] %v7756
      %7789 = vst [vmem:[%s244 + $0xa8] sm:$0xff] %v7757
      %7790 = vst [vmem:[%s244 + $0xb0] sm:$0xff] %v7758
      %7791 = vst [vmem:[%s244 + $0xb8] sm:$0xff] %v7759
      %7792 = vst [vmem:[%s244 + $0xc0] sm:$0xff] %v7760
      %7793 = vst [vmem:[%s244 + $0xc8] sm:$0xff] %v7761
      %7794 = vst [vmem:[%s244 + $0xd0] sm:$0xff] %v7762
      %7795 = vst [vmem:[%s244 + $0xd8] sm:$0xff] %v7763
      %7796 = vst [vmem:[%s244 + $0xe0] sm:$0xff] %v7764
      %7797 = vst [vmem:[%s244 + $0xe8] sm:$0xff] %v7765
      %7798 = vst [vmem:[%s244 + $0xf0] sm:$0xff] %v7766
      %7799 = vst [vmem:[%s244 + $0xf8] sm:$0xff] %v7767
      %p7800 = scmp.lt.s32.totalorder %s16, 1
      %s7801 = scalar_select %p7800, %s16, 1
      %s7802 = smul.addr %s7801, 32
      %s7803 = smul.addr %s7802, 8
      %s7804 = scalar_lea.vmem %s5, %s7803
      // Predicated region
      $region41: #{wf_forward.1} parent=39 // pred_check
        %p7805 = pneg %p149
      $region42: #{wf_forward.1} parent=39 // pred_check_branch
        %7807 = sbr.rel (%p7805) target = $region44
      $region43: #{wf_forward.1} parent=39 // pred_region
        _
      $region44: #{wf_forward.1} parent=39 // pred_fallthru
        _
    $region40: #{wf_forward.1} parent=5 // pred_fallthru
      _
    %p7808 = scmp.le.s32.totalorder 2, %s11
    // Predicated region
    $region45: #{wf_forward.1} parent=5 // pred_check
      %p7809 = pneg %p7808
    $region46: #{wf_forward.1} parent=5 // pred_check_branch
      %7811 = sbr.rel (%p7809) target = $region48
    $region47: #{wf_forward.1} parent=5 // pred_region
      %s7812 = ssub.s32 %s11, 2
      // Predicated region
      $region49: #{wf_forward.1} parent=47 // pred_check
        %p7813 = pneg %p155
      $region50: #{wf_forward.1} parent=47 // pred_check_branch
        %7815 = sbr.rel (%p7813) target = $region52
      $region51: #{wf_forward.1} parent=47 // pred_region
        %p7816 = scmp.lt.s32.totalorder %s17, 1
        %s7817 = scalar_select %p7816, %s17, 1
        %s7818 = smul.addr %s7817, 32
        %s7819 = smul.addr %s7818, 8
        %s7820 = scalar_lea.vmem %s5, %s7819
      $region52: #{wf_forward.1} parent=47 // pred_fallthru
        _
    $region48: #{wf_forward.1} parent=5 // pred_fallthru
      _
  $region6: #{wf_forward.1} parent=0 // loop_footer
    %s15 = sadd.s32 1, %s11
  $region7: #{wf_forward.1} parent=0 // loop_footer_branch
    %10 = sbr.rel target = $region3
  $region8: #{wf_forward.1} parent=0 // loop_exit
    _

</llo_original>
